<compile_context>
chip_gen: v6e
topology: v6e:2x2x1
jax: 0.10.0
libtpu: 0.0.40
codegen_flags: <defaults>
</compile_context>

<pallas_src>
import functools
import math

import jax
import jax.numpy as jnp
from jax.experimental import pallas as pl
from jax.experimental.pallas import tpu as pltpu

EMBED_DIM = 32          # "embed_dim"  (768 in the reference module; shrunk for demo)
NUM_HEADS = 4           # must divide EMBED_DIM
NUM_LAYERS = 2          # "num_layers" (12 in the reference module)
DIM_FF = 64             # nn.TransformerEncoderLayer default is 2048; shrunk for demo
NUM_CLASSES = 10
HEAD_OUT_PAD = 128      # lane-dense output slab; sliced to D / num_classes outside
LN_EPS = 1e-5


def _layer_norm(x, gamma, beta):
    mu = jnp.mean(x, axis=-1, keepdims=True)
    var = jnp.mean((x - mu) ** 2, axis=-1, keepdims=True)
    return (x - mu) * jax.lax.rsqrt(var + LN_EPS) * gamma + beta


# ----------------------------------------------------------------------------
# Fully fused per-stage kernel:
#   patch embed -> random token mask -> cls/pos add -> L transformer layers
#   -> cls extraction (-> MLP head for the last stage)
# Single invocation, no grid: all weights live in VMEM for the whole stage.
# ----------------------------------------------------------------------------
def _fused_stage_kernel(
        # stage inputs
        x_flat_ref, wpe_ref, bpe_ref, mask_ref, tokadd_ref,
        # per-layer stacked weights (leading L axis, indexed statically)
        win_ref, bin_ref, wout_ref, bout_ref,
        g1_ref, be1_ref, w1_ref, b1_ref, w2_ref, b2_ref, g2_ref, be2_ref,
        # MLP head (only read when with_head=True)
        hw1_ref, hb1_ref, hw2_ref, hb2_ref,
        # output (lane-dense padded slab)
        o_ref,
        *, num_heads, num_layers, with_head):
    bf16 = jnp.bfloat16
    b, _ = x_flat_ref.shape
    d = wpe_ref.shape[1]
    dh = d // num_heads
    scale = 1.0 / math.sqrt(dh)

    # ---- patch embed + random token mask + cls / position embed ----
    emb = jnp.dot(x_flat_ref[...].astype(bf16), wpe_ref[...],
                  preferred_element_type=jnp.float32) + bpe_ref[...]     # (B, D)
    emb = emb * mask_ref[...]            # random whole-token masking (pre pos-add)
    tokadd = tokadd_ref[...]             # (2, D): row0 = cls+pos0, row1 = pos1
    cls_rows = jnp.broadcast_to(tokadd[0:1, :], (b, d))
    patch_rows = emb + tokadd[1:2, :]
    # TODO(synk): nn.Dropout after the position add is identity (eval mode).
    # rows [0:B] = cls column, rows [B:2B] = patch column (torch seq=B, batch=2)
    x = jnp.concatenate([cls_rows, patch_rows], axis=0)                  # (2B, D)

    def split_cols_heads(t):
        # (2B, D) -> (2*H, B, dh); group axis g = (token column, head)
        return jnp.stack([t[s * b:(s + 1) * b, h * dh:(h + 1) * dh]
                          for s in range(2) for h in range(num_heads)], axis=0)

    # ---- num_layers post-norm TransformerEncoderLayers, unrolled in-kernel ----
    for l in range(num_layers):
        qkv = jnp.dot(x.astype(bf16), win_ref[l],
                      preferred_element_type=jnp.float32) + bin_ref[l]   # (2B, 3D)
        q = qkv[:, 0 * d:1 * d].astype(bf16)
        k = qkv[:, 1 * d:2 * d].astype(bf16)
        v = qkv[:, 2 * d:3 * d].astype(bf16)

        q_g = split_cols_heads(q)                                        # (2H,B,dh)
        k_g = split_cols_heads(k)
        v_g = split_cols_heads(v)

        # Column-batched attention: no cross-column mask, no wasted half of
        # the score matrix.  bf16 MXU inputs, f32 accumulation; softmax in f32.
        s_sc = jnp.einsum('gqc,gkc->gqk', q_g, k_g,
                          preferred_element_type=jnp.float32) * scale    # (2H,B,B)
        s_sc = s_sc - jnp.max(s_sc, axis=-1, keepdims=True)
        p = jnp.exp(s_sc)
        p = p * pl.reciprocal(jnp.sum(p, axis=-1, keepdims=True), approx=True)
        ctx = jnp.einsum('gqk,gkc->gqc', p.astype(bf16), v_g,
                         preferred_element_type=jnp.float32)             # (2H,B,dh)

        # Merge heads back onto lanes and columns back onto rows -> (2B, D),
        # then ONE full-depth out-projection matmul (no per-head matmul+sum).
        ctx_m = jnp.concatenate(
            [jnp.concatenate([ctx[s * num_heads + h] for h in range(num_heads)],
                             axis=-1)
             for s in range(2)], axis=0)                                 # (2B, D)
        attn = jnp.dot(ctx_m.astype(bf16), wout_ref[l],
                       preferred_element_type=jnp.float32) + bout_ref[l]

        h1 = _layer_norm(x + attn, g1_ref[l], be1_ref[l])
        ff = jnp.dot(h1.astype(bf16), w1_ref[l],
                     preferred_element_type=jnp.float32) + b1_ref[l]
        ff = jnp.maximum(ff, 0.0)                                        # ReLU
        ff = jnp.dot(ff.astype(bf16), w2_ref[l],
                     preferred_element_type=jnp.float32) + b2_ref[l]
        x = _layer_norm(h1 + ff, g2_ref[l], be2_ref[l])

    # ---- cls extraction (+ fused MLP head); lane-dense padded output ----
    cls_out = x[0:b, :]                                  # == torch x[:, 0]
    out_w = o_ref.shape[1]
    if with_head:
        h = jnp.dot(cls_out.astype(bf16), hw1_ref[...],
                    preferred_element_type=jnp.float32) + hb1_ref[...]
        h = jnp.maximum(h, 0.0)
        o_ref[...] = jnp.dot(h.astype(bf16), hw2_ref[...],
                             preferred_element_type=jnp.float32) + hb2_ref[...]
    else:
        if out_w > d:
            cls_out = jnp.concatenate(
                [cls_out, jnp.zeros((b, out_w - d), jnp.float32)], axis=-1)
        o_ref[...] = cls_out


def _build_stage_call(B, F, D, H, FF, L, with_head):
    kernel = functools.partial(_fused_stage_kernel, num_heads=H,
                               num_layers=L, with_head=with_head)
    # Rough advisory cost estimate for XLA's scheduler.
    R = 2 * B
    dh = D // H
    flops_layer = (2 * R * D * 3 * D            # qkv
                   + 4 * (2 * H) * B * B * dh   # scores + PV
                   + 2 * R * D * D              # out-proj
                   + 4 * R * D * FF)            # FFN
    flops = 2 * B * F * D + L * flops_layer
    if with_head:
        flops += 2 * B * D * D + 2 * B * D * HEAD_OUT_PAD
    bytes_accessed = (4 * (B * F + B * HEAD_OUT_PAD + 2 * D + B)
                      + 2 * (F * D + D * D + D * HEAD_OUT_PAD)
                      + L * (2 * (4 * D * D + 2 * D * FF) + 4 * (8 * D + FF)))
    # NOTE: at real sizes (768-dim / 12 layers / 2048 FF) switch to a
    # grid=(L,) weight-streaming design (stacked specs + pl.Buffered) with a
    # per-generation vmem_limit_bytes budget; at demo sizes everything fits
    # in VMEM and a single un-gridded call avoids all pipeline overhead.
    return pl.pallas_call(
        kernel,
        out_shape=jax.ShapeDtypeStruct((B, HEAD_OUT_PAD), jnp.float32),
        compiler_params=pltpu.CompilerParams(
            vmem_limit_bytes=32 * 1024 * 1024),   # safe on v5e/v6e/v7x
        cost_estimate=pl.CostEstimate(
            flops=int(flops),
            transcendentals=int(L * 2 * H * B * B),
            bytes_accessed=int(bytes_accessed)),
    )


# ----------------------------------------------------------------------------
# Model wrapper (plain-JAX glue around the fused Pallas stage kernel)
# ----------------------------------------------------------------------------
class FuzzyViTPallas:
    def __init__(self, num_classes, embed_dim, num_heads, num_layers, dim_ff,
                 channels, time_steps, key):
        assert embed_dim % num_heads == 0
        assert embed_dim <= HEAD_OUT_PAD and num_classes <= HEAD_OUT_PAD
        self.embed_dim = embed_dim
        self.num_heads = num_heads
        self.num_layers = num_layers
        self.dim_ff = dim_ff
        self.num_classes = num_classes
        self._key = key
        d = embed_dim

        # cls_token is an nn.Parameter initialized to zeros in the reference.
        cls_token = jnp.zeros((1, d), jnp.float32)
        # position_embed = randn(num_patches + 1, D); num_patches is always 1
        # (patch_size == T), so it is created once and shared by all stages.
        pos = jax.random.normal(self._next_key(), (2, d), jnp.float32)
        self.tokadd = jnp.concatenate([cls_token + pos[0:1], pos[1:2]], axis=0)

        # Patch-embed linears pre-created for the two in_features the forward
        # uses.  Stages 2 and 3 share one linear: the reference only recreates
        # the lazy linear when in_features changes, and they match.
        f1 = channels * time_steps
        f23 = (embed_dim + channels) * time_steps
        self.pe1 = self._make_linear(f1, d)
        self.pe23 = self._make_linear(f23, d)

        # Transformer weights, stacked along a leading layer axis.  Matmul
        # weights are stored in bf16 (f32 MXU accumulation in-kernel).
        def rnd(shape):
            return 0.02 * jax.random.normal(self._next_key(), shape, jnp.float32)

        L = num_layers
        self.stk = {
            "win": jnp.stack([rnd((d, 3 * d)) for _ in range(L)]).astype(jnp.bfloat16),
            "bin": jnp.zeros((L, 1, 3 * d), jnp.float32),
            "wout": jnp.stack([rnd((d, d)) for _ in range(L)]).astype(jnp.bfloat16),
            "bout": jnp.zeros((L, 1, d), jnp.float32),
            "g1": jnp.ones((L, 1, d), jnp.float32),
            "be1": jnp.zeros((L, 1, d), jnp.float32),
            "w1": jnp.stack([rnd((d, dim_ff)) for _ in range(L)]).astype(jnp.bfloat16),
            "b1": jnp.zeros((L, 1, dim_ff), jnp.float32),
            "w2": jnp.stack([rnd((dim_ff, d)) for _ in range(L)]).astype(jnp.bfloat16),
            "b2": jnp.zeros((L, 1, d), jnp.float32),
            "g2": jnp.ones((L, 1, d), jnp.float32),
            "be2": jnp.zeros((L, 1, d), jnp.float32),
        }

        # MLP head: Linear(D, D) -> ReLU -> Linear(D, num_classes); second
        # linear padded to a lane-dense 128-wide output slab.
        self.head_w1 = rnd((d, d)).astype(jnp.bfloat16)
        self.head_b1 = jnp.zeros((1, d), jnp.float32)
        hw2 = rnd((d, num_classes))
        self.head_w2 = (jnp.zeros((d, HEAD_OUT_PAD), jnp.float32)
                        .at[:, :num_classes].set(hw2).astype(jnp.bfloat16))
        self.head_b2 = jnp.zeros((1, HEAD_OUT_PAD), jnp.float32)

        self._forward = jax.jit(self._forward_impl)

    def _next_key(self):
        self._key, sub = jax.random.split(self._key)
        return sub

    def _make_linear(self, f_in, d):
        w = 0.02 * jax.random.normal(self._next_key(), (f_in, d), jnp.float32)
        return w.astype(jnp.bfloat16), jnp.zeros((1, d), jnp.float32)

    def _stage(self, x3d, pe, key, with_head):
        B, C, T = x3d.shape
        f_in = C * T
        # torch unfold(2, T, T).view(B, 1, C*T) == row-major flatten of (C, T).
        x_flat = x3d.reshape(B, f_in)
        # position_masking(mode='random'): zero whole patch tokens w.p. 0.5.
        mask = jax.random.randint(key, (B, 1), 0, 2).astype(jnp.float32)
        w_pe, b_pe = pe
        call = _build_stage_call(B, f_in, self.embed_dim, self.num_heads,
                                 self.dim_ff, self.num_layers, with_head)
        s = self.stk
        return call(x_flat, w_pe, b_pe, mask, self.tokadd,
                    s["win"], s["bin"], s["wout"], s["bout"],
                    s["g1"], s["be1"], s["w1"], s["b1"], s["w2"], s["b2"],
                    s["g2"], s["be2"],
                    self.head_w1, self.head_b1, self.head_w2, self.head_b2)

    def _forward_impl(self, mel1, mel2, mel3, key):
        k1, k2, k3 = jax.random.split(key, 3)
        B = mel1.shape[0]
        d = self.embed_dim
        out1 = self._stage(mel1, self.pe1, k1, with_head=False)[:, :d]   # (B, D)
        out1_exp = jnp.broadcast_to(out1[:, :, None], (B, d, mel2.shape[2]))
        out2 = self._stage(jnp.concatenate([out1_exp, mel2], axis=1),
                           self.pe23, k2, with_head=False)[:, :d]        # (B, D)
        out2_exp = jnp.broadcast_to(out2[:, :, None], (B, d, mel3.shape[2]))
        logits_pad = self._stage(jnp.concatenate([out2_exp, mel3], axis=1),
                                 self.pe23, k3, with_head=True)          # (B, 128)
        return logits_pad[:, :self.num_classes]

    def __call__(self, mel1, mel2, mel3, key):
        return self._forward(mel1, mel2, mel3, key)


if __name__ == "__main__":
    key = jax.random.PRNGKey(0)
    k_param, k_mask, k1, k2, k3 = jax.random.split(key, 5)

    B, C, T = 2, 4, 16
    mel1 = jax.random.normal(k1, (B, C, T), jnp.float32)
    mel2 = jax.random.normal(k2, (B, C, T), jnp.float32)
    mel3 = jax.random.normal(k3, (B, C, T), jnp.float32)

    model = FuzzyViTPallas(num_classes=NUM_CLASSES, embed_dim=EMBED_DIM,
                           num_heads=NUM_HEADS, num_layers=NUM_LAYERS,
                           dim_ff=DIM_FF, channels=C, time_steps=T, key=k_param)

    logits = model(mel1, mel2, mel3, k_mask)       # (B, NUM_CLASSES)
    jax.block_until_ready(logits)
    assert logits.shape == (B, NUM_CLASSES)
    assert bool(jnp.all(jnp.isfinite(logits)))
    print("KERNEL_OK")
</pallas_src>

<mosaic_0001>
module attributes {stable_mosaic.version = 11 : i64} {
  func.func @_fused_stage_kernel(%arg0: memref<2x64xf32, #tpu.memory_space<vmem>>, %arg1: memref<64x32xbf16, #tpu.memory_space<vmem>>, %arg2: memref<1x32xf32, #tpu.memory_space<vmem>>, %arg3: memref<2x1xf32, #tpu.memory_space<vmem>>, %arg4: memref<2x32xf32, #tpu.memory_space<vmem>>, %arg5: memref<2x32x96xbf16, #tpu.memory_space<vmem>>, %arg6: memref<2x1x96xf32, #tpu.memory_space<vmem>>, %arg7: memref<2x32x32xbf16, #tpu.memory_space<vmem>>, %arg8: memref<2x1x32xf32, #tpu.memory_space<vmem>>, %arg9: memref<2x1x32xf32, #tpu.memory_space<vmem>>, %arg10: memref<2x1x32xf32, #tpu.memory_space<vmem>>, %arg11: memref<2x32x64xbf16, #tpu.memory_space<vmem>>, %arg12: memref<2x1x64xf32, #tpu.memory_space<vmem>>, %arg13: memref<2x64x32xbf16, #tpu.memory_space<vmem>>, %arg14: memref<2x1x32xf32, #tpu.memory_space<vmem>>, %arg15: memref<2x1x32xf32, #tpu.memory_space<vmem>>, %arg16: memref<2x1x32xf32, #tpu.memory_space<vmem>>, %arg17: memref<32x32xbf16, #tpu.memory_space<vmem>>, %arg18: memref<1x32xf32, #tpu.memory_space<vmem>>, %arg19: memref<32x128xbf16, #tpu.memory_space<vmem>>, %arg20: memref<1x128xf32, #tpu.memory_space<vmem>>, %arg21: memref<2x128xf32, #tpu.memory_space<vmem>>) attributes {dimension_semantics = [], scalar_prefetch = 0 : i64, scratch_operands = 0 : i64, tpu.core_type = #tpu.core_type<tc>} {
    %c0 = arith.constant 0 : index
    %c0_0 = arith.constant 0 : index
    %0 = vector.load %arg0[%c0, %c0_0] : memref<2x64xf32, #tpu.memory_space<vmem>>, vector<2x64xf32>
    %1 = arith.truncf %0 : vector<2x64xf32> to vector<2x64xbf16>
    %c0_1 = arith.constant 0 : index
    %c0_2 = arith.constant 0 : index
    %2 = vector.load %arg1[%c0_1, %c0_2] : memref<64x32xbf16, #tpu.memory_space<vmem>>, vector<64x32xbf16>
    %cst = arith.constant dense<0.000000e+00> : vector<2x32xf32>
    %3 = tpu.matmul %1, %2, %cst {dimension_numbers = #tpu.dot_dimension_numbers<[1], [0], [0], [1], [0, 0, 1, 1], [], []>} : vector<2x64xbf16>, vector<64x32xbf16>, vector<2x32xf32> -> vector<2x32xf32>
    %c0_3 = arith.constant 0 : index
    %c0_4 = arith.constant 0 : index
    %4 = vector.load %arg2[%c0_3, %c0_4] : memref<1x32xf32, #tpu.memory_space<vmem>>, vector<1x32xf32>
    %5 = vector.broadcast %4 : vector<1x32xf32> to vector<2x32xf32>
    %6 = arith.addf %3, %5 : vector<2x32xf32>
    %c0_5 = arith.constant 0 : index
    %c0_6 = arith.constant 0 : index
    %7 = vector.load %arg3[%c0_5, %c0_6] : memref<2x1xf32, #tpu.memory_space<vmem>>, vector<2x1xf32>
    %8 = vector.broadcast %7 : vector<2x1xf32> to vector<2x32xf32>
    %9 = arith.mulf %6, %8 : vector<2x32xf32>
    %c0_7 = arith.constant 0 : index
    %c0_8 = arith.constant 0 : index
    %10 = vector.load %arg4[%c0_7, %c0_8] : memref<2x32xf32, #tpu.memory_space<vmem>>, vector<2x32xf32>
    %11 = vector.extract_strided_slice %10 {offsets = [0, 0], sizes = [1, 32], strides = [1, 1]} : vector<2x32xf32> to vector<1x32xf32>
    %12 = vector.shape_cast %11 : vector<1x32xf32> to vector<1x32xf32>
    %13 = vector.broadcast %12 : vector<1x32xf32> to vector<2x32xf32>
    %14 = vector.extract_strided_slice %10 {offsets = [1, 0], sizes = [1, 32], strides = [1, 1]} : vector<2x32xf32> to vector<1x32xf32>
    %15 = vector.broadcast %14 : vector<1x32xf32> to vector<2x32xf32>
    %16 = arith.addf %9, %15 : vector<2x32xf32>
    %17 = tpu.concatenate %13, %16 in 0 : vector<2x32xf32>, vector<2x32xf32> -> vector<4x32xf32>
    %18 = arith.truncf %17 : vector<4x32xf32> to vector<4x32xbf16>
    %c0_9 = arith.constant 0 : index
    %c0_10 = arith.constant 0 : index
    %c0_11 = arith.constant 0 : index
    %19 = vector.load %arg5[%c0_9, %c0_10, %c0_11] : memref<2x32x96xbf16, #tpu.memory_space<vmem>>, vector<1x32x96xbf16>
    %20 = vector.shape_cast %19 : vector<1x32x96xbf16> to vector<32x96xbf16>
    %cst_12 = arith.constant dense<0.000000e+00> : vector<4x96xf32>
    %21 = tpu.matmul %18, %20, %cst_12 {dimension_numbers = #tpu.dot_dimension_numbers<[1], [0], [0], [1], [0, 0, 1, 1], [], []>} : vector<4x32xbf16>, vector<32x96xbf16>, vector<4x96xf32> -> vector<4x96xf32>
    %c0_13 = arith.constant 0 : index
    %c0_14 = arith.constant 0 : index
    %c0_15 = arith.constant 0 : index
    %22 = vector.load %arg6[%c0_13, %c0_14, %c0_15] : memref<2x1x96xf32, #tpu.memory_space<vmem>>, vector<1x1x96xf32>
    %23 = vector.shape_cast %22 : vector<1x1x96xf32> to vector<1x96xf32>
    %24 = vector.broadcast %23 : vector<1x96xf32> to vector<4x96xf32>
    %25 = arith.addf %21, %24 : vector<4x96xf32>
    %26 = vector.extract_strided_slice %25 {offsets = [0, 0], sizes = [4, 32], strides = [1, 1]} : vector<4x96xf32> to vector<4x32xf32>
    %27 = arith.truncf %26 : vector<4x32xf32> to vector<4x32xbf16>
    %28 = vector.extract_strided_slice %25 {offsets = [0, 32], sizes = [4, 32], strides = [1, 1]} : vector<4x96xf32> to vector<4x32xf32>
    %29 = arith.truncf %28 : vector<4x32xf32> to vector<4x32xbf16>
    %30 = vector.extract_strided_slice %25 {offsets = [0, 64], sizes = [4, 32], strides = [1, 1]} : vector<4x96xf32> to vector<4x32xf32>
    %31 = arith.truncf %30 : vector<4x32xf32> to vector<4x32xbf16>
    %32 = vector.extract_strided_slice %27 {offsets = [0, 0], sizes = [2, 8], strides = [1, 1]} : vector<4x32xbf16> to vector<2x8xbf16>
    %33 = vector.extract_strided_slice %27 {offsets = [0, 8], sizes = [2, 8], strides = [1, 1]} : vector<4x32xbf16> to vector<2x8xbf16>
    %34 = vector.extract_strided_slice %27 {offsets = [0, 16], sizes = [2, 8], strides = [1, 1]} : vector<4x32xbf16> to vector<2x8xbf16>
    %35 = vector.extract_strided_slice %27 {offsets = [0, 24], sizes = [2, 8], strides = [1, 1]} : vector<4x32xbf16> to vector<2x8xbf16>
    %36 = vector.extract_strided_slice %27 {offsets = [2, 0], sizes = [2, 8], strides = [1, 1]} : vector<4x32xbf16> to vector<2x8xbf16>
    %37 = vector.extract_strided_slice %27 {offsets = [2, 8], sizes = [2, 8], strides = [1, 1]} : vector<4x32xbf16> to vector<2x8xbf16>
    %38 = vector.extract_strided_slice %27 {offsets = [2, 16], sizes = [2, 8], strides = [1, 1]} : vector<4x32xbf16> to vector<2x8xbf16>
    %39 = vector.extract_strided_slice %27 {offsets = [2, 24], sizes = [2, 8], strides = [1, 1]} : vector<4x32xbf16> to vector<2x8xbf16>
    %40 = vector.shape_cast %32 : vector<2x8xbf16> to vector<1x2x8xbf16>
    %41 = vector.shape_cast %33 : vector<2x8xbf16> to vector<1x2x8xbf16>
    %42 = vector.shape_cast %34 : vector<2x8xbf16> to vector<1x2x8xbf16>
    %43 = vector.shape_cast %35 : vector<2x8xbf16> to vector<1x2x8xbf16>
    %44 = vector.shape_cast %36 : vector<2x8xbf16> to vector<1x2x8xbf16>
    %45 = vector.shape_cast %37 : vector<2x8xbf16> to vector<1x2x8xbf16>
    %46 = vector.shape_cast %38 : vector<2x8xbf16> to vector<1x2x8xbf16>
    %47 = vector.shape_cast %39 : vector<2x8xbf16> to vector<1x2x8xbf16>
    %48 = tpu.concatenate %40, %41, %42, %43, %44, %45, %46, %47 in 0 : vector<1x2x8xbf16>, vector<1x2x8xbf16>, vector<1x2x8xbf16>, vector<1x2x8xbf16>, vector<1x2x8xbf16>, vector<1x2x8xbf16>, vector<1x2x8xbf16>, vector<1x2x8xbf16> -> vector<8x2x8xbf16>
    %49 = vector.extract_strided_slice %29 {offsets = [0, 0], sizes = [2, 8], strides = [1, 1]} : vector<4x32xbf16> to vector<2x8xbf16>
    %50 = vector.extract_strided_slice %29 {offsets = [0, 8], sizes = [2, 8], strides = [1, 1]} : vector<4x32xbf16> to vector<2x8xbf16>
    %51 = vector.extract_strided_slice %29 {offsets = [0, 16], sizes = [2, 8], strides = [1, 1]} : vector<4x32xbf16> to vector<2x8xbf16>
    %52 = vector.extract_strided_slice %29 {offsets = [0, 24], sizes = [2, 8], strides = [1, 1]} : vector<4x32xbf16> to vector<2x8xbf16>
    %53 = vector.extract_strided_slice %29 {offsets = [2, 0], sizes = [2, 8], strides = [1, 1]} : vector<4x32xbf16> to vector<2x8xbf16>
    %54 = vector.extract_strided_slice %29 {offsets = [2, 8], sizes = [2, 8], strides = [1, 1]} : vector<4x32xbf16> to vector<2x8xbf16>
    %55 = vector.extract_strided_slice %29 {offsets = [2, 16], sizes = [2, 8], strides = [1, 1]} : vector<4x32xbf16> to vector<2x8xbf16>
    %56 = vector.extract_strided_slice %29 {offsets = [2, 24], sizes = [2, 8], strides = [1, 1]} : vector<4x32xbf16> to vector<2x8xbf16>
    %57 = vector.shape_cast %49 : vector<2x8xbf16> to vector<1x2x8xbf16>
    %58 = vector.shape_cast %50 : vector<2x8xbf16> to vector<1x2x8xbf16>
    %59 = vector.shape_cast %51 : vector<2x8xbf16> to vector<1x2x8xbf16>
    %60 = vector.shape_cast %52 : vector<2x8xbf16> to vector<1x2x8xbf16>
    %61 = vector.shape_cast %53 : vector<2x8xbf16> to vector<1x2x8xbf16>
    %62 = vector.shape_cast %54 : vector<2x8xbf16> to vector<1x2x8xbf16>
    %63 = vector.shape_cast %55 : vector<2x8xbf16> to vector<1x2x8xbf16>
    %64 = vector.shape_cast %56 : vector<2x8xbf16> to vector<1x2x8xbf16>
    %65 = tpu.concatenate %57, %58, %59, %60, %61, %62, %63, %64 in 0 : vector<1x2x8xbf16>, vector<1x2x8xbf16>, vector<1x2x8xbf16>, vector<1x2x8xbf16>, vector<1x2x8xbf16>, vector<1x2x8xbf16>, vector<1x2x8xbf16>, vector<1x2x8xbf16> -> vector<8x2x8xbf16>
    %66 = vector.extract_strided_slice %31 {offsets = [0, 0], sizes = [2, 8], strides = [1, 1]} : vector<4x32xbf16> to vector<2x8xbf16>
    %67 = vector.extract_strided_slice %31 {offsets = [0, 8], sizes = [2, 8], strides = [1, 1]} : vector<4x32xbf16> to vector<2x8xbf16>
    %68 = vector.extract_strided_slice %31 {offsets = [0, 16], sizes = [2, 8], strides = [1, 1]} : vector<4x32xbf16> to vector<2x8xbf16>
    %69 = vector.extract_strided_slice %31 {offsets = [0, 24], sizes = [2, 8], strides = [1, 1]} : vector<4x32xbf16> to vector<2x8xbf16>
    %70 = vector.extract_strided_slice %31 {offsets = [2, 0], sizes = [2, 8], strides = [1, 1]} : vector<4x32xbf16> to vector<2x8xbf16>
    %71 = vector.extract_strided_slice %31 {offsets = [2, 8], sizes = [2, 8], strides = [1, 1]} : vector<4x32xbf16> to vector<2x8xbf16>
    %72 = vector.extract_strided_slice %31 {offsets = [2, 16], sizes = [2, 8], strides = [1, 1]} : vector<4x32xbf16> to vector<2x8xbf16>
    %73 = vector.extract_strided_slice %31 {offsets = [2, 24], sizes = [2, 8], strides = [1, 1]} : vector<4x32xbf16> to vector<2x8xbf16>
    %74 = vector.shape_cast %66 : vector<2x8xbf16> to vector<1x2x8xbf16>
    %75 = vector.shape_cast %67 : vector<2x8xbf16> to vector<1x2x8xbf16>
    %76 = vector.shape_cast %68 : vector<2x8xbf16> to vector<1x2x8xbf16>
    %77 = vector.shape_cast %69 : vector<2x8xbf16> to vector<1x2x8xbf16>
    %78 = vector.shape_cast %70 : vector<2x8xbf16> to vector<1x2x8xbf16>
    %79 = vector.shape_cast %71 : vector<2x8xbf16> to vector<1x2x8xbf16>
    %80 = vector.shape_cast %72 : vector<2x8xbf16> to vector<1x2x8xbf16>
    %81 = vector.shape_cast %73 : vector<2x8xbf16> to vector<1x2x8xbf16>
    %82 = tpu.concatenate %74, %75, %76, %77, %78, %79, %80, %81 in 0 : vector<1x2x8xbf16>, vector<1x2x8xbf16>, vector<1x2x8xbf16>, vector<1x2x8xbf16>, vector<1x2x8xbf16>, vector<1x2x8xbf16>, vector<1x2x8xbf16>, vector<1x2x8xbf16> -> vector<8x2x8xbf16>
    "tpu.trace_start"() <{level = 10 : i32, message = "gqc,gkc->gqk"}> : () -> ()
    %cst_16 = arith.constant dense<0.000000e+00> : vector<8x2x2xf32>
    %83 = tpu.matmul %48, %65, %cst_16 {dimension_numbers = #tpu.dot_dimension_numbers<[2], [2], [1], [1], [0, 0, 0, 1, 1, 1], [0], [0]>} : vector<8x2x8xbf16>, vector<8x2x8xbf16>, vector<8x2x2xf32> -> vector<8x2x2xf32>
    "tpu.trace_stop"() : () -> ()
    %cst_17 = arith.constant 0.353553385 : f32
    %84 = vector.broadcast %cst_17 : f32 to vector<8x2x2xf32>
    %85 = arith.mulf %83, %84 : vector<8x2x2xf32>
    %cst_18 = arith.constant dense<0xFF800000> : vector<8x2xf32>
    %86 = vector.multi_reduction <maximumf>, %85, %cst_18 [2] : vector<8x2x2xf32> to vector<8x2xf32>
    %87 = vector.shape_cast %86 : vector<8x2xf32> to vector<8x2x1xf32>
    %88 = vector.broadcast %87 : vector<8x2x1xf32> to vector<8x2x2xf32>
    %89 = arith.subf %85, %88 : vector<8x2x2xf32>
    %90 = math.exp %89 : vector<8x2x2xf32>
    %cst_19 = arith.constant dense<0.000000e+00> : vector<8x2xf32>
    %91 = vector.multi_reduction <add>, %90, %cst_19 [2] : vector<8x2x2xf32> to vector<8x2xf32>
    %92 = vector.shape_cast %91 : vector<8x2xf32> to vector<8x2x1xf32>
    %93 = tpu.reciprocal %92 {approx = true} : vector<8x2x1xf32> -> vector<8x2x1xf32>
    %94 = vector.broadcast %93 : vector<8x2x1xf32> to vector<8x2x2xf32>
    %95 = arith.mulf %90, %94 : vector<8x2x2xf32>
    %96 = arith.truncf %95 : vector<8x2x2xf32> to vector<8x2x2xbf16>
    "tpu.trace_start"() <{level = 10 : i32, message = "gqk,gkc->gqc"}> : () -> ()
    %cst_20 = arith.constant dense<0.000000e+00> : vector<8x2x8xf32>
    %97 = tpu.matmul %96, %82, %cst_20 {dimension_numbers = #tpu.dot_dimension_numbers<[2], [1], [1], [2], [0, 0, 0, 1, 1, 2], [0], [0]>} : vector<8x2x2xbf16>, vector<8x2x8xbf16>, vector<8x2x8xf32> -> vector<8x2x8xf32>
    "tpu.trace_stop"() : () -> ()
    %98 = vector.extract_strided_slice %97 {offsets = [0, 0, 0], sizes = [1, 2, 8], strides = [1, 1, 1]} : vector<8x2x8xf32> to vector<1x2x8xf32>
    %99 = vector.shape_cast %98 : vector<1x2x8xf32> to vector<2x8xf32>
    %100 = vector.extract_strided_slice %97 {offsets = [1, 0, 0], sizes = [1, 2, 8], strides = [1, 1, 1]} : vector<8x2x8xf32> to vector<1x2x8xf32>
    %101 = vector.shape_cast %100 : vector<1x2x8xf32> to vector<2x8xf32>
    %102 = vector.extract_strided_slice %97 {offsets = [2, 0, 0], sizes = [1, 2, 8], strides = [1, 1, 1]} : vector<8x2x8xf32> to vector<1x2x8xf32>
    %103 = vector.shape_cast %102 : vector<1x2x8xf32> to vector<2x8xf32>
    %104 = vector.extract_strided_slice %97 {offsets = [3, 0, 0], sizes = [1, 2, 8], strides = [1, 1, 1]} : vector<8x2x8xf32> to vector<1x2x8xf32>
    %105 = vector.shape_cast %104 : vector<1x2x8xf32> to vector<2x8xf32>
    %106 = tpu.concatenate %99, %101, %103, %105 in 1 : vector<2x8xf32>, vector<2x8xf32>, vector<2x8xf32>, vector<2x8xf32> -> vector<2x32xf32>
    %107 = vector.extract_strided_slice %97 {offsets = [4, 0, 0], sizes = [1, 2, 8], strides = [1, 1, 1]} : vector<8x2x8xf32> to vector<1x2x8xf32>
    %108 = vector.shape_cast %107 : vector<1x2x8xf32> to vector<2x8xf32>
    %109 = vector.extract_strided_slice %97 {offsets = [5, 0, 0], sizes = [1, 2, 8], strides = [1, 1, 1]} : vector<8x2x8xf32> to vector<1x2x8xf32>
    %110 = vector.shape_cast %109 : vector<1x2x8xf32> to vector<2x8xf32>
    %111 = vector.extract_strided_slice %97 {offsets = [6, 0, 0], sizes = [1, 2, 8], strides = [1, 1, 1]} : vector<8x2x8xf32> to vector<1x2x8xf32>
    %112 = vector.shape_cast %111 : vector<1x2x8xf32> to vector<2x8xf32>
    %113 = vector.extract_strided_slice %97 {offsets = [7, 0, 0], sizes = [1, 2, 8], strides = [1, 1, 1]} : vector<8x2x8xf32> to vector<1x2x8xf32>
    %114 = vector.shape_cast %113 : vector<1x2x8xf32> to vector<2x8xf32>
    %115 = tpu.concatenate %108, %110, %112, %114 in 1 : vector<2x8xf32>, vector<2x8xf32>, vector<2x8xf32>, vector<2x8xf32> -> vector<2x32xf32>
    %116 = tpu.concatenate %106, %115 in 0 : vector<2x32xf32>, vector<2x32xf32> -> vector<4x32xf32>
    %117 = arith.truncf %116 : vector<4x32xf32> to vector<4x32xbf16>
    %c0_21 = arith.constant 0 : index
    %c0_22 = arith.constant 0 : index
    %c0_23 = arith.constant 0 : index
    %118 = vector.load %arg7[%c0_21, %c0_22, %c0_23] : memref<2x32x32xbf16, #tpu.memory_space<vmem>>, vector<1x32x32xbf16>
    %119 = vector.shape_cast %118 : vector<1x32x32xbf16> to vector<32x32xbf16>
    %cst_24 = arith.constant dense<0.000000e+00> : vector<4x32xf32>
    %120 = tpu.matmul %117, %119, %cst_24 {dimension_numbers = #tpu.dot_dimension_numbers<[1], [0], [0], [1], [0, 0, 1, 1], [], []>} : vector<4x32xbf16>, vector<32x32xbf16>, vector<4x32xf32> -> vector<4x32xf32>
    %c0_25 = arith.constant 0 : index
    %c0_26 = arith.constant 0 : index
    %c0_27 = arith.constant 0 : index
    %121 = vector.load %arg8[%c0_25, %c0_26, %c0_27] : memref<2x1x32xf32, #tpu.memory_space<vmem>>, vector<1x1x32xf32>
    %122 = vector.shape_cast %121 : vector<1x1x32xf32> to vector<1x32xf32>
    %123 = vector.broadcast %122 : vector<1x32xf32> to vector<4x32xf32>
    %124 = arith.addf %120, %123 : vector<4x32xf32>
    %125 = arith.addf %17, %124 : vector<4x32xf32>
    %c0_28 = arith.constant 0 : index
    %c0_29 = arith.constant 0 : index
    %c0_30 = arith.constant 0 : index
    %126 = vector.load %arg9[%c0_28, %c0_29, %c0_30] : memref<2x1x32xf32, #tpu.memory_space<vmem>>, vector<1x1x32xf32>
    %127 = vector.shape_cast %126 : vector<1x1x32xf32> to vector<1x32xf32>
    %c0_31 = arith.constant 0 : index
    %c0_32 = arith.constant 0 : index
    %c0_33 = arith.constant 0 : index
    %128 = vector.load %arg10[%c0_31, %c0_32, %c0_33] : memref<2x1x32xf32, #tpu.memory_space<vmem>>, vector<1x1x32xf32>
    %129 = vector.shape_cast %128 : vector<1x1x32xf32> to vector<1x32xf32>
    %cst_34 = arith.constant dense<0.000000e+00> : vector<4xf32>
    %130 = vector.multi_reduction <add>, %125, %cst_34 [1] : vector<4x32xf32> to vector<4xf32>
    %131 = vector.shape_cast %130 : vector<4xf32> to vector<4x1xf32>
    %cst_35 = arith.constant 3.200000e+01 : f32
    %132 = vector.broadcast %cst_35 : f32 to vector<4x1xf32>
    %133 = arith.divf %131, %132 : vector<4x1xf32>
    %134 = vector.broadcast %133 : vector<4x1xf32> to vector<4x32xf32>
    %135 = arith.subf %125, %134 : vector<4x32xf32>
    %136 = arith.mulf %135, %135 : vector<4x32xf32>
    %cst_36 = arith.constant dense<0.000000e+00> : vector<4xf32>
    %137 = vector.multi_reduction <add>, %136, %cst_36 [1] : vector<4x32xf32> to vector<4xf32>
    %138 = vector.shape_cast %137 : vector<4xf32> to vector<4x1xf32>
    %cst_37 = arith.constant 3.200000e+01 : f32
    %139 = vector.broadcast %cst_37 : f32 to vector<4x1xf32>
    %140 = arith.divf %138, %139 : vector<4x1xf32>
    %141 = vector.broadcast %133 : vector<4x1xf32> to vector<4x32xf32>
    %142 = arith.subf %125, %141 : vector<4x32xf32>
    %cst_38 = arith.constant 9.99999974E-6 : f32
    %143 = vector.broadcast %cst_38 : f32 to vector<4x1xf32>
    %144 = arith.addf %140, %143 : vector<4x1xf32>
    %145 = math.rsqrt %144 : vector<4x1xf32>
    %146 = vector.broadcast %145 : vector<4x1xf32> to vector<4x32xf32>
    %147 = arith.mulf %142, %146 : vector<4x32xf32>
    %148 = vector.broadcast %127 : vector<1x32xf32> to vector<4x32xf32>
    %149 = arith.mulf %147, %148 : vector<4x32xf32>
    %150 = vector.broadcast %129 : vector<1x32xf32> to vector<4x32xf32>
    %151 = arith.addf %149, %150 : vector<4x32xf32>
    %152 = arith.truncf %151 : vector<4x32xf32> to vector<4x32xbf16>
    %c0_39 = arith.constant 0 : index
    %c0_40 = arith.constant 0 : index
    %c0_41 = arith.constant 0 : index
    %153 = vector.load %arg11[%c0_39, %c0_40, %c0_41] : memref<2x32x64xbf16, #tpu.memory_space<vmem>>, vector<1x32x64xbf16>
    %154 = vector.shape_cast %153 : vector<1x32x64xbf16> to vector<32x64xbf16>
    %cst_42 = arith.constant dense<0.000000e+00> : vector<4x64xf32>
    %155 = tpu.matmul %152, %154, %cst_42 {dimension_numbers = #tpu.dot_dimension_numbers<[1], [0], [0], [1], [0, 0, 1, 1], [], []>} : vector<4x32xbf16>, vector<32x64xbf16>, vector<4x64xf32> -> vector<4x64xf32>
    %c0_43 = arith.constant 0 : index
    %c0_44 = arith.constant 0 : index
    %c0_45 = arith.constant 0 : index
    %156 = vector.load %arg12[%c0_43, %c0_44, %c0_45] : memref<2x1x64xf32, #tpu.memory_space<vmem>>, vector<1x1x64xf32>
    %157 = vector.shape_cast %156 : vector<1x1x64xf32> to vector<1x64xf32>
    %158 = vector.broadcast %157 : vector<1x64xf32> to vector<4x64xf32>
    %159 = arith.addf %155, %158 : vector<4x64xf32>
    %cst_46 = arith.constant 0.000000e+00 : f32
    %160 = vector.broadcast %cst_46 : f32 to vector<4x64xf32>
    %161 = arith.maximumf %159, %160 : vector<4x64xf32>
    %162 = arith.truncf %161 : vector<4x64xf32> to vector<4x64xbf16>
    %c0_47 = arith.constant 0 : index
    %c0_48 = arith.constant 0 : index
    %c0_49 = arith.constant 0 : index
    %163 = vector.load %arg13[%c0_47, %c0_48, %c0_49] : memref<2x64x32xbf16, #tpu.memory_space<vmem>>, vector<1x64x32xbf16>
    %164 = vector.shape_cast %163 : vector<1x64x32xbf16> to vector<64x32xbf16>
    %cst_50 = arith.constant dense<0.000000e+00> : vector<4x32xf32>
    %165 = tpu.matmul %162, %164, %cst_50 {dimension_numbers = #tpu.dot_dimension_numbers<[1], [0], [0], [1], [0, 0, 1, 1], [], []>} : vector<4x64xbf16>, vector<64x32xbf16>, vector<4x32xf32> -> vector<4x32xf32>
    %c0_51 = arith.constant 0 : index
    %c0_52 = arith.constant 0 : index
    %c0_53 = arith.constant 0 : index
    %166 = vector.load %arg14[%c0_51, %c0_52, %c0_53] : memref<2x1x32xf32, #tpu.memory_space<vmem>>, vector<1x1x32xf32>
    %167 = vector.shape_cast %166 : vector<1x1x32xf32> to vector<1x32xf32>
    %168 = vector.broadcast %167 : vector<1x32xf32> to vector<4x32xf32>
    %169 = arith.addf %165, %168 : vector<4x32xf32>
    %170 = arith.addf %151, %169 : vector<4x32xf32>
    %c0_54 = arith.constant 0 : index
    %c0_55 = arith.constant 0 : index
    %c0_56 = arith.constant 0 : index
    %171 = vector.load %arg15[%c0_54, %c0_55, %c0_56] : memref<2x1x32xf32, #tpu.memory_space<vmem>>, vector<1x1x32xf32>
    %172 = vector.shape_cast %171 : vector<1x1x32xf32> to vector<1x32xf32>
    %c0_57 = arith.constant 0 : index
    %c0_58 = arith.constant 0 : index
    %c0_59 = arith.constant 0 : index
    %173 = vector.load %arg16[%c0_57, %c0_58, %c0_59] : memref<2x1x32xf32, #tpu.memory_space<vmem>>, vector<1x1x32xf32>
    %174 = vector.shape_cast %173 : vector<1x1x32xf32> to vector<1x32xf32>
    %cst_60 = arith.constant dense<0.000000e+00> : vector<4xf32>
    %175 = vector.multi_reduction <add>, %170, %cst_60 [1] : vector<4x32xf32> to vector<4xf32>
    %176 = vector.shape_cast %175 : vector<4xf32> to vector<4x1xf32>
    %cst_61 = arith.constant 3.200000e+01 : f32
    %177 = vector.broadcast %cst_61 : f32 to vector<4x1xf32>
    %178 = arith.divf %176, %177 : vector<4x1xf32>
    %179 = vector.broadcast %178 : vector<4x1xf32> to vector<4x32xf32>
    %180 = arith.subf %170, %179 : vector<4x32xf32>
    %181 = arith.mulf %180, %180 : vector<4x32xf32>
    %cst_62 = arith.constant dense<0.000000e+00> : vector<4xf32>
    %182 = vector.multi_reduction <add>, %181, %cst_62 [1] : vector<4x32xf32> to vector<4xf32>
    %183 = vector.shape_cast %182 : vector<4xf32> to vector<4x1xf32>
    %cst_63 = arith.constant 3.200000e+01 : f32
    %184 = vector.broadcast %cst_63 : f32 to vector<4x1xf32>
    %185 = arith.divf %183, %184 : vector<4x1xf32>
    %186 = vector.broadcast %178 : vector<4x1xf32> to vector<4x32xf32>
    %187 = arith.subf %170, %186 : vector<4x32xf32>
    %cst_64 = arith.constant 9.99999974E-6 : f32
    %188 = vector.broadcast %cst_64 : f32 to vector<4x1xf32>
    %189 = arith.addf %185, %188 : vector<4x1xf32>
    %190 = math.rsqrt %189 : vector<4x1xf32>
    %191 = vector.broadcast %190 : vector<4x1xf32> to vector<4x32xf32>
    %192 = arith.mulf %187, %191 : vector<4x32xf32>
    %193 = vector.broadcast %172 : vector<1x32xf32> to vector<4x32xf32>
    %194 = arith.mulf %192, %193 : vector<4x32xf32>
    %195 = vector.broadcast %174 : vector<1x32xf32> to vector<4x32xf32>
    %196 = arith.addf %194, %195 : vector<4x32xf32>
    %197 = arith.truncf %196 : vector<4x32xf32> to vector<4x32xbf16>
    %c1 = arith.constant 1 : index
    %c0_65 = arith.constant 0 : index
    %c0_66 = arith.constant 0 : index
    %198 = vector.load %arg5[%c1, %c0_65, %c0_66] : memref<2x32x96xbf16, #tpu.memory_space<vmem>>, vector<1x32x96xbf16>
    %199 = vector.shape_cast %198 : vector<1x32x96xbf16> to vector<32x96xbf16>
    %cst_67 = arith.constant dense<0.000000e+00> : vector<4x96xf32>
    %200 = tpu.matmul %197, %199, %cst_67 {dimension_numbers = #tpu.dot_dimension_numbers<[1], [0], [0], [1], [0, 0, 1, 1], [], []>} : vector<4x32xbf16>, vector<32x96xbf16>, vector<4x96xf32> -> vector<4x96xf32>
    %c1_68 = arith.constant 1 : index
    %c0_69 = arith.constant 0 : index
    %c0_70 = arith.constant 0 : index
    %201 = vector.load %arg6[%c1_68, %c0_69, %c0_70] : memref<2x1x96xf32, #tpu.memory_space<vmem>>, vector<1x1x96xf32>
    %202 = vector.shape_cast %201 : vector<1x1x96xf32> to vector<1x96xf32>
    %203 = vector.broadcast %202 : vector<1x96xf32> to vector<4x96xf32>
    %204 = arith.addf %200, %203 : vector<4x96xf32>
    %205 = vector.extract_strided_slice %204 {offsets = [0, 0], sizes = [4, 32], strides = [1, 1]} : vector<4x96xf32> to vector<4x32xf32>
    %206 = arith.truncf %205 : vector<4x32xf32> to vector<4x32xbf16>
    %207 = vector.extract_strided_slice %204 {offsets = [0, 32], sizes = [4, 32], strides = [1, 1]} : vector<4x96xf32> to vector<4x32xf32>
    %208 = arith.truncf %207 : vector<4x32xf32> to vector<4x32xbf16>
    %209 = vector.extract_strided_slice %204 {offsets = [0, 64], sizes = [4, 32], strides = [1, 1]} : vector<4x96xf32> to vector<4x32xf32>
    %210 = arith.truncf %209 : vector<4x32xf32> to vector<4x32xbf16>
    %211 = vector.extract_strided_slice %206 {offsets = [0, 0], sizes = [2, 8], strides = [1, 1]} : vector<4x32xbf16> to vector<2x8xbf16>
    %212 = vector.extract_strided_slice %206 {offsets = [0, 8], sizes = [2, 8], strides = [1, 1]} : vector<4x32xbf16> to vector<2x8xbf16>
    %213 = vector.extract_strided_slice %206 {offsets = [0, 16], sizes = [2, 8], strides = [1, 1]} : vector<4x32xbf16> to vector<2x8xbf16>
    %214 = vector.extract_strided_slice %206 {offsets = [0, 24], sizes = [2, 8], strides = [1, 1]} : vector<4x32xbf16> to vector<2x8xbf16>
    %215 = vector.extract_strided_slice %206 {offsets = [2, 0], sizes = [2, 8], strides = [1, 1]} : vector<4x32xbf16> to vector<2x8xbf16>
    %216 = vector.extract_strided_slice %206 {offsets = [2, 8], sizes = [2, 8], strides = [1, 1]} : vector<4x32xbf16> to vector<2x8xbf16>
    %217 = vector.extract_strided_slice %206 {offsets = [2, 16], sizes = [2, 8], strides = [1, 1]} : vector<4x32xbf16> to vector<2x8xbf16>
    %218 = vector.extract_strided_slice %206 {offsets = [2, 24], sizes = [2, 8], strides = [1, 1]} : vector<4x32xbf16> to vector<2x8xbf16>
    %219 = vector.shape_cast %211 : vector<2x8xbf16> to vector<1x2x8xbf16>
    %220 = vector.shape_cast %212 : vector<2x8xbf16> to vector<1x2x8xbf16>
    %221 = vector.shape_cast %213 : vector<2x8xbf16> to vector<1x2x8xbf16>
    %222 = vector.shape_cast %214 : vector<2x8xbf16> to vector<1x2x8xbf16>
    %223 = vector.shape_cast %215 : vector<2x8xbf16> to vector<1x2x8xbf16>
    %224 = vector.shape_cast %216 : vector<2x8xbf16> to vector<1x2x8xbf16>
    %225 = vector.shape_cast %217 : vector<2x8xbf16> to vector<1x2x8xbf16>
    %226 = vector.shape_cast %218 : vector<2x8xbf16> to vector<1x2x8xbf16>
    %227 = tpu.concatenate %219, %220, %221, %222, %223, %224, %225, %226 in 0 : vector<1x2x8xbf16>, vector<1x2x8xbf16>, vector<1x2x8xbf16>, vector<1x2x8xbf16>, vector<1x2x8xbf16>, vector<1x2x8xbf16>, vector<1x2x8xbf16>, vector<1x2x8xbf16> -> vector<8x2x8xbf16>
    %228 = vector.extract_strided_slice %208 {offsets = [0, 0], sizes = [2, 8], strides = [1, 1]} : vector<4x32xbf16> to vector<2x8xbf16>
    %229 = vector.extract_strided_slice %208 {offsets = [0, 8], sizes = [2, 8], strides = [1, 1]} : vector<4x32xbf16> to vector<2x8xbf16>
    %230 = vector.extract_strided_slice %208 {offsets = [0, 16], sizes = [2, 8], strides = [1, 1]} : vector<4x32xbf16> to vector<2x8xbf16>
    %231 = vector.extract_strided_slice %208 {offsets = [0, 24], sizes = [2, 8], strides = [1, 1]} : vector<4x32xbf16> to vector<2x8xbf16>
    %232 = vector.extract_strided_slice %208 {offsets = [2, 0], sizes = [2, 8], strides = [1, 1]} : vector<4x32xbf16> to vector<2x8xbf16>
    %233 = vector.extract_strided_slice %208 {offsets = [2, 8], sizes = [2, 8], strides = [1, 1]} : vector<4x32xbf16> to vector<2x8xbf16>
    %234 = vector.extract_strided_slice %208 {offsets = [2, 16], sizes = [2, 8], strides = [1, 1]} : vector<4x32xbf16> to vector<2x8xbf16>
    %235 = vector.extract_strided_slice %208 {offsets = [2, 24], sizes = [2, 8], strides = [1, 1]} : vector<4x32xbf16> to vector<2x8xbf16>
    %236 = vector.shape_cast %228 : vector<2x8xbf16> to vector<1x2x8xbf16>
    %237 = vector.shape_cast %229 : vector<2x8xbf16> to vector<1x2x8xbf16>
    %238 = vector.shape_cast %230 : vector<2x8xbf16> to vector<1x2x8xbf16>
    %239 = vector.shape_cast %231 : vector<2x8xbf16> to vector<1x2x8xbf16>
    %240 = vector.shape_cast %232 : vector<2x8xbf16> to vector<1x2x8xbf16>
    %241 = vector.shape_cast %233 : vector<2x8xbf16> to vector<1x2x8xbf16>
    %242 = vector.shape_cast %234 : vector<2x8xbf16> to vector<1x2x8xbf16>
    %243 = vector.shape_cast %235 : vector<2x8xbf16> to vector<1x2x8xbf16>
    %244 = tpu.concatenate %236, %237, %238, %239, %240, %241, %242, %243 in 0 : vector<1x2x8xbf16>, vector<1x2x8xbf16>, vector<1x2x8xbf16>, vector<1x2x8xbf16>, vector<1x2x8xbf16>, vector<1x2x8xbf16>, vector<1x2x8xbf16>, vector<1x2x8xbf16> -> vector<8x2x8xbf16>
    %245 = vector.extract_strided_slice %210 {offsets = [0, 0], sizes = [2, 8], strides = [1, 1]} : vector<4x32xbf16> to vector<2x8xbf16>
    %246 = vector.extract_strided_slice %210 {offsets = [0, 8], sizes = [2, 8], strides = [1, 1]} : vector<4x32xbf16> to vector<2x8xbf16>
    %247 = vector.extract_strided_slice %210 {offsets = [0, 16], sizes = [2, 8], strides = [1, 1]} : vector<4x32xbf16> to vector<2x8xbf16>
    %248 = vector.extract_strided_slice %210 {offsets = [0, 24], sizes = [2, 8], strides = [1, 1]} : vector<4x32xbf16> to vector<2x8xbf16>
    %249 = vector.extract_strided_slice %210 {offsets = [2, 0], sizes = [2, 8], strides = [1, 1]} : vector<4x32xbf16> to vector<2x8xbf16>
    %250 = vector.extract_strided_slice %210 {offsets = [2, 8], sizes = [2, 8], strides = [1, 1]} : vector<4x32xbf16> to vector<2x8xbf16>
    %251 = vector.extract_strided_slice %210 {offsets = [2, 16], sizes = [2, 8], strides = [1, 1]} : vector<4x32xbf16> to vector<2x8xbf16>
    %252 = vector.extract_strided_slice %210 {offsets = [2, 24], sizes = [2, 8], strides = [1, 1]} : vector<4x32xbf16> to vector<2x8xbf16>
    %253 = vector.shape_cast %245 : vector<2x8xbf16> to vector<1x2x8xbf16>
    %254 = vector.shape_cast %246 : vector<2x8xbf16> to vector<1x2x8xbf16>
    %255 = vector.shape_cast %247 : vector<2x8xbf16> to vector<1x2x8xbf16>
    %256 = vector.shape_cast %248 : vector<2x8xbf16> to vector<1x2x8xbf16>
    %257 = vector.shape_cast %249 : vector<2x8xbf16> to vector<1x2x8xbf16>
    %258 = vector.shape_cast %250 : vector<2x8xbf16> to vector<1x2x8xbf16>
    %259 = vector.shape_cast %251 : vector<2x8xbf16> to vector<1x2x8xbf16>
    %260 = vector.shape_cast %252 : vector<2x8xbf16> to vector<1x2x8xbf16>
    %261 = tpu.concatenate %253, %254, %255, %256, %257, %258, %259, %260 in 0 : vector<1x2x8xbf16>, vector<1x2x8xbf16>, vector<1x2x8xbf16>, vector<1x2x8xbf16>, vector<1x2x8xbf16>, vector<1x2x8xbf16>, vector<1x2x8xbf16>, vector<1x2x8xbf16> -> vector<8x2x8xbf16>
    "tpu.trace_start"() <{level = 10 : i32, message = "gqc,gkc->gqk"}> : () -> ()
    %cst_71 = arith.constant dense<0.000000e+00> : vector<8x2x2xf32>
    %262 = tpu.matmul %227, %244, %cst_71 {dimension_numbers = #tpu.dot_dimension_numbers<[2], [2], [1], [1], [0, 0, 0, 1, 1, 1], [0], [0]>} : vector<8x2x8xbf16>, vector<8x2x8xbf16>, vector<8x2x2xf32> -> vector<8x2x2xf32>
    "tpu.trace_stop"() : () -> ()
    %cst_72 = arith.constant 0.353553385 : f32
    %263 = vector.broadcast %cst_72 : f32 to vector<8x2x2xf32>
    %264 = arith.mulf %262, %263 : vector<8x2x2xf32>
    %cst_73 = arith.constant dense<0xFF800000> : vector<8x2xf32>
    %265 = vector.multi_reduction <maximumf>, %264, %cst_73 [2] : vector<8x2x2xf32> to vector<8x2xf32>
    %266 = vector.shape_cast %265 : vector<8x2xf32> to vector<8x2x1xf32>
    %267 = vector.broadcast %266 : vector<8x2x1xf32> to vector<8x2x2xf32>
    %268 = arith.subf %264, %267 : vector<8x2x2xf32>
    %269 = math.exp %268 : vector<8x2x2xf32>
    %cst_74 = arith.constant dense<0.000000e+00> : vector<8x2xf32>
    %270 = vector.multi_reduction <add>, %269, %cst_74 [2] : vector<8x2x2xf32> to vector<8x2xf32>
    %271 = vector.shape_cast %270 : vector<8x2xf32> to vector<8x2x1xf32>
    %272 = tpu.reciprocal %271 {approx = true} : vector<8x2x1xf32> -> vector<8x2x1xf32>
    %273 = vector.broadcast %272 : vector<8x2x1xf32> to vector<8x2x2xf32>
    %274 = arith.mulf %269, %273 : vector<8x2x2xf32>
    %275 = arith.truncf %274 : vector<8x2x2xf32> to vector<8x2x2xbf16>
    "tpu.trace_start"() <{level = 10 : i32, message = "gqk,gkc->gqc"}> : () -> ()
    %cst_75 = arith.constant dense<0.000000e+00> : vector<8x2x8xf32>
    %276 = tpu.matmul %275, %261, %cst_75 {dimension_numbers = #tpu.dot_dimension_numbers<[2], [1], [1], [2], [0, 0, 0, 1, 1, 2], [0], [0]>} : vector<8x2x2xbf16>, vector<8x2x8xbf16>, vector<8x2x8xf32> -> vector<8x2x8xf32>
    "tpu.trace_stop"() : () -> ()
    %277 = vector.extract_strided_slice %276 {offsets = [0, 0, 0], sizes = [1, 2, 8], strides = [1, 1, 1]} : vector<8x2x8xf32> to vector<1x2x8xf32>
    %278 = vector.shape_cast %277 : vector<1x2x8xf32> to vector<2x8xf32>
    %279 = vector.extract_strided_slice %276 {offsets = [1, 0, 0], sizes = [1, 2, 8], strides = [1, 1, 1]} : vector<8x2x8xf32> to vector<1x2x8xf32>
    %280 = vector.shape_cast %279 : vector<1x2x8xf32> to vector<2x8xf32>
    %281 = vector.extract_strided_slice %276 {offsets = [2, 0, 0], sizes = [1, 2, 8], strides = [1, 1, 1]} : vector<8x2x8xf32> to vector<1x2x8xf32>
    %282 = vector.shape_cast %281 : vector<1x2x8xf32> to vector<2x8xf32>
    %283 = vector.extract_strided_slice %276 {offsets = [3, 0, 0], sizes = [1, 2, 8], strides = [1, 1, 1]} : vector<8x2x8xf32> to vector<1x2x8xf32>
    %284 = vector.shape_cast %283 : vector<1x2x8xf32> to vector<2x8xf32>
    %285 = tpu.concatenate %278, %280, %282, %284 in 1 : vector<2x8xf32>, vector<2x8xf32>, vector<2x8xf32>, vector<2x8xf32> -> vector<2x32xf32>
    %286 = vector.extract_strided_slice %276 {offsets = [4, 0, 0], sizes = [1, 2, 8], strides = [1, 1, 1]} : vector<8x2x8xf32> to vector<1x2x8xf32>
    %287 = vector.shape_cast %286 : vector<1x2x8xf32> to vector<2x8xf32>
    %288 = vector.extract_strided_slice %276 {offsets = [5, 0, 0], sizes = [1, 2, 8], strides = [1, 1, 1]} : vector<8x2x8xf32> to vector<1x2x8xf32>
    %289 = vector.shape_cast %288 : vector<1x2x8xf32> to vector<2x8xf32>
    %290 = vector.extract_strided_slice %276 {offsets = [6, 0, 0], sizes = [1, 2, 8], strides = [1, 1, 1]} : vector<8x2x8xf32> to vector<1x2x8xf32>
    %291 = vector.shape_cast %290 : vector<1x2x8xf32> to vector<2x8xf32>
    %292 = vector.extract_strided_slice %276 {offsets = [7, 0, 0], sizes = [1, 2, 8], strides = [1, 1, 1]} : vector<8x2x8xf32> to vector<1x2x8xf32>
    %293 = vector.shape_cast %292 : vector<1x2x8xf32> to vector<2x8xf32>
    %294 = tpu.concatenate %287, %289, %291, %293 in 1 : vector<2x8xf32>, vector<2x8xf32>, vector<2x8xf32>, vector<2x8xf32> -> vector<2x32xf32>
    %295 = tpu.concatenate %285, %294 in 0 : vector<2x32xf32>, vector<2x32xf32> -> vector<4x32xf32>
    %296 = arith.truncf %295 : vector<4x32xf32> to vector<4x32xbf16>
    %c1_76 = arith.constant 1 : index
    %c0_77 = arith.constant 0 : index
    %c0_78 = arith.constant 0 : index
    %297 = vector.load %arg7[%c1_76, %c0_77, %c0_78] : memref<2x32x32xbf16, #tpu.memory_space<vmem>>, vector<1x32x32xbf16>
    %298 = vector.shape_cast %297 : vector<1x32x32xbf16> to vector<32x32xbf16>
    %cst_79 = arith.constant dense<0.000000e+00> : vector<4x32xf32>
    %299 = tpu.matmul %296, %298, %cst_79 {dimension_numbers = #tpu.dot_dimension_numbers<[1], [0], [0], [1], [0, 0, 1, 1], [], []>} : vector<4x32xbf16>, vector<32x32xbf16>, vector<4x32xf32> -> vector<4x32xf32>
    %c1_80 = arith.constant 1 : index
    %c0_81 = arith.constant 0 : index
    %c0_82 = arith.constant 0 : index
    %300 = vector.load %arg8[%c1_80, %c0_81, %c0_82] : memref<2x1x32xf32, #tpu.memory_space<vmem>>, vector<1x1x32xf32>
    %301 = vector.shape_cast %300 : vector<1x1x32xf32> to vector<1x32xf32>
    %302 = vector.broadcast %301 : vector<1x32xf32> to vector<4x32xf32>
    %303 = arith.addf %299, %302 : vector<4x32xf32>
    %304 = arith.addf %196, %303 : vector<4x32xf32>
    %c1_83 = arith.constant 1 : index
    %c0_84 = arith.constant 0 : index
    %c0_85 = arith.constant 0 : index
    %305 = vector.load %arg9[%c1_83, %c0_84, %c0_85] : memref<2x1x32xf32, #tpu.memory_space<vmem>>, vector<1x1x32xf32>
    %306 = vector.shape_cast %305 : vector<1x1x32xf32> to vector<1x32xf32>
    %c1_86 = arith.constant 1 : index
    %c0_87 = arith.constant 0 : index
    %c0_88 = arith.constant 0 : index
    %307 = vector.load %arg10[%c1_86, %c0_87, %c0_88] : memref<2x1x32xf32, #tpu.memory_space<vmem>>, vector<1x1x32xf32>
    %308 = vector.shape_cast %307 : vector<1x1x32xf32> to vector<1x32xf32>
    %cst_89 = arith.constant dense<0.000000e+00> : vector<4xf32>
    %309 = vector.multi_reduction <add>, %304, %cst_89 [1] : vector<4x32xf32> to vector<4xf32>
    %310 = vector.shape_cast %309 : vector<4xf32> to vector<4x1xf32>
    %cst_90 = arith.constant 3.200000e+01 : f32
    %311 = vector.broadcast %cst_90 : f32 to vector<4x1xf32>
    %312 = arith.divf %310, %311 : vector<4x1xf32>
    %313 = vector.broadcast %312 : vector<4x1xf32> to vector<4x32xf32>
    %314 = arith.subf %304, %313 : vector<4x32xf32>
    %315 = arith.mulf %314, %314 : vector<4x32xf32>
    %cst_91 = arith.constant dense<0.000000e+00> : vector<4xf32>
    %316 = vector.multi_reduction <add>, %315, %cst_91 [1] : vector<4x32xf32> to vector<4xf32>
    %317 = vector.shape_cast %316 : vector<4xf32> to vector<4x1xf32>
    %cst_92 = arith.constant 3.200000e+01 : f32
    %318 = vector.broadcast %cst_92 : f32 to vector<4x1xf32>
    %319 = arith.divf %317, %318 : vector<4x1xf32>
    %320 = vector.broadcast %312 : vector<4x1xf32> to vector<4x32xf32>
    %321 = arith.subf %304, %320 : vector<4x32xf32>
    %cst_93 = arith.constant 9.99999974E-6 : f32
    %322 = vector.broadcast %cst_93 : f32 to vector<4x1xf32>
    %323 = arith.addf %319, %322 : vector<4x1xf32>
    %324 = math.rsqrt %323 : vector<4x1xf32>
    %325 = vector.broadcast %324 : vector<4x1xf32> to vector<4x32xf32>
    %326 = arith.mulf %321, %325 : vector<4x32xf32>
    %327 = vector.broadcast %306 : vector<1x32xf32> to vector<4x32xf32>
    %328 = arith.mulf %326, %327 : vector<4x32xf32>
    %329 = vector.broadcast %308 : vector<1x32xf32> to vector<4x32xf32>
    %330 = arith.addf %328, %329 : vector<4x32xf32>
    %331 = arith.truncf %330 : vector<4x32xf32> to vector<4x32xbf16>
    %c1_94 = arith.constant 1 : index
    %c0_95 = arith.constant 0 : index
    %c0_96 = arith.constant 0 : index
    %332 = vector.load %arg11[%c1_94, %c0_95, %c0_96] : memref<2x32x64xbf16, #tpu.memory_space<vmem>>, vector<1x32x64xbf16>
    %333 = vector.shape_cast %332 : vector<1x32x64xbf16> to vector<32x64xbf16>
    %cst_97 = arith.constant dense<0.000000e+00> : vector<4x64xf32>
    %334 = tpu.matmul %331, %333, %cst_97 {dimension_numbers = #tpu.dot_dimension_numbers<[1], [0], [0], [1], [0, 0, 1, 1], [], []>} : vector<4x32xbf16>, vector<32x64xbf16>, vector<4x64xf32> -> vector<4x64xf32>
    %c1_98 = arith.constant 1 : index
    %c0_99 = arith.constant 0 : index
    %c0_100 = arith.constant 0 : index
    %335 = vector.load %arg12[%c1_98, %c0_99, %c0_100] : memref<2x1x64xf32, #tpu.memory_space<vmem>>, vector<1x1x64xf32>
    %336 = vector.shape_cast %335 : vector<1x1x64xf32> to vector<1x64xf32>
    %337 = vector.broadcast %336 : vector<1x64xf32> to vector<4x64xf32>
    %338 = arith.addf %334, %337 : vector<4x64xf32>
    %cst_101 = arith.constant 0.000000e+00 : f32
    %339 = vector.broadcast %cst_101 : f32 to vector<4x64xf32>
    %340 = arith.maximumf %338, %339 : vector<4x64xf32>
    %341 = arith.truncf %340 : vector<4x64xf32> to vector<4x64xbf16>
    %c1_102 = arith.constant 1 : index
    %c0_103 = arith.constant 0 : index
    %c0_104 = arith.constant 0 : index
    %342 = vector.load %arg13[%c1_102, %c0_103, %c0_104] : memref<2x64x32xbf16, #tpu.memory_space<vmem>>, vector<1x64x32xbf16>
    %343 = vector.shape_cast %342 : vector<1x64x32xbf16> to vector<64x32xbf16>
    %cst_105 = arith.constant dense<0.000000e+00> : vector<4x32xf32>
    %344 = tpu.matmul %341, %343, %cst_105 {dimension_numbers = #tpu.dot_dimension_numbers<[1], [0], [0], [1], [0, 0, 1, 1], [], []>} : vector<4x64xbf16>, vector<64x32xbf16>, vector<4x32xf32> -> vector<4x32xf32>
    %c1_106 = arith.constant 1 : index
    %c0_107 = arith.constant 0 : index
    %c0_108 = arith.constant 0 : index
    %345 = vector.load %arg14[%c1_106, %c0_107, %c0_108] : memref<2x1x32xf32, #tpu.memory_space<vmem>>, vector<1x1x32xf32>
    %346 = vector.shape_cast %345 : vector<1x1x32xf32> to vector<1x32xf32>
    %347 = vector.broadcast %346 : vector<1x32xf32> to vector<4x32xf32>
    %348 = arith.addf %344, %347 : vector<4x32xf32>
    %349 = arith.addf %330, %348 : vector<4x32xf32>
    %c1_109 = arith.constant 1 : index
    %c0_110 = arith.constant 0 : index
    %c0_111 = arith.constant 0 : index
    %350 = vector.load %arg15[%c1_109, %c0_110, %c0_111] : memref<2x1x32xf32, #tpu.memory_space<vmem>>, vector<1x1x32xf32>
    %351 = vector.shape_cast %350 : vector<1x1x32xf32> to vector<1x32xf32>
    %c1_112 = arith.constant 1 : index
    %c0_113 = arith.constant 0 : index
    %c0_114 = arith.constant 0 : index
    %352 = vector.load %arg16[%c1_112, %c0_113, %c0_114] : memref<2x1x32xf32, #tpu.memory_space<vmem>>, vector<1x1x32xf32>
    %353 = vector.shape_cast %352 : vector<1x1x32xf32> to vector<1x32xf32>
    %cst_115 = arith.constant dense<0.000000e+00> : vector<4xf32>
    %354 = vector.multi_reduction <add>, %349, %cst_115 [1] : vector<4x32xf32> to vector<4xf32>
    %355 = vector.shape_cast %354 : vector<4xf32> to vector<4x1xf32>
    %cst_116 = arith.constant 3.200000e+01 : f32
    %356 = vector.broadcast %cst_116 : f32 to vector<4x1xf32>
    %357 = arith.divf %355, %356 : vector<4x1xf32>
    %358 = vector.broadcast %357 : vector<4x1xf32> to vector<4x32xf32>
    %359 = arith.subf %349, %358 : vector<4x32xf32>
    %360 = arith.mulf %359, %359 : vector<4x32xf32>
    %cst_117 = arith.constant dense<0.000000e+00> : vector<4xf32>
    %361 = vector.multi_reduction <add>, %360, %cst_117 [1] : vector<4x32xf32> to vector<4xf32>
    %362 = vector.shape_cast %361 : vector<4xf32> to vector<4x1xf32>
    %cst_118 = arith.constant 3.200000e+01 : f32
    %363 = vector.broadcast %cst_118 : f32 to vector<4x1xf32>
    %364 = arith.divf %362, %363 : vector<4x1xf32>
    %365 = vector.broadcast %357 : vector<4x1xf32> to vector<4x32xf32>
    %366 = arith.subf %349, %365 : vector<4x32xf32>
    %cst_119 = arith.constant 9.99999974E-6 : f32
    %367 = vector.broadcast %cst_119 : f32 to vector<4x1xf32>
    %368 = arith.addf %364, %367 : vector<4x1xf32>
    %369 = math.rsqrt %368 : vector<4x1xf32>
    %370 = vector.broadcast %369 : vector<4x1xf32> to vector<4x32xf32>
    %371 = arith.mulf %366, %370 : vector<4x32xf32>
    %372 = vector.broadcast %351 : vector<1x32xf32> to vector<4x32xf32>
    %373 = arith.mulf %371, %372 : vector<4x32xf32>
    %374 = vector.broadcast %353 : vector<1x32xf32> to vector<4x32xf32>
    %375 = arith.addf %373, %374 : vector<4x32xf32>
    %376 = vector.extract_strided_slice %375 {offsets = [0, 0], sizes = [2, 32], strides = [1, 1]} : vector<4x32xf32> to vector<2x32xf32>
    %cst_120 = arith.constant 0.000000e+00 : f32
    %377 = vector.broadcast %cst_120 : f32 to vector<2x96xf32>
    %378 = tpu.concatenate %376, %377 in 1 : vector<2x32xf32>, vector<2x96xf32> -> vector<2x128xf32>
    %c0_121 = arith.constant 0 : index
    %c0_122 = arith.constant 0 : index
    %379 = vector.load %arg21[%c0_121, %c0_122] : memref<2x128xf32, #tpu.memory_space<vmem>>, vector<2x128xf32>
    tpu.vector_store %arg21[%c0_121, %c0_122], %378 {strides = array<i32>} : memref<2x128xf32, #tpu.memory_space<vmem>>, vector<2x128xf32>,
    return
  }
}

module attributes {stable_mosaic.version = 11 : i64} {
  func.func @_fused_stage_kernel(%arg0: memref<2x576xf32, #tpu.memory_space<vmem>>, %arg1: memref<576x32xbf16, #tpu.memory_space<vmem>>, %arg2: memref<1x32xf32, #tpu.memory_space<vmem>>, %arg3: memref<2x1xf32, #tpu.memory_space<vmem>>, %arg4: memref<2x32xf32, #tpu.memory_space<vmem>>, %arg5: memref<2x32x96xbf16, #tpu.memory_space<vmem>>, %arg6: memref<2x1x96xf32, #tpu.memory_space<vmem>>, %arg7: memref<2x32x32xbf16, #tpu.memory_space<vmem>>, %arg8: memref<2x1x32xf32, #tpu.memory_space<vmem>>, %arg9: memref<2x1x32xf32, #tpu.memory_space<vmem>>, %arg10: memref<2x1x32xf32, #tpu.memory_space<vmem>>, %arg11: memref<2x32x64xbf16, #tpu.memory_space<vmem>>, %arg12: memref<2x1x64xf32, #tpu.memory_space<vmem>>, %arg13: memref<2x64x32xbf16, #tpu.memory_space<vmem>>, %arg14: memref<2x1x32xf32, #tpu.memory_space<vmem>>, %arg15: memref<2x1x32xf32, #tpu.memory_space<vmem>>, %arg16: memref<2x1x32xf32, #tpu.memory_space<vmem>>, %arg17: memref<32x32xbf16, #tpu.memory_space<vmem>>, %arg18: memref<1x32xf32, #tpu.memory_space<vmem>>, %arg19: memref<32x128xbf16, #tpu.memory_space<vmem>>, %arg20: memref<1x128xf32, #tpu.memory_space<vmem>>, %arg21: memref<2x128xf32, #tpu.memory_space<vmem>>) attributes {dimension_semantics = [], scalar_prefetch = 0 : i64, scratch_operands = 0 : i64, tpu.core_type = #tpu.core_type<tc>} {
    %c0 = arith.constant 0 : index
    %c0_0 = arith.constant 0 : index
    %0 = vector.load %arg0[%c0, %c0_0] : memref<2x576xf32, #tpu.memory_space<vmem>>, vector<2x576xf32>
    %1 = arith.truncf %0 : vector<2x576xf32> to vector<2x576xbf16>
    %c0_1 = arith.constant 0 : index
    %c0_2 = arith.constant 0 : index
    %2 = vector.load %arg1[%c0_1, %c0_2] : memref<576x32xbf16, #tpu.memory_space<vmem>>, vector<576x32xbf16>
    %cst = arith.constant dense<0.000000e+00> : vector<2x32xf32>
    %3 = tpu.matmul %1, %2, %cst {dimension_numbers = #tpu.dot_dimension_numbers<[1], [0], [0], [1], [0, 0, 1, 1], [], []>} : vector<2x576xbf16>, vector<576x32xbf16>, vector<2x32xf32> -> vector<2x32xf32>
    %c0_3 = arith.constant 0 : index
    %c0_4 = arith.constant 0 : index
    %4 = vector.load %arg2[%c0_3, %c0_4] : memref<1x32xf32, #tpu.memory_space<vmem>>, vector<1x32xf32>
    %5 = vector.broadcast %4 : vector<1x32xf32> to vector<2x32xf32>
    %6 = arith.addf %3, %5 : vector<2x32xf32>
    %c0_5 = arith.constant 0 : index
    %c0_6 = arith.constant 0 : index
    %7 = vector.load %arg3[%c0_5, %c0_6] : memref<2x1xf32, #tpu.memory_space<vmem>>, vector<2x1xf32>
    %8 = vector.broadcast %7 : vector<2x1xf32> to vector<2x32xf32>
    %9 = arith.mulf %6, %8 : vector<2x32xf32>
    %c0_7 = arith.constant 0 : index
    %c0_8 = arith.constant 0 : index
    %10 = vector.load %arg4[%c0_7, %c0_8] : memref<2x32xf32, #tpu.memory_space<vmem>>, vector<2x32xf32>
    %11 = vector.extract_strided_slice %10 {offsets = [0, 0], sizes = [1, 32], strides = [1, 1]} : vector<2x32xf32> to vector<1x32xf32>
    %12 = vector.shape_cast %11 : vector<1x32xf32> to vector<1x32xf32>
    %13 = vector.broadcast %12 : vector<1x32xf32> to vector<2x32xf32>
    %14 = vector.extract_strided_slice %10 {offsets = [1, 0], sizes = [1, 32], strides = [1, 1]} : vector<2x32xf32> to vector<1x32xf32>
    %15 = vector.broadcast %14 : vector<1x32xf32> to vector<2x32xf32>
    %16 = arith.addf %9, %15 : vector<2x32xf32>
    %17 = tpu.concatenate %13, %16 in 0 : vector<2x32xf32>, vector<2x32xf32> -> vector<4x32xf32>
    %18 = arith.truncf %17 : vector<4x32xf32> to vector<4x32xbf16>
    %c0_9 = arith.constant 0 : index
    %c0_10 = arith.constant 0 : index
    %c0_11 = arith.constant 0 : index
    %19 = vector.load %arg5[%c0_9, %c0_10, %c0_11] : memref<2x32x96xbf16, #tpu.memory_space<vmem>>, vector<1x32x96xbf16>
    %20 = vector.shape_cast %19 : vector<1x32x96xbf16> to vector<32x96xbf16>
    %cst_12 = arith.constant dense<0.000000e+00> : vector<4x96xf32>
    %21 = tpu.matmul %18, %20, %cst_12 {dimension_numbers = #tpu.dot_dimension_numbers<[1], [0], [0], [1], [0, 0, 1, 1], [], []>} : vector<4x32xbf16>, vector<32x96xbf16>, vector<4x96xf32> -> vector<4x96xf32>
    %c0_13 = arith.constant 0 : index
    %c0_14 = arith.constant 0 : index
    %c0_15 = arith.constant 0 : index
    %22 = vector.load %arg6[%c0_13, %c0_14, %c0_15] : memref<2x1x96xf32, #tpu.memory_space<vmem>>, vector<1x1x96xf32>
    %23 = vector.shape_cast %22 : vector<1x1x96xf32> to vector<1x96xf32>
    %24 = vector.broadcast %23 : vector<1x96xf32> to vector<4x96xf32>
    %25 = arith.addf %21, %24 : vector<4x96xf32>
    %26 = vector.extract_strided_slice %25 {offsets = [0, 0], sizes = [4, 32], strides = [1, 1]} : vector<4x96xf32> to vector<4x32xf32>
    %27 = arith.truncf %26 : vector<4x32xf32> to vector<4x32xbf16>
    %28 = vector.extract_strided_slice %25 {offsets = [0, 32], sizes = [4, 32], strides = [1, 1]} : vector<4x96xf32> to vector<4x32xf32>
    %29 = arith.truncf %28 : vector<4x32xf32> to vector<4x32xbf16>
    %30 = vector.extract_strided_slice %25 {offsets = [0, 64], sizes = [4, 32], strides = [1, 1]} : vector<4x96xf32> to vector<4x32xf32>
    %31 = arith.truncf %30 : vector<4x32xf32> to vector<4x32xbf16>
    %32 = vector.extract_strided_slice %27 {offsets = [0, 0], sizes = [2, 8], strides = [1, 1]} : vector<4x32xbf16> to vector<2x8xbf16>
    %33 = vector.extract_strided_slice %27 {offsets = [0, 8], sizes = [2, 8], strides = [1, 1]} : vector<4x32xbf16> to vector<2x8xbf16>
    %34 = vector.extract_strided_slice %27 {offsets = [0, 16], sizes = [2, 8], strides = [1, 1]} : vector<4x32xbf16> to vector<2x8xbf16>
    %35 = vector.extract_strided_slice %27 {offsets = [0, 24], sizes = [2, 8], strides = [1, 1]} : vector<4x32xbf16> to vector<2x8xbf16>
    %36 = vector.extract_strided_slice %27 {offsets = [2, 0], sizes = [2, 8], strides = [1, 1]} : vector<4x32xbf16> to vector<2x8xbf16>
    %37 = vector.extract_strided_slice %27 {offsets = [2, 8], sizes = [2, 8], strides = [1, 1]} : vector<4x32xbf16> to vector<2x8xbf16>
    %38 = vector.extract_strided_slice %27 {offsets = [2, 16], sizes = [2, 8], strides = [1, 1]} : vector<4x32xbf16> to vector<2x8xbf16>
    %39 = vector.extract_strided_slice %27 {offsets = [2, 24], sizes = [2, 8], strides = [1, 1]} : vector<4x32xbf16> to vector<2x8xbf16>
    %40 = vector.shape_cast %32 : vector<2x8xbf16> to vector<1x2x8xbf16>
    %41 = vector.shape_cast %33 : vector<2x8xbf16> to vector<1x2x8xbf16>
    %42 = vector.shape_cast %34 : vector<2x8xbf16> to vector<1x2x8xbf16>
    %43 = vector.shape_cast %35 : vector<2x8xbf16> to vector<1x2x8xbf16>
    %44 = vector.shape_cast %36 : vector<2x8xbf16> to vector<1x2x8xbf16>
    %45 = vector.shape_cast %37 : vector<2x8xbf16> to vector<1x2x8xbf16>
    %46 = vector.shape_cast %38 : vector<2x8xbf16> to vector<1x2x8xbf16>
    %47 = vector.shape_cast %39 : vector<2x8xbf16> to vector<1x2x8xbf16>
    %48 = tpu.concatenate %40, %41, %42, %43, %44, %45, %46, %47 in 0 : vector<1x2x8xbf16>, vector<1x2x8xbf16>, vector<1x2x8xbf16>, vector<1x2x8xbf16>, vector<1x2x8xbf16>, vector<1x2x8xbf16>, vector<1x2x8xbf16>, vector<1x2x8xbf16> -> vector<8x2x8xbf16>
    %49 = vector.extract_strided_slice %29 {offsets = [0, 0], sizes = [2, 8], strides = [1, 1]} : vector<4x32xbf16> to vector<2x8xbf16>
    %50 = vector.extract_strided_slice %29 {offsets = [0, 8], sizes = [2, 8], strides = [1, 1]} : vector<4x32xbf16> to vector<2x8xbf16>
    %51 = vector.extract_strided_slice %29 {offsets = [0, 16], sizes = [2, 8], strides = [1, 1]} : vector<4x32xbf16> to vector<2x8xbf16>
    %52 = vector.extract_strided_slice %29 {offsets = [0, 24], sizes = [2, 8], strides = [1, 1]} : vector<4x32xbf16> to vector<2x8xbf16>
    %53 = vector.extract_strided_slice %29 {offsets = [2, 0], sizes = [2, 8], strides = [1, 1]} : vector<4x32xbf16> to vector<2x8xbf16>
    %54 = vector.extract_strided_slice %29 {offsets = [2, 8], sizes = [2, 8], strides = [1, 1]} : vector<4x32xbf16> to vector<2x8xbf16>
    %55 = vector.extract_strided_slice %29 {offsets = [2, 16], sizes = [2, 8], strides = [1, 1]} : vector<4x32xbf16> to vector<2x8xbf16>
    %56 = vector.extract_strided_slice %29 {offsets = [2, 24], sizes = [2, 8], strides = [1, 1]} : vector<4x32xbf16> to vector<2x8xbf16>
    %57 = vector.shape_cast %49 : vector<2x8xbf16> to vector<1x2x8xbf16>
    %58 = vector.shape_cast %50 : vector<2x8xbf16> to vector<1x2x8xbf16>
    %59 = vector.shape_cast %51 : vector<2x8xbf16> to vector<1x2x8xbf16>
    %60 = vector.shape_cast %52 : vector<2x8xbf16> to vector<1x2x8xbf16>
    %61 = vector.shape_cast %53 : vector<2x8xbf16> to vector<1x2x8xbf16>
    %62 = vector.shape_cast %54 : vector<2x8xbf16> to vector<1x2x8xbf16>
    %63 = vector.shape_cast %55 : vector<2x8xbf16> to vector<1x2x8xbf16>
    %64 = vector.shape_cast %56 : vector<2x8xbf16> to vector<1x2x8xbf16>
    %65 = tpu.concatenate %57, %58, %59, %60, %61, %62, %63, %64 in 0 : vector<1x2x8xbf16>, vector<1x2x8xbf16>, vector<1x2x8xbf16>, vector<1x2x8xbf16>, vector<1x2x8xbf16>, vector<1x2x8xbf16>, vector<1x2x8xbf16>, vector<1x2x8xbf16> -> vector<8x2x8xbf16>
    %66 = vector.extract_strided_slice %31 {offsets = [0, 0], sizes = [2, 8], strides = [1, 1]} : vector<4x32xbf16> to vector<2x8xbf16>
    %67 = vector.extract_strided_slice %31 {offsets = [0, 8], sizes = [2, 8], strides = [1, 1]} : vector<4x32xbf16> to vector<2x8xbf16>
    %68 = vector.extract_strided_slice %31 {offsets = [0, 16], sizes = [2, 8], strides = [1, 1]} : vector<4x32xbf16> to vector<2x8xbf16>
    %69 = vector.extract_strided_slice %31 {offsets = [0, 24], sizes = [2, 8], strides = [1, 1]} : vector<4x32xbf16> to vector<2x8xbf16>
    %70 = vector.extract_strided_slice %31 {offsets = [2, 0], sizes = [2, 8], strides = [1, 1]} : vector<4x32xbf16> to vector<2x8xbf16>
    %71 = vector.extract_strided_slice %31 {offsets = [2, 8], sizes = [2, 8], strides = [1, 1]} : vector<4x32xbf16> to vector<2x8xbf16>
    %72 = vector.extract_strided_slice %31 {offsets = [2, 16], sizes = [2, 8], strides = [1, 1]} : vector<4x32xbf16> to vector<2x8xbf16>
    %73 = vector.extract_strided_slice %31 {offsets = [2, 24], sizes = [2, 8], strides = [1, 1]} : vector<4x32xbf16> to vector<2x8xbf16>
    %74 = vector.shape_cast %66 : vector<2x8xbf16> to vector<1x2x8xbf16>
    %75 = vector.shape_cast %67 : vector<2x8xbf16> to vector<1x2x8xbf16>
    %76 = vector.shape_cast %68 : vector<2x8xbf16> to vector<1x2x8xbf16>
    %77 = vector.shape_cast %69 : vector<2x8xbf16> to vector<1x2x8xbf16>
    %78 = vector.shape_cast %70 : vector<2x8xbf16> to vector<1x2x8xbf16>
    %79 = vector.shape_cast %71 : vector<2x8xbf16> to vector<1x2x8xbf16>
    %80 = vector.shape_cast %72 : vector<2x8xbf16> to vector<1x2x8xbf16>
    %81 = vector.shape_cast %73 : vector<2x8xbf16> to vector<1x2x8xbf16>
    %82 = tpu.concatenate %74, %75, %76, %77, %78, %79, %80, %81 in 0 : vector<1x2x8xbf16>, vector<1x2x8xbf16>, vector<1x2x8xbf16>, vector<1x2x8xbf16>, vector<1x2x8xbf16>, vector<1x2x8xbf16>, vector<1x2x8xbf16>, vector<1x2x8xbf16> -> vector<8x2x8xbf16>
    "tpu.trace_start"() <{level = 10 : i32, message = "gqc,gkc->gqk"}> : () -> ()
    %cst_16 = arith.constant dense<0.000000e+00> : vector<8x2x2xf32>
    %83 = tpu.matmul %48, %65, %cst_16 {dimension_numbers = #tpu.dot_dimension_numbers<[2], [2], [1], [1], [0, 0, 0, 1, 1, 1], [0], [0]>} : vector<8x2x8xbf16>, vector<8x2x8xbf16>, vector<8x2x2xf32> -> vector<8x2x2xf32>
    "tpu.trace_stop"() : () -> ()
    %cst_17 = arith.constant 0.353553385 : f32
    %84 = vector.broadcast %cst_17 : f32 to vector<8x2x2xf32>
    %85 = arith.mulf %83, %84 : vector<8x2x2xf32>
    %cst_18 = arith.constant dense<0xFF800000> : vector<8x2xf32>
    %86 = vector.multi_reduction <maximumf>, %85, %cst_18 [2] : vector<8x2x2xf32> to vector<8x2xf32>
    %87 = vector.shape_cast %86 : vector<8x2xf32> to vector<8x2x1xf32>
    %88 = vector.broadcast %87 : vector<8x2x1xf32> to vector<8x2x2xf32>
    %89 = arith.subf %85, %88 : vector<8x2x2xf32>
    %90 = math.exp %89 : vector<8x2x2xf32>
    %cst_19 = arith.constant dense<0.000000e+00> : vector<8x2xf32>
    %91 = vector.multi_reduction <add>, %90, %cst_19 [2] : vector<8x2x2xf32> to vector<8x2xf32>
    %92 = vector.shape_cast %91 : vector<8x2xf32> to vector<8x2x1xf32>
    %93 = tpu.reciprocal %92 {approx = true} : vector<8x2x1xf32> -> vector<8x2x1xf32>
    %94 = vector.broadcast %93 : vector<8x2x1xf32> to vector<8x2x2xf32>
    %95 = arith.mulf %90, %94 : vector<8x2x2xf32>
    %96 = arith.truncf %95 : vector<8x2x2xf32> to vector<8x2x2xbf16>
    "tpu.trace_start"() <{level = 10 : i32, message = "gqk,gkc->gqc"}> : () -> ()
    %cst_20 = arith.constant dense<0.000000e+00> : vector<8x2x8xf32>
    %97 = tpu.matmul %96, %82, %cst_20 {dimension_numbers = #tpu.dot_dimension_numbers<[2], [1], [1], [2], [0, 0, 0, 1, 1, 2], [0], [0]>} : vector<8x2x2xbf16>, vector<8x2x8xbf16>, vector<8x2x8xf32> -> vector<8x2x8xf32>
    "tpu.trace_stop"() : () -> ()
    %98 = vector.extract_strided_slice %97 {offsets = [0, 0, 0], sizes = [1, 2, 8], strides = [1, 1, 1]} : vector<8x2x8xf32> to vector<1x2x8xf32>
    %99 = vector.shape_cast %98 : vector<1x2x8xf32> to vector<2x8xf32>
    %100 = vector.extract_strided_slice %97 {offsets = [1, 0, 0], sizes = [1, 2, 8], strides = [1, 1, 1]} : vector<8x2x8xf32> to vector<1x2x8xf32>
    %101 = vector.shape_cast %100 : vector<1x2x8xf32> to vector<2x8xf32>
    %102 = vector.extract_strided_slice %97 {offsets = [2, 0, 0], sizes = [1, 2, 8], strides = [1, 1, 1]} : vector<8x2x8xf32> to vector<1x2x8xf32>
    %103 = vector.shape_cast %102 : vector<1x2x8xf32> to vector<2x8xf32>
    %104 = vector.extract_strided_slice %97 {offsets = [3, 0, 0], sizes = [1, 2, 8], strides = [1, 1, 1]} : vector<8x2x8xf32> to vector<1x2x8xf32>
    %105 = vector.shape_cast %104 : vector<1x2x8xf32> to vector<2x8xf32>
    %106 = tpu.concatenate %99, %101, %103, %105 in 1 : vector<2x8xf32>, vector<2x8xf32>, vector<2x8xf32>, vector<2x8xf32> -> vector<2x32xf32>
    %107 = vector.extract_strided_slice %97 {offsets = [4, 0, 0], sizes = [1, 2, 8], strides = [1, 1, 1]} : vector<8x2x8xf32> to vector<1x2x8xf32>
    %108 = vector.shape_cast %107 : vector<1x2x8xf32> to vector<2x8xf32>
    %109 = vector.extract_strided_slice %97 {offsets = [5, 0, 0], sizes = [1, 2, 8], strides = [1, 1, 1]} : vector<8x2x8xf32> to vector<1x2x8xf32>
    %110 = vector.shape_cast %109 : vector<1x2x8xf32> to vector<2x8xf32>
    %111 = vector.extract_strided_slice %97 {offsets = [6, 0, 0], sizes = [1, 2, 8], strides = [1, 1, 1]} : vector<8x2x8xf32> to vector<1x2x8xf32>
    %112 = vector.shape_cast %111 : vector<1x2x8xf32> to vector<2x8xf32>
    %113 = vector.extract_strided_slice %97 {offsets = [7, 0, 0], sizes = [1, 2, 8], strides = [1, 1, 1]} : vector<8x2x8xf32> to vector<1x2x8xf32>
    %114 = vector.shape_cast %113 : vector<1x2x8xf32> to vector<2x8xf32>
    %115 = tpu.concatenate %108, %110, %112, %114 in 1 : vector<2x8xf32>, vector<2x8xf32>, vector<2x8xf32>, vector<2x8xf32> -> vector<2x32xf32>
    %116 = tpu.concatenate %106, %115 in 0 : vector<2x32xf32>, vector<2x32xf32> -> vector<4x32xf32>
    %117 = arith.truncf %116 : vector<4x32xf32> to vector<4x32xbf16>
    %c0_21 = arith.constant 0 : index
    %c0_22 = arith.constant 0 : index
    %c0_23 = arith.constant 0 : index
    %118 = vector.load %arg7[%c0_21, %c0_22, %c0_23] : memref<2x32x32xbf16, #tpu.memory_space<vmem>>, vector<1x32x32xbf16>
    %119 = vector.shape_cast %118 : vector<1x32x32xbf16> to vector<32x32xbf16>
    %cst_24 = arith.constant dense<0.000000e+00> : vector<4x32xf32>
    %120 = tpu.matmul %117, %119, %cst_24 {dimension_numbers = #tpu.dot_dimension_numbers<[1], [0], [0], [1], [0, 0, 1, 1], [], []>} : vector<4x32xbf16>, vector<32x32xbf16>, vector<4x32xf32> -> vector<4x32xf32>
    %c0_25 = arith.constant 0 : index
    %c0_26 = arith.constant 0 : index
    %c0_27 = arith.constant 0 : index
    %121 = vector.load %arg8[%c0_25, %c0_26, %c0_27] : memref<2x1x32xf32, #tpu.memory_space<vmem>>, vector<1x1x32xf32>
    %122 = vector.shape_cast %121 : vector<1x1x32xf32> to vector<1x32xf32>
    %123 = vector.broadcast %122 : vector<1x32xf32> to vector<4x32xf32>
    %124 = arith.addf %120, %123 : vector<4x32xf32>
    %125 = arith.addf %17, %124 : vector<4x32xf32>
    %c0_28 = arith.constant 0 : index
    %c0_29 = arith.constant 0 : index
    %c0_30 = arith.constant 0 : index
    %126 = vector.load %arg9[%c0_28, %c0_29, %c0_30] : memref<2x1x32xf32, #tpu.memory_space<vmem>>, vector<1x1x32xf32>
    %127 = vector.shape_cast %126 : vector<1x1x32xf32> to vector<1x32xf32>
    %c0_31 = arith.constant 0 : index
    %c0_32 = arith.constant 0 : index
    %c0_33 = arith.constant 0 : index
    %128 = vector.load %arg10[%c0_31, %c0_32, %c0_33] : memref<2x1x32xf32, #tpu.memory_space<vmem>>, vector<1x1x32xf32>
    %129 = vector.shape_cast %128 : vector<1x1x32xf32> to vector<1x32xf32>
    %cst_34 = arith.constant dense<0.000000e+00> : vector<4xf32>
    %130 = vector.multi_reduction <add>, %125, %cst_34 [1] : vector<4x32xf32> to vector<4xf32>
    %131 = vector.shape_cast %130 : vector<4xf32> to vector<4x1xf32>
    %cst_35 = arith.constant 3.200000e+01 : f32
    %132 = vector.broadcast %cst_35 : f32 to vector<4x1xf32>
    %133 = arith.divf %131, %132 : vector<4x1xf32>
    %134 = vector.broadcast %133 : vector<4x1xf32> to vector<4x32xf32>
    %135 = arith.subf %125, %134 : vector<4x32xf32>
    %136 = arith.mulf %135, %135 : vector<4x32xf32>
    %cst_36 = arith.constant dense<0.000000e+00> : vector<4xf32>
    %137 = vector.multi_reduction <add>, %136, %cst_36 [1] : vector<4x32xf32> to vector<4xf32>
    %138 = vector.shape_cast %137 : vector<4xf32> to vector<4x1xf32>
    %cst_37 = arith.constant 3.200000e+01 : f32
    %139 = vector.broadcast %cst_37 : f32 to vector<4x1xf32>
    %140 = arith.divf %138, %139 : vector<4x1xf32>
    %141 = vector.broadcast %133 : vector<4x1xf32> to vector<4x32xf32>
    %142 = arith.subf %125, %141 : vector<4x32xf32>
    %cst_38 = arith.constant 9.99999974E-6 : f32
    %143 = vector.broadcast %cst_38 : f32 to vector<4x1xf32>
    %144 = arith.addf %140, %143 : vector<4x1xf32>
    %145 = math.rsqrt %144 : vector<4x1xf32>
    %146 = vector.broadcast %145 : vector<4x1xf32> to vector<4x32xf32>
    %147 = arith.mulf %142, %146 : vector<4x32xf32>
    %148 = vector.broadcast %127 : vector<1x32xf32> to vector<4x32xf32>
    %149 = arith.mulf %147, %148 : vector<4x32xf32>
    %150 = vector.broadcast %129 : vector<1x32xf32> to vector<4x32xf32>
    %151 = arith.addf %149, %150 : vector<4x32xf32>
    %152 = arith.truncf %151 : vector<4x32xf32> to vector<4x32xbf16>
    %c0_39 = arith.constant 0 : index
    %c0_40 = arith.constant 0 : index
    %c0_41 = arith.constant 0 : index
    %153 = vector.load %arg11[%c0_39, %c0_40, %c0_41] : memref<2x32x64xbf16, #tpu.memory_space<vmem>>, vector<1x32x64xbf16>
    %154 = vector.shape_cast %153 : vector<1x32x64xbf16> to vector<32x64xbf16>
    %cst_42 = arith.constant dense<0.000000e+00> : vector<4x64xf32>
    %155 = tpu.matmul %152, %154, %cst_42 {dimension_numbers = #tpu.dot_dimension_numbers<[1], [0], [0], [1], [0, 0, 1, 1], [], []>} : vector<4x32xbf16>, vector<32x64xbf16>, vector<4x64xf32> -> vector<4x64xf32>
    %c0_43 = arith.constant 0 : index
    %c0_44 = arith.constant 0 : index
    %c0_45 = arith.constant 0 : index
    %156 = vector.load %arg12[%c0_43, %c0_44, %c0_45] : memref<2x1x64xf32, #tpu.memory_space<vmem>>, vector<1x1x64xf32>
    %157 = vector.shape_cast %156 : vector<1x1x64xf32> to vector<1x64xf32>
    %158 = vector.broadcast %157 : vector<1x64xf32> to vector<4x64xf32>
    %159 = arith.addf %155, %158 : vector<4x64xf32>
    %cst_46 = arith.constant 0.000000e+00 : f32
    %160 = vector.broadcast %cst_46 : f32 to vector<4x64xf32>
    %161 = arith.maximumf %159, %160 : vector<4x64xf32>
    %162 = arith.truncf %161 : vector<4x64xf32> to vector<4x64xbf16>
    %c0_47 = arith.constant 0 : index
    %c0_48 = arith.constant 0 : index
    %c0_49 = arith.constant 0 : index
    %163 = vector.load %arg13[%c0_47, %c0_48, %c0_49] : memref<2x64x32xbf16, #tpu.memory_space<vmem>>, vector<1x64x32xbf16>
    %164 = vector.shape_cast %163 : vector<1x64x32xbf16> to vector<64x32xbf16>
    %cst_50 = arith.constant dense<0.000000e+00> : vector<4x32xf32>
    %165 = tpu.matmul %162, %164, %cst_50 {dimension_numbers = #tpu.dot_dimension_numbers<[1], [0], [0], [1], [0, 0, 1, 1], [], []>} : vector<4x64xbf16>, vector<64x32xbf16>, vector<4x32xf32> -> vector<4x32xf32>
    %c0_51 = arith.constant 0 : index
    %c0_52 = arith.constant 0 : index
    %c0_53 = arith.constant 0 : index
    %166 = vector.load %arg14[%c0_51, %c0_52, %c0_53] : memref<2x1x32xf32, #tpu.memory_space<vmem>>, vector<1x1x32xf32>
    %167 = vector.shape_cast %166 : vector<1x1x32xf32> to vector<1x32xf32>
    %168 = vector.broadcast %167 : vector<1x32xf32> to vector<4x32xf32>
    %169 = arith.addf %165, %168 : vector<4x32xf32>
    %170 = arith.addf %151, %169 : vector<4x32xf32>
    %c0_54 = arith.constant 0 : index
    %c0_55 = arith.constant 0 : index
    %c0_56 = arith.constant 0 : index
    %171 = vector.load %arg15[%c0_54, %c0_55, %c0_56] : memref<2x1x32xf32, #tpu.memory_space<vmem>>, vector<1x1x32xf32>
    %172 = vector.shape_cast %171 : vector<1x1x32xf32> to vector<1x32xf32>
    %c0_57 = arith.constant 0 : index
    %c0_58 = arith.constant 0 : index
    %c0_59 = arith.constant 0 : index
    %173 = vector.load %arg16[%c0_57, %c0_58, %c0_59] : memref<2x1x32xf32, #tpu.memory_space<vmem>>, vector<1x1x32xf32>
    %174 = vector.shape_cast %173 : vector<1x1x32xf32> to vector<1x32xf32>
    %cst_60 = arith.constant dense<0.000000e+00> : vector<4xf32>
    %175 = vector.multi_reduction <add>, %170, %cst_60 [1] : vector<4x32xf32> to vector<4xf32>
    %176 = vector.shape_cast %175 : vector<4xf32> to vector<4x1xf32>
    %cst_61 = arith.constant 3.200000e+01 : f32
    %177 = vector.broadcast %cst_61 : f32 to vector<4x1xf32>
    %178 = arith.divf %176, %177 : vector<4x1xf32>
    %179 = vector.broadcast %178 : vector<4x1xf32> to vector<4x32xf32>
    %180 = arith.subf %170, %179 : vector<4x32xf32>
    %181 = arith.mulf %180, %180 : vector<4x32xf32>
    %cst_62 = arith.constant dense<0.000000e+00> : vector<4xf32>
    %182 = vector.multi_reduction <add>, %181, %cst_62 [1] : vector<4x32xf32> to vector<4xf32>
    %183 = vector.shape_cast %182 : vector<4xf32> to vector<4x1xf32>
    %cst_63 = arith.constant 3.200000e+01 : f32
    %184 = vector.broadcast %cst_63 : f32 to vector<4x1xf32>
    %185 = arith.divf %183, %184 : vector<4x1xf32>
    %186 = vector.broadcast %178 : vector<4x1xf32> to vector<4x32xf32>
    %187 = arith.subf %170, %186 : vector<4x32xf32>
    %cst_64 = arith.constant 9.99999974E-6 : f32
    %188 = vector.broadcast %cst_64 : f32 to vector<4x1xf32>
    %189 = arith.addf %185, %188 : vector<4x1xf32>
    %190 = math.rsqrt %189 : vector<4x1xf32>
    %191 = vector.broadcast %190 : vector<4x1xf32> to vector<4x32xf32>
    %192 = arith.mulf %187, %191 : vector<4x32xf32>
    %193 = vector.broadcast %172 : vector<1x32xf32> to vector<4x32xf32>
    %194 = arith.mulf %192, %193 : vector<4x32xf32>
    %195 = vector.broadcast %174 : vector<1x32xf32> to vector<4x32xf32>
    %196 = arith.addf %194, %195 : vector<4x32xf32>
    %197 = arith.truncf %196 : vector<4x32xf32> to vector<4x32xbf16>
    %c1 = arith.constant 1 : index
    %c0_65 = arith.constant 0 : index
    %c0_66 = arith.constant 0 : index
    %198 = vector.load %arg5[%c1, %c0_65, %c0_66] : memref<2x32x96xbf16, #tpu.memory_space<vmem>>, vector<1x32x96xbf16>
    %199 = vector.shape_cast %198 : vector<1x32x96xbf16> to vector<32x96xbf16>
    %cst_67 = arith.constant dense<0.000000e+00> : vector<4x96xf32>
    %200 = tpu.matmul %197, %199, %cst_67 {dimension_numbers = #tpu.dot_dimension_numbers<[1], [0], [0], [1], [0, 0, 1, 1], [], []>} : vector<4x32xbf16>, vector<32x96xbf16>, vector<4x96xf32> -> vector<4x96xf32>
    %c1_68 = arith.constant 1 : index
    %c0_69 = arith.constant 0 : index
    %c0_70 = arith.constant 0 : index
    %201 = vector.load %arg6[%c1_68, %c0_69, %c0_70] : memref<2x1x96xf32, #tpu.memory_space<vmem>>, vector<1x1x96xf32>
    %202 = vector.shape_cast %201 : vector<1x1x96xf32> to vector<1x96xf32>
    %203 = vector.broadcast %202 : vector<1x96xf32> to vector<4x96xf32>
    %204 = arith.addf %200, %203 : vector<4x96xf32>
    %205 = vector.extract_strided_slice %204 {offsets = [0, 0], sizes = [4, 32], strides = [1, 1]} : vector<4x96xf32> to vector<4x32xf32>
    %206 = arith.truncf %205 : vector<4x32xf32> to vector<4x32xbf16>
    %207 = vector.extract_strided_slice %204 {offsets = [0, 32], sizes = [4, 32], strides = [1, 1]} : vector<4x96xf32> to vector<4x32xf32>
    %208 = arith.truncf %207 : vector<4x32xf32> to vector<4x32xbf16>
    %209 = vector.extract_strided_slice %204 {offsets = [0, 64], sizes = [4, 32], strides = [1, 1]} : vector<4x96xf32> to vector<4x32xf32>
    %210 = arith.truncf %209 : vector<4x32xf32> to vector<4x32xbf16>
    %211 = vector.extract_strided_slice %206 {offsets = [0, 0], sizes = [2, 8], strides = [1, 1]} : vector<4x32xbf16> to vector<2x8xbf16>
    %212 = vector.extract_strided_slice %206 {offsets = [0, 8], sizes = [2, 8], strides = [1, 1]} : vector<4x32xbf16> to vector<2x8xbf16>
    %213 = vector.extract_strided_slice %206 {offsets = [0, 16], sizes = [2, 8], strides = [1, 1]} : vector<4x32xbf16> to vector<2x8xbf16>
    %214 = vector.extract_strided_slice %206 {offsets = [0, 24], sizes = [2, 8], strides = [1, 1]} : vector<4x32xbf16> to vector<2x8xbf16>
    %215 = vector.extract_strided_slice %206 {offsets = [2, 0], sizes = [2, 8], strides = [1, 1]} : vector<4x32xbf16> to vector<2x8xbf16>
    %216 = vector.extract_strided_slice %206 {offsets = [2, 8], sizes = [2, 8], strides = [1, 1]} : vector<4x32xbf16> to vector<2x8xbf16>
    %217 = vector.extract_strided_slice %206 {offsets = [2, 16], sizes = [2, 8], strides = [1, 1]} : vector<4x32xbf16> to vector<2x8xbf16>
    %218 = vector.extract_strided_slice %206 {offsets = [2, 24], sizes = [2, 8], strides = [1, 1]} : vector<4x32xbf16> to vector<2x8xbf16>
    %219 = vector.shape_cast %211 : vector<2x8xbf16> to vector<1x2x8xbf16>
    %220 = vector.shape_cast %212 : vector<2x8xbf16> to vector<1x2x8xbf16>
    %221 = vector.shape_cast %213 : vector<2x8xbf16> to vector<1x2x8xbf16>
    %222 = vector.shape_cast %214 : vector<2x8xbf16> to vector<1x2x8xbf16>
    %223 = vector.shape_cast %215 : vector<2x8xbf16> to vector<1x2x8xbf16>
    %224 = vector.shape_cast %216 : vector<2x8xbf16> to vector<1x2x8xbf16>
    %225 = vector.shape_cast %217 : vector<2x8xbf16> to vector<1x2x8xbf16>
    %226 = vector.shape_cast %218 : vector<2x8xbf16> to vector<1x2x8xbf16>
    %227 = tpu.concatenate %219, %220, %221, %222, %223, %224, %225, %226 in 0 : vector<1x2x8xbf16>, vector<1x2x8xbf16>, vector<1x2x8xbf16>, vector<1x2x8xbf16>, vector<1x2x8xbf16>, vector<1x2x8xbf16>, vector<1x2x8xbf16>, vector<1x2x8xbf16> -> vector<8x2x8xbf16>
    %228 = vector.extract_strided_slice %208 {offsets = [0, 0], sizes = [2, 8], strides = [1, 1]} : vector<4x32xbf16> to vector<2x8xbf16>
    %229 = vector.extract_strided_slice %208 {offsets = [0, 8], sizes = [2, 8], strides = [1, 1]} : vector<4x32xbf16> to vector<2x8xbf16>
    %230 = vector.extract_strided_slice %208 {offsets = [0, 16], sizes = [2, 8], strides = [1, 1]} : vector<4x32xbf16> to vector<2x8xbf16>
    %231 = vector.extract_strided_slice %208 {offsets = [0, 24], sizes = [2, 8], strides = [1, 1]} : vector<4x32xbf16> to vector<2x8xbf16>
    %232 = vector.extract_strided_slice %208 {offsets = [2, 0], sizes = [2, 8], strides = [1, 1]} : vector<4x32xbf16> to vector<2x8xbf16>
    %233 = vector.extract_strided_slice %208 {offsets = [2, 8], sizes = [2, 8], strides = [1, 1]} : vector<4x32xbf16> to vector<2x8xbf16>
    %234 = vector.extract_strided_slice %208 {offsets = [2, 16], sizes = [2, 8], strides = [1, 1]} : vector<4x32xbf16> to vector<2x8xbf16>
    %235 = vector.extract_strided_slice %208 {offsets = [2, 24], sizes = [2, 8], strides = [1, 1]} : vector<4x32xbf16> to vector<2x8xbf16>
    %236 = vector.shape_cast %228 : vector<2x8xbf16> to vector<1x2x8xbf16>
    %237 = vector.shape_cast %229 : vector<2x8xbf16> to vector<1x2x8xbf16>
    %238 = vector.shape_cast %230 : vector<2x8xbf16> to vector<1x2x8xbf16>
    %239 = vector.shape_cast %231 : vector<2x8xbf16> to vector<1x2x8xbf16>
    %240 = vector.shape_cast %232 : vector<2x8xbf16> to vector<1x2x8xbf16>
    %241 = vector.shape_cast %233 : vector<2x8xbf16> to vector<1x2x8xbf16>
    %242 = vector.shape_cast %234 : vector<2x8xbf16> to vector<1x2x8xbf16>
    %243 = vector.shape_cast %235 : vector<2x8xbf16> to vector<1x2x8xbf16>
    %244 = tpu.concatenate %236, %237, %238, %239, %240, %241, %242, %243 in 0 : vector<1x2x8xbf16>, vector<1x2x8xbf16>, vector<1x2x8xbf16>, vector<1x2x8xbf16>, vector<1x2x8xbf16>, vector<1x2x8xbf16>, vector<1x2x8xbf16>, vector<1x2x8xbf16> -> vector<8x2x8xbf16>
    %245 = vector.extract_strided_slice %210 {offsets = [0, 0], sizes = [2, 8], strides = [1, 1]} : vector<4x32xbf16> to vector<2x8xbf16>
    %246 = vector.extract_strided_slice %210 {offsets = [0, 8], sizes = [2, 8], strides = [1, 1]} : vector<4x32xbf16> to vector<2x8xbf16>
    %247 = vector.extract_strided_slice %210 {offsets = [0, 16], sizes = [2, 8], strides = [1, 1]} : vector<4x32xbf16> to vector<2x8xbf16>
    %248 = vector.extract_strided_slice %210 {offsets = [0, 24], sizes = [2, 8], strides = [1, 1]} : vector<4x32xbf16> to vector<2x8xbf16>
    %249 = vector.extract_strided_slice %210 {offsets = [2, 0], sizes = [2, 8], strides = [1, 1]} : vector<4x32xbf16> to vector<2x8xbf16>
    %250 = vector.extract_strided_slice %210 {offsets = [2, 8], sizes = [2, 8], strides = [1, 1]} : vector<4x32xbf16> to vector<2x8xbf16>
    %251 = vector.extract_strided_slice %210 {offsets = [2, 16], sizes = [2, 8], strides = [1, 1]} : vector<4x32xbf16> to vector<2x8xbf16>
    %252 = vector.extract_strided_slice %210 {offsets = [2, 24], sizes = [2, 8], strides = [1, 1]} : vector<4x32xbf16> to vector<2x8xbf16>
    %253 = vector.shape_cast %245 : vector<2x8xbf16> to vector<1x2x8xbf16>
    %254 = vector.shape_cast %246 : vector<2x8xbf16> to vector<1x2x8xbf16>
    %255 = vector.shape_cast %247 : vector<2x8xbf16> to vector<1x2x8xbf16>
    %256 = vector.shape_cast %248 : vector<2x8xbf16> to vector<1x2x8xbf16>
    %257 = vector.shape_cast %249 : vector<2x8xbf16> to vector<1x2x8xbf16>
    %258 = vector.shape_cast %250 : vector<2x8xbf16> to vector<1x2x8xbf16>
    %259 = vector.shape_cast %251 : vector<2x8xbf16> to vector<1x2x8xbf16>
    %260 = vector.shape_cast %252 : vector<2x8xbf16> to vector<1x2x8xbf16>
    %261 = tpu.concatenate %253, %254, %255, %256, %257, %258, %259, %260 in 0 : vector<1x2x8xbf16>, vector<1x2x8xbf16>, vector<1x2x8xbf16>, vector<1x2x8xbf16>, vector<1x2x8xbf16>, vector<1x2x8xbf16>, vector<1x2x8xbf16>, vector<1x2x8xbf16> -> vector<8x2x8xbf16>
    "tpu.trace_start"() <{level = 10 : i32, message = "gqc,gkc->gqk"}> : () -> ()
    %cst_71 = arith.constant dense<0.000000e+00> : vector<8x2x2xf32>
    %262 = tpu.matmul %227, %244, %cst_71 {dimension_numbers = #tpu.dot_dimension_numbers<[2], [2], [1], [1], [0, 0, 0, 1, 1, 1], [0], [0]>} : vector<8x2x8xbf16>, vector<8x2x8xbf16>, vector<8x2x2xf32> -> vector<8x2x2xf32>
    "tpu.trace_stop"() : () -> ()
    %cst_72 = arith.constant 0.353553385 : f32
    %263 = vector.broadcast %cst_72 : f32 to vector<8x2x2xf32>
    %264 = arith.mulf %262, %263 : vector<8x2x2xf32>
    %cst_73 = arith.constant dense<0xFF800000> : vector<8x2xf32>
    %265 = vector.multi_reduction <maximumf>, %264, %cst_73 [2] : vector<8x2x2xf32> to vector<8x2xf32>
    %266 = vector.shape_cast %265 : vector<8x2xf32> to vector<8x2x1xf32>
    %267 = vector.broadcast %266 : vector<8x2x1xf32> to vector<8x2x2xf32>
    %268 = arith.subf %264, %267 : vector<8x2x2xf32>
    %269 = math.exp %268 : vector<8x2x2xf32>
    %cst_74 = arith.constant dense<0.000000e+00> : vector<8x2xf32>
    %270 = vector.multi_reduction <add>, %269, %cst_74 [2] : vector<8x2x2xf32> to vector<8x2xf32>
    %271 = vector.shape_cast %270 : vector<8x2xf32> to vector<8x2x1xf32>
    %272 = tpu.reciprocal %271 {approx = true} : vector<8x2x1xf32> -> vector<8x2x1xf32>
    %273 = vector.broadcast %272 : vector<8x2x1xf32> to vector<8x2x2xf32>
    %274 = arith.mulf %269, %273 : vector<8x2x2xf32>
    %275 = arith.truncf %274 : vector<8x2x2xf32> to vector<8x2x2xbf16>
    "tpu.trace_start"() <{level = 10 : i32, message = "gqk,gkc->gqc"}> : () -> ()
    %cst_75 = arith.constant dense<0.000000e+00> : vector<8x2x8xf32>
    %276 = tpu.matmul %275, %261, %cst_75 {dimension_numbers = #tpu.dot_dimension_numbers<[2], [1], [1], [2], [0, 0, 0, 1, 1, 2], [0], [0]>} : vector<8x2x2xbf16>, vector<8x2x8xbf16>, vector<8x2x8xf32> -> vector<8x2x8xf32>
    "tpu.trace_stop"() : () -> ()
    %277 = vector.extract_strided_slice %276 {offsets = [0, 0, 0], sizes = [1, 2, 8], strides = [1, 1, 1]} : vector<8x2x8xf32> to vector<1x2x8xf32>
    %278 = vector.shape_cast %277 : vector<1x2x8xf32> to vector<2x8xf32>
    %279 = vector.extract_strided_slice %276 {offsets = [1, 0, 0], sizes = [1, 2, 8], strides = [1, 1, 1]} : vector<8x2x8xf32> to vector<1x2x8xf32>
    %280 = vector.shape_cast %279 : vector<1x2x8xf32> to vector<2x8xf32>
    %281 = vector.extract_strided_slice %276 {offsets = [2, 0, 0], sizes = [1, 2, 8], strides = [1, 1, 1]} : vector<8x2x8xf32> to vector<1x2x8xf32>
    %282 = vector.shape_cast %281 : vector<1x2x8xf32> to vector<2x8xf32>
    %283 = vector.extract_strided_slice %276 {offsets = [3, 0, 0], sizes = [1, 2, 8], strides = [1, 1, 1]} : vector<8x2x8xf32> to vector<1x2x8xf32>
    %284 = vector.shape_cast %283 : vector<1x2x8xf32> to vector<2x8xf32>
    %285 = tpu.concatenate %278, %280, %282, %284 in 1 : vector<2x8xf32>, vector<2x8xf32>, vector<2x8xf32>, vector<2x8xf32> -> vector<2x32xf32>
    %286 = vector.extract_strided_slice %276 {offsets = [4, 0, 0], sizes = [1, 2, 8], strides = [1, 1, 1]} : vector<8x2x8xf32> to vector<1x2x8xf32>
    %287 = vector.shape_cast %286 : vector<1x2x8xf32> to vector<2x8xf32>
    %288 = vector.extract_strided_slice %276 {offsets = [5, 0, 0], sizes = [1, 2, 8], strides = [1, 1, 1]} : vector<8x2x8xf32> to vector<1x2x8xf32>
    %289 = vector.shape_cast %288 : vector<1x2x8xf32> to vector<2x8xf32>
    %290 = vector.extract_strided_slice %276 {offsets = [6, 0, 0], sizes = [1, 2, 8], strides = [1, 1, 1]} : vector<8x2x8xf32> to vector<1x2x8xf32>
    %291 = vector.shape_cast %290 : vector<1x2x8xf32> to vector<2x8xf32>
    %292 = vector.extract_strided_slice %276 {offsets = [7, 0, 0], sizes = [1, 2, 8], strides = [1, 1, 1]} : vector<8x2x8xf32> to vector<1x2x8xf32>
    %293 = vector.shape_cast %292 : vector<1x2x8xf32> to vector<2x8xf32>
    %294 = tpu.concatenate %287, %289, %291, %293 in 1 : vector<2x8xf32>, vector<2x8xf32>, vector<2x8xf32>, vector<2x8xf32> -> vector<2x32xf32>
    %295 = tpu.concatenate %285, %294 in 0 : vector<2x32xf32>, vector<2x32xf32> -> vector<4x32xf32>
    %296 = arith.truncf %295 : vector<4x32xf32> to vector<4x32xbf16>
    %c1_76 = arith.constant 1 : index
    %c0_77 = arith.constant 0 : index
    %c0_78 = arith.constant 0 : index
    %297 = vector.load %arg7[%c1_76, %c0_77, %c0_78] : memref<2x32x32xbf16, #tpu.memory_space<vmem>>, vector<1x32x32xbf16>
    %298 = vector.shape_cast %297 : vector<1x32x32xbf16> to vector<32x32xbf16>
    %cst_79 = arith.constant dense<0.000000e+00> : vector<4x32xf32>
    %299 = tpu.matmul %296, %298, %cst_79 {dimension_numbers = #tpu.dot_dimension_numbers<[1], [0], [0], [1], [0, 0, 1, 1], [], []>} : vector<4x32xbf16>, vector<32x32xbf16>, vector<4x32xf32> -> vector<4x32xf32>
    %c1_80 = arith.constant 1 : index
    %c0_81 = arith.constant 0 : index
    %c0_82 = arith.constant 0 : index
    %300 = vector.load %arg8[%c1_80, %c0_81, %c0_82] : memref<2x1x32xf32, #tpu.memory_space<vmem>>, vector<1x1x32xf32>
    %301 = vector.shape_cast %300 : vector<1x1x32xf32> to vector<1x32xf32>
    %302 = vector.broadcast %301 : vector<1x32xf32> to vector<4x32xf32>
    %303 = arith.addf %299, %302 : vector<4x32xf32>
    %304 = arith.addf %196, %303 : vector<4x32xf32>
    %c1_83 = arith.constant 1 : index
    %c0_84 = arith.constant 0 : index
    %c0_85 = arith.constant 0 : index
    %305 = vector.load %arg9[%c1_83, %c0_84, %c0_85] : memref<2x1x32xf32, #tpu.memory_space<vmem>>, vector<1x1x32xf32>
    %306 = vector.shape_cast %305 : vector<1x1x32xf32> to vector<1x32xf32>
    %c1_86 = arith.constant 1 : index
    %c0_87 = arith.constant 0 : index
    %c0_88 = arith.constant 0 : index
    %307 = vector.load %arg10[%c1_86, %c0_87, %c0_88] : memref<2x1x32xf32, #tpu.memory_space<vmem>>, vector<1x1x32xf32>
    %308 = vector.shape_cast %307 : vector<1x1x32xf32> to vector<1x32xf32>
    %cst_89 = arith.constant dense<0.000000e+00> : vector<4xf32>
    %309 = vector.multi_reduction <add>, %304, %cst_89 [1] : vector<4x32xf32> to vector<4xf32>
    %310 = vector.shape_cast %309 : vector<4xf32> to vector<4x1xf32>
    %cst_90 = arith.constant 3.200000e+01 : f32
    %311 = vector.broadcast %cst_90 : f32 to vector<4x1xf32>
    %312 = arith.divf %310, %311 : vector<4x1xf32>
    %313 = vector.broadcast %312 : vector<4x1xf32> to vector<4x32xf32>
    %314 = arith.subf %304, %313 : vector<4x32xf32>
    %315 = arith.mulf %314, %314 : vector<4x32xf32>
    %cst_91 = arith.constant dense<0.000000e+00> : vector<4xf32>
    %316 = vector.multi_reduction <add>, %315, %cst_91 [1] : vector<4x32xf32> to vector<4xf32>
    %317 = vector.shape_cast %316 : vector<4xf32> to vector<4x1xf32>
    %cst_92 = arith.constant 3.200000e+01 : f32
    %318 = vector.broadcast %cst_92 : f32 to vector<4x1xf32>
    %319 = arith.divf %317, %318 : vector<4x1xf32>
    %320 = vector.broadcast %312 : vector<4x1xf32> to vector<4x32xf32>
    %321 = arith.subf %304, %320 : vector<4x32xf32>
    %cst_93 = arith.constant 9.99999974E-6 : f32
    %322 = vector.broadcast %cst_93 : f32 to vector<4x1xf32>
    %323 = arith.addf %319, %322 : vector<4x1xf32>
    %324 = math.rsqrt %323 : vector<4x1xf32>
    %325 = vector.broadcast %324 : vector<4x1xf32> to vector<4x32xf32>
    %326 = arith.mulf %321, %325 : vector<4x32xf32>
    %327 = vector.broadcast %306 : vector<1x32xf32> to vector<4x32xf32>
    %328 = arith.mulf %326, %327 : vector<4x32xf32>
    %329 = vector.broadcast %308 : vector<1x32xf32> to vector<4x32xf32>
    %330 = arith.addf %328, %329 : vector<4x32xf32>
    %331 = arith.truncf %330 : vector<4x32xf32> to vector<4x32xbf16>
    %c1_94 = arith.constant 1 : index
    %c0_95 = arith.constant 0 : index
    %c0_96 = arith.constant 0 : index
    %332 = vector.load %arg11[%c1_94, %c0_95, %c0_96] : memref<2x32x64xbf16, #tpu.memory_space<vmem>>, vector<1x32x64xbf16>
    %333 = vector.shape_cast %332 : vector<1x32x64xbf16> to vector<32x64xbf16>
    %cst_97 = arith.constant dense<0.000000e+00> : vector<4x64xf32>
    %334 = tpu.matmul %331, %333, %cst_97 {dimension_numbers = #tpu.dot_dimension_numbers<[1], [0], [0], [1], [0, 0, 1, 1], [], []>} : vector<4x32xbf16>, vector<32x64xbf16>, vector<4x64xf32> -> vector<4x64xf32>
    %c1_98 = arith.constant 1 : index
    %c0_99 = arith.constant 0 : index
    %c0_100 = arith.constant 0 : index
    %335 = vector.load %arg12[%c1_98, %c0_99, %c0_100] : memref<2x1x64xf32, #tpu.memory_space<vmem>>, vector<1x1x64xf32>
    %336 = vector.shape_cast %335 : vector<1x1x64xf32> to vector<1x64xf32>
    %337 = vector.broadcast %336 : vector<1x64xf32> to vector<4x64xf32>
    %338 = arith.addf %334, %337 : vector<4x64xf32>
    %cst_101 = arith.constant 0.000000e+00 : f32
    %339 = vector.broadcast %cst_101 : f32 to vector<4x64xf32>
    %340 = arith.maximumf %338, %339 : vector<4x64xf32>
    %341 = arith.truncf %340 : vector<4x64xf32> to vector<4x64xbf16>
    %c1_102 = arith.constant 1 : index
    %c0_103 = arith.constant 0 : index
    %c0_104 = arith.constant 0 : index
    %342 = vector.load %arg13[%c1_102, %c0_103, %c0_104] : memref<2x64x32xbf16, #tpu.memory_space<vmem>>, vector<1x64x32xbf16>
    %343 = vector.shape_cast %342 : vector<1x64x32xbf16> to vector<64x32xbf16>
    %cst_105 = arith.constant dense<0.000000e+00> : vector<4x32xf32>
    %344 = tpu.matmul %341, %343, %cst_105 {dimension_numbers = #tpu.dot_dimension_numbers<[1], [0], [0], [1], [0, 0, 1, 1], [], []>} : vector<4x64xbf16>, vector<64x32xbf16>, vector<4x32xf32> -> vector<4x32xf32>
    %c1_106 = arith.constant 1 : index
    %c0_107 = arith.constant 0 : index
    %c0_108 = arith.constant 0 : index
    %345 = vector.load %arg14[%c1_106, %c0_107, %c0_108] : memref<2x1x32xf32, #tpu.memory_space<vmem>>, vector<1x1x32xf32>
    %346 = vector.shape_cast %345 : vector<1x1x32xf32> to vector<1x32xf32>
    %347 = vector.broadcast %346 : vector<1x32xf32> to vector<4x32xf32>
    %348 = arith.addf %344, %347 : vector<4x32xf32>
    %349 = arith.addf %330, %348 : vector<4x32xf32>
    %c1_109 = arith.constant 1 : index
    %c0_110 = arith.constant 0 : index
    %c0_111 = arith.constant 0 : index
    %350 = vector.load %arg15[%c1_109, %c0_110, %c0_111] : memref<2x1x32xf32, #tpu.memory_space<vmem>>, vector<1x1x32xf32>
    %351 = vector.shape_cast %350 : vector<1x1x32xf32> to vector<1x32xf32>
    %c1_112 = arith.constant 1 : index
    %c0_113 = arith.constant 0 : index
    %c0_114 = arith.constant 0 : index
    %352 = vector.load %arg16[%c1_112, %c0_113, %c0_114] : memref<2x1x32xf32, #tpu.memory_space<vmem>>, vector<1x1x32xf32>
    %353 = vector.shape_cast %352 : vector<1x1x32xf32> to vector<1x32xf32>
    %cst_115 = arith.constant dense<0.000000e+00> : vector<4xf32>
    %354 = vector.multi_reduction <add>, %349, %cst_115 [1] : vector<4x32xf32> to vector<4xf32>
    %355 = vector.shape_cast %354 : vector<4xf32> to vector<4x1xf32>
    %cst_116 = arith.constant 3.200000e+01 : f32
    %356 = vector.broadcast %cst_116 : f32 to vector<4x1xf32>
    %357 = arith.divf %355, %356 : vector<4x1xf32>
    %358 = vector.broadcast %357 : vector<4x1xf32> to vector<4x32xf32>
    %359 = arith.subf %349, %358 : vector<4x32xf32>
    %360 = arith.mulf %359, %359 : vector<4x32xf32>
    %cst_117 = arith.constant dense<0.000000e+00> : vector<4xf32>
    %361 = vector.multi_reduction <add>, %360, %cst_117 [1] : vector<4x32xf32> to vector<4xf32>
    %362 = vector.shape_cast %361 : vector<4xf32> to vector<4x1xf32>
    %cst_118 = arith.constant 3.200000e+01 : f32
    %363 = vector.broadcast %cst_118 : f32 to vector<4x1xf32>
    %364 = arith.divf %362, %363 : vector<4x1xf32>
    %365 = vector.broadcast %357 : vector<4x1xf32> to vector<4x32xf32>
    %366 = arith.subf %349, %365 : vector<4x32xf32>
    %cst_119 = arith.constant 9.99999974E-6 : f32
    %367 = vector.broadcast %cst_119 : f32 to vector<4x1xf32>
    %368 = arith.addf %364, %367 : vector<4x1xf32>
    %369 = math.rsqrt %368 : vector<4x1xf32>
    %370 = vector.broadcast %369 : vector<4x1xf32> to vector<4x32xf32>
    %371 = arith.mulf %366, %370 : vector<4x32xf32>
    %372 = vector.broadcast %351 : vector<1x32xf32> to vector<4x32xf32>
    %373 = arith.mulf %371, %372 : vector<4x32xf32>
    %374 = vector.broadcast %353 : vector<1x32xf32> to vector<4x32xf32>
    %375 = arith.addf %373, %374 : vector<4x32xf32>
    %376 = vector.extract_strided_slice %375 {offsets = [0, 0], sizes = [2, 32], strides = [1, 1]} : vector<4x32xf32> to vector<2x32xf32>
    %cst_120 = arith.constant 0.000000e+00 : f32
    %377 = vector.broadcast %cst_120 : f32 to vector<2x96xf32>
    %378 = tpu.concatenate %376, %377 in 1 : vector<2x32xf32>, vector<2x96xf32> -> vector<2x128xf32>
    %c0_121 = arith.constant 0 : index
    %c0_122 = arith.constant 0 : index
    %379 = vector.load %arg21[%c0_121, %c0_122] : memref<2x128xf32, #tpu.memory_space<vmem>>, vector<2x128xf32>
    tpu.vector_store %arg21[%c0_121, %c0_122], %378 {strides = array<i32>} : memref<2x128xf32, #tpu.memory_space<vmem>>, vector<2x128xf32>,
    return
  }
}

module attributes {stable_mosaic.version = 11 : i64} {
  func.func @_fused_stage_kernel(%arg0: memref<2x576xf32, #tpu.memory_space<vmem>>, %arg1: memref<576x32xbf16, #tpu.memory_space<vmem>>, %arg2: memref<1x32xf32, #tpu.memory_space<vmem>>, %arg3: memref<2x1xf32, #tpu.memory_space<vmem>>, %arg4: memref<2x32xf32, #tpu.memory_space<vmem>>, %arg5: memref<2x32x96xbf16, #tpu.memory_space<vmem>>, %arg6: memref<2x1x96xf32, #tpu.memory_space<vmem>>, %arg7: memref<2x32x32xbf16, #tpu.memory_space<vmem>>, %arg8: memref<2x1x32xf32, #tpu.memory_space<vmem>>, %arg9: memref<2x1x32xf32, #tpu.memory_space<vmem>>, %arg10: memref<2x1x32xf32, #tpu.memory_space<vmem>>, %arg11: memref<2x32x64xbf16, #tpu.memory_space<vmem>>, %arg12: memref<2x1x64xf32, #tpu.memory_space<vmem>>, %arg13: memref<2x64x32xbf16, #tpu.memory_space<vmem>>, %arg14: memref<2x1x32xf32, #tpu.memory_space<vmem>>, %arg15: memref<2x1x32xf32, #tpu.memory_space<vmem>>, %arg16: memref<2x1x32xf32, #tpu.memory_space<vmem>>, %arg17: memref<32x32xbf16, #tpu.memory_space<vmem>>, %arg18: memref<1x32xf32, #tpu.memory_space<vmem>>, %arg19: memref<32x128xbf16, #tpu.memory_space<vmem>>, %arg20: memref<1x128xf32, #tpu.memory_space<vmem>>, %arg21: memref<2x128xf32, #tpu.memory_space<vmem>>) attributes {dimension_semantics = [], scalar_prefetch = 0 : i64, scratch_operands = 0 : i64, tpu.core_type = #tpu.core_type<tc>} {
    %c0 = arith.constant 0 : index
    %c0_0 = arith.constant 0 : index
    %0 = vector.load %arg0[%c0, %c0_0] : memref<2x576xf32, #tpu.memory_space<vmem>>, vector<2x576xf32>
    %1 = arith.truncf %0 : vector<2x576xf32> to vector<2x576xbf16>
    %c0_1 = arith.constant 0 : index
    %c0_2 = arith.constant 0 : index
    %2 = vector.load %arg1[%c0_1, %c0_2] : memref<576x32xbf16, #tpu.memory_space<vmem>>, vector<576x32xbf16>
    %cst = arith.constant dense<0.000000e+00> : vector<2x32xf32>
    %3 = tpu.matmul %1, %2, %cst {dimension_numbers = #tpu.dot_dimension_numbers<[1], [0], [0], [1], [0, 0, 1, 1], [], []>} : vector<2x576xbf16>, vector<576x32xbf16>, vector<2x32xf32> -> vector<2x32xf32>
    %c0_3 = arith.constant 0 : index
    %c0_4 = arith.constant 0 : index
    %4 = vector.load %arg2[%c0_3, %c0_4] : memref<1x32xf32, #tpu.memory_space<vmem>>, vector<1x32xf32>
    %5 = vector.broadcast %4 : vector<1x32xf32> to vector<2x32xf32>
    %6 = arith.addf %3, %5 : vector<2x32xf32>
    %c0_5 = arith.constant 0 : index
    %c0_6 = arith.constant 0 : index
    %7 = vector.load %arg3[%c0_5, %c0_6] : memref<2x1xf32, #tpu.memory_space<vmem>>, vector<2x1xf32>
    %8 = vector.broadcast %7 : vector<2x1xf32> to vector<2x32xf32>
    %9 = arith.mulf %6, %8 : vector<2x32xf32>
    %c0_7 = arith.constant 0 : index
    %c0_8 = arith.constant 0 : index
    %10 = vector.load %arg4[%c0_7, %c0_8] : memref<2x32xf32, #tpu.memory_space<vmem>>, vector<2x32xf32>
    %11 = vector.extract_strided_slice %10 {offsets = [0, 0], sizes = [1, 32], strides = [1, 1]} : vector<2x32xf32> to vector<1x32xf32>
    %12 = vector.shape_cast %11 : vector<1x32xf32> to vector<1x32xf32>
    %13 = vector.broadcast %12 : vector<1x32xf32> to vector<2x32xf32>
    %14 = vector.extract_strided_slice %10 {offsets = [1, 0], sizes = [1, 32], strides = [1, 1]} : vector<2x32xf32> to vector<1x32xf32>
    %15 = vector.broadcast %14 : vector<1x32xf32> to vector<2x32xf32>
    %16 = arith.addf %9, %15 : vector<2x32xf32>
    %17 = tpu.concatenate %13, %16 in 0 : vector<2x32xf32>, vector<2x32xf32> -> vector<4x32xf32>
    %18 = arith.truncf %17 : vector<4x32xf32> to vector<4x32xbf16>
    %c0_9 = arith.constant 0 : index
    %c0_10 = arith.constant 0 : index
    %c0_11 = arith.constant 0 : index
    %19 = vector.load %arg5[%c0_9, %c0_10, %c0_11] : memref<2x32x96xbf16, #tpu.memory_space<vmem>>, vector<1x32x96xbf16>
    %20 = vector.shape_cast %19 : vector<1x32x96xbf16> to vector<32x96xbf16>
    %cst_12 = arith.constant dense<0.000000e+00> : vector<4x96xf32>
    %21 = tpu.matmul %18, %20, %cst_12 {dimension_numbers = #tpu.dot_dimension_numbers<[1], [0], [0], [1], [0, 0, 1, 1], [], []>} : vector<4x32xbf16>, vector<32x96xbf16>, vector<4x96xf32> -> vector<4x96xf32>
    %c0_13 = arith.constant 0 : index
    %c0_14 = arith.constant 0 : index
    %c0_15 = arith.constant 0 : index
    %22 = vector.load %arg6[%c0_13, %c0_14, %c0_15] : memref<2x1x96xf32, #tpu.memory_space<vmem>>, vector<1x1x96xf32>
    %23 = vector.shape_cast %22 : vector<1x1x96xf32> to vector<1x96xf32>
    %24 = vector.broadcast %23 : vector<1x96xf32> to vector<4x96xf32>
    %25 = arith.addf %21, %24 : vector<4x96xf32>
    %26 = vector.extract_strided_slice %25 {offsets = [0, 0], sizes = [4, 32], strides = [1, 1]} : vector<4x96xf32> to vector<4x32xf32>
    %27 = arith.truncf %26 : vector<4x32xf32> to vector<4x32xbf16>
    %28 = vector.extract_strided_slice %25 {offsets = [0, 32], sizes = [4, 32], strides = [1, 1]} : vector<4x96xf32> to vector<4x32xf32>
    %29 = arith.truncf %28 : vector<4x32xf32> to vector<4x32xbf16>
    %30 = vector.extract_strided_slice %25 {offsets = [0, 64], sizes = [4, 32], strides = [1, 1]} : vector<4x96xf32> to vector<4x32xf32>
    %31 = arith.truncf %30 : vector<4x32xf32> to vector<4x32xbf16>
    %32 = vector.extract_strided_slice %27 {offsets = [0, 0], sizes = [2, 8], strides = [1, 1]} : vector<4x32xbf16> to vector<2x8xbf16>
    %33 = vector.extract_strided_slice %27 {offsets = [0, 8], sizes = [2, 8], strides = [1, 1]} : vector<4x32xbf16> to vector<2x8xbf16>
    %34 = vector.extract_strided_slice %27 {offsets = [0, 16], sizes = [2, 8], strides = [1, 1]} : vector<4x32xbf16> to vector<2x8xbf16>
    %35 = vector.extract_strided_slice %27 {offsets = [0, 24], sizes = [2, 8], strides = [1, 1]} : vector<4x32xbf16> to vector<2x8xbf16>
    %36 = vector.extract_strided_slice %27 {offsets = [2, 0], sizes = [2, 8], strides = [1, 1]} : vector<4x32xbf16> to vector<2x8xbf16>
    %37 = vector.extract_strided_slice %27 {offsets = [2, 8], sizes = [2, 8], strides = [1, 1]} : vector<4x32xbf16> to vector<2x8xbf16>
    %38 = vector.extract_strided_slice %27 {offsets = [2, 16], sizes = [2, 8], strides = [1, 1]} : vector<4x32xbf16> to vector<2x8xbf16>
    %39 = vector.extract_strided_slice %27 {offsets = [2, 24], sizes = [2, 8], strides = [1, 1]} : vector<4x32xbf16> to vector<2x8xbf16>
    %40 = vector.shape_cast %32 : vector<2x8xbf16> to vector<1x2x8xbf16>
    %41 = vector.shape_cast %33 : vector<2x8xbf16> to vector<1x2x8xbf16>
    %42 = vector.shape_cast %34 : vector<2x8xbf16> to vector<1x2x8xbf16>
    %43 = vector.shape_cast %35 : vector<2x8xbf16> to vector<1x2x8xbf16>
    %44 = vector.shape_cast %36 : vector<2x8xbf16> to vector<1x2x8xbf16>
    %45 = vector.shape_cast %37 : vector<2x8xbf16> to vector<1x2x8xbf16>
    %46 = vector.shape_cast %38 : vector<2x8xbf16> to vector<1x2x8xbf16>
    %47 = vector.shape_cast %39 : vector<2x8xbf16> to vector<1x2x8xbf16>
    %48 = tpu.concatenate %40, %41, %42, %43, %44, %45, %46, %47 in 0 : vector<1x2x8xbf16>, vector<1x2x8xbf16>, vector<1x2x8xbf16>, vector<1x2x8xbf16>, vector<1x2x8xbf16>, vector<1x2x8xbf16>, vector<1x2x8xbf16>, vector<1x2x8xbf16> -> vector<8x2x8xbf16>
    %49 = vector.extract_strided_slice %29 {offsets = [0, 0], sizes = [2, 8], strides = [1, 1]} : vector<4x32xbf16> to vector<2x8xbf16>
    %50 = vector.extract_strided_slice %29 {offsets = [0, 8], sizes = [2, 8], strides = [1, 1]} : vector<4x32xbf16> to vector<2x8xbf16>
    %51 = vector.extract_strided_slice %29 {offsets = [0, 16], sizes = [2, 8], strides = [1, 1]} : vector<4x32xbf16> to vector<2x8xbf16>
    %52 = vector.extract_strided_slice %29 {offsets = [0, 24], sizes = [2, 8], strides = [1, 1]} : vector<4x32xbf16> to vector<2x8xbf16>
    %53 = vector.extract_strided_slice %29 {offsets = [2, 0], sizes = [2, 8], strides = [1, 1]} : vector<4x32xbf16> to vector<2x8xbf16>
    %54 = vector.extract_strided_slice %29 {offsets = [2, 8], sizes = [2, 8], strides = [1, 1]} : vector<4x32xbf16> to vector<2x8xbf16>
    %55 = vector.extract_strided_slice %29 {offsets = [2, 16], sizes = [2, 8], strides = [1, 1]} : vector<4x32xbf16> to vector<2x8xbf16>
    %56 = vector.extract_strided_slice %29 {offsets = [2, 24], sizes = [2, 8], strides = [1, 1]} : vector<4x32xbf16> to vector<2x8xbf16>
    %57 = vector.shape_cast %49 : vector<2x8xbf16> to vector<1x2x8xbf16>
    %58 = vector.shape_cast %50 : vector<2x8xbf16> to vector<1x2x8xbf16>
    %59 = vector.shape_cast %51 : vector<2x8xbf16> to vector<1x2x8xbf16>
    %60 = vector.shape_cast %52 : vector<2x8xbf16> to vector<1x2x8xbf16>
    %61 = vector.shape_cast %53 : vector<2x8xbf16> to vector<1x2x8xbf16>
    %62 = vector.shape_cast %54 : vector<2x8xbf16> to vector<1x2x8xbf16>
    %63 = vector.shape_cast %55 : vector<2x8xbf16> to vector<1x2x8xbf16>
    %64 = vector.shape_cast %56 : vector<2x8xbf16> to vector<1x2x8xbf16>
    %65 = tpu.concatenate %57, %58, %59, %60, %61, %62, %63, %64 in 0 : vector<1x2x8xbf16>, vector<1x2x8xbf16>, vector<1x2x8xbf16>, vector<1x2x8xbf16>, vector<1x2x8xbf16>, vector<1x2x8xbf16>, vector<1x2x8xbf16>, vector<1x2x8xbf16> -> vector<8x2x8xbf16>
    %66 = vector.extract_strided_slice %31 {offsets = [0, 0], sizes = [2, 8], strides = [1, 1]} : vector<4x32xbf16> to vector<2x8xbf16>
    %67 = vector.extract_strided_slice %31 {offsets = [0, 8], sizes = [2, 8], strides = [1, 1]} : vector<4x32xbf16> to vector<2x8xbf16>
    %68 = vector.extract_strided_slice %31 {offsets = [0, 16], sizes = [2, 8], strides = [1, 1]} : vector<4x32xbf16> to vector<2x8xbf16>
    %69 = vector.extract_strided_slice %31 {offsets = [0, 24], sizes = [2, 8], strides = [1, 1]} : vector<4x32xbf16> to vector<2x8xbf16>
    %70 = vector.extract_strided_slice %31 {offsets = [2, 0], sizes = [2, 8], strides = [1, 1]} : vector<4x32xbf16> to vector<2x8xbf16>
    %71 = vector.extract_strided_slice %31 {offsets = [2, 8], sizes = [2, 8], strides = [1, 1]} : vector<4x32xbf16> to vector<2x8xbf16>
    %72 = vector.extract_strided_slice %31 {offsets = [2, 16], sizes = [2, 8], strides = [1, 1]} : vector<4x32xbf16> to vector<2x8xbf16>
    %73 = vector.extract_strided_slice %31 {offsets = [2, 24], sizes = [2, 8], strides = [1, 1]} : vector<4x32xbf16> to vector<2x8xbf16>
    %74 = vector.shape_cast %66 : vector<2x8xbf16> to vector<1x2x8xbf16>
    %75 = vector.shape_cast %67 : vector<2x8xbf16> to vector<1x2x8xbf16>
    %76 = vector.shape_cast %68 : vector<2x8xbf16> to vector<1x2x8xbf16>
    %77 = vector.shape_cast %69 : vector<2x8xbf16> to vector<1x2x8xbf16>
    %78 = vector.shape_cast %70 : vector<2x8xbf16> to vector<1x2x8xbf16>
    %79 = vector.shape_cast %71 : vector<2x8xbf16> to vector<1x2x8xbf16>
    %80 = vector.shape_cast %72 : vector<2x8xbf16> to vector<1x2x8xbf16>
    %81 = vector.shape_cast %73 : vector<2x8xbf16> to vector<1x2x8xbf16>
    %82 = tpu.concatenate %74, %75, %76, %77, %78, %79, %80, %81 in 0 : vector<1x2x8xbf16>, vector<1x2x8xbf16>, vector<1x2x8xbf16>, vector<1x2x8xbf16>, vector<1x2x8xbf16>, vector<1x2x8xbf16>, vector<1x2x8xbf16>, vector<1x2x8xbf16> -> vector<8x2x8xbf16>
    "tpu.trace_start"() <{level = 10 : i32, message = "gqc,gkc->gqk"}> : () -> ()
    %cst_16 = arith.constant dense<0.000000e+00> : vector<8x2x2xf32>
    %83 = tpu.matmul %48, %65, %cst_16 {dimension_numbers = #tpu.dot_dimension_numbers<[2], [2], [1], [1], [0, 0, 0, 1, 1, 1], [0], [0]>} : vector<8x2x8xbf16>, vector<8x2x8xbf16>, vector<8x2x2xf32> -> vector<8x2x2xf32>
    "tpu.trace_stop"() : () -> ()
    %cst_17 = arith.constant 0.353553385 : f32
    %84 = vector.broadcast %cst_17 : f32 to vector<8x2x2xf32>
    %85 = arith.mulf %83, %84 : vector<8x2x2xf32>
    %cst_18 = arith.constant dense<0xFF800000> : vector<8x2xf32>
    %86 = vector.multi_reduction <maximumf>, %85, %cst_18 [2] : vector<8x2x2xf32> to vector<8x2xf32>
    %87 = vector.shape_cast %86 : vector<8x2xf32> to vector<8x2x1xf32>
    %88 = vector.broadcast %87 : vector<8x2x1xf32> to vector<8x2x2xf32>
    %89 = arith.subf %85, %88 : vector<8x2x2xf32>
    %90 = math.exp %89 : vector<8x2x2xf32>
    %cst_19 = arith.constant dense<0.000000e+00> : vector<8x2xf32>
    %91 = vector.multi_reduction <add>, %90, %cst_19 [2] : vector<8x2x2xf32> to vector<8x2xf32>
    %92 = vector.shape_cast %91 : vector<8x2xf32> to vector<8x2x1xf32>
    %93 = tpu.reciprocal %92 {approx = true} : vector<8x2x1xf32> -> vector<8x2x1xf32>
    %94 = vector.broadcast %93 : vector<8x2x1xf32> to vector<8x2x2xf32>
    %95 = arith.mulf %90, %94 : vector<8x2x2xf32>
    %96 = arith.truncf %95 : vector<8x2x2xf32> to vector<8x2x2xbf16>
    "tpu.trace_start"() <{level = 10 : i32, message = "gqk,gkc->gqc"}> : () -> ()
    %cst_20 = arith.constant dense<0.000000e+00> : vector<8x2x8xf32>
    %97 = tpu.matmul %96, %82, %cst_20 {dimension_numbers = #tpu.dot_dimension_numbers<[2], [1], [1], [2], [0, 0, 0, 1, 1, 2], [0], [0]>} : vector<8x2x2xbf16>, vector<8x2x8xbf16>, vector<8x2x8xf32> -> vector<8x2x8xf32>
    "tpu.trace_stop"() : () -> ()
    %98 = vector.extract_strided_slice %97 {offsets = [0, 0, 0], sizes = [1, 2, 8], strides = [1, 1, 1]} : vector<8x2x8xf32> to vector<1x2x8xf32>
    %99 = vector.shape_cast %98 : vector<1x2x8xf32> to vector<2x8xf32>
    %100 = vector.extract_strided_slice %97 {offsets = [1, 0, 0], sizes = [1, 2, 8], strides = [1, 1, 1]} : vector<8x2x8xf32> to vector<1x2x8xf32>
    %101 = vector.shape_cast %100 : vector<1x2x8xf32> to vector<2x8xf32>
    %102 = vector.extract_strided_slice %97 {offsets = [2, 0, 0], sizes = [1, 2, 8], strides = [1, 1, 1]} : vector<8x2x8xf32> to vector<1x2x8xf32>
    %103 = vector.shape_cast %102 : vector<1x2x8xf32> to vector<2x8xf32>
    %104 = vector.extract_strided_slice %97 {offsets = [3, 0, 0], sizes = [1, 2, 8], strides = [1, 1, 1]} : vector<8x2x8xf32> to vector<1x2x8xf32>
    %105 = vector.shape_cast %104 : vector<1x2x8xf32> to vector<2x8xf32>
    %106 = tpu.concatenate %99, %101, %103, %105 in 1 : vector<2x8xf32>, vector<2x8xf32>, vector<2x8xf32>, vector<2x8xf32> -> vector<2x32xf32>
    %107 = vector.extract_strided_slice %97 {offsets = [4, 0, 0], sizes = [1, 2, 8], strides = [1, 1, 1]} : vector<8x2x8xf32> to vector<1x2x8xf32>
    %108 = vector.shape_cast %107 : vector<1x2x8xf32> to vector<2x8xf32>
    %109 = vector.extract_strided_slice %97 {offsets = [5, 0, 0], sizes = [1, 2, 8], strides = [1, 1, 1]} : vector<8x2x8xf32> to vector<1x2x8xf32>
    %110 = vector.shape_cast %109 : vector<1x2x8xf32> to vector<2x8xf32>
    %111 = vector.extract_strided_slice %97 {offsets = [6, 0, 0], sizes = [1, 2, 8], strides = [1, 1, 1]} : vector<8x2x8xf32> to vector<1x2x8xf32>
    %112 = vector.shape_cast %111 : vector<1x2x8xf32> to vector<2x8xf32>
    %113 = vector.extract_strided_slice %97 {offsets = [7, 0, 0], sizes = [1, 2, 8], strides = [1, 1, 1]} : vector<8x2x8xf32> to vector<1x2x8xf32>
    %114 = vector.shape_cast %113 : vector<1x2x8xf32> to vector<2x8xf32>
    %115 = tpu.concatenate %108, %110, %112, %114 in 1 : vector<2x8xf32>, vector<2x8xf32>, vector<2x8xf32>, vector<2x8xf32> -> vector<2x32xf32>
    %116 = tpu.concatenate %106, %115 in 0 : vector<2x32xf32>, vector<2x32xf32> -> vector<4x32xf32>
    %117 = arith.truncf %116 : vector<4x32xf32> to vector<4x32xbf16>
    %c0_21 = arith.constant 0 : index
    %c0_22 = arith.constant 0 : index
    %c0_23 = arith.constant 0 : index
    %118 = vector.load %arg7[%c0_21, %c0_22, %c0_23] : memref<2x32x32xbf16, #tpu.memory_space<vmem>>, vector<1x32x32xbf16>
    %119 = vector.shape_cast %118 : vector<1x32x32xbf16> to vector<32x32xbf16>
    %cst_24 = arith.constant dense<0.000000e+00> : vector<4x32xf32>
    %120 = tpu.matmul %117, %119, %cst_24 {dimension_numbers = #tpu.dot_dimension_numbers<[1], [0], [0], [1], [0, 0, 1, 1], [], []>} : vector<4x32xbf16>, vector<32x32xbf16>, vector<4x32xf32> -> vector<4x32xf32>
    %c0_25 = arith.constant 0 : index
    %c0_26 = arith.constant 0 : index
    %c0_27 = arith.constant 0 : index
    %121 = vector.load %arg8[%c0_25, %c0_26, %c0_27] : memref<2x1x32xf32, #tpu.memory_space<vmem>>, vector<1x1x32xf32>
    %122 = vector.shape_cast %121 : vector<1x1x32xf32> to vector<1x32xf32>
    %123 = vector.broadcast %122 : vector<1x32xf32> to vector<4x32xf32>
    %124 = arith.addf %120, %123 : vector<4x32xf32>
    %125 = arith.addf %17, %124 : vector<4x32xf32>
    %c0_28 = arith.constant 0 : index
    %c0_29 = arith.constant 0 : index
    %c0_30 = arith.constant 0 : index
    %126 = vector.load %arg9[%c0_28, %c0_29, %c0_30] : memref<2x1x32xf32, #tpu.memory_space<vmem>>, vector<1x1x32xf32>
    %127 = vector.shape_cast %126 : vector<1x1x32xf32> to vector<1x32xf32>
    %c0_31 = arith.constant 0 : index
    %c0_32 = arith.constant 0 : index
    %c0_33 = arith.constant 0 : index
    %128 = vector.load %arg10[%c0_31, %c0_32, %c0_33] : memref<2x1x32xf32, #tpu.memory_space<vmem>>, vector<1x1x32xf32>
    %129 = vector.shape_cast %128 : vector<1x1x32xf32> to vector<1x32xf32>
    %cst_34 = arith.constant dense<0.000000e+00> : vector<4xf32>
    %130 = vector.multi_reduction <add>, %125, %cst_34 [1] : vector<4x32xf32> to vector<4xf32>
    %131 = vector.shape_cast %130 : vector<4xf32> to vector<4x1xf32>
    %cst_35 = arith.constant 3.200000e+01 : f32
    %132 = vector.broadcast %cst_35 : f32 to vector<4x1xf32>
    %133 = arith.divf %131, %132 : vector<4x1xf32>
    %134 = vector.broadcast %133 : vector<4x1xf32> to vector<4x32xf32>
    %135 = arith.subf %125, %134 : vector<4x32xf32>
    %136 = arith.mulf %135, %135 : vector<4x32xf32>
    %cst_36 = arith.constant dense<0.000000e+00> : vector<4xf32>
    %137 = vector.multi_reduction <add>, %136, %cst_36 [1] : vector<4x32xf32> to vector<4xf32>
    %138 = vector.shape_cast %137 : vector<4xf32> to vector<4x1xf32>
    %cst_37 = arith.constant 3.200000e+01 : f32
    %139 = vector.broadcast %cst_37 : f32 to vector<4x1xf32>
    %140 = arith.divf %138, %139 : vector<4x1xf32>
    %141 = vector.broadcast %133 : vector<4x1xf32> to vector<4x32xf32>
    %142 = arith.subf %125, %141 : vector<4x32xf32>
    %cst_38 = arith.constant 9.99999974E-6 : f32
    %143 = vector.broadcast %cst_38 : f32 to vector<4x1xf32>
    %144 = arith.addf %140, %143 : vector<4x1xf32>
    %145 = math.rsqrt %144 : vector<4x1xf32>
    %146 = vector.broadcast %145 : vector<4x1xf32> to vector<4x32xf32>
    %147 = arith.mulf %142, %146 : vector<4x32xf32>
    %148 = vector.broadcast %127 : vector<1x32xf32> to vector<4x32xf32>
    %149 = arith.mulf %147, %148 : vector<4x32xf32>
    %150 = vector.broadcast %129 : vector<1x32xf32> to vector<4x32xf32>
    %151 = arith.addf %149, %150 : vector<4x32xf32>
    %152 = arith.truncf %151 : vector<4x32xf32> to vector<4x32xbf16>
    %c0_39 = arith.constant 0 : index
    %c0_40 = arith.constant 0 : index
    %c0_41 = arith.constant 0 : index
    %153 = vector.load %arg11[%c0_39, %c0_40, %c0_41] : memref<2x32x64xbf16, #tpu.memory_space<vmem>>, vector<1x32x64xbf16>
    %154 = vector.shape_cast %153 : vector<1x32x64xbf16> to vector<32x64xbf16>
    %cst_42 = arith.constant dense<0.000000e+00> : vector<4x64xf32>
    %155 = tpu.matmul %152, %154, %cst_42 {dimension_numbers = #tpu.dot_dimension_numbers<[1], [0], [0], [1], [0, 0, 1, 1], [], []>} : vector<4x32xbf16>, vector<32x64xbf16>, vector<4x64xf32> -> vector<4x64xf32>
    %c0_43 = arith.constant 0 : index
    %c0_44 = arith.constant 0 : index
    %c0_45 = arith.constant 0 : index
    %156 = vector.load %arg12[%c0_43, %c0_44, %c0_45] : memref<2x1x64xf32, #tpu.memory_space<vmem>>, vector<1x1x64xf32>
    %157 = vector.shape_cast %156 : vector<1x1x64xf32> to vector<1x64xf32>
    %158 = vector.broadcast %157 : vector<1x64xf32> to vector<4x64xf32>
    %159 = arith.addf %155, %158 : vector<4x64xf32>
    %cst_46 = arith.constant 0.000000e+00 : f32
    %160 = vector.broadcast %cst_46 : f32 to vector<4x64xf32>
    %161 = arith.maximumf %159, %160 : vector<4x64xf32>
    %162 = arith.truncf %161 : vector<4x64xf32> to vector<4x64xbf16>
    %c0_47 = arith.constant 0 : index
    %c0_48 = arith.constant 0 : index
    %c0_49 = arith.constant 0 : index
    %163 = vector.load %arg13[%c0_47, %c0_48, %c0_49] : memref<2x64x32xbf16, #tpu.memory_space<vmem>>, vector<1x64x32xbf16>
    %164 = vector.shape_cast %163 : vector<1x64x32xbf16> to vector<64x32xbf16>
    %cst_50 = arith.constant dense<0.000000e+00> : vector<4x32xf32>
    %165 = tpu.matmul %162, %164, %cst_50 {dimension_numbers = #tpu.dot_dimension_numbers<[1], [0], [0], [1], [0, 0, 1, 1], [], []>} : vector<4x64xbf16>, vector<64x32xbf16>, vector<4x32xf32> -> vector<4x32xf32>
    %c0_51 = arith.constant 0 : index
    %c0_52 = arith.constant 0 : index
    %c0_53 = arith.constant 0 : index
    %166 = vector.load %arg14[%c0_51, %c0_52, %c0_53] : memref<2x1x32xf32, #tpu.memory_space<vmem>>, vector<1x1x32xf32>
    %167 = vector.shape_cast %166 : vector<1x1x32xf32> to vector<1x32xf32>
    %168 = vector.broadcast %167 : vector<1x32xf32> to vector<4x32xf32>
    %169 = arith.addf %165, %168 : vector<4x32xf32>
    %170 = arith.addf %151, %169 : vector<4x32xf32>
    %c0_54 = arith.constant 0 : index
    %c0_55 = arith.constant 0 : index
    %c0_56 = arith.constant 0 : index
    %171 = vector.load %arg15[%c0_54, %c0_55, %c0_56] : memref<2x1x32xf32, #tpu.memory_space<vmem>>, vector<1x1x32xf32>
    %172 = vector.shape_cast %171 : vector<1x1x32xf32> to vector<1x32xf32>
    %c0_57 = arith.constant 0 : index
    %c0_58 = arith.constant 0 : index
    %c0_59 = arith.constant 0 : index
    %173 = vector.load %arg16[%c0_57, %c0_58, %c0_59] : memref<2x1x32xf32, #tpu.memory_space<vmem>>, vector<1x1x32xf32>
    %174 = vector.shape_cast %173 : vector<1x1x32xf32> to vector<1x32xf32>
    %cst_60 = arith.constant dense<0.000000e+00> : vector<4xf32>
    %175 = vector.multi_reduction <add>, %170, %cst_60 [1] : vector<4x32xf32> to vector<4xf32>
    %176 = vector.shape_cast %175 : vector<4xf32> to vector<4x1xf32>
    %cst_61 = arith.constant 3.200000e+01 : f32
    %177 = vector.broadcast %cst_61 : f32 to vector<4x1xf32>
    %178 = arith.divf %176, %177 : vector<4x1xf32>
    %179 = vector.broadcast %178 : vector<4x1xf32> to vector<4x32xf32>
    %180 = arith.subf %170, %179 : vector<4x32xf32>
    %181 = arith.mulf %180, %180 : vector<4x32xf32>
    %cst_62 = arith.constant dense<0.000000e+00> : vector<4xf32>
    %182 = vector.multi_reduction <add>, %181, %cst_62 [1] : vector<4x32xf32> to vector<4xf32>
    %183 = vector.shape_cast %182 : vector<4xf32> to vector<4x1xf32>
    %cst_63 = arith.constant 3.200000e+01 : f32
    %184 = vector.broadcast %cst_63 : f32 to vector<4x1xf32>
    %185 = arith.divf %183, %184 : vector<4x1xf32>
    %186 = vector.broadcast %178 : vector<4x1xf32> to vector<4x32xf32>
    %187 = arith.subf %170, %186 : vector<4x32xf32>
    %cst_64 = arith.constant 9.99999974E-6 : f32
    %188 = vector.broadcast %cst_64 : f32 to vector<4x1xf32>
    %189 = arith.addf %185, %188 : vector<4x1xf32>
    %190 = math.rsqrt %189 : vector<4x1xf32>
    %191 = vector.broadcast %190 : vector<4x1xf32> to vector<4x32xf32>
    %192 = arith.mulf %187, %191 : vector<4x32xf32>
    %193 = vector.broadcast %172 : vector<1x32xf32> to vector<4x32xf32>
    %194 = arith.mulf %192, %193 : vector<4x32xf32>
    %195 = vector.broadcast %174 : vector<1x32xf32> to vector<4x32xf32>
    %196 = arith.addf %194, %195 : vector<4x32xf32>
    %197 = arith.truncf %196 : vector<4x32xf32> to vector<4x32xbf16>
    %c1 = arith.constant 1 : index
    %c0_65 = arith.constant 0 : index
    %c0_66 = arith.constant 0 : index
    %198 = vector.load %arg5[%c1, %c0_65, %c0_66] : memref<2x32x96xbf16, #tpu.memory_space<vmem>>, vector<1x32x96xbf16>
    %199 = vector.shape_cast %198 : vector<1x32x96xbf16> to vector<32x96xbf16>
    %cst_67 = arith.constant dense<0.000000e+00> : vector<4x96xf32>
    %200 = tpu.matmul %197, %199, %cst_67 {dimension_numbers = #tpu.dot_dimension_numbers<[1], [0], [0], [1], [0, 0, 1, 1], [], []>} : vector<4x32xbf16>, vector<32x96xbf16>, vector<4x96xf32> -> vector<4x96xf32>
    %c1_68 = arith.constant 1 : index
    %c0_69 = arith.constant 0 : index
    %c0_70 = arith.constant 0 : index
    %201 = vector.load %arg6[%c1_68, %c0_69, %c0_70] : memref<2x1x96xf32, #tpu.memory_space<vmem>>, vector<1x1x96xf32>
    %202 = vector.shape_cast %201 : vector<1x1x96xf32> to vector<1x96xf32>
    %203 = vector.broadcast %202 : vector<1x96xf32> to vector<4x96xf32>
    %204 = arith.addf %200, %203 : vector<4x96xf32>
    %205 = vector.extract_strided_slice %204 {offsets = [0, 0], sizes = [4, 32], strides = [1, 1]} : vector<4x96xf32> to vector<4x32xf32>
    %206 = arith.truncf %205 : vector<4x32xf32> to vector<4x32xbf16>
    %207 = vector.extract_strided_slice %204 {offsets = [0, 32], sizes = [4, 32], strides = [1, 1]} : vector<4x96xf32> to vector<4x32xf32>
    %208 = arith.truncf %207 : vector<4x32xf32> to vector<4x32xbf16>
    %209 = vector.extract_strided_slice %204 {offsets = [0, 64], sizes = [4, 32], strides = [1, 1]} : vector<4x96xf32> to vector<4x32xf32>
    %210 = arith.truncf %209 : vector<4x32xf32> to vector<4x32xbf16>
    %211 = vector.extract_strided_slice %206 {offsets = [0, 0], sizes = [2, 8], strides = [1, 1]} : vector<4x32xbf16> to vector<2x8xbf16>
    %212 = vector.extract_strided_slice %206 {offsets = [0, 8], sizes = [2, 8], strides = [1, 1]} : vector<4x32xbf16> to vector<2x8xbf16>
    %213 = vector.extract_strided_slice %206 {offsets = [0, 16], sizes = [2, 8], strides = [1, 1]} : vector<4x32xbf16> to vector<2x8xbf16>
    %214 = vector.extract_strided_slice %206 {offsets = [0, 24], sizes = [2, 8], strides = [1, 1]} : vector<4x32xbf16> to vector<2x8xbf16>
    %215 = vector.extract_strided_slice %206 {offsets = [2, 0], sizes = [2, 8], strides = [1, 1]} : vector<4x32xbf16> to vector<2x8xbf16>
    %216 = vector.extract_strided_slice %206 {offsets = [2, 8], sizes = [2, 8], strides = [1, 1]} : vector<4x32xbf16> to vector<2x8xbf16>
    %217 = vector.extract_strided_slice %206 {offsets = [2, 16], sizes = [2, 8], strides = [1, 1]} : vector<4x32xbf16> to vector<2x8xbf16>
    %218 = vector.extract_strided_slice %206 {offsets = [2, 24], sizes = [2, 8], strides = [1, 1]} : vector<4x32xbf16> to vector<2x8xbf16>
    %219 = vector.shape_cast %211 : vector<2x8xbf16> to vector<1x2x8xbf16>
    %220 = vector.shape_cast %212 : vector<2x8xbf16> to vector<1x2x8xbf16>
    %221 = vector.shape_cast %213 : vector<2x8xbf16> to vector<1x2x8xbf16>
    %222 = vector.shape_cast %214 : vector<2x8xbf16> to vector<1x2x8xbf16>
    %223 = vector.shape_cast %215 : vector<2x8xbf16> to vector<1x2x8xbf16>
    %224 = vector.shape_cast %216 : vector<2x8xbf16> to vector<1x2x8xbf16>
    %225 = vector.shape_cast %217 : vector<2x8xbf16> to vector<1x2x8xbf16>
    %226 = vector.shape_cast %218 : vector<2x8xbf16> to vector<1x2x8xbf16>
    %227 = tpu.concatenate %219, %220, %221, %222, %223, %224, %225, %226 in 0 : vector<1x2x8xbf16>, vector<1x2x8xbf16>, vector<1x2x8xbf16>, vector<1x2x8xbf16>, vector<1x2x8xbf16>, vector<1x2x8xbf16>, vector<1x2x8xbf16>, vector<1x2x8xbf16> -> vector<8x2x8xbf16>
    %228 = vector.extract_strided_slice %208 {offsets = [0, 0], sizes = [2, 8], strides = [1, 1]} : vector<4x32xbf16> to vector<2x8xbf16>
    %229 = vector.extract_strided_slice %208 {offsets = [0, 8], sizes = [2, 8], strides = [1, 1]} : vector<4x32xbf16> to vector<2x8xbf16>
    %230 = vector.extract_strided_slice %208 {offsets = [0, 16], sizes = [2, 8], strides = [1, 1]} : vector<4x32xbf16> to vector<2x8xbf16>
    %231 = vector.extract_strided_slice %208 {offsets = [0, 24], sizes = [2, 8], strides = [1, 1]} : vector<4x32xbf16> to vector<2x8xbf16>
    %232 = vector.extract_strided_slice %208 {offsets = [2, 0], sizes = [2, 8], strides = [1, 1]} : vector<4x32xbf16> to vector<2x8xbf16>
    %233 = vector.extract_strided_slice %208 {offsets = [2, 8], sizes = [2, 8], strides = [1, 1]} : vector<4x32xbf16> to vector<2x8xbf16>
    %234 = vector.extract_strided_slice %208 {offsets = [2, 16], sizes = [2, 8], strides = [1, 1]} : vector<4x32xbf16> to vector<2x8xbf16>
    %235 = vector.extract_strided_slice %208 {offsets = [2, 24], sizes = [2, 8], strides = [1, 1]} : vector<4x32xbf16> to vector<2x8xbf16>
    %236 = vector.shape_cast %228 : vector<2x8xbf16> to vector<1x2x8xbf16>
    %237 = vector.shape_cast %229 : vector<2x8xbf16> to vector<1x2x8xbf16>
    %238 = vector.shape_cast %230 : vector<2x8xbf16> to vector<1x2x8xbf16>
    %239 = vector.shape_cast %231 : vector<2x8xbf16> to vector<1x2x8xbf16>
    %240 = vector.shape_cast %232 : vector<2x8xbf16> to vector<1x2x8xbf16>
    %241 = vector.shape_cast %233 : vector<2x8xbf16> to vector<1x2x8xbf16>
    %242 = vector.shape_cast %234 : vector<2x8xbf16> to vector<1x2x8xbf16>
    %243 = vector.shape_cast %235 : vector<2x8xbf16> to vector<1x2x8xbf16>
    %244 = tpu.concatenate %236, %237, %238, %239, %240, %241, %242, %243 in 0 : vector<1x2x8xbf16>, vector<1x2x8xbf16>, vector<1x2x8xbf16>, vector<1x2x8xbf16>, vector<1x2x8xbf16>, vector<1x2x8xbf16>, vector<1x2x8xbf16>, vector<1x2x8xbf16> -> vector<8x2x8xbf16>
    %245 = vector.extract_strided_slice %210 {offsets = [0, 0], sizes = [2, 8], strides = [1, 1]} : vector<4x32xbf16> to vector<2x8xbf16>
    %246 = vector.extract_strided_slice %210 {offsets = [0, 8], sizes = [2, 8], strides = [1, 1]} : vector<4x32xbf16> to vector<2x8xbf16>
    %247 = vector.extract_strided_slice %210 {offsets = [0, 16], sizes = [2, 8], strides = [1, 1]} : vector<4x32xbf16> to vector<2x8xbf16>
    %248 = vector.extract_strided_slice %210 {offsets = [0, 24], sizes = [2, 8], strides = [1, 1]} : vector<4x32xbf16> to vector<2x8xbf16>
    %249 = vector.extract_strided_slice %210 {offsets = [2, 0], sizes = [2, 8], strides = [1, 1]} : vector<4x32xbf16> to vector<2x8xbf16>
    %250 = vector.extract_strided_slice %210 {offsets = [2, 8], sizes = [2, 8], strides = [1, 1]} : vector<4x32xbf16> to vector<2x8xbf16>
    %251 = vector.extract_strided_slice %210 {offsets = [2, 16], sizes = [2, 8], strides = [1, 1]} : vector<4x32xbf16> to vector<2x8xbf16>
    %252 = vector.extract_strided_slice %210 {offsets = [2, 24], sizes = [2, 8], strides = [1, 1]} : vector<4x32xbf16> to vector<2x8xbf16>
    %253 = vector.shape_cast %245 : vector<2x8xbf16> to vector<1x2x8xbf16>
    %254 = vector.shape_cast %246 : vector<2x8xbf16> to vector<1x2x8xbf16>
    %255 = vector.shape_cast %247 : vector<2x8xbf16> to vector<1x2x8xbf16>
    %256 = vector.shape_cast %248 : vector<2x8xbf16> to vector<1x2x8xbf16>
    %257 = vector.shape_cast %249 : vector<2x8xbf16> to vector<1x2x8xbf16>
    %258 = vector.shape_cast %250 : vector<2x8xbf16> to vector<1x2x8xbf16>
    %259 = vector.shape_cast %251 : vector<2x8xbf16> to vector<1x2x8xbf16>
    %260 = vector.shape_cast %252 : vector<2x8xbf16> to vector<1x2x8xbf16>
    %261 = tpu.concatenate %253, %254, %255, %256, %257, %258, %259, %260 in 0 : vector<1x2x8xbf16>, vector<1x2x8xbf16>, vector<1x2x8xbf16>, vector<1x2x8xbf16>, vector<1x2x8xbf16>, vector<1x2x8xbf16>, vector<1x2x8xbf16>, vector<1x2x8xbf16> -> vector<8x2x8xbf16>
    "tpu.trace_start"() <{level = 10 : i32, message = "gqc,gkc->gqk"}> : () -> ()
    %cst_71 = arith.constant dense<0.000000e+00> : vector<8x2x2xf32>
    %262 = tpu.matmul %227, %244, %cst_71 {dimension_numbers = #tpu.dot_dimension_numbers<[2], [2], [1], [1], [0, 0, 0, 1, 1, 1], [0], [0]>} : vector<8x2x8xbf16>, vector<8x2x8xbf16>, vector<8x2x2xf32> -> vector<8x2x2xf32>
    "tpu.trace_stop"() : () -> ()
    %cst_72 = arith.constant 0.353553385 : f32
    %263 = vector.broadcast %cst_72 : f32 to vector<8x2x2xf32>
    %264 = arith.mulf %262, %263 : vector<8x2x2xf32>
    %cst_73 = arith.constant dense<0xFF800000> : vector<8x2xf32>
    %265 = vector.multi_reduction <maximumf>, %264, %cst_73 [2] : vector<8x2x2xf32> to vector<8x2xf32>
    %266 = vector.shape_cast %265 : vector<8x2xf32> to vector<8x2x1xf32>
    %267 = vector.broadcast %266 : vector<8x2x1xf32> to vector<8x2x2xf32>
    %268 = arith.subf %264, %267 : vector<8x2x2xf32>
    %269 = math.exp %268 : vector<8x2x2xf32>
    %cst_74 = arith.constant dense<0.000000e+00> : vector<8x2xf32>
    %270 = vector.multi_reduction <add>, %269, %cst_74 [2] : vector<8x2x2xf32> to vector<8x2xf32>
    %271 = vector.shape_cast %270 : vector<8x2xf32> to vector<8x2x1xf32>
    %272 = tpu.reciprocal %271 {approx = true} : vector<8x2x1xf32> -> vector<8x2x1xf32>
    %273 = vector.broadcast %272 : vector<8x2x1xf32> to vector<8x2x2xf32>
    %274 = arith.mulf %269, %273 : vector<8x2x2xf32>
    %275 = arith.truncf %274 : vector<8x2x2xf32> to vector<8x2x2xbf16>
    "tpu.trace_start"() <{level = 10 : i32, message = "gqk,gkc->gqc"}> : () -> ()
    %cst_75 = arith.constant dense<0.000000e+00> : vector<8x2x8xf32>
    %276 = tpu.matmul %275, %261, %cst_75 {dimension_numbers = #tpu.dot_dimension_numbers<[2], [1], [1], [2], [0, 0, 0, 1, 1, 2], [0], [0]>} : vector<8x2x2xbf16>, vector<8x2x8xbf16>, vector<8x2x8xf32> -> vector<8x2x8xf32>
    "tpu.trace_stop"() : () -> ()
    %277 = vector.extract_strided_slice %276 {offsets = [0, 0, 0], sizes = [1, 2, 8], strides = [1, 1, 1]} : vector<8x2x8xf32> to vector<1x2x8xf32>
    %278 = vector.shape_cast %277 : vector<1x2x8xf32> to vector<2x8xf32>
    %279 = vector.extract_strided_slice %276 {offsets = [1, 0, 0], sizes = [1, 2, 8], strides = [1, 1, 1]} : vector<8x2x8xf32> to vector<1x2x8xf32>
    %280 = vector.shape_cast %279 : vector<1x2x8xf32> to vector<2x8xf32>
    %281 = vector.extract_strided_slice %276 {offsets = [2, 0, 0], sizes = [1, 2, 8], strides = [1, 1, 1]} : vector<8x2x8xf32> to vector<1x2x8xf32>
    %282 = vector.shape_cast %281 : vector<1x2x8xf32> to vector<2x8xf32>
    %283 = vector.extract_strided_slice %276 {offsets = [3, 0, 0], sizes = [1, 2, 8], strides = [1, 1, 1]} : vector<8x2x8xf32> to vector<1x2x8xf32>
    %284 = vector.shape_cast %283 : vector<1x2x8xf32> to vector<2x8xf32>
    %285 = tpu.concatenate %278, %280, %282, %284 in 1 : vector<2x8xf32>, vector<2x8xf32>, vector<2x8xf32>, vector<2x8xf32> -> vector<2x32xf32>
    %286 = vector.extract_strided_slice %276 {offsets = [4, 0, 0], sizes = [1, 2, 8], strides = [1, 1, 1]} : vector<8x2x8xf32> to vector<1x2x8xf32>
    %287 = vector.shape_cast %286 : vector<1x2x8xf32> to vector<2x8xf32>
    %288 = vector.extract_strided_slice %276 {offsets = [5, 0, 0], sizes = [1, 2, 8], strides = [1, 1, 1]} : vector<8x2x8xf32> to vector<1x2x8xf32>
    %289 = vector.shape_cast %288 : vector<1x2x8xf32> to vector<2x8xf32>
    %290 = vector.extract_strided_slice %276 {offsets = [6, 0, 0], sizes = [1, 2, 8], strides = [1, 1, 1]} : vector<8x2x8xf32> to vector<1x2x8xf32>
    %291 = vector.shape_cast %290 : vector<1x2x8xf32> to vector<2x8xf32>
    %292 = vector.extract_strided_slice %276 {offsets = [7, 0, 0], sizes = [1, 2, 8], strides = [1, 1, 1]} : vector<8x2x8xf32> to vector<1x2x8xf32>
    %293 = vector.shape_cast %292 : vector<1x2x8xf32> to vector<2x8xf32>
    %294 = tpu.concatenate %287, %289, %291, %293 in 1 : vector<2x8xf32>, vector<2x8xf32>, vector<2x8xf32>, vector<2x8xf32> -> vector<2x32xf32>
    %295 = tpu.concatenate %285, %294 in 0 : vector<2x32xf32>, vector<2x32xf32> -> vector<4x32xf32>
    %296 = arith.truncf %295 : vector<4x32xf32> to vector<4x32xbf16>
    %c1_76 = arith.constant 1 : index
    %c0_77 = arith.constant 0 : index
    %c0_78 = arith.constant 0 : index
    %297 = vector.load %arg7[%c1_76, %c0_77, %c0_78] : memref<2x32x32xbf16, #tpu.memory_space<vmem>>, vector<1x32x32xbf16>
    %298 = vector.shape_cast %297 : vector<1x32x32xbf16> to vector<32x32xbf16>
    %cst_79 = arith.constant dense<0.000000e+00> : vector<4x32xf32>
    %299 = tpu.matmul %296, %298, %cst_79 {dimension_numbers = #tpu.dot_dimension_numbers<[1], [0], [0], [1], [0, 0, 1, 1], [], []>} : vector<4x32xbf16>, vector<32x32xbf16>, vector<4x32xf32> -> vector<4x32xf32>
    %c1_80 = arith.constant 1 : index
    %c0_81 = arith.constant 0 : index
    %c0_82 = arith.constant 0 : index
    %300 = vector.load %arg8[%c1_80, %c0_81, %c0_82] : memref<2x1x32xf32, #tpu.memory_space<vmem>>, vector<1x1x32xf32>
    %301 = vector.shape_cast %300 : vector<1x1x32xf32> to vector<1x32xf32>
    %302 = vector.broadcast %301 : vector<1x32xf32> to vector<4x32xf32>
    %303 = arith.addf %299, %302 : vector<4x32xf32>
    %304 = arith.addf %196, %303 : vector<4x32xf32>
    %c1_83 = arith.constant 1 : index
    %c0_84 = arith.constant 0 : index
    %c0_85 = arith.constant 0 : index
    %305 = vector.load %arg9[%c1_83, %c0_84, %c0_85] : memref<2x1x32xf32, #tpu.memory_space<vmem>>, vector<1x1x32xf32>
    %306 = vector.shape_cast %305 : vector<1x1x32xf32> to vector<1x32xf32>
    %c1_86 = arith.constant 1 : index
    %c0_87 = arith.constant 0 : index
    %c0_88 = arith.constant 0 : index
    %307 = vector.load %arg10[%c1_86, %c0_87, %c0_88] : memref<2x1x32xf32, #tpu.memory_space<vmem>>, vector<1x1x32xf32>
    %308 = vector.shape_cast %307 : vector<1x1x32xf32> to vector<1x32xf32>
    %cst_89 = arith.constant dense<0.000000e+00> : vector<4xf32>
    %309 = vector.multi_reduction <add>, %304, %cst_89 [1] : vector<4x32xf32> to vector<4xf32>
    %310 = vector.shape_cast %309 : vector<4xf32> to vector<4x1xf32>
    %cst_90 = arith.constant 3.200000e+01 : f32
    %311 = vector.broadcast %cst_90 : f32 to vector<4x1xf32>
    %312 = arith.divf %310, %311 : vector<4x1xf32>
    %313 = vector.broadcast %312 : vector<4x1xf32> to vector<4x32xf32>
    %314 = arith.subf %304, %313 : vector<4x32xf32>
    %315 = arith.mulf %314, %314 : vector<4x32xf32>
    %cst_91 = arith.constant dense<0.000000e+00> : vector<4xf32>
    %316 = vector.multi_reduction <add>, %315, %cst_91 [1] : vector<4x32xf32> to vector<4xf32>
    %317 = vector.shape_cast %316 : vector<4xf32> to vector<4x1xf32>
    %cst_92 = arith.constant 3.200000e+01 : f32
    %318 = vector.broadcast %cst_92 : f32 to vector<4x1xf32>
    %319 = arith.divf %317, %318 : vector<4x1xf32>
    %320 = vector.broadcast %312 : vector<4x1xf32> to vector<4x32xf32>
    %321 = arith.subf %304, %320 : vector<4x32xf32>
    %cst_93 = arith.constant 9.99999974E-6 : f32
    %322 = vector.broadcast %cst_93 : f32 to vector<4x1xf32>
    %323 = arith.addf %319, %322 : vector<4x1xf32>
    %324 = math.rsqrt %323 : vector<4x1xf32>
    %325 = vector.broadcast %324 : vector<4x1xf32> to vector<4x32xf32>
    %326 = arith.mulf %321, %325 : vector<4x32xf32>
    %327 = vector.broadcast %306 : vector<1x32xf32> to vector<4x32xf32>
    %328 = arith.mulf %326, %327 : vector<4x32xf32>
    %329 = vector.broadcast %308 : vector<1x32xf32> to vector<4x32xf32>
    %330 = arith.addf %328, %329 : vector<4x32xf32>
    %331 = arith.truncf %330 : vector<4x32xf32> to vector<4x32xbf16>
    %c1_94 = arith.constant 1 : index
    %c0_95 = arith.constant 0 : index
    %c0_96 = arith.constant 0 : index
    %332 = vector.load %arg11[%c1_94, %c0_95, %c0_96] : memref<2x32x64xbf16, #tpu.memory_space<vmem>>, vector<1x32x64xbf16>
    %333 = vector.shape_cast %332 : vector<1x32x64xbf16> to vector<32x64xbf16>
    %cst_97 = arith.constant dense<0.000000e+00> : vector<4x64xf32>
    %334 = tpu.matmul %331, %333, %cst_97 {dimension_numbers = #tpu.dot_dimension_numbers<[1], [0], [0], [1], [0, 0, 1, 1], [], []>} : vector<4x32xbf16>, vector<32x64xbf16>, vector<4x64xf32> -> vector<4x64xf32>
    %c1_98 = arith.constant 1 : index
    %c0_99 = arith.constant 0 : index
    %c0_100 = arith.constant 0 : index
    %335 = vector.load %arg12[%c1_98, %c0_99, %c0_100] : memref<2x1x64xf32, #tpu.memory_space<vmem>>, vector<1x1x64xf32>
    %336 = vector.shape_cast %335 : vector<1x1x64xf32> to vector<1x64xf32>
    %337 = vector.broadcast %336 : vector<1x64xf32> to vector<4x64xf32>
    %338 = arith.addf %334, %337 : vector<4x64xf32>
    %cst_101 = arith.constant 0.000000e+00 : f32
    %339 = vector.broadcast %cst_101 : f32 to vector<4x64xf32>
    %340 = arith.maximumf %338, %339 : vector<4x64xf32>
    %341 = arith.truncf %340 : vector<4x64xf32> to vector<4x64xbf16>
    %c1_102 = arith.constant 1 : index
    %c0_103 = arith.constant 0 : index
    %c0_104 = arith.constant 0 : index
    %342 = vector.load %arg13[%c1_102, %c0_103, %c0_104] : memref<2x64x32xbf16, #tpu.memory_space<vmem>>, vector<1x64x32xbf16>
    %343 = vector.shape_cast %342 : vector<1x64x32xbf16> to vector<64x32xbf16>
    %cst_105 = arith.constant dense<0.000000e+00> : vector<4x32xf32>
    %344 = tpu.matmul %341, %343, %cst_105 {dimension_numbers = #tpu.dot_dimension_numbers<[1], [0], [0], [1], [0, 0, 1, 1], [], []>} : vector<4x64xbf16>, vector<64x32xbf16>, vector<4x32xf32> -> vector<4x32xf32>
    %c1_106 = arith.constant 1 : index
    %c0_107 = arith.constant 0 : index
    %c0_108 = arith.constant 0 : index
    %345 = vector.load %arg14[%c1_106, %c0_107, %c0_108] : memref<2x1x32xf32, #tpu.memory_space<vmem>>, vector<1x1x32xf32>
    %346 = vector.shape_cast %345 : vector<1x1x32xf32> to vector<1x32xf32>
    %347 = vector.broadcast %346 : vector<1x32xf32> to vector<4x32xf32>
    %348 = arith.addf %344, %347 : vector<4x32xf32>
    %349 = arith.addf %330, %348 : vector<4x32xf32>
    %c1_109 = arith.constant 1 : index
    %c0_110 = arith.constant 0 : index
    %c0_111 = arith.constant 0 : index
    %350 = vector.load %arg15[%c1_109, %c0_110, %c0_111] : memref<2x1x32xf32, #tpu.memory_space<vmem>>, vector<1x1x32xf32>
    %351 = vector.shape_cast %350 : vector<1x1x32xf32> to vector<1x32xf32>
    %c1_112 = arith.constant 1 : index
    %c0_113 = arith.constant 0 : index
    %c0_114 = arith.constant 0 : index
    %352 = vector.load %arg16[%c1_112, %c0_113, %c0_114] : memref<2x1x32xf32, #tpu.memory_space<vmem>>, vector<1x1x32xf32>
    %353 = vector.shape_cast %352 : vector<1x1x32xf32> to vector<1x32xf32>
    %cst_115 = arith.constant dense<0.000000e+00> : vector<4xf32>
    %354 = vector.multi_reduction <add>, %349, %cst_115 [1] : vector<4x32xf32> to vector<4xf32>
    %355 = vector.shape_cast %354 : vector<4xf32> to vector<4x1xf32>
    %cst_116 = arith.constant 3.200000e+01 : f32
    %356 = vector.broadcast %cst_116 : f32 to vector<4x1xf32>
    %357 = arith.divf %355, %356 : vector<4x1xf32>
    %358 = vector.broadcast %357 : vector<4x1xf32> to vector<4x32xf32>
    %359 = arith.subf %349, %358 : vector<4x32xf32>
    %360 = arith.mulf %359, %359 : vector<4x32xf32>
    %cst_117 = arith.constant dense<0.000000e+00> : vector<4xf32>
    %361 = vector.multi_reduction <add>, %360, %cst_117 [1] : vector<4x32xf32> to vector<4xf32>
    %362 = vector.shape_cast %361 : vector<4xf32> to vector<4x1xf32>
    %cst_118 = arith.constant 3.200000e+01 : f32
    %363 = vector.broadcast %cst_118 : f32 to vector<4x1xf32>
    %364 = arith.divf %362, %363 : vector<4x1xf32>
    %365 = vector.broadcast %357 : vector<4x1xf32> to vector<4x32xf32>
    %366 = arith.subf %349, %365 : vector<4x32xf32>
    %cst_119 = arith.constant 9.99999974E-6 : f32
    %367 = vector.broadcast %cst_119 : f32 to vector<4x1xf32>
    %368 = arith.addf %364, %367 : vector<4x1xf32>
    %369 = math.rsqrt %368 : vector<4x1xf32>
    %370 = vector.broadcast %369 : vector<4x1xf32> to vector<4x32xf32>
    %371 = arith.mulf %366, %370 : vector<4x32xf32>
    %372 = vector.broadcast %351 : vector<1x32xf32> to vector<4x32xf32>
    %373 = arith.mulf %371, %372 : vector<4x32xf32>
    %374 = vector.broadcast %353 : vector<1x32xf32> to vector<4x32xf32>
    %375 = arith.addf %373, %374 : vector<4x32xf32>
    %376 = vector.extract_strided_slice %375 {offsets = [0, 0], sizes = [2, 32], strides = [1, 1]} : vector<4x32xf32> to vector<2x32xf32>
    %377 = arith.truncf %376 : vector<2x32xf32> to vector<2x32xbf16>
    %c0_120 = arith.constant 0 : index
    %c0_121 = arith.constant 0 : index
    %378 = vector.load %arg17[%c0_120, %c0_121] : memref<32x32xbf16, #tpu.memory_space<vmem>>, vector<32x32xbf16>
    %cst_122 = arith.constant dense<0.000000e+00> : vector<2x32xf32>
    %379 = tpu.matmul %377, %378, %cst_122 {dimension_numbers = #tpu.dot_dimension_numbers<[1], [0], [0], [1], [0, 0, 1, 1], [], []>} : vector<2x32xbf16>, vector<32x32xbf16>, vector<2x32xf32> -> vector<2x32xf32>
    %c0_123 = arith.constant 0 : index
    %c0_124 = arith.constant 0 : index
    %380 = vector.load %arg18[%c0_123, %c0_124] : memref<1x32xf32, #tpu.memory_space<vmem>>, vector<1x32xf32>
    %381 = vector.broadcast %380 : vector<1x32xf32> to vector<2x32xf32>
    %382 = arith.addf %379, %381 : vector<2x32xf32>
    %cst_125 = arith.constant 0.000000e+00 : f32
    %383 = vector.broadcast %cst_125 : f32 to vector<2x32xf32>
    %384 = arith.maximumf %382, %383 : vector<2x32xf32>
    %385 = arith.truncf %384 : vector<2x32xf32> to vector<2x32xbf16>
    %c0_126 = arith.constant 0 : index
    %c0_127 = arith.constant 0 : index
    %386 = vector.load %arg19[%c0_126, %c0_127] : memref<32x128xbf16, #tpu.memory_space<vmem>>, vector<32x128xbf16>
    %cst_128 = arith.constant dense<0.000000e+00> : vector<2x128xf32>
    %387 = tpu.matmul %385, %386, %cst_128 {dimension_numbers = #tpu.dot_dimension_numbers<[1], [0], [0], [1], [0, 0, 1, 1], [], []>} : vector<2x32xbf16>, vector<32x128xbf16>, vector<2x128xf32> -> vector<2x128xf32>
    %c0_129 = arith.constant 0 : index
    %c0_130 = arith.constant 0 : index
    %388 = vector.load %arg20[%c0_129, %c0_130] : memref<1x128xf32, #tpu.memory_space<vmem>>, vector<1x128xf32>
    %389 = vector.broadcast %388 : vector<1x128xf32> to vector<2x128xf32>
    %390 = arith.addf %387, %389 : vector<2x128xf32>
    %c0_131 = arith.constant 0 : index
    %c0_132 = arith.constant 0 : index
    %391 = vector.load %arg21[%c0_131, %c0_132] : memref<2x128xf32, #tpu.memory_space<vmem>>, vector<2x128xf32>
    tpu.vector_store %arg21[%c0_131, %c0_132], %390 {strides = array<i32>} : memref<2x128xf32, #tpu.memory_space<vmem>>, vector<2x128xf32>,
    return
  }
}

</mosaic_0001>

<llo_original>
// kernel: _forward_impl.3
$region0: #{_forward_impl.3}
  #allocation0 [shape = 'u32[]', space=smem, size = 0x4, offset = 0x4, fixed_abs, tag = 'smem constant byte address 0x4 - core index']
  #allocation1 [shape = 'u32[144,128]{1,0:T(1,128)}', space=vmem, size = 0x12000, scoped, tag = 'internal scratch']
  %s0 = inlined_call_operand.vmem [shape: f32[2,64], index: 0, kind: input, shape index: {}]
  %s1 = inlined_call_operand.hbm [shape: bf16[64,32], index: 1, kind: input, shape index: {}]
  %s2 = inlined_call_operand.vmem [shape: f32[1,32], index: 2, kind: input, shape index: {}, may-alias: {2,18}]
  %s3 = inlined_call_operand.vmem [shape: f32[2,1], index: 3, kind: input, shape index: {}]
  %s4 = inlined_call_operand.vmem [shape: f32[2,32], index: 4, kind: input, shape index: {}]
  %s5 = inlined_call_operand.vmem [shape: bf16[2,32,96], index: 5, kind: input, shape index: {}]
  %s6 = inlined_call_operand.vmem [shape: f32[2,1,96], index: 6, kind: input, shape index: {}]
  %s7 = inlined_call_operand.vmem [shape: bf16[2,32,32], index: 7, kind: input, shape index: {}]
  %s8 = inlined_call_operand.vmem [shape: f32[2,1,32], index: 8, kind: input, shape index: {}, may-alias: {8,10,14,16}]
  %s9 = inlined_call_operand.vmem [shape: f32[2,1,32], index: 9, kind: input, shape index: {}, may-alias: {9,15}]
  %s10 = inlined_call_operand.vmem [shape: f32[2,1,32], index: 10, kind: input, shape index: {}, may-alias: {8,10,14,16}]
  %s11 = inlined_call_operand.hbm [shape: bf16[2,32,64], index: 11, kind: input, shape index: {}]
  %s12 = inlined_call_operand.vmem [shape: f32[2,1,64], index: 12, kind: input, shape index: {}]
  %s13 = inlined_call_operand.vmem [shape: bf16[2,64,32], index: 13, kind: input, shape index: {}]
  %s14 = inlined_call_operand.vmem [shape: f32[2,1,32], index: 14, kind: input, shape index: {}, may-alias: {8,10,14,16}]
  %s15 = inlined_call_operand.vmem [shape: f32[2,1,32], index: 15, kind: input, shape index: {}, may-alias: {9,15}]
  %s16 = inlined_call_operand.vmem [shape: f32[2,1,32], index: 16, kind: input, shape index: {}, may-alias: {8,10,14,16}]
  %s17 = inlined_call_operand.hbm [shape: bf16[32,32], index: 17, kind: input, shape index: {}]
  %s18 = inlined_call_operand.vmem [shape: f32[1,32], index: 18, kind: input, shape index: {}, may-alias: {2,18}]
  %s19 = inlined_call_operand.hbm [shape: bf16[32,128], index: 19, kind: input, shape index: {}]
  %s20 = inlined_call_operand.vmem [shape: f32[1,128], index: 20, kind: input, shape index: {}]
  %s21 = inlined_call_operand.vmem [shape: f32[2,128], index: 21, kind: output, shape index: {}]
  %s22 = sld [smem:[#allocation0]]
  $region110: #{_forward_impl.3} parent=0
    _
  %s24 = ssub.s32 1, %s22
  %s25 = scalar_select 0, %s24, %s22
  $region1: #{_forward_impl.3} parent=0
    #allocation2 [shape = 'u8[16384]{0}', space=vmem, size = 0x4000, scoped, tag = 'input window, operand 1, single buffered']
    #allocation3 [shape = 's32[1]{0}', space=sflag, size = 0x4, scoped, tag = 'scoped memory for _forward_impl.3']
    #allocation4 [shape = 'u8[16384]{0}', space=vmem, size = 0x4000, scoped, tag = 'input window, operand 11, single buffered']
    #allocation5 [shape = 's32[1]{0}', space=sflag, size = 0x4, scoped, tag = 'scoped memory for _forward_impl.3']
    #allocation6 [shape = 'u8[8192]{0}', space=vmem, size = 0x2000, scoped, tag = 'input window, operand 17, single buffered']
    #allocation7 [shape = 'u8[8192]{0}', space=vmem, size = 0x2000, scoped, tag = 'input window, operand 19, single buffered']
    #allocation8 [shape = 's32[1]{0}', space=sflag, size = 0x4, scoped, tag = 'scoped memory for _forward_impl.3']
    %26 = vsyncpa [#allocation3], 0
    %27 = vsyncpa [#allocation5], 0
    %28 = vsyncpa [#allocation8], 0
    // Predicated region
    $region2: #{_forward_impl.3} parent=1 // pred_check
      _
    $region3: #{_forward_impl.3} parent=1 // pred_check_branch
      %30 = sbr.rel (0) target = $region5
    $region4: #{_forward_impl.3} parent=1 // pred_region
      _
    $region5: #{_forward_impl.3} parent=1 // pred_fallthru
      _
    // Predicated region
    $region6: #{_forward_impl.3} parent=1 // pred_check
      _
    $region7: #{_forward_impl.3} parent=1 // pred_check_branch
      %32 = sbr.rel (0) target = $region9
    $region8: #{_forward_impl.3} parent=1 // pred_region
      %s34 = ssub.s32 512, 512
      %35 = vsyncadd [#allocation3], %s34
      %s36 = sshll.u32 [#allocation2], 4
      %s37 = int_to_ptr.vmem [resolvable:$true] %s36
      %42 = dma.hbm_to_vmem [thread:$0]  %s1, 512, %s37, [#allocation3], 64, 64, 4
    $region9: #{_forward_impl.3} parent=1 // pred_fallthru
      _
    // Predicated region
    $region10: #{_forward_impl.3} parent=1 // pred_check
      _
    $region11: #{_forward_impl.3} parent=1 // pred_check_branch
      %44 = sbr.rel (0) target = $region13
    $region12: #{_forward_impl.3} parent=1 // pred_region
      _
    $region13: #{_forward_impl.3} parent=1 // pred_fallthru
      _
    // Predicated region
    $region14: #{_forward_impl.3} parent=1 // pred_check
      _
    $region15: #{_forward_impl.3} parent=1 // pred_check_branch
      %46 = sbr.rel (0) target = $region17
    $region16: #{_forward_impl.3} parent=1 // pred_region
      _
    $region17: #{_forward_impl.3} parent=1 // pred_fallthru
      _
    // Predicated region
    $region18: #{_forward_impl.3} parent=1 // pred_check
      _
    $region19: #{_forward_impl.3} parent=1 // pred_check_branch
      %48 = sbr.rel (0) target = $region21
    $region20: #{_forward_impl.3} parent=1 // pred_region
      _
    $region21: #{_forward_impl.3} parent=1 // pred_fallthru
      _
    // Predicated region
    $region22: #{_forward_impl.3} parent=1 // pred_check
      _
    $region23: #{_forward_impl.3} parent=1 // pred_check_branch
      %50 = sbr.rel (0) target = $region25
    $region24: #{_forward_impl.3} parent=1 // pred_region
      _
    $region25: #{_forward_impl.3} parent=1 // pred_fallthru
      _
    // Predicated region
    $region26: #{_forward_impl.3} parent=1 // pred_check
      _
    $region27: #{_forward_impl.3} parent=1 // pred_check_branch
      %52 = sbr.rel (0) target = $region29
    $region28: #{_forward_impl.3} parent=1 // pred_region
      _
    $region29: #{_forward_impl.3} parent=1 // pred_fallthru
      _
    // Predicated region
    $region30: #{_forward_impl.3} parent=1 // pred_check
      _
    $region31: #{_forward_impl.3} parent=1 // pred_check_branch
      %54 = sbr.rel (0) target = $region33
    $region32: #{_forward_impl.3} parent=1 // pred_region
      _
    $region33: #{_forward_impl.3} parent=1 // pred_fallthru
      _
    // Predicated region
    $region34: #{_forward_impl.3} parent=1 // pred_check
      _
    $region35: #{_forward_impl.3} parent=1 // pred_check_branch
      %56 = sbr.rel (0) target = $region37
    $region36: #{_forward_impl.3} parent=1 // pred_region
      _
    $region37: #{_forward_impl.3} parent=1 // pred_fallthru
      _
    // Predicated region
    $region38: #{_forward_impl.3} parent=1 // pred_check
      _
    $region39: #{_forward_impl.3} parent=1 // pred_check_branch
      %58 = sbr.rel (0) target = $region41
    $region40: #{_forward_impl.3} parent=1 // pred_region
      _
    $region41: #{_forward_impl.3} parent=1 // pred_fallthru
      _
    // Predicated region
    $region42: #{_forward_impl.3} parent=1 // pred_check
      _
    $region43: #{_forward_impl.3} parent=1 // pred_check_branch
      %60 = sbr.rel (0) target = $region45
    $region44: #{_forward_impl.3} parent=1 // pred_region
      _
    $region45: #{_forward_impl.3} parent=1 // pred_fallthru
      _
    // Predicated region
    $region46: #{_forward_impl.3} parent=1 // pred_check
      _
    $region47: #{_forward_impl.3} parent=1 // pred_check_branch
      %62 = sbr.rel (0) target = $region49
    $region48: #{_forward_impl.3} parent=1 // pred_region
      %s64 = ssub.s32 512, 512
      %65 = vsyncadd [#allocation5], %s64
      %s66 = sshll.u32 [#allocation4], 4
      %s67 = int_to_ptr.vmem [resolvable:$true] %s66
      %72 = dma.hbm_to_vmem [thread:$0]  %s11, 512, %s67, [#allocation5], 64, 64, 4
    $region49: #{_forward_impl.3} parent=1 // pred_fallthru
      _
    // Predicated region
    $region50: #{_forward_impl.3} parent=1 // pred_check
      _
    $region51: #{_forward_impl.3} parent=1 // pred_check_branch
      %74 = sbr.rel (0) target = $region53
    $region52: #{_forward_impl.3} parent=1 // pred_region
      _
    $region53: #{_forward_impl.3} parent=1 // pred_fallthru
      _
    // Predicated region
    $region54: #{_forward_impl.3} parent=1 // pred_check
      _
    $region55: #{_forward_impl.3} parent=1 // pred_check_branch
      %76 = sbr.rel (0) target = $region57
    $region56: #{_forward_impl.3} parent=1 // pred_region
      _
    $region57: #{_forward_impl.3} parent=1 // pred_fallthru
      _
    // Predicated region
    $region58: #{_forward_impl.3} parent=1 // pred_check
      _
    $region59: #{_forward_impl.3} parent=1 // pred_check_branch
      %78 = sbr.rel (0) target = $region61
    $region60: #{_forward_impl.3} parent=1 // pred_region
      _
    $region61: #{_forward_impl.3} parent=1 // pred_fallthru
      _
    // Predicated region
    $region62: #{_forward_impl.3} parent=1 // pred_check
      _
    $region63: #{_forward_impl.3} parent=1 // pred_check_branch
      %80 = sbr.rel (0) target = $region65
    $region64: #{_forward_impl.3} parent=1 // pred_region
      _
    $region65: #{_forward_impl.3} parent=1 // pred_fallthru
      _
    // Predicated region
    $region66: #{_forward_impl.3} parent=1 // pred_check
      _
    $region67: #{_forward_impl.3} parent=1 // pred_check_branch
      %82 = sbr.rel (0) target = $region69
    $region68: #{_forward_impl.3} parent=1 // pred_region
      _
    $region69: #{_forward_impl.3} parent=1 // pred_fallthru
      _
    // Predicated region
    $region70: #{_forward_impl.3} parent=1 // pred_check
      _
    $region71: #{_forward_impl.3} parent=1 // pred_check_branch
      %84 = sbr.rel (0) target = $region73
    $region72: #{_forward_impl.3} parent=1 // pred_region
      %s86 = ssub.s32 256, 256
      %87 = vsyncadd [#allocation5], %s86
      %s88 = sshll.u32 [#allocation6], 4
      %s89 = int_to_ptr.vmem [resolvable:$true] %s88
      %94 = dma.hbm_to_vmem [thread:$0]  %s17, 256, %s89, [#allocation5], 64, 64, 4
    $region73: #{_forward_impl.3} parent=1 // pred_fallthru
      _
    // Predicated region
    $region74: #{_forward_impl.3} parent=1 // pred_check
      _
    $region75: #{_forward_impl.3} parent=1 // pred_check_branch
      %96 = sbr.rel (0) target = $region77
    $region76: #{_forward_impl.3} parent=1 // pred_region
      _
    $region77: #{_forward_impl.3} parent=1 // pred_fallthru
      _
    // Predicated region
    $region78: #{_forward_impl.3} parent=1 // pred_check
      _
    $region79: #{_forward_impl.3} parent=1 // pred_check_branch
      %98 = sbr.rel (0) target = $region81
    $region80: #{_forward_impl.3} parent=1 // pred_region
      %s100 = ssub.s32 256, 256
      %101 = vsyncadd [#allocation8], %s100
      %s102 = sshll.u32 [#allocation7], 4
      %s103 = int_to_ptr.vmem [resolvable:$true] %s102
      %108 = dma.hbm_to_vmem [thread:$0]  %s19, 256, %s103, [#allocation8], 64, 64, 4
    $region81: #{_forward_impl.3} parent=1 // pred_fallthru
      _
    // Predicated region
    $region82: #{_forward_impl.3} parent=1 // pred_check
      _
    $region83: #{_forward_impl.3} parent=1 // pred_check_branch
      %110 = sbr.rel (0) target = $region85
    $region84: #{_forward_impl.3} parent=1 // pred_region
      _
    $region85: #{_forward_impl.3} parent=1 // pred_fallthru
      _
    // Predicated region
    $region86: #{_forward_impl.3} parent=1 // pred_check
      _
    $region87: #{_forward_impl.3} parent=1 // pred_check_branch
      %112 = sbr.rel (0) target = $region89
    $region88: #{_forward_impl.3} parent=1 // pred_region
      %113 = dma.done [#allocation3], 512
    $region89: #{_forward_impl.3} parent=1 // pred_fallthru
      _
    // Predicated region
    $region90: #{_forward_impl.3} parent=1 // pred_check
      _
    $region91: #{_forward_impl.3} parent=1 // pred_check_branch
      %115 = sbr.rel (0) target = $region93
    $region92: #{_forward_impl.3} parent=1 // pred_region
      %116 = dma.done [#allocation5], 512
    $region93: #{_forward_impl.3} parent=1 // pred_fallthru
      _
    // Predicated region
    $region94: #{_forward_impl.3} parent=1 // pred_check
      _
    $region95: #{_forward_impl.3} parent=1 // pred_check_branch
      %118 = sbr.rel (0) target = $region97
    $region96: #{_forward_impl.3} parent=1 // pred_region
      %119 = dma.done [#allocation5], 256
    $region97: #{_forward_impl.3} parent=1 // pred_fallthru
      _
    // Predicated region
    $region98: #{_forward_impl.3} parent=1 // pred_check
      _
    $region99: #{_forward_impl.3} parent=1 // pred_check_branch
      %121 = sbr.rel (0) target = $region101
    $region100: #{_forward_impl.3} parent=1 // pred_region
      %122 = dma.done [#allocation8], 256
    $region101: #{_forward_impl.3} parent=1 // pred_fallthru
      _
    %v124 = vld [vmem:[%s0] sm:$0x3]
    %v125 = vpack.c.bf16 %v124, %v124
    %v126 = vld [vmem:[#allocation2] sm:$0xf]
    %v127 = vld [vmem:[#allocation2 + $0x4] sm:$0xf]
    %v128 = vld [vmem:[#allocation2 + $0x8] sm:$0xf]
    %v129 = vld [vmem:[#allocation2 + $0xc] sm:$0xf]
    %v130 = vld [vmem:[#allocation2 + $0x10] sm:$0xf]
    %v131 = vld [vmem:[#allocation2 + $0x14] sm:$0xf]
    %v132 = vld [vmem:[#allocation2 + $0x18] sm:$0xf]
    %v133 = vld [vmem:[#allocation2 + $0x1c] sm:$0xf]
    %v134 = vld [vmem:[%s2] sm:$0x1]
    %v136 = vlaneseq
    %v137 = vshrl.u32 %v136, 7
    %v138 = vsub.s32 0, %v137
    %v139 = vrot.slane %v134, %v138
    %v149 = vunpack.c.l.b16 %v126
    %v150 = vunpack.c.l.b16 %v127
    %v151 = vunpack.c.l.b16 %v128
    %v152 = vunpack.c.l.b16 %v129
    %v153 = vunpack.c.l.b16 %v130
    %v154 = vunpack.c.l.b16 %v131
    %v155 = vunpack.c.l.b16 %v132
    %v156 = vunpack.c.l.b16 %v133
    %v157 = vpack.c.b16 %v150, %v149
    %v158 = vpack.c.b16 %v152, %v151
    %v159 = vpack.c.b16 %v154, %v153
    %v160 = vpack.c.b16 %v156, %v155
    %vm165 = vcmask 523264
    %v167 = vsel %vm165, %v125, 0
    %169 = vmatprep.subr.bf16.mxu0 0
    %170 = vmatpush1.bf16.msra.mxu0 0
    %171 = vmatprep.subr.bf16.mxu0 0
    %172 = vmatpush1.bf16.msra.mxu0 0
    %173 = vmatprep.subr.bf16.mxu0 0
    %174 = vmatpush1.bf16.msra.mxu0 0
    %175 = vmatprep.subr.bf16.mxu0 0
    %176 = vmatpush1.bf16.msra.mxu0 0
    %177 = vmatprep.subr.bf16.mxu0 0
    %178 = vmatpush1.bf16.msra.mxu0 %v160
    %179 = vmatprep.subr.bf16.mxu0 0
    %180 = vmatpush1.bf16.msra.mxu0 %v159
    %181 = vmatprep.subr.bf16.mxu0 0
    %182 = vmatpush1.bf16.msra.mxu0 %v158
    %183 = vmatprep.subr.bf16.mxu0 0
    %184 = vmatpush1.bf16.msra.mxu0 %v157
    %185 = vmatprep.subr.bf16.mxu0 0
    %186 = vmatpush2.bf16.msra.mxu0 0
    %187 = vmatprep.subr.bf16.mxu0 0
    %188 = vmatpush2.bf16.msra.mxu0 0
    %189 = vmatprep.subr.bf16.mxu0 0
    %190 = vmatpush2.bf16.msra.mxu0 0
    %191 = vmatprep.subr.bf16.mxu0 0
    %192 = vmatpush2.bf16.msra.mxu0 0
    %193 = vmatprep.subr.bf16.mxu0 0
    %194 = vmatpush2.bf16.msra.mxu0 0
    %195 = vmatprep.subr.bf16.mxu0 0
    %196 = vmatpush2.bf16.msra.mxu0 0
    %197 = vmatprep.subr.bf16.mxu0 0
    %198 = vmatpush2.bf16.msra.mxu0 0
    %199 = vmatprep.subr.bf16.mxu0 0
    %200 = vmatpush2.bf16.msra.mxu0 0
    %201 = vmatprep.mubr.bf16.mxu0 0
    %202 = vmatmul.mubr.bf16.gmra.mxu0 %v167
    %v203 = vpop.f32.mrf.mxu0
    %v204 = vadd.f32 %v139, %v203
    %v205 = vpop.f32.mrf.mxu0
    %v206 = vpop.f32.mrf.mxu0
    %v207 = vpop.f32.mrf.mxu0
    %208 = vdwg.mxu0
    %v209 = vld [vmem:[%s3] sm:$0x3]
    %211 = vset.pattern.permute.xlu0 0
    %212 = vperm.xlu0 %211, %v209
    %v213 = vpop.permute.xlu0 %212
    %v215 = vmul.f32 %v204, %v213
    %v216 = vld [vmem:[%s4] sm:$0x3]
    %v217 = vlaneseq
    %v218 = vshrl.u32 %v217, 7
    %v219 = vsub.s32 0, %v218
    %v220 = vrot.slane %v216, %v219
    %v221 = vlaneseq
    %v222 = vshrl.u32 %v221, 7
    %v223 = vsub.s32 1, %v222
    %v224 = vrot.slane %v216, %v223
    %v225 = vadd.f32 %v215, %v224
    %v227 = vrot.slane %v225, 6
    %vm229 = vcmask 1041408
    %v230 = vsel %vm229, %v220, %v227
    %v231 = vpack.c.bf16 %v230, %v230
    %v232 = vld [vmem:[%s5] sm:$0xf]
    %v233 = vld [vmem:[%s5 + $0x4] sm:$0xf]
    %v234 = vld [vmem:[%s5 + $0x8] sm:$0xf]
    %v235 = vld [vmem:[%s5 + $0xc] sm:$0xf]
    %v236 = vld [vmem:[%s6] sm:$0x1]
    %v238 = vlaneseq
    %v239 = vshrl.u32 %v238, 7
    %v240 = vsub.s32 0, %v239
    %v241 = vrot.slane %v236, %v240
    %v247 = vunpack.c.l.b16 %v232
    %v248 = vunpack.c.l.b16 %v233
    %v249 = vunpack.c.l.b16 %v234
    %v250 = vunpack.c.l.b16 %v235
    %v251 = vpack.c.b16 %v248, %v247
    %v252 = vpack.c.b16 %v250, %v249
    %vm255 = vcmask 261120
    %v257 = vsel %vm255, %v231, 0
    %259 = vmatprep.subr.bf16.mxu0 0
    %260 = vmatpush1.bf16.msra.mxu0 0
    %261 = vmatprep.subr.bf16.mxu0 0
    %262 = vmatpush1.bf16.msra.mxu0 0
    %263 = vmatprep.subr.bf16.mxu0 0
    %264 = vmatpush1.bf16.msra.mxu0 0
    %265 = vmatprep.subr.bf16.mxu0 0
    %266 = vmatpush1.bf16.msra.mxu0 0
    %267 = vmatprep.subr.bf16.mxu0 0
    %268 = vmatpush1.bf16.msra.mxu0 0
    %269 = vmatprep.subr.bf16.mxu0 0
    %270 = vmatpush1.bf16.msra.mxu0 0
    %271 = vmatprep.subr.bf16.mxu0 0
    %272 = vmatpush1.bf16.msra.mxu0 %v252
    %273 = vmatprep.subr.bf16.mxu0 0
    %274 = vmatpush1.bf16.msra.mxu0 %v251
    %275 = vmatprep.subr.bf16.mxu0 0
    %276 = vmatpush2.bf16.msra.mxu0 0
    %277 = vmatprep.subr.bf16.mxu0 0
    %278 = vmatpush2.bf16.msra.mxu0 0
    %279 = vmatprep.subr.bf16.mxu0 0
    %280 = vmatpush2.bf16.msra.mxu0 0
    %281 = vmatprep.subr.bf16.mxu0 0
    %282 = vmatpush2.bf16.msra.mxu0 0
    %283 = vmatprep.subr.bf16.mxu0 0
    %284 = vmatpush2.bf16.msra.mxu0 0
    %285 = vmatprep.subr.bf16.mxu0 0
    %286 = vmatpush2.bf16.msra.mxu0 0
    %287 = vmatprep.subr.bf16.mxu0 0
    %288 = vmatpush2.bf16.msra.mxu0 0
    %289 = vmatprep.subr.bf16.mxu0 0
    %290 = vmatpush2.bf16.msra.mxu0 0
    %291 = vmatprep.mubr.bf16.mxu0 0
    %292 = vmatmul.mubr.bf16.gmra.mxu0 %v257
    %v293 = vpop.f32.mrf.mxu0
    %v294 = vadd.f32 %v241, %v293
    %v295 = vpop.f32.mrf.mxu0
    %v296 = vpop.f32.mrf.mxu0
    %v297 = vpop.f32.mrf.mxu0
    %298 = vdwg.mxu0
    %v299 = vpack.c.bf16 %v294, %v294
    %301 = vrot.lane.b32.xlu0 %v299, 120
    %v302 = vpop.permute.xlu0 %301
    %303 = vrot.lane.b32.xlu0 %v299, 112
    %v304 = vpop.permute.xlu0 %303
    %305 = vrot.lane.b32.xlu0 %v299, 104
    %v306 = vpop.permute.xlu0 %305
    %v307 = vrot.slane %v299, 1
    %308 = vrot.lane.b32.xlu0 %v307, 120
    %v309 = vpop.permute.xlu0 %308
    %310 = vrot.lane.b32.xlu0 %v307, 112
    %v311 = vpop.permute.xlu0 %310
    %312 = vrot.lane.b32.xlu0 %v307, 104
    %v313 = vpop.permute.xlu0 %312
    %314 = vrot.lane.b32.xlu0 %v299, 96
    %v315 = vpop.permute.xlu0 %314
    %vm316 = vcmask 64512
    %v318 = vsel %vm316, %v299, 0
    %v321 = vsel %vm316, %v315, 0
    %323 = vmatprep.subr.bf16.mxu0 0
    %324 = vmatpush1.bf16.xpose.msra.mxu0 0
    %325 = vmatprep.subr.bf16.mxu0 0
    %326 = vmatpush1.bf16.xpose.msra.mxu0 0
    %327 = vmatprep.subr.bf16.mxu0 0
    %328 = vmatpush1.bf16.xpose.msra.mxu0 0
    %329 = vmatprep.subr.bf16.mxu0 0
    %330 = vmatpush1.bf16.xpose.msra.mxu0 0
    %331 = vmatprep.subr.bf16.mxu0 0
    %332 = vmatpush1.bf16.xpose.msra.mxu0 0
    %333 = vmatprep.subr.bf16.mxu0 0
    %334 = vmatpush1.bf16.xpose.msra.mxu0 0
    %335 = vmatprep.subr.bf16.mxu0 0
    %336 = vmatpush1.bf16.xpose.msra.mxu0 0
    %337 = vmatprep.subr.bf16.mxu0 0
    %338 = vmatpush1.bf16.xpose.msra.mxu0 %v321
    %339 = vmatprep.subr.bf16.mxu0 0
    %340 = vmatpush2.bf16.xpose.msra.mxu0 0
    %341 = vmatprep.subr.bf16.mxu0 0
    %342 = vmatpush2.bf16.xpose.msra.mxu0 0
    %343 = vmatprep.subr.bf16.mxu0 0
    %344 = vmatpush2.bf16.xpose.msra.mxu0 0
    %345 = vmatprep.subr.bf16.mxu0 0
    %346 = vmatpush2.bf16.xpose.msra.mxu0 0
    %347 = vmatprep.subr.bf16.mxu0 0
    %348 = vmatpush2.bf16.xpose.msra.mxu0 0
    %349 = vmatprep.subr.bf16.mxu0 0
    %350 = vmatpush2.bf16.xpose.msra.mxu0 0
    %351 = vmatprep.subr.bf16.mxu0 0
    %352 = vmatpush2.bf16.xpose.msra.mxu0 0
    %353 = vmatprep.subr.bf16.mxu0 0
    %354 = vmatpush2.bf16.xpose.msra.mxu0 0
    %355 = vmatprep.mubr.bf16.mxu0 0
    %356 = vmatmul.mubr.bf16.gmra.mxu0 %v318
    %v357 = vpop.f32.mrf.mxu0
    %v358 = vadd.f32 0.0, %v357
    %v359 = vpop.f32.mrf.mxu0
    %v360 = vpop.f32.mrf.mxu0
    %v361 = vpop.f32.mrf.mxu0
    %362 = vdwg.mxu0
    %363 = vrot.lane.b32.xlu0 %v302, 96
    %v364 = vpop.permute.xlu0 %363
    %v366 = vsel %vm316, %v302, 0
    %v369 = vsel %vm316, %v364, 0
    %371 = vmatprep.subr.bf16.mxu0 0
    %372 = vmatpush1.bf16.xpose.msra.mxu0 0
    %373 = vmatprep.subr.bf16.mxu0 0
    %374 = vmatpush1.bf16.xpose.msra.mxu0 0
    %375 = vmatprep.subr.bf16.mxu0 0
    %376 = vmatpush1.bf16.xpose.msra.mxu0 0
    %377 = vmatprep.subr.bf16.mxu0 0
    %378 = vmatpush1.bf16.xpose.msra.mxu0 0
    %379 = vmatprep.subr.bf16.mxu0 0
    %380 = vmatpush1.bf16.xpose.msra.mxu0 0
    %381 = vmatprep.subr.bf16.mxu0 0
    %382 = vmatpush1.bf16.xpose.msra.mxu0 0
    %383 = vmatprep.subr.bf16.mxu0 0
    %384 = vmatpush1.bf16.xpose.msra.mxu0 0
    %385 = vmatprep.subr.bf16.mxu0 0
    %386 = vmatpush1.bf16.xpose.msra.mxu0 %v369
    %387 = vmatprep.subr.bf16.mxu0 0
    %388 = vmatpush2.bf16.xpose.msra.mxu0 0
    %389 = vmatprep.subr.bf16.mxu0 0
    %390 = vmatpush2.bf16.xpose.msra.mxu0 0
    %391 = vmatprep.subr.bf16.mxu0 0
    %392 = vmatpush2.bf16.xpose.msra.mxu0 0
    %393 = vmatprep.subr.bf16.mxu0 0
    %394 = vmatpush2.bf16.xpose.msra.mxu0 0
    %395 = vmatprep.subr.bf16.mxu0 0
    %396 = vmatpush2.bf16.xpose.msra.mxu0 0
    %397 = vmatprep.subr.bf16.mxu0 0
    %398 = vmatpush2.bf16.xpose.msra.mxu0 0
    %399 = vmatprep.subr.bf16.mxu0 0
    %400 = vmatpush2.bf16.xpose.msra.mxu0 0
    %401 = vmatprep.subr.bf16.mxu0 0
    %402 = vmatpush2.bf16.xpose.msra.mxu0 0
    %403 = vmatprep.mubr.bf16.mxu0 0
    %404 = vmatmul.mubr.bf16.gmra.mxu0 %v366
    %v405 = vpop.f32.mrf.mxu0
    %v406 = vadd.f32 0.0, %v405
    %v407 = vpop.f32.mrf.mxu0
    %v408 = vpop.f32.mrf.mxu0
    %v409 = vpop.f32.mrf.mxu0
    %410 = vdwg.mxu0
    %411 = vrot.lane.b32.xlu0 %v304, 96
    %v412 = vpop.permute.xlu0 %411
    %v414 = vsel %vm316, %v304, 0
    %v417 = vsel %vm316, %v412, 0
    %419 = vmatprep.subr.bf16.mxu0 0
    %420 = vmatpush1.bf16.xpose.msra.mxu0 0
    %421 = vmatprep.subr.bf16.mxu0 0
    %422 = vmatpush1.bf16.xpose.msra.mxu0 0
    %423 = vmatprep.subr.bf16.mxu0 0
    %424 = vmatpush1.bf16.xpose.msra.mxu0 0
    %425 = vmatprep.subr.bf16.mxu0 0
    %426 = vmatpush1.bf16.xpose.msra.mxu0 0
    %427 = vmatprep.subr.bf16.mxu0 0
    %428 = vmatpush1.bf16.xpose.msra.mxu0 0
    %429 = vmatprep.subr.bf16.mxu0 0
    %430 = vmatpush1.bf16.xpose.msra.mxu0 0
    %431 = vmatprep.subr.bf16.mxu0 0
    %432 = vmatpush1.bf16.xpose.msra.mxu0 0
    %433 = vmatprep.subr.bf16.mxu0 0
    %434 = vmatpush1.bf16.xpose.msra.mxu0 %v417
    %435 = vmatprep.subr.bf16.mxu0 0
    %436 = vmatpush2.bf16.xpose.msra.mxu0 0
    %437 = vmatprep.subr.bf16.mxu0 0
    %438 = vmatpush2.bf16.xpose.msra.mxu0 0
    %439 = vmatprep.subr.bf16.mxu0 0
    %440 = vmatpush2.bf16.xpose.msra.mxu0 0
    %441 = vmatprep.subr.bf16.mxu0 0
    %442 = vmatpush2.bf16.xpose.msra.mxu0 0
    %443 = vmatprep.subr.bf16.mxu0 0
    %444 = vmatpush2.bf16.xpose.msra.mxu0 0
    %445 = vmatprep.subr.bf16.mxu0 0
    %446 = vmatpush2.bf16.xpose.msra.mxu0 0
    %447 = vmatprep.subr.bf16.mxu0 0
    %448 = vmatpush2.bf16.xpose.msra.mxu0 0
    %449 = vmatprep.subr.bf16.mxu0 0
    %450 = vmatpush2.bf16.xpose.msra.mxu0 0
    %451 = vmatprep.mubr.bf16.mxu0 0
    %452 = vmatmul.mubr.bf16.gmra.mxu0 %v414
    %v453 = vpop.f32.mrf.mxu0
    %v454 = vadd.f32 0.0, %v453
    %v455 = vpop.f32.mrf.mxu0
    %v456 = vpop.f32.mrf.mxu0
    %v457 = vpop.f32.mrf.mxu0
    %458 = vdwg.mxu0
    %459 = vrot.lane.b32.xlu0 %v306, 96
    %v460 = vpop.permute.xlu0 %459
    %v462 = vsel %vm316, %v306, 0
    %v465 = vsel %vm316, %v460, 0
    %467 = vmatprep.subr.bf16.mxu0 0
    %468 = vmatpush1.bf16.xpose.msra.mxu0 0
    %469 = vmatprep.subr.bf16.mxu0 0
    %470 = vmatpush1.bf16.xpose.msra.mxu0 0
    %471 = vmatprep.subr.bf16.mxu0 0
    %472 = vmatpush1.bf16.xpose.msra.mxu0 0
    %473 = vmatprep.subr.bf16.mxu0 0
    %474 = vmatpush1.bf16.xpose.msra.mxu0 0
    %475 = vmatprep.subr.bf16.mxu0 0
    %476 = vmatpush1.bf16.xpose.msra.mxu0 0
    %477 = vmatprep.subr.bf16.mxu0 0
    %478 = vmatpush1.bf16.xpose.msra.mxu0 0
    %479 = vmatprep.subr.bf16.mxu0 0
    %480 = vmatpush1.bf16.xpose.msra.mxu0 0
    %481 = vmatprep.subr.bf16.mxu0 0
    %482 = vmatpush1.bf16.xpose.msra.mxu0 %v465
    %483 = vmatprep.subr.bf16.mxu0 0
    %484 = vmatpush2.bf16.xpose.msra.mxu0 0
    %485 = vmatprep.subr.bf16.mxu0 0
    %486 = vmatpush2.bf16.xpose.msra.mxu0 0
    %487 = vmatprep.subr.bf16.mxu0 0
    %488 = vmatpush2.bf16.xpose.msra.mxu0 0
    %489 = vmatprep.subr.bf16.mxu0 0
    %490 = vmatpush2.bf16.xpose.msra.mxu0 0
    %491 = vmatprep.subr.bf16.mxu0 0
    %492 = vmatpush2.bf16.xpose.msra.mxu0 0
    %493 = vmatprep.subr.bf16.mxu0 0
    %494 = vmatpush2.bf16.xpose.msra.mxu0 0
    %495 = vmatprep.subr.bf16.mxu0 0
    %496 = vmatpush2.bf16.xpose.msra.mxu0 0
    %497 = vmatprep.subr.bf16.mxu0 0
    %498 = vmatpush2.bf16.xpose.msra.mxu0 0
    %499 = vmatprep.mubr.bf16.mxu0 0
    %500 = vmatmul.mubr.bf16.gmra.mxu0 %v462
    %v501 = vpop.f32.mrf.mxu0
    %v502 = vadd.f32 0.0, %v501
    %v503 = vpop.f32.mrf.mxu0
    %v504 = vpop.f32.mrf.mxu0
    %v505 = vpop.f32.mrf.mxu0
    %506 = vdwg.mxu0
    %507 = vrot.lane.b32.xlu0 %v307, 96
    %v508 = vpop.permute.xlu0 %507
    %v510 = vsel %vm316, %v307, 0
    %v513 = vsel %vm316, %v508, 0
    %515 = vmatprep.subr.bf16.mxu0 0
    %516 = vmatpush1.bf16.xpose.msra.mxu0 0
    %517 = vmatprep.subr.bf16.mxu0 0
    %518 = vmatpush1.bf16.xpose.msra.mxu0 0
    %519 = vmatprep.subr.bf16.mxu0 0
    %520 = vmatpush1.bf16.xpose.msra.mxu0 0
    %521 = vmatprep.subr.bf16.mxu0 0
    %522 = vmatpush1.bf16.xpose.msra.mxu0 0
    %523 = vmatprep.subr.bf16.mxu0 0
    %524 = vmatpush1.bf16.xpose.msra.mxu0 0
    %525 = vmatprep.subr.bf16.mxu0 0
    %526 = vmatpush1.bf16.xpose.msra.mxu0 0
    %527 = vmatprep.subr.bf16.mxu0 0
    %528 = vmatpush1.bf16.xpose.msra.mxu0 0
    %529 = vmatprep.subr.bf16.mxu0 0
    %530 = vmatpush1.bf16.xpose.msra.mxu0 %v513
    %531 = vmatprep.subr.bf16.mxu0 0
    %532 = vmatpush2.bf16.xpose.msra.mxu0 0
    %533 = vmatprep.subr.bf16.mxu0 0
    %534 = vmatpush2.bf16.xpose.msra.mxu0 0
    %535 = vmatprep.subr.bf16.mxu0 0
    %536 = vmatpush2.bf16.xpose.msra.mxu0 0
    %537 = vmatprep.subr.bf16.mxu0 0
    %538 = vmatpush2.bf16.xpose.msra.mxu0 0
    %539 = vmatprep.subr.bf16.mxu0 0
    %540 = vmatpush2.bf16.xpose.msra.mxu0 0
    %541 = vmatprep.subr.bf16.mxu0 0
    %542 = vmatpush2.bf16.xpose.msra.mxu0 0
    %543 = vmatprep.subr.bf16.mxu0 0
    %544 = vmatpush2.bf16.xpose.msra.mxu0 0
    %545 = vmatprep.subr.bf16.mxu0 0
    %546 = vmatpush2.bf16.xpose.msra.mxu0 0
    %547 = vmatprep.mubr.bf16.mxu0 0
    %548 = vmatmul.mubr.bf16.gmra.mxu0 %v510
    %v549 = vpop.f32.mrf.mxu0
    %v550 = vadd.f32 0.0, %v549
    %v551 = vpop.f32.mrf.mxu0
    %v552 = vpop.f32.mrf.mxu0
    %v553 = vpop.f32.mrf.mxu0
    %554 = vdwg.mxu0
    %555 = vrot.lane.b32.xlu0 %v309, 96
    %v556 = vpop.permute.xlu0 %555
    %v558 = vsel %vm316, %v309, 0
    %v561 = vsel %vm316, %v556, 0
    %563 = vmatprep.subr.bf16.mxu0 0
    %564 = vmatpush1.bf16.xpose.msra.mxu0 0
    %565 = vmatprep.subr.bf16.mxu0 0
    %566 = vmatpush1.bf16.xpose.msra.mxu0 0
    %567 = vmatprep.subr.bf16.mxu0 0
    %568 = vmatpush1.bf16.xpose.msra.mxu0 0
    %569 = vmatprep.subr.bf16.mxu0 0
    %570 = vmatpush1.bf16.xpose.msra.mxu0 0
    %571 = vmatprep.subr.bf16.mxu0 0
    %572 = vmatpush1.bf16.xpose.msra.mxu0 0
    %573 = vmatprep.subr.bf16.mxu0 0
    %574 = vmatpush1.bf16.xpose.msra.mxu0 0
    %575 = vmatprep.subr.bf16.mxu0 0
    %576 = vmatpush1.bf16.xpose.msra.mxu0 0
    %577 = vmatprep.subr.bf16.mxu0 0
    %578 = vmatpush1.bf16.xpose.msra.mxu0 %v561
    %579 = vmatprep.subr.bf16.mxu0 0
    %580 = vmatpush2.bf16.xpose.msra.mxu0 0
    %581 = vmatprep.subr.bf16.mxu0 0
    %582 = vmatpush2.bf16.xpose.msra.mxu0 0
    %583 = vmatprep.subr.bf16.mxu0 0
    %584 = vmatpush2.bf16.xpose.msra.mxu0 0
    %585 = vmatprep.subr.bf16.mxu0 0
    %586 = vmatpush2.bf16.xpose.msra.mxu0 0
    %587 = vmatprep.subr.bf16.mxu0 0
    %588 = vmatpush2.bf16.xpose.msra.mxu0 0
    %589 = vmatprep.subr.bf16.mxu0 0
    %590 = vmatpush2.bf16.xpose.msra.mxu0 0
    %591 = vmatprep.subr.bf16.mxu0 0
    %592 = vmatpush2.bf16.xpose.msra.mxu0 0
    %593 = vmatprep.subr.bf16.mxu0 0
    %594 = vmatpush2.bf16.xpose.msra.mxu0 0
    %595 = vmatprep.mubr.bf16.mxu0 0
    %596 = vmatmul.mubr.bf16.gmra.mxu0 %v558
    %v597 = vpop.f32.mrf.mxu0
    %v598 = vadd.f32 0.0, %v597
    %v599 = vpop.f32.mrf.mxu0
    %v600 = vpop.f32.mrf.mxu0
    %v601 = vpop.f32.mrf.mxu0
    %602 = vdwg.mxu0
    %603 = vrot.lane.b32.xlu0 %v311, 96
    %v604 = vpop.permute.xlu0 %603
    %v606 = vsel %vm316, %v311, 0
    %v609 = vsel %vm316, %v604, 0
    %611 = vmatprep.subr.bf16.mxu0 0
    %612 = vmatpush1.bf16.xpose.msra.mxu0 0
    %613 = vmatprep.subr.bf16.mxu0 0
    %614 = vmatpush1.bf16.xpose.msra.mxu0 0
    %615 = vmatprep.subr.bf16.mxu0 0
    %616 = vmatpush1.bf16.xpose.msra.mxu0 0
    %617 = vmatprep.subr.bf16.mxu0 0
    %618 = vmatpush1.bf16.xpose.msra.mxu0 0
    %619 = vmatprep.subr.bf16.mxu0 0
    %620 = vmatpush1.bf16.xpose.msra.mxu0 0
    %621 = vmatprep.subr.bf16.mxu0 0
    %622 = vmatpush1.bf16.xpose.msra.mxu0 0
    %623 = vmatprep.subr.bf16.mxu0 0
    %624 = vmatpush1.bf16.xpose.msra.mxu0 0
    %625 = vmatprep.subr.bf16.mxu0 0
    %626 = vmatpush1.bf16.xpose.msra.mxu0 %v609
    %627 = vmatprep.subr.bf16.mxu0 0
    %628 = vmatpush2.bf16.xpose.msra.mxu0 0
    %629 = vmatprep.subr.bf16.mxu0 0
    %630 = vmatpush2.bf16.xpose.msra.mxu0 0
    %631 = vmatprep.subr.bf16.mxu0 0
    %632 = vmatpush2.bf16.xpose.msra.mxu0 0
    %633 = vmatprep.subr.bf16.mxu0 0
    %634 = vmatpush2.bf16.xpose.msra.mxu0 0
    %635 = vmatprep.subr.bf16.mxu0 0
    %636 = vmatpush2.bf16.xpose.msra.mxu0 0
    %637 = vmatprep.subr.bf16.mxu0 0
    %638 = vmatpush2.bf16.xpose.msra.mxu0 0
    %639 = vmatprep.subr.bf16.mxu0 0
    %640 = vmatpush2.bf16.xpose.msra.mxu0 0
    %641 = vmatprep.subr.bf16.mxu0 0
    %642 = vmatpush2.bf16.xpose.msra.mxu0 0
    %643 = vmatprep.mubr.bf16.mxu0 0
    %644 = vmatmul.mubr.bf16.gmra.mxu0 %v606
    %v645 = vpop.f32.mrf.mxu0
    %v646 = vadd.f32 0.0, %v645
    %v647 = vpop.f32.mrf.mxu0
    %v648 = vpop.f32.mrf.mxu0
    %v649 = vpop.f32.mrf.mxu0
    %650 = vdwg.mxu0
    %651 = vrot.lane.b32.xlu0 %v313, 96
    %v652 = vpop.permute.xlu0 %651
    %v654 = vsel %vm316, %v313, 0
    %v657 = vsel %vm316, %v652, 0
    %659 = vmatprep.subr.bf16.mxu0 0
    %660 = vmatpush1.bf16.xpose.msra.mxu0 0
    %661 = vmatprep.subr.bf16.mxu0 0
    %662 = vmatpush1.bf16.xpose.msra.mxu0 0
    %663 = vmatprep.subr.bf16.mxu0 0
    %664 = vmatpush1.bf16.xpose.msra.mxu0 0
    %665 = vmatprep.subr.bf16.mxu0 0
    %666 = vmatpush1.bf16.xpose.msra.mxu0 0
    %667 = vmatprep.subr.bf16.mxu0 0
    %668 = vmatpush1.bf16.xpose.msra.mxu0 0
    %669 = vmatprep.subr.bf16.mxu0 0
    %670 = vmatpush1.bf16.xpose.msra.mxu0 0
    %671 = vmatprep.subr.bf16.mxu0 0
    %672 = vmatpush1.bf16.xpose.msra.mxu0 0
    %673 = vmatprep.subr.bf16.mxu0 0
    %674 = vmatpush1.bf16.xpose.msra.mxu0 %v657
    %675 = vmatprep.subr.bf16.mxu0 0
    %676 = vmatpush2.bf16.xpose.msra.mxu0 0
    %677 = vmatprep.subr.bf16.mxu0 0
    %678 = vmatpush2.bf16.xpose.msra.mxu0 0
    %679 = vmatprep.subr.bf16.mxu0 0
    %680 = vmatpush2.bf16.xpose.msra.mxu0 0
    %681 = vmatprep.subr.bf16.mxu0 0
    %682 = vmatpush2.bf16.xpose.msra.mxu0 0
    %683 = vmatprep.subr.bf16.mxu0 0
    %684 = vmatpush2.bf16.xpose.msra.mxu0 0
    %685 = vmatprep.subr.bf16.mxu0 0
    %686 = vmatpush2.bf16.xpose.msra.mxu0 0
    %687 = vmatprep.subr.bf16.mxu0 0
    %688 = vmatpush2.bf16.xpose.msra.mxu0 0
    %689 = vmatprep.subr.bf16.mxu0 0
    %690 = vmatpush2.bf16.xpose.msra.mxu0 0
    %691 = vmatprep.mubr.bf16.mxu0 0
    %692 = vmatmul.mubr.bf16.gmra.mxu0 %v654
    %v693 = vpop.f32.mrf.mxu0
    %v694 = vadd.f32 0.0, %v693
    %v695 = vpop.f32.mrf.mxu0
    %v696 = vpop.f32.mrf.mxu0
    %v697 = vpop.f32.mrf.mxu0
    %698 = vdwg.mxu0
    %v699 = vmul.f32 %v358, 0.35355338
    %v700 = vmul.f32 %v406, 0.35355338
    %v701 = vmul.f32 %v454, 0.35355338
    %v702 = vmul.f32 %v502, 0.35355338
    %v703 = vmul.f32 %v550, 0.35355338
    %v704 = vmul.f32 %v598, 0.35355338
    %v705 = vmul.f32 %v646, 0.35355338
    %v706 = vmul.f32 %v694, 0.35355338
    %vm707 = vcmask 9216
    %v708 = vsel %vm707, %v699, -inf
    %709 = vmax.xlane.f32.xlu0 %v708
    %v710 = vpop.xlane.xlu0 %709
    %v711 = vsel %vm707, %v700, -inf
    %712 = vmax.xlane.f32.xlu0 %v711
    %v713 = vpop.xlane.xlu0 %712
    %v714 = vsel %vm707, %v701, -inf
    %715 = vmax.xlane.f32.xlu0 %v714
    %v716 = vpop.xlane.xlu0 %715
    %v717 = vsel %vm707, %v702, -inf
    %718 = vmax.xlane.f32.xlu0 %v717
    %v719 = vpop.xlane.xlu0 %718
    %v720 = vsel %vm707, %v703, -inf
    %721 = vmax.xlane.f32.xlu0 %v720
    %v722 = vpop.xlane.xlu0 %721
    %v723 = vsel %vm707, %v704, -inf
    %724 = vmax.xlane.f32.xlu0 %v723
    %v725 = vpop.xlane.xlu0 %724
    %v726 = vsel %vm707, %v705, -inf
    %727 = vmax.xlane.f32.xlu0 %v726
    %v728 = vpop.xlane.xlu0 %727
    %v729 = vsel %vm707, %v706, -inf
    %730 = vmax.xlane.f32.xlu0 %v729
    %v731 = vpop.xlane.xlu0 %730
    %v732 = vsub.f32 %v699, %v710
    %v733 = vsub.f32 %v700, %v713
    %v734 = vsub.f32 %v701, %v716
    %v735 = vsub.f32 %v702, %v719
    %v736 = vsub.f32 %v703, %v722
    %v737 = vsub.f32 %v704, %v725
    %v738 = vsub.f32 %v705, %v728
    %v739 = vsub.f32 %v706, %v731
    %v740 = vmul.f32 %v732, 1.442695
    %v741 = vpow.pop %v740
    %v742 = vmul.f32 %v733, 1.442695
    %v743 = vpow.pop %v742
    %v744 = vmul.f32 %v734, 1.442695
    %v745 = vpow.pop %v744
    %v746 = vmul.f32 %v735, 1.442695
    %v747 = vpow.pop %v746
    %v748 = vmul.f32 %v736, 1.442695
    %v749 = vpow.pop %v748
    %v750 = vmul.f32 %v737, 1.442695
    %v751 = vpow.pop %v750
    %v752 = vmul.f32 %v738, 1.442695
    %v753 = vpow.pop %v752
    %v754 = vmul.f32 %v739, 1.442695
    %v755 = vpow.pop %v754
    %v756 = vsel %vm707, %v741, 0.0
    %757 = vadd.xlane.f32.xlu0 %v756
    %v758 = vpop.xlane.xlu0 %757
    %v759 = vsel %vm707, %v743, 0.0
    %760 = vadd.xlane.f32.xlu0 %v759
    %v761 = vpop.xlane.xlu0 %760
    %v762 = vsel %vm707, %v745, 0.0
    %763 = vadd.xlane.f32.xlu0 %v762
    %v764 = vpop.xlane.xlu0 %763
    %v765 = vsel %vm707, %v747, 0.0
    %766 = vadd.xlane.f32.xlu0 %v765
    %v767 = vpop.xlane.xlu0 %766
    %v768 = vsel %vm707, %v749, 0.0
    %769 = vadd.xlane.f32.xlu0 %v768
    %v770 = vpop.xlane.xlu0 %769
    %v771 = vsel %vm707, %v751, 0.0
    %772 = vadd.xlane.f32.xlu0 %v771
    %v773 = vpop.xlane.xlu0 %772
    %v774 = vsel %vm707, %v753, 0.0
    %775 = vadd.xlane.f32.xlu0 %v774
    %v776 = vpop.xlane.xlu0 %775
    %v777 = vsel %vm707, %v755, 0.0
    %778 = vadd.xlane.f32.xlu0 %v777
    %v779 = vpop.xlane.xlu0 %778
    %v780 = vrcp.pop %v758
    %v781 = vrcp.pop %v761
    %v782 = vrcp.pop %v764
    %v783 = vrcp.pop %v767
    %v784 = vrcp.pop %v770
    %v785 = vrcp.pop %v773
    %v786 = vrcp.pop %v776
    %v787 = vrcp.pop %v779
    %v788 = vmul.f32 %v741, %v780
    %v789 = vmul.f32 %v743, %v781
    %v790 = vmul.f32 %v745, %v782
    %v791 = vmul.f32 %v747, %v783
    %v792 = vmul.f32 %v749, %v784
    %v793 = vmul.f32 %v751, %v785
    %v794 = vmul.f32 %v753, %v786
    %v795 = vmul.f32 %v755, %v787
    %v796 = vpack.c.bf16 %v788, %v788
    %v797 = vpack.c.bf16 %v789, %v789
    %v798 = vpack.c.bf16 %v790, %v790
    %v799 = vpack.c.bf16 %v791, %v791
    %v800 = vpack.c.bf16 %v792, %v792
    %v801 = vpack.c.bf16 %v793, %v793
    %v802 = vpack.c.bf16 %v794, %v794
    %v803 = vpack.c.bf16 %v795, %v795
    %804 = vrot.lane.b32.xlu0 %v299, 64
    %v805 = vpop.permute.xlu0 %804
    %vm806 = vcmask 15360
    %v808 = vsel %vm806, %v796, 0
    %vm810 = vcmask 1040384
    %v812 = vsel %vm810, %v805, 0
    %814 = vmatprep.subr.bf16.mxu0 0
    %815 = vmatpush1.bf16.msra.mxu0 0
    %816 = vmatprep.subr.bf16.mxu0 0
    %817 = vmatpush1.bf16.msra.mxu0 0
    %818 = vmatprep.subr.bf16.mxu0 0
    %819 = vmatpush1.bf16.msra.mxu0 0
    %820 = vmatprep.subr.bf16.mxu0 0
    %821 = vmatpush1.bf16.msra.mxu0 0
    %822 = vmatprep.subr.bf16.mxu0 0
    %823 = vmatpush1.bf16.msra.mxu0 0
    %824 = vmatprep.subr.bf16.mxu0 0
    %825 = vmatpush1.bf16.msra.mxu0 0
    %826 = vmatprep.subr.bf16.mxu0 0
    %827 = vmatpush1.bf16.msra.mxu0 0
    %828 = vmatprep.subr.bf16.mxu0 0
    %829 = vmatpush1.bf16.msra.mxu0 %v812
    %830 = vmatprep.subr.bf16.mxu0 0
    %831 = vmatpush2.bf16.msra.mxu0 0
    %832 = vmatprep.subr.bf16.mxu0 0
    %833 = vmatpush2.bf16.msra.mxu0 0
    %834 = vmatprep.subr.bf16.mxu0 0
    %835 = vmatpush2.bf16.msra.mxu0 0
    %836 = vmatprep.subr.bf16.mxu0 0
    %837 = vmatpush2.bf16.msra.mxu0 0
    %838 = vmatprep.subr.bf16.mxu0 0
    %839 = vmatpush2.bf16.msra.mxu0 0
    %840 = vmatprep.subr.bf16.mxu0 0
    %841 = vmatpush2.bf16.msra.mxu0 0
    %842 = vmatprep.subr.bf16.mxu0 0
    %843 = vmatpush2.bf16.msra.mxu0 0
    %844 = vmatprep.subr.bf16.mxu0 0
    %845 = vmatpush2.bf16.msra.mxu0 0
    %846 = vmatprep.mubr.bf16.mxu0 0
    %847 = vmatmul.mubr.bf16.gmra.mxu0 %v808
    %v848 = vpop.f32.mrf.mxu0
    %v849 = vadd.f32 0.0, %v848
    %v850 = vpop.f32.mrf.mxu0
    %v851 = vpop.f32.mrf.mxu0
    %v852 = vpop.f32.mrf.mxu0
    %853 = vdwg.mxu0
    %854 = vrot.lane.b32.xlu0 %v302, 64
    %v855 = vpop.permute.xlu0 %854
    %v857 = vsel %vm806, %v797, 0
    %v860 = vsel %vm810, %v855, 0
    %862 = vmatprep.subr.bf16.mxu0 0
    %863 = vmatpush1.bf16.msra.mxu0 0
    %864 = vmatprep.subr.bf16.mxu0 0
    %865 = vmatpush1.bf16.msra.mxu0 0
    %866 = vmatprep.subr.bf16.mxu0 0
    %867 = vmatpush1.bf16.msra.mxu0 0
    %868 = vmatprep.subr.bf16.mxu0 0
    %869 = vmatpush1.bf16.msra.mxu0 0
    %870 = vmatprep.subr.bf16.mxu0 0
    %871 = vmatpush1.bf16.msra.mxu0 0
    %872 = vmatprep.subr.bf16.mxu0 0
    %873 = vmatpush1.bf16.msra.mxu0 0
    %874 = vmatprep.subr.bf16.mxu0 0
    %875 = vmatpush1.bf16.msra.mxu0 0
    %876 = vmatprep.subr.bf16.mxu0 0
    %877 = vmatpush1.bf16.msra.mxu0 %v860
    %878 = vmatprep.subr.bf16.mxu0 0
    %879 = vmatpush2.bf16.msra.mxu0 0
    %880 = vmatprep.subr.bf16.mxu0 0
    %881 = vmatpush2.bf16.msra.mxu0 0
    %882 = vmatprep.subr.bf16.mxu0 0
    %883 = vmatpush2.bf16.msra.mxu0 0
    %884 = vmatprep.subr.bf16.mxu0 0
    %885 = vmatpush2.bf16.msra.mxu0 0
    %886 = vmatprep.subr.bf16.mxu0 0
    %887 = vmatpush2.bf16.msra.mxu0 0
    %888 = vmatprep.subr.bf16.mxu0 0
    %889 = vmatpush2.bf16.msra.mxu0 0
    %890 = vmatprep.subr.bf16.mxu0 0
    %891 = vmatpush2.bf16.msra.mxu0 0
    %892 = vmatprep.subr.bf16.mxu0 0
    %893 = vmatpush2.bf16.msra.mxu0 0
    %894 = vmatprep.mubr.bf16.mxu0 0
    %895 = vmatmul.mubr.bf16.gmra.mxu0 %v857
    %v896 = vpop.f32.mrf.mxu0
    %v897 = vadd.f32 0.0, %v896
    %v898 = vpop.f32.mrf.mxu0
    %v899 = vpop.f32.mrf.mxu0
    %v900 = vpop.f32.mrf.mxu0
    %901 = vdwg.mxu0
    %902 = vrot.lane.b32.xlu0 %v304, 64
    %v903 = vpop.permute.xlu0 %902
    %v905 = vsel %vm806, %v798, 0
    %v908 = vsel %vm810, %v903, 0
    %910 = vmatprep.subr.bf16.mxu0 0
    %911 = vmatpush1.bf16.msra.mxu0 0
    %912 = vmatprep.subr.bf16.mxu0 0
    %913 = vmatpush1.bf16.msra.mxu0 0
    %914 = vmatprep.subr.bf16.mxu0 0
    %915 = vmatpush1.bf16.msra.mxu0 0
    %916 = vmatprep.subr.bf16.mxu0 0
    %917 = vmatpush1.bf16.msra.mxu0 0
    %918 = vmatprep.subr.bf16.mxu0 0
    %919 = vmatpush1.bf16.msra.mxu0 0
    %920 = vmatprep.subr.bf16.mxu0 0
    %921 = vmatpush1.bf16.msra.mxu0 0
    %922 = vmatprep.subr.bf16.mxu0 0
    %923 = vmatpush1.bf16.msra.mxu0 0
    %924 = vmatprep.subr.bf16.mxu0 0
    %925 = vmatpush1.bf16.msra.mxu0 %v908
    %926 = vmatprep.subr.bf16.mxu0 0
    %927 = vmatpush2.bf16.msra.mxu0 0
    %928 = vmatprep.subr.bf16.mxu0 0
    %929 = vmatpush2.bf16.msra.mxu0 0
    %930 = vmatprep.subr.bf16.mxu0 0
    %931 = vmatpush2.bf16.msra.mxu0 0
    %932 = vmatprep.subr.bf16.mxu0 0
    %933 = vmatpush2.bf16.msra.mxu0 0
    %934 = vmatprep.subr.bf16.mxu0 0
    %935 = vmatpush2.bf16.msra.mxu0 0
    %936 = vmatprep.subr.bf16.mxu0 0
    %937 = vmatpush2.bf16.msra.mxu0 0
    %938 = vmatprep.subr.bf16.mxu0 0
    %939 = vmatpush2.bf16.msra.mxu0 0
    %940 = vmatprep.subr.bf16.mxu0 0
    %941 = vmatpush2.bf16.msra.mxu0 0
    %942 = vmatprep.mubr.bf16.mxu0 0
    %943 = vmatmul.mubr.bf16.gmra.mxu0 %v905
    %v944 = vpop.f32.mrf.mxu0
    %v945 = vadd.f32 0.0, %v944
    %v946 = vpop.f32.mrf.mxu0
    %v947 = vpop.f32.mrf.mxu0
    %v948 = vpop.f32.mrf.mxu0
    %949 = vdwg.mxu0
    %950 = vrot.lane.b32.xlu0 %v306, 64
    %v951 = vpop.permute.xlu0 %950
    %v953 = vsel %vm806, %v799, 0
    %v956 = vsel %vm810, %v951, 0
    %958 = vmatprep.subr.bf16.mxu0 0
    %959 = vmatpush1.bf16.msra.mxu0 0
    %960 = vmatprep.subr.bf16.mxu0 0
    %961 = vmatpush1.bf16.msra.mxu0 0
    %962 = vmatprep.subr.bf16.mxu0 0
    %963 = vmatpush1.bf16.msra.mxu0 0
    %964 = vmatprep.subr.bf16.mxu0 0
    %965 = vmatpush1.bf16.msra.mxu0 0
    %966 = vmatprep.subr.bf16.mxu0 0
    %967 = vmatpush1.bf16.msra.mxu0 0
    %968 = vmatprep.subr.bf16.mxu0 0
    %969 = vmatpush1.bf16.msra.mxu0 0
    %970 = vmatprep.subr.bf16.mxu0 0
    %971 = vmatpush1.bf16.msra.mxu0 0
    %972 = vmatprep.subr.bf16.mxu0 0
    %973 = vmatpush1.bf16.msra.mxu0 %v956
    %974 = vmatprep.subr.bf16.mxu0 0
    %975 = vmatpush2.bf16.msra.mxu0 0
    %976 = vmatprep.subr.bf16.mxu0 0
    %977 = vmatpush2.bf16.msra.mxu0 0
    %978 = vmatprep.subr.bf16.mxu0 0
    %979 = vmatpush2.bf16.msra.mxu0 0
    %980 = vmatprep.subr.bf16.mxu0 0
    %981 = vmatpush2.bf16.msra.mxu0 0
    %982 = vmatprep.subr.bf16.mxu0 0
    %983 = vmatpush2.bf16.msra.mxu0 0
    %984 = vmatprep.subr.bf16.mxu0 0
    %985 = vmatpush2.bf16.msra.mxu0 0
    %986 = vmatprep.subr.bf16.mxu0 0
    %987 = vmatpush2.bf16.msra.mxu0 0
    %988 = vmatprep.subr.bf16.mxu0 0
    %989 = vmatpush2.bf16.msra.mxu0 0
    %990 = vmatprep.mubr.bf16.mxu0 0
    %991 = vmatmul.mubr.bf16.gmra.mxu0 %v953
    %v992 = vpop.f32.mrf.mxu0
    %v993 = vadd.f32 0.0, %v992
    %v994 = vpop.f32.mrf.mxu0
    %v995 = vpop.f32.mrf.mxu0
    %v996 = vpop.f32.mrf.mxu0
    %997 = vdwg.mxu0
    %998 = vrot.lane.b32.xlu0 %v307, 64
    %v999 = vpop.permute.xlu0 %998
    %v1001 = vsel %vm806, %v800, 0
    %v1004 = vsel %vm810, %v999, 0
    %1006 = vmatprep.subr.bf16.mxu0 0
    %1007 = vmatpush1.bf16.msra.mxu0 0
    %1008 = vmatprep.subr.bf16.mxu0 0
    %1009 = vmatpush1.bf16.msra.mxu0 0
    %1010 = vmatprep.subr.bf16.mxu0 0
    %1011 = vmatpush1.bf16.msra.mxu0 0
    %1012 = vmatprep.subr.bf16.mxu0 0
    %1013 = vmatpush1.bf16.msra.mxu0 0
    %1014 = vmatprep.subr.bf16.mxu0 0
    %1015 = vmatpush1.bf16.msra.mxu0 0
    %1016 = vmatprep.subr.bf16.mxu0 0
    %1017 = vmatpush1.bf16.msra.mxu0 0
    %1018 = vmatprep.subr.bf16.mxu0 0
    %1019 = vmatpush1.bf16.msra.mxu0 0
    %1020 = vmatprep.subr.bf16.mxu0 0
    %1021 = vmatpush1.bf16.msra.mxu0 %v1004
    %1022 = vmatprep.subr.bf16.mxu0 0
    %1023 = vmatpush2.bf16.msra.mxu0 0
    %1024 = vmatprep.subr.bf16.mxu0 0
    %1025 = vmatpush2.bf16.msra.mxu0 0
    %1026 = vmatprep.subr.bf16.mxu0 0
    %1027 = vmatpush2.bf16.msra.mxu0 0
    %1028 = vmatprep.subr.bf16.mxu0 0
    %1029 = vmatpush2.bf16.msra.mxu0 0
    %1030 = vmatprep.subr.bf16.mxu0 0
    %1031 = vmatpush2.bf16.msra.mxu0 0
    %1032 = vmatprep.subr.bf16.mxu0 0
    %1033 = vmatpush2.bf16.msra.mxu0 0
    %1034 = vmatprep.subr.bf16.mxu0 0
    %1035 = vmatpush2.bf16.msra.mxu0 0
    %1036 = vmatprep.subr.bf16.mxu0 0
    %1037 = vmatpush2.bf16.msra.mxu0 0
    %1038 = vmatprep.mubr.bf16.mxu0 0
    %1039 = vmatmul.mubr.bf16.gmra.mxu0 %v1001
    %v1040 = vpop.f32.mrf.mxu0
    %v1041 = vadd.f32 0.0, %v1040
    %v1042 = vpop.f32.mrf.mxu0
    %v1043 = vpop.f32.mrf.mxu0
    %v1044 = vpop.f32.mrf.mxu0
    %1045 = vdwg.mxu0
    %1046 = vrot.lane.b32.xlu0 %v309, 64
    %v1047 = vpop.permute.xlu0 %1046
    %v1049 = vsel %vm806, %v801, 0
    %v1052 = vsel %vm810, %v1047, 0
    %1054 = vmatprep.subr.bf16.mxu0 0
    %1055 = vmatpush1.bf16.msra.mxu0 0
    %1056 = vmatprep.subr.bf16.mxu0 0
    %1057 = vmatpush1.bf16.msra.mxu0 0
    %1058 = vmatprep.subr.bf16.mxu0 0
    %1059 = vmatpush1.bf16.msra.mxu0 0
    %1060 = vmatprep.subr.bf16.mxu0 0
    %1061 = vmatpush1.bf16.msra.mxu0 0
    %1062 = vmatprep.subr.bf16.mxu0 0
    %1063 = vmatpush1.bf16.msra.mxu0 0
    %1064 = vmatprep.subr.bf16.mxu0 0
    %1065 = vmatpush1.bf16.msra.mxu0 0
    %1066 = vmatprep.subr.bf16.mxu0 0
    %1067 = vmatpush1.bf16.msra.mxu0 0
    %1068 = vmatprep.subr.bf16.mxu0 0
    %1069 = vmatpush1.bf16.msra.mxu0 %v1052
    %1070 = vmatprep.subr.bf16.mxu0 0
    %1071 = vmatpush2.bf16.msra.mxu0 0
    %1072 = vmatprep.subr.bf16.mxu0 0
    %1073 = vmatpush2.bf16.msra.mxu0 0
    %1074 = vmatprep.subr.bf16.mxu0 0
    %1075 = vmatpush2.bf16.msra.mxu0 0
    %1076 = vmatprep.subr.bf16.mxu0 0
    %1077 = vmatpush2.bf16.msra.mxu0 0
    %1078 = vmatprep.subr.bf16.mxu0 0
    %1079 = vmatpush2.bf16.msra.mxu0 0
    %1080 = vmatprep.subr.bf16.mxu0 0
    %1081 = vmatpush2.bf16.msra.mxu0 0
    %1082 = vmatprep.subr.bf16.mxu0 0
    %1083 = vmatpush2.bf16.msra.mxu0 0
    %1084 = vmatprep.subr.bf16.mxu0 0
    %1085 = vmatpush2.bf16.msra.mxu0 0
    %1086 = vmatprep.mubr.bf16.mxu0 0
    %1087 = vmatmul.mubr.bf16.gmra.mxu0 %v1049
    %v1088 = vpop.f32.mrf.mxu0
    %v1089 = vadd.f32 0.0, %v1088
    %v1090 = vpop.f32.mrf.mxu0
    %v1091 = vpop.f32.mrf.mxu0
    %v1092 = vpop.f32.mrf.mxu0
    %1093 = vdwg.mxu0
    %1094 = vrot.lane.b32.xlu0 %v311, 64
    %v1095 = vpop.permute.xlu0 %1094
    %v1097 = vsel %vm806, %v802, 0
    %v1100 = vsel %vm810, %v1095, 0
    %1102 = vmatprep.subr.bf16.mxu0 0
    %1103 = vmatpush1.bf16.msra.mxu0 0
    %1104 = vmatprep.subr.bf16.mxu0 0
    %1105 = vmatpush1.bf16.msra.mxu0 0
    %1106 = vmatprep.subr.bf16.mxu0 0
    %1107 = vmatpush1.bf16.msra.mxu0 0
    %1108 = vmatprep.subr.bf16.mxu0 0
    %1109 = vmatpush1.bf16.msra.mxu0 0
    %1110 = vmatprep.subr.bf16.mxu0 0
    %1111 = vmatpush1.bf16.msra.mxu0 0
    %1112 = vmatprep.subr.bf16.mxu0 0
    %1113 = vmatpush1.bf16.msra.mxu0 0
    %1114 = vmatprep.subr.bf16.mxu0 0
    %1115 = vmatpush1.bf16.msra.mxu0 0
    %1116 = vmatprep.subr.bf16.mxu0 0
    %1117 = vmatpush1.bf16.msra.mxu0 %v1100
    %1118 = vmatprep.subr.bf16.mxu0 0
    %1119 = vmatpush2.bf16.msra.mxu0 0
    %1120 = vmatprep.subr.bf16.mxu0 0
    %1121 = vmatpush2.bf16.msra.mxu0 0
    %1122 = vmatprep.subr.bf16.mxu0 0
    %1123 = vmatpush2.bf16.msra.mxu0 0
    %1124 = vmatprep.subr.bf16.mxu0 0
    %1125 = vmatpush2.bf16.msra.mxu0 0
    %1126 = vmatprep.subr.bf16.mxu0 0
    %1127 = vmatpush2.bf16.msra.mxu0 0
    %1128 = vmatprep.subr.bf16.mxu0 0
    %1129 = vmatpush2.bf16.msra.mxu0 0
    %1130 = vmatprep.subr.bf16.mxu0 0
    %1131 = vmatpush2.bf16.msra.mxu0 0
    %1132 = vmatprep.subr.bf16.mxu0 0
    %1133 = vmatpush2.bf16.msra.mxu0 0
    %1134 = vmatprep.mubr.bf16.mxu0 0
    %1135 = vmatmul.mubr.bf16.gmra.mxu0 %v1097
    %v1136 = vpop.f32.mrf.mxu0
    %v1137 = vadd.f32 0.0, %v1136
    %v1138 = vpop.f32.mrf.mxu0
    %v1139 = vpop.f32.mrf.mxu0
    %v1140 = vpop.f32.mrf.mxu0
    %1141 = vdwg.mxu0
    %1142 = vrot.lane.b32.xlu0 %v313, 64
    %v1143 = vpop.permute.xlu0 %1142
    %v1145 = vsel %vm806, %v803, 0
    %v1148 = vsel %vm810, %v1143, 0
    %1150 = vmatprep.subr.bf16.mxu0 0
    %1151 = vmatpush1.bf16.msra.mxu0 0
    %1152 = vmatprep.subr.bf16.mxu0 0
    %1153 = vmatpush1.bf16.msra.mxu0 0
    %1154 = vmatprep.subr.bf16.mxu0 0
    %1155 = vmatpush1.bf16.msra.mxu0 0
    %1156 = vmatprep.subr.bf16.mxu0 0
    %1157 = vmatpush1.bf16.msra.mxu0 0
    %1158 = vmatprep.subr.bf16.mxu0 0
    %1159 = vmatpush1.bf16.msra.mxu0 0
    %1160 = vmatprep.subr.bf16.mxu0 0
    %1161 = vmatpush1.bf16.msra.mxu0 0
    %1162 = vmatprep.subr.bf16.mxu0 0
    %1163 = vmatpush1.bf16.msra.mxu0 0
    %1164 = vmatprep.subr.bf16.mxu0 0
    %1165 = vmatpush1.bf16.msra.mxu0 %v1148
    %1166 = vmatprep.subr.bf16.mxu0 0
    %1167 = vmatpush2.bf16.msra.mxu0 0
    %1168 = vmatprep.subr.bf16.mxu0 0
    %1169 = vmatpush2.bf16.msra.mxu0 0
    %1170 = vmatprep.subr.bf16.mxu0 0
    %1171 = vmatpush2.bf16.msra.mxu0 0
    %1172 = vmatprep.subr.bf16.mxu0 0
    %1173 = vmatpush2.bf16.msra.mxu0 0
    %1174 = vmatprep.subr.bf16.mxu0 0
    %1175 = vmatpush2.bf16.msra.mxu0 0
    %1176 = vmatprep.subr.bf16.mxu0 0
    %1177 = vmatpush2.bf16.msra.mxu0 0
    %1178 = vmatprep.subr.bf16.mxu0 0
    %1179 = vmatpush2.bf16.msra.mxu0 0
    %1180 = vmatprep.subr.bf16.mxu0 0
    %1181 = vmatpush2.bf16.msra.mxu0 0
    %1182 = vmatprep.mubr.bf16.mxu0 0
    %1183 = vmatmul.mubr.bf16.gmra.mxu0 %v1145
    %v1184 = vpop.f32.mrf.mxu0
    %v1185 = vadd.f32 0.0, %v1184
    %v1186 = vpop.f32.mrf.mxu0
    %v1187 = vpop.f32.mrf.mxu0
    %v1188 = vpop.f32.mrf.mxu0
    %1189 = vdwg.mxu0
    %1191 = vrot.lane.b32.xlu0 %v897, 8
    %v1192 = vpop.permute.xlu0 %1191
    %1195 = vrot.lane.b32.xlu0 %v945, 16
    %v1196 = vpop.permute.xlu0 %1195
    %1199 = vrot.lane.b32.xlu0 %v993, 24
    %v1200 = vpop.permute.xlu0 %1199
    %v1202 = vsel %vm316, %v849, %v1192
    %vm1203 = vcmask 130048
    %v1204 = vsel %vm1203, %v1202, %v1196
    %vm1205 = vcmask 195584
    %v1206 = vsel %vm1205, %v1204, %v1200
    %1208 = vrot.lane.b32.xlu0 %v1089, 8
    %v1209 = vpop.permute.xlu0 %1208
    %1212 = vrot.lane.b32.xlu0 %v1137, 16
    %v1213 = vpop.permute.xlu0 %1212
    %1216 = vrot.lane.b32.xlu0 %v1185, 24
    %v1217 = vpop.permute.xlu0 %1216
    %v1219 = vsel %vm316, %v1041, %v1209
    %v1220 = vsel %vm1203, %v1219, %v1213
    %v1221 = vsel %vm1205, %v1220, %v1217
    %v1223 = vrot.slane %v1221, 6
    %v1225 = vsel %vm229, %v1206, %v1223
    %v1226 = vpack.c.bf16 %v1225, %v1225
    %v1227 = vld [vmem:[%s7] sm:$0xf]
    %v1228 = vld [vmem:[%s7 + $0x4] sm:$0xf]
    %v1229 = vld [vmem:[%s7 + $0x8] sm:$0xf]
    %v1230 = vld [vmem:[%s7 + $0xc] sm:$0xf]
    %v1231 = vld [vmem:[%s8] sm:$0x1]
    %v1233 = vlaneseq
    %v1234 = vshrl.u32 %v1233, 7
    %v1235 = vsub.s32 0, %v1234
    %v1236 = vrot.slane %v1231, %v1235
    %v1242 = vunpack.c.l.b16 %v1227
    %v1243 = vunpack.c.l.b16 %v1228
    %v1244 = vunpack.c.l.b16 %v1229
    %v1245 = vunpack.c.l.b16 %v1230
    %v1246 = vpack.c.b16 %v1243, %v1242
    %v1247 = vpack.c.b16 %v1245, %v1244
    %v1251 = vsel %vm255, %v1226, 0
    %1253 = vmatprep.subr.bf16.mxu0 0
    %1254 = vmatpush1.bf16.msra.mxu0 0
    %1255 = vmatprep.subr.bf16.mxu0 0
    %1256 = vmatpush1.bf16.msra.mxu0 0
    %1257 = vmatprep.subr.bf16.mxu0 0
    %1258 = vmatpush1.bf16.msra.mxu0 0
    %1259 = vmatprep.subr.bf16.mxu0 0
    %1260 = vmatpush1.bf16.msra.mxu0 0
    %1261 = vmatprep.subr.bf16.mxu0 0
    %1262 = vmatpush1.bf16.msra.mxu0 0
    %1263 = vmatprep.subr.bf16.mxu0 0
    %1264 = vmatpush1.bf16.msra.mxu0 0
    %1265 = vmatprep.subr.bf16.mxu0 0
    %1266 = vmatpush1.bf16.msra.mxu0 %v1247
    %1267 = vmatprep.subr.bf16.mxu0 0
    %1268 = vmatpush1.bf16.msra.mxu0 %v1246
    %1269 = vmatprep.subr.bf16.mxu0 0
    %1270 = vmatpush2.bf16.msra.mxu0 0
    %1271 = vmatprep.subr.bf16.mxu0 0
    %1272 = vmatpush2.bf16.msra.mxu0 0
    %1273 = vmatprep.subr.bf16.mxu0 0
    %1274 = vmatpush2.bf16.msra.mxu0 0
    %1275 = vmatprep.subr.bf16.mxu0 0
    %1276 = vmatpush2.bf16.msra.mxu0 0
    %1277 = vmatprep.subr.bf16.mxu0 0
    %1278 = vmatpush2.bf16.msra.mxu0 0
    %1279 = vmatprep.subr.bf16.mxu0 0
    %1280 = vmatpush2.bf16.msra.mxu0 0
    %1281 = vmatprep.subr.bf16.mxu0 0
    %1282 = vmatpush2.bf16.msra.mxu0 0
    %1283 = vmatprep.subr.bf16.mxu0 0
    %1284 = vmatpush2.bf16.msra.mxu0 0
    %1285 = vmatprep.mubr.bf16.mxu0 0
    %1286 = vmatmul.mubr.bf16.gmra.mxu0 %v1251
    %v1287 = vpop.f32.mrf.mxu0
    %v1288 = vadd.f32 %v1236, %v1287
    %v1289 = vpop.f32.mrf.mxu0
    %v1290 = vpop.f32.mrf.mxu0
    %v1291 = vpop.f32.mrf.mxu0
    %1292 = vdwg.mxu0
    %v1293 = vadd.f32 %v230, %v1288
    %v1294 = vld [vmem:[%s9] sm:$0x1]
    %v1295 = vld [vmem:[%s10] sm:$0x1]
    %vm1296 = vcmask 257024
    %v1297 = vsel %vm1296, %v1293, 0.0
    %1298 = vadd.xlane.f32.xlu0 %v1297
    %v1299 = vpop.xlane.xlu0 %1298
    %v1300 = vrcp.pop 32.0
    %v1301 = vmul.f32 %v1299, %v1300
    %v1302 = vsub.f32 %v1293, %v1301
    %v1303 = vmul.f32 %v1302, %v1302
    %v1304 = vsel %vm1296, %v1303, 0.0
    %1305 = vadd.xlane.f32.xlu0 %v1304
    %v1306 = vpop.xlane.xlu0 %1305
    %v1307 = vmul.f32 %v1306, %v1300
    %v1308 = vadd.f32 %v1307, 1e-05
    %v1309 = vrsqrt.pop %v1308
    %v1310 = vmul.f32 %v1302, %v1309
    %v1312 = vlaneseq
    %v1313 = vshrl.u32 %v1312, 7
    %v1314 = vsub.s32 0, %v1313
    %v1315 = vrot.slane %v1294, %v1314
    %v1317 = vmul.f32 %v1310, %v1315
    %v1319 = vlaneseq
    %v1320 = vshrl.u32 %v1319, 7
    %v1321 = vsub.s32 0, %v1320
    %v1322 = vrot.slane %v1295, %v1321
    %v1324 = vadd.f32 %v1317, %v1322
    %v1325 = vpack.c.bf16 %v1324, %v1324
    %v1326 = vld [vmem:[#allocation4] sm:$0xf]
    %v1327 = vld [vmem:[#allocation4 + $0x4] sm:$0xf]
    %v1328 = vld [vmem:[#allocation4 + $0x8] sm:$0xf]
    %v1329 = vld [vmem:[#allocation4 + $0xc] sm:$0xf]
    %v1330 = vld [vmem:[%s12] sm:$0x1]
    %v1332 = vlaneseq
    %v1333 = vshrl.u32 %v1332, 7
    %v1334 = vsub.s32 0, %v1333
    %v1335 = vrot.slane %v1330, %v1334
    %v1341 = vunpack.c.l.b16 %v1326
    %v1342 = vunpack.c.l.b16 %v1327
    %v1343 = vunpack.c.l.b16 %v1328
    %v1344 = vunpack.c.l.b16 %v1329
    %v1345 = vpack.c.b16 %v1342, %v1341
    %v1346 = vpack.c.b16 %v1344, %v1343
    %v1350 = vsel %vm255, %v1325, 0
    %1352 = vmatprep.subr.bf16.mxu0 0
    %1353 = vmatpush1.bf16.msra.mxu0 0
    %1354 = vmatprep.subr.bf16.mxu0 0
    %1355 = vmatpush1.bf16.msra.mxu0 0
    %1356 = vmatprep.subr.bf16.mxu0 0
    %1357 = vmatpush1.bf16.msra.mxu0 0
    %1358 = vmatprep.subr.bf16.mxu0 0
    %1359 = vmatpush1.bf16.msra.mxu0 0
    %1360 = vmatprep.subr.bf16.mxu0 0
    %1361 = vmatpush1.bf16.msra.mxu0 0
    %1362 = vmatprep.subr.bf16.mxu0 0
    %1363 = vmatpush1.bf16.msra.mxu0 0
    %1364 = vmatprep.subr.bf16.mxu0 0
    %1365 = vmatpush1.bf16.msra.mxu0 %v1346
    %1366 = vmatprep.subr.bf16.mxu0 0
    %1367 = vmatpush1.bf16.msra.mxu0 %v1345
    %1368 = vmatprep.subr.bf16.mxu0 0
    %1369 = vmatpush2.bf16.msra.mxu0 0
    %1370 = vmatprep.subr.bf16.mxu0 0
    %1371 = vmatpush2.bf16.msra.mxu0 0
    %1372 = vmatprep.subr.bf16.mxu0 0
    %1373 = vmatpush2.bf16.msra.mxu0 0
    %1374 = vmatprep.subr.bf16.mxu0 0
    %1375 = vmatpush2.bf16.msra.mxu0 0
    %1376 = vmatprep.subr.bf16.mxu0 0
    %1377 = vmatpush2.bf16.msra.mxu0 0
    %1378 = vmatprep.subr.bf16.mxu0 0
    %1379 = vmatpush2.bf16.msra.mxu0 0
    %1380 = vmatprep.subr.bf16.mxu0 0
    %1381 = vmatpush2.bf16.msra.mxu0 0
    %1382 = vmatprep.subr.bf16.mxu0 0
    %1383 = vmatpush2.bf16.msra.mxu0 0
    %1384 = vmatprep.mubr.bf16.mxu0 0
    %1385 = vmatmul.mubr.bf16.gmra.mxu0 %v1350
    %v1386 = vpop.f32.mrf.mxu0
    %v1387 = vadd.f32 %v1335, %v1386
    %v1388 = vpop.f32.mrf.mxu0
    %v1389 = vpop.f32.mrf.mxu0
    %v1390 = vpop.f32.mrf.mxu0
    %1391 = vdwg.mxu0
    %v1392 = vmax.f32 %v1387, 0.0
    %v1393 = vpack.c.bf16 %v1392, %v1392
    %v1394 = vld [vmem:[%s13] sm:$0xf]
    %v1395 = vld [vmem:[%s13 + $0x4] sm:$0xf]
    %v1396 = vld [vmem:[%s13 + $0x8] sm:$0xf]
    %v1397 = vld [vmem:[%s13 + $0xc] sm:$0xf]
    %v1398 = vld [vmem:[%s13 + $0x10] sm:$0xf]
    %v1399 = vld [vmem:[%s13 + $0x14] sm:$0xf]
    %v1400 = vld [vmem:[%s13 + $0x18] sm:$0xf]
    %v1401 = vld [vmem:[%s13 + $0x1c] sm:$0xf]
    %v1402 = vld [vmem:[%s14] sm:$0x1]
    %v1404 = vlaneseq
    %v1405 = vshrl.u32 %v1404, 7
    %v1406 = vsub.s32 0, %v1405
    %v1407 = vrot.slane %v1402, %v1406
    %v1417 = vunpack.c.l.b16 %v1394
    %v1418 = vunpack.c.l.b16 %v1395
    %v1419 = vunpack.c.l.b16 %v1396
    %v1420 = vunpack.c.l.b16 %v1397
    %v1421 = vunpack.c.l.b16 %v1398
    %v1422 = vunpack.c.l.b16 %v1399
    %v1423 = vunpack.c.l.b16 %v1400
    %v1424 = vunpack.c.l.b16 %v1401
    %v1425 = vpack.c.b16 %v1418, %v1417
    %v1426 = vpack.c.b16 %v1420, %v1419
    %v1427 = vpack.c.b16 %v1422, %v1421
    %v1428 = vpack.c.b16 %v1424, %v1423
    %v1434 = vsel %vm165, %v1393, 0
    %1436 = vmatprep.subr.bf16.mxu0 0
    %1437 = vmatpush1.bf16.msra.mxu0 0
    %1438 = vmatprep.subr.bf16.mxu0 0
    %1439 = vmatpush1.bf16.msra.mxu0 0
    %1440 = vmatprep.subr.bf16.mxu0 0
    %1441 = vmatpush1.bf16.msra.mxu0 0
    %1442 = vmatprep.subr.bf16.mxu0 0
    %1443 = vmatpush1.bf16.msra.mxu0 0
    %1444 = vmatprep.subr.bf16.mxu0 0
    %1445 = vmatpush1.bf16.msra.mxu0 %v1428
    %1446 = vmatprep.subr.bf16.mxu0 0
    %1447 = vmatpush1.bf16.msra.mxu0 %v1427
    %1448 = vmatprep.subr.bf16.mxu0 0
    %1449 = vmatpush1.bf16.msra.mxu0 %v1426
    %1450 = vmatprep.subr.bf16.mxu0 0
    %1451 = vmatpush1.bf16.msra.mxu0 %v1425
    %1452 = vmatprep.subr.bf16.mxu0 0
    %1453 = vmatpush2.bf16.msra.mxu0 0
    %1454 = vmatprep.subr.bf16.mxu0 0
    %1455 = vmatpush2.bf16.msra.mxu0 0
    %1456 = vmatprep.subr.bf16.mxu0 0
    %1457 = vmatpush2.bf16.msra.mxu0 0
    %1458 = vmatprep.subr.bf16.mxu0 0
    %1459 = vmatpush2.bf16.msra.mxu0 0
    %1460 = vmatprep.subr.bf16.mxu0 0
    %1461 = vmatpush2.bf16.msra.mxu0 0
    %1462 = vmatprep.subr.bf16.mxu0 0
    %1463 = vmatpush2.bf16.msra.mxu0 0
    %1464 = vmatprep.subr.bf16.mxu0 0
    %1465 = vmatpush2.bf16.msra.mxu0 0
    %1466 = vmatprep.subr.bf16.mxu0 0
    %1467 = vmatpush2.bf16.msra.mxu0 0
    %1468 = vmatprep.mubr.bf16.mxu0 0
    %1469 = vmatmul.mubr.bf16.gmra.mxu0 %v1434
    %v1470 = vpop.f32.mrf.mxu0
    %v1471 = vadd.f32 %v1407, %v1470
    %v1472 = vpop.f32.mrf.mxu0
    %v1473 = vpop.f32.mrf.mxu0
    %v1474 = vpop.f32.mrf.mxu0
    %1475 = vdwg.mxu0
    %v1476 = vadd.f32 %v1324, %v1471
    %v1477 = vld [vmem:[%s15] sm:$0x1]
    %v1478 = vld [vmem:[%s16] sm:$0x1]
    %v1479 = vsel %vm1296, %v1476, 0.0
    %1480 = vadd.xlane.f32.xlu0 %v1479
    %v1481 = vpop.xlane.xlu0 %1480
    %v1482 = vmul.f32 %v1481, %v1300
    %v1483 = vsub.f32 %v1476, %v1482
    %v1484 = vmul.f32 %v1483, %v1483
    %v1485 = vsel %vm1296, %v1484, 0.0
    %1486 = vadd.xlane.f32.xlu0 %v1485
    %v1487 = vpop.xlane.xlu0 %1486
    %v1488 = vmul.f32 %v1487, %v1300
    %v1489 = vadd.f32 %v1488, 1e-05
    %v1490 = vrsqrt.pop %v1489
    %v1491 = vmul.f32 %v1483, %v1490
    %v1493 = vlaneseq
    %v1494 = vshrl.u32 %v1493, 7
    %v1495 = vsub.s32 0, %v1494
    %v1496 = vrot.slane %v1477, %v1495
    %v1498 = vmul.f32 %v1491, %v1496
    %v1500 = vlaneseq
    %v1501 = vshrl.u32 %v1500, 7
    %v1502 = vsub.s32 0, %v1501
    %v1503 = vrot.slane %v1478, %v1502
    %v1505 = vadd.f32 %v1498, %v1503
    %v1506 = vpack.c.bf16 %v1505, %v1505
    %s1507 = scalar_lea.vmem %s5, 16
    %v1508 = vld [vmem:[%s1507] sm:$0xf]
    %v1509 = vld [vmem:[%s1507 + $0x4] sm:$0xf]
    %v1510 = vld [vmem:[%s1507 + $0x8] sm:$0xf]
    %v1511 = vld [vmem:[%s1507 + $0xc] sm:$0xf]
    %s1512 = scalar_lea.vmem %s6, 1
    %v1513 = vld [vmem:[%s1512] sm:$0x1]
    %v1515 = vlaneseq
    %v1516 = vshrl.u32 %v1515, 7
    %v1517 = vsub.s32 0, %v1516
    %v1518 = vrot.slane %v1513, %v1517
    %v1524 = vunpack.c.l.b16 %v1508
    %v1525 = vunpack.c.l.b16 %v1509
    %v1526 = vunpack.c.l.b16 %v1510
    %v1527 = vunpack.c.l.b16 %v1511
    %v1528 = vpack.c.b16 %v1525, %v1524
    %v1529 = vpack.c.b16 %v1527, %v1526
    %v1533 = vsel %vm255, %v1506, 0
    %1535 = vmatprep.subr.bf16.mxu0 0
    %1536 = vmatpush1.bf16.msra.mxu0 0
    %1537 = vmatprep.subr.bf16.mxu0 0
    %1538 = vmatpush1.bf16.msra.mxu0 0
    %1539 = vmatprep.subr.bf16.mxu0 0
    %1540 = vmatpush1.bf16.msra.mxu0 0
    %1541 = vmatprep.subr.bf16.mxu0 0
    %1542 = vmatpush1.bf16.msra.mxu0 0
    %1543 = vmatprep.subr.bf16.mxu0 0
    %1544 = vmatpush1.bf16.msra.mxu0 0
    %1545 = vmatprep.subr.bf16.mxu0 0
    %1546 = vmatpush1.bf16.msra.mxu0 0
    %1547 = vmatprep.subr.bf16.mxu0 0
    %1548 = vmatpush1.bf16.msra.mxu0 %v1529
    %1549 = vmatprep.subr.bf16.mxu0 0
    %1550 = vmatpush1.bf16.msra.mxu0 %v1528
    %1551 = vmatprep.subr.bf16.mxu0 0
    %1552 = vmatpush2.bf16.msra.mxu0 0
    %1553 = vmatprep.subr.bf16.mxu0 0
    %1554 = vmatpush2.bf16.msra.mxu0 0
    %1555 = vmatprep.subr.bf16.mxu0 0
    %1556 = vmatpush2.bf16.msra.mxu0 0
    %1557 = vmatprep.subr.bf16.mxu0 0
    %1558 = vmatpush2.bf16.msra.mxu0 0
    %1559 = vmatprep.subr.bf16.mxu0 0
    %1560 = vmatpush2.bf16.msra.mxu0 0
    %1561 = vmatprep.subr.bf16.mxu0 0
    %1562 = vmatpush2.bf16.msra.mxu0 0
    %1563 = vmatprep.subr.bf16.mxu0 0
    %1564 = vmatpush2.bf16.msra.mxu0 0
    %1565 = vmatprep.subr.bf16.mxu0 0
    %1566 = vmatpush2.bf16.msra.mxu0 0
    %1567 = vmatprep.mubr.bf16.mxu0 0
    %1568 = vmatmul.mubr.bf16.gmra.mxu0 %v1533
    %v1569 = vpop.f32.mrf.mxu0
    %v1570 = vadd.f32 %v1518, %v1569
    %v1571 = vpop.f32.mrf.mxu0
    %v1572 = vpop.f32.mrf.mxu0
    %v1573 = vpop.f32.mrf.mxu0
    %1574 = vdwg.mxu0
    %v1575 = vpack.c.bf16 %v1570, %v1570
    %1577 = vrot.lane.b32.xlu0 %v1575, 120
    %v1578 = vpop.permute.xlu0 %1577
    %1579 = vrot.lane.b32.xlu0 %v1575, 112
    %v1580 = vpop.permute.xlu0 %1579
    %1581 = vrot.lane.b32.xlu0 %v1575, 104
    %v1582 = vpop.permute.xlu0 %1581
    %v1583 = vrot.slane %v1575, 1
    %1584 = vrot.lane.b32.xlu0 %v1583, 120
    %v1585 = vpop.permute.xlu0 %1584
    %1586 = vrot.lane.b32.xlu0 %v1583, 112
    %v1587 = vpop.permute.xlu0 %1586
    %1588 = vrot.lane.b32.xlu0 %v1583, 104
    %v1589 = vpop.permute.xlu0 %1588
    %1590 = vrot.lane.b32.xlu0 %v1575, 96
    %v1591 = vpop.permute.xlu0 %1590
    %v1593 = vsel %vm316, %v1575, 0
    %v1596 = vsel %vm316, %v1591, 0
    %1598 = vmatprep.subr.bf16.mxu0 0
    %1599 = vmatpush1.bf16.xpose.msra.mxu0 0
    %1600 = vmatprep.subr.bf16.mxu0 0
    %1601 = vmatpush1.bf16.xpose.msra.mxu0 0
    %1602 = vmatprep.subr.bf16.mxu0 0
    %1603 = vmatpush1.bf16.xpose.msra.mxu0 0
    %1604 = vmatprep.subr.bf16.mxu0 0
    %1605 = vmatpush1.bf16.xpose.msra.mxu0 0
    %1606 = vmatprep.subr.bf16.mxu0 0
    %1607 = vmatpush1.bf16.xpose.msra.mxu0 0
    %1608 = vmatprep.subr.bf16.mxu0 0
    %1609 = vmatpush1.bf16.xpose.msra.mxu0 0
    %1610 = vmatprep.subr.bf16.mxu0 0
    %1611 = vmatpush1.bf16.xpose.msra.mxu0 0
    %1612 = vmatprep.subr.bf16.mxu0 0
    %1613 = vmatpush1.bf16.xpose.msra.mxu0 %v1596
    %1614 = vmatprep.subr.bf16.mxu0 0
    %1615 = vmatpush2.bf16.xpose.msra.mxu0 0
    %1616 = vmatprep.subr.bf16.mxu0 0
    %1617 = vmatpush2.bf16.xpose.msra.mxu0 0
    %1618 = vmatprep.subr.bf16.mxu0 0
    %1619 = vmatpush2.bf16.xpose.msra.mxu0 0
    %1620 = vmatprep.subr.bf16.mxu0 0
    %1621 = vmatpush2.bf16.xpose.msra.mxu0 0
    %1622 = vmatprep.subr.bf16.mxu0 0
    %1623 = vmatpush2.bf16.xpose.msra.mxu0 0
    %1624 = vmatprep.subr.bf16.mxu0 0
    %1625 = vmatpush2.bf16.xpose.msra.mxu0 0
    %1626 = vmatprep.subr.bf16.mxu0 0
    %1627 = vmatpush2.bf16.xpose.msra.mxu0 0
    %1628 = vmatprep.subr.bf16.mxu0 0
    %1629 = vmatpush2.bf16.xpose.msra.mxu0 0
    %1630 = vmatprep.mubr.bf16.mxu0 0
    %1631 = vmatmul.mubr.bf16.gmra.mxu0 %v1593
    %v1632 = vpop.f32.mrf.mxu0
    %v1633 = vadd.f32 0.0, %v1632
    %v1634 = vpop.f32.mrf.mxu0
    %v1635 = vpop.f32.mrf.mxu0
    %v1636 = vpop.f32.mrf.mxu0
    %1637 = vdwg.mxu0
    %1638 = vrot.lane.b32.xlu0 %v1578, 96
    %v1639 = vpop.permute.xlu0 %1638
    %v1641 = vsel %vm316, %v1578, 0
    %v1644 = vsel %vm316, %v1639, 0
    %1646 = vmatprep.subr.bf16.mxu0 0
    %1647 = vmatpush1.bf16.xpose.msra.mxu0 0
    %1648 = vmatprep.subr.bf16.mxu0 0
    %1649 = vmatpush1.bf16.xpose.msra.mxu0 0
    %1650 = vmatprep.subr.bf16.mxu0 0
    %1651 = vmatpush1.bf16.xpose.msra.mxu0 0
    %1652 = vmatprep.subr.bf16.mxu0 0
    %1653 = vmatpush1.bf16.xpose.msra.mxu0 0
    %1654 = vmatprep.subr.bf16.mxu0 0
    %1655 = vmatpush1.bf16.xpose.msra.mxu0 0
    %1656 = vmatprep.subr.bf16.mxu0 0
    %1657 = vmatpush1.bf16.xpose.msra.mxu0 0
    %1658 = vmatprep.subr.bf16.mxu0 0
    %1659 = vmatpush1.bf16.xpose.msra.mxu0 0
    %1660 = vmatprep.subr.bf16.mxu0 0
    %1661 = vmatpush1.bf16.xpose.msra.mxu0 %v1644
    %1662 = vmatprep.subr.bf16.mxu0 0
    %1663 = vmatpush2.bf16.xpose.msra.mxu0 0
    %1664 = vmatprep.subr.bf16.mxu0 0
    %1665 = vmatpush2.bf16.xpose.msra.mxu0 0
    %1666 = vmatprep.subr.bf16.mxu0 0
    %1667 = vmatpush2.bf16.xpose.msra.mxu0 0
    %1668 = vmatprep.subr.bf16.mxu0 0
    %1669 = vmatpush2.bf16.xpose.msra.mxu0 0
    %1670 = vmatprep.subr.bf16.mxu0 0
    %1671 = vmatpush2.bf16.xpose.msra.mxu0 0
    %1672 = vmatprep.subr.bf16.mxu0 0
    %1673 = vmatpush2.bf16.xpose.msra.mxu0 0
    %1674 = vmatprep.subr.bf16.mxu0 0
    %1675 = vmatpush2.bf16.xpose.msra.mxu0 0
    %1676 = vmatprep.subr.bf16.mxu0 0
    %1677 = vmatpush2.bf16.xpose.msra.mxu0 0
    %1678 = vmatprep.mubr.bf16.mxu0 0
    %1679 = vmatmul.mubr.bf16.gmra.mxu0 %v1641
    %v1680 = vpop.f32.mrf.mxu0
    %v1681 = vadd.f32 0.0, %v1680
    %v1682 = vpop.f32.mrf.mxu0
    %v1683 = vpop.f32.mrf.mxu0
    %v1684 = vpop.f32.mrf.mxu0
    %1685 = vdwg.mxu0
    %1686 = vrot.lane.b32.xlu0 %v1580, 96
    %v1687 = vpop.permute.xlu0 %1686
    %v1689 = vsel %vm316, %v1580, 0
    %v1692 = vsel %vm316, %v1687, 0
    %1694 = vmatprep.subr.bf16.mxu0 0
    %1695 = vmatpush1.bf16.xpose.msra.mxu0 0
    %1696 = vmatprep.subr.bf16.mxu0 0
    %1697 = vmatpush1.bf16.xpose.msra.mxu0 0
    %1698 = vmatprep.subr.bf16.mxu0 0
    %1699 = vmatpush1.bf16.xpose.msra.mxu0 0
    %1700 = vmatprep.subr.bf16.mxu0 0
    %1701 = vmatpush1.bf16.xpose.msra.mxu0 0
    %1702 = vmatprep.subr.bf16.mxu0 0
    %1703 = vmatpush1.bf16.xpose.msra.mxu0 0
    %1704 = vmatprep.subr.bf16.mxu0 0
    %1705 = vmatpush1.bf16.xpose.msra.mxu0 0
    %1706 = vmatprep.subr.bf16.mxu0 0
    %1707 = vmatpush1.bf16.xpose.msra.mxu0 0
    %1708 = vmatprep.subr.bf16.mxu0 0
    %1709 = vmatpush1.bf16.xpose.msra.mxu0 %v1692
    %1710 = vmatprep.subr.bf16.mxu0 0
    %1711 = vmatpush2.bf16.xpose.msra.mxu0 0
    %1712 = vmatprep.subr.bf16.mxu0 0
    %1713 = vmatpush2.bf16.xpose.msra.mxu0 0
    %1714 = vmatprep.subr.bf16.mxu0 0
    %1715 = vmatpush2.bf16.xpose.msra.mxu0 0
    %1716 = vmatprep.subr.bf16.mxu0 0
    %1717 = vmatpush2.bf16.xpose.msra.mxu0 0
    %1718 = vmatprep.subr.bf16.mxu0 0
    %1719 = vmatpush2.bf16.xpose.msra.mxu0 0
    %1720 = vmatprep.subr.bf16.mxu0 0
    %1721 = vmatpush2.bf16.xpose.msra.mxu0 0
    %1722 = vmatprep.subr.bf16.mxu0 0
    %1723 = vmatpush2.bf16.xpose.msra.mxu0 0
    %1724 = vmatprep.subr.bf16.mxu0 0
    %1725 = vmatpush2.bf16.xpose.msra.mxu0 0
    %1726 = vmatprep.mubr.bf16.mxu0 0
    %1727 = vmatmul.mubr.bf16.gmra.mxu0 %v1689
    %v1728 = vpop.f32.mrf.mxu0
    %v1729 = vadd.f32 0.0, %v1728
    %v1730 = vpop.f32.mrf.mxu0
    %v1731 = vpop.f32.mrf.mxu0
    %v1732 = vpop.f32.mrf.mxu0
    %1733 = vdwg.mxu0
    %1734 = vrot.lane.b32.xlu0 %v1582, 96
    %v1735 = vpop.permute.xlu0 %1734
    %v1737 = vsel %vm316, %v1582, 0
    %v1740 = vsel %vm316, %v1735, 0
    %1742 = vmatprep.subr.bf16.mxu0 0
    %1743 = vmatpush1.bf16.xpose.msra.mxu0 0
    %1744 = vmatprep.subr.bf16.mxu0 0
    %1745 = vmatpush1.bf16.xpose.msra.mxu0 0
    %1746 = vmatprep.subr.bf16.mxu0 0
    %1747 = vmatpush1.bf16.xpose.msra.mxu0 0
    %1748 = vmatprep.subr.bf16.mxu0 0
    %1749 = vmatpush1.bf16.xpose.msra.mxu0 0
    %1750 = vmatprep.subr.bf16.mxu0 0
    %1751 = vmatpush1.bf16.xpose.msra.mxu0 0
    %1752 = vmatprep.subr.bf16.mxu0 0
    %1753 = vmatpush1.bf16.xpose.msra.mxu0 0
    %1754 = vmatprep.subr.bf16.mxu0 0
    %1755 = vmatpush1.bf16.xpose.msra.mxu0 0
    %1756 = vmatprep.subr.bf16.mxu0 0
    %1757 = vmatpush1.bf16.xpose.msra.mxu0 %v1740
    %1758 = vmatprep.subr.bf16.mxu0 0
    %1759 = vmatpush2.bf16.xpose.msra.mxu0 0
    %1760 = vmatprep.subr.bf16.mxu0 0
    %1761 = vmatpush2.bf16.xpose.msra.mxu0 0
    %1762 = vmatprep.subr.bf16.mxu0 0
    %1763 = vmatpush2.bf16.xpose.msra.mxu0 0
    %1764 = vmatprep.subr.bf16.mxu0 0
    %1765 = vmatpush2.bf16.xpose.msra.mxu0 0
    %1766 = vmatprep.subr.bf16.mxu0 0
    %1767 = vmatpush2.bf16.xpose.msra.mxu0 0
    %1768 = vmatprep.subr.bf16.mxu0 0
    %1769 = vmatpush2.bf16.xpose.msra.mxu0 0
    %1770 = vmatprep.subr.bf16.mxu0 0
    %1771 = vmatpush2.bf16.xpose.msra.mxu0 0
    %1772 = vmatprep.subr.bf16.mxu0 0
    %1773 = vmatpush2.bf16.xpose.msra.mxu0 0
    %1774 = vmatprep.mubr.bf16.mxu0 0
    %1775 = vmatmul.mubr.bf16.gmra.mxu0 %v1737
    %v1776 = vpop.f32.mrf.mxu0
    %v1777 = vadd.f32 0.0, %v1776
    %v1778 = vpop.f32.mrf.mxu0
    %v1779 = vpop.f32.mrf.mxu0
    %v1780 = vpop.f32.mrf.mxu0
    %1781 = vdwg.mxu0
    %1782 = vrot.lane.b32.xlu0 %v1583, 96
    %v1783 = vpop.permute.xlu0 %1782
    %v1785 = vsel %vm316, %v1583, 0
    %v1788 = vsel %vm316, %v1783, 0
    %1790 = vmatprep.subr.bf16.mxu0 0
    %1791 = vmatpush1.bf16.xpose.msra.mxu0 0
    %1792 = vmatprep.subr.bf16.mxu0 0
    %1793 = vmatpush1.bf16.xpose.msra.mxu0 0
    %1794 = vmatprep.subr.bf16.mxu0 0
    %1795 = vmatpush1.bf16.xpose.msra.mxu0 0
    %1796 = vmatprep.subr.bf16.mxu0 0
    %1797 = vmatpush1.bf16.xpose.msra.mxu0 0
    %1798 = vmatprep.subr.bf16.mxu0 0
    %1799 = vmatpush1.bf16.xpose.msra.mxu0 0
    %1800 = vmatprep.subr.bf16.mxu0 0
    %1801 = vmatpush1.bf16.xpose.msra.mxu0 0
    %1802 = vmatprep.subr.bf16.mxu0 0
    %1803 = vmatpush1.bf16.xpose.msra.mxu0 0
    %1804 = vmatprep.subr.bf16.mxu0 0
    %1805 = vmatpush1.bf16.xpose.msra.mxu0 %v1788
    %1806 = vmatprep.subr.bf16.mxu0 0
    %1807 = vmatpush2.bf16.xpose.msra.mxu0 0
    %1808 = vmatprep.subr.bf16.mxu0 0
    %1809 = vmatpush2.bf16.xpose.msra.mxu0 0
    %1810 = vmatprep.subr.bf16.mxu0 0
    %1811 = vmatpush2.bf16.xpose.msra.mxu0 0
    %1812 = vmatprep.subr.bf16.mxu0 0
    %1813 = vmatpush2.bf16.xpose.msra.mxu0 0
    %1814 = vmatprep.subr.bf16.mxu0 0
    %1815 = vmatpush2.bf16.xpose.msra.mxu0 0
    %1816 = vmatprep.subr.bf16.mxu0 0
    %1817 = vmatpush2.bf16.xpose.msra.mxu0 0
    %1818 = vmatprep.subr.bf16.mxu0 0
    %1819 = vmatpush2.bf16.xpose.msra.mxu0 0
    %1820 = vmatprep.subr.bf16.mxu0 0
    %1821 = vmatpush2.bf16.xpose.msra.mxu0 0
    %1822 = vmatprep.mubr.bf16.mxu0 0
    %1823 = vmatmul.mubr.bf16.gmra.mxu0 %v1785
    %v1824 = vpop.f32.mrf.mxu0
    %v1825 = vadd.f32 0.0, %v1824
    %v1826 = vpop.f32.mrf.mxu0
    %v1827 = vpop.f32.mrf.mxu0
    %v1828 = vpop.f32.mrf.mxu0
    %1829 = vdwg.mxu0
    %1830 = vrot.lane.b32.xlu0 %v1585, 96
    %v1831 = vpop.permute.xlu0 %1830
    %v1833 = vsel %vm316, %v1585, 0
    %v1836 = vsel %vm316, %v1831, 0
    %1838 = vmatprep.subr.bf16.mxu0 0
    %1839 = vmatpush1.bf16.xpose.msra.mxu0 0
    %1840 = vmatprep.subr.bf16.mxu0 0
    %1841 = vmatpush1.bf16.xpose.msra.mxu0 0
    %1842 = vmatprep.subr.bf16.mxu0 0
    %1843 = vmatpush1.bf16.xpose.msra.mxu0 0
    %1844 = vmatprep.subr.bf16.mxu0 0
    %1845 = vmatpush1.bf16.xpose.msra.mxu0 0
    %1846 = vmatprep.subr.bf16.mxu0 0
    %1847 = vmatpush1.bf16.xpose.msra.mxu0 0
    %1848 = vmatprep.subr.bf16.mxu0 0
    %1849 = vmatpush1.bf16.xpose.msra.mxu0 0
    %1850 = vmatprep.subr.bf16.mxu0 0
    %1851 = vmatpush1.bf16.xpose.msra.mxu0 0
    %1852 = vmatprep.subr.bf16.mxu0 0
    %1853 = vmatpush1.bf16.xpose.msra.mxu0 %v1836
    %1854 = vmatprep.subr.bf16.mxu0 0
    %1855 = vmatpush2.bf16.xpose.msra.mxu0 0
    %1856 = vmatprep.subr.bf16.mxu0 0
    %1857 = vmatpush2.bf16.xpose.msra.mxu0 0
    %1858 = vmatprep.subr.bf16.mxu0 0
    %1859 = vmatpush2.bf16.xpose.msra.mxu0 0
    %1860 = vmatprep.subr.bf16.mxu0 0
    %1861 = vmatpush2.bf16.xpose.msra.mxu0 0
    %1862 = vmatprep.subr.bf16.mxu0 0
    %1863 = vmatpush2.bf16.xpose.msra.mxu0 0
    %1864 = vmatprep.subr.bf16.mxu0 0
    %1865 = vmatpush2.bf16.xpose.msra.mxu0 0
    %1866 = vmatprep.subr.bf16.mxu0 0
    %1867 = vmatpush2.bf16.xpose.msra.mxu0 0
    %1868 = vmatprep.subr.bf16.mxu0 0
    %1869 = vmatpush2.bf16.xpose.msra.mxu0 0
    %1870 = vmatprep.mubr.bf16.mxu0 0
    %1871 = vmatmul.mubr.bf16.gmra.mxu0 %v1833
    %v1872 = vpop.f32.mrf.mxu0
    %v1873 = vadd.f32 0.0, %v1872
    %v1874 = vpop.f32.mrf.mxu0
    %v1875 = vpop.f32.mrf.mxu0
    %v1876 = vpop.f32.mrf.mxu0
    %1877 = vdwg.mxu0
    %1878 = vrot.lane.b32.xlu0 %v1587, 96
    %v1879 = vpop.permute.xlu0 %1878
    %v1881 = vsel %vm316, %v1587, 0
    %v1884 = vsel %vm316, %v1879, 0
    %1886 = vmatprep.subr.bf16.mxu0 0
    %1887 = vmatpush1.bf16.xpose.msra.mxu0 0
    %1888 = vmatprep.subr.bf16.mxu0 0
    %1889 = vmatpush1.bf16.xpose.msra.mxu0 0
    %1890 = vmatprep.subr.bf16.mxu0 0
    %1891 = vmatpush1.bf16.xpose.msra.mxu0 0
    %1892 = vmatprep.subr.bf16.mxu0 0
    %1893 = vmatpush1.bf16.xpose.msra.mxu0 0
    %1894 = vmatprep.subr.bf16.mxu0 0
    %1895 = vmatpush1.bf16.xpose.msra.mxu0 0
    %1896 = vmatprep.subr.bf16.mxu0 0
    %1897 = vmatpush1.bf16.xpose.msra.mxu0 0
    %1898 = vmatprep.subr.bf16.mxu0 0
    %1899 = vmatpush1.bf16.xpose.msra.mxu0 0
    %1900 = vmatprep.subr.bf16.mxu0 0
    %1901 = vmatpush1.bf16.xpose.msra.mxu0 %v1884
    %1902 = vmatprep.subr.bf16.mxu0 0
    %1903 = vmatpush2.bf16.xpose.msra.mxu0 0
    %1904 = vmatprep.subr.bf16.mxu0 0
    %1905 = vmatpush2.bf16.xpose.msra.mxu0 0
    %1906 = vmatprep.subr.bf16.mxu0 0
    %1907 = vmatpush2.bf16.xpose.msra.mxu0 0
    %1908 = vmatprep.subr.bf16.mxu0 0
    %1909 = vmatpush2.bf16.xpose.msra.mxu0 0
    %1910 = vmatprep.subr.bf16.mxu0 0
    %1911 = vmatpush2.bf16.xpose.msra.mxu0 0
    %1912 = vmatprep.subr.bf16.mxu0 0
    %1913 = vmatpush2.bf16.xpose.msra.mxu0 0
    %1914 = vmatprep.subr.bf16.mxu0 0
    %1915 = vmatpush2.bf16.xpose.msra.mxu0 0
    %1916 = vmatprep.subr.bf16.mxu0 0
    %1917 = vmatpush2.bf16.xpose.msra.mxu0 0
    %1918 = vmatprep.mubr.bf16.mxu0 0
    %1919 = vmatmul.mubr.bf16.gmra.mxu0 %v1881
    %v1920 = vpop.f32.mrf.mxu0
    %v1921 = vadd.f32 0.0, %v1920
    %v1922 = vpop.f32.mrf.mxu0
    %v1923 = vpop.f32.mrf.mxu0
    %v1924 = vpop.f32.mrf.mxu0
    %1925 = vdwg.mxu0
    %1926 = vrot.lane.b32.xlu0 %v1589, 96
    %v1927 = vpop.permute.xlu0 %1926
    %v1929 = vsel %vm316, %v1589, 0
    %v1932 = vsel %vm316, %v1927, 0
    %1934 = vmatprep.subr.bf16.mxu0 0
    %1935 = vmatpush1.bf16.xpose.msra.mxu0 0
    %1936 = vmatprep.subr.bf16.mxu0 0
    %1937 = vmatpush1.bf16.xpose.msra.mxu0 0
    %1938 = vmatprep.subr.bf16.mxu0 0
    %1939 = vmatpush1.bf16.xpose.msra.mxu0 0
    %1940 = vmatprep.subr.bf16.mxu0 0
    %1941 = vmatpush1.bf16.xpose.msra.mxu0 0
    %1942 = vmatprep.subr.bf16.mxu0 0
    %1943 = vmatpush1.bf16.xpose.msra.mxu0 0
    %1944 = vmatprep.subr.bf16.mxu0 0
    %1945 = vmatpush1.bf16.xpose.msra.mxu0 0
    %1946 = vmatprep.subr.bf16.mxu0 0
    %1947 = vmatpush1.bf16.xpose.msra.mxu0 0
    %1948 = vmatprep.subr.bf16.mxu0 0
    %1949 = vmatpush1.bf16.xpose.msra.mxu0 %v1932
    %1950 = vmatprep.subr.bf16.mxu0 0
    %1951 = vmatpush2.bf16.xpose.msra.mxu0 0
    %1952 = vmatprep.subr.bf16.mxu0 0
    %1953 = vmatpush2.bf16.xpose.msra.mxu0 0
    %1954 = vmatprep.subr.bf16.mxu0 0
    %1955 = vmatpush2.bf16.xpose.msra.mxu0 0
    %1956 = vmatprep.subr.bf16.mxu0 0
    %1957 = vmatpush2.bf16.xpose.msra.mxu0 0
    %1958 = vmatprep.subr.bf16.mxu0 0
    %1959 = vmatpush2.bf16.xpose.msra.mxu0 0
    %1960 = vmatprep.subr.bf16.mxu0 0
    %1961 = vmatpush2.bf16.xpose.msra.mxu0 0
    %1962 = vmatprep.subr.bf16.mxu0 0
    %1963 = vmatpush2.bf16.xpose.msra.mxu0 0
    %1964 = vmatprep.subr.bf16.mxu0 0
    %1965 = vmatpush2.bf16.xpose.msra.mxu0 0
    %1966 = vmatprep.mubr.bf16.mxu0 0
    %1967 = vmatmul.mubr.bf16.gmra.mxu0 %v1929
    %v1968 = vpop.f32.mrf.mxu0
    %v1969 = vadd.f32 0.0, %v1968
    %v1970 = vpop.f32.mrf.mxu0
    %v1971 = vpop.f32.mrf.mxu0
    %v1972 = vpop.f32.mrf.mxu0
    %1973 = vdwg.mxu0
    %v1974 = vmul.f32 %v1633, 0.35355338
    %v1975 = vmul.f32 %v1681, 0.35355338
    %v1976 = vmul.f32 %v1729, 0.35355338
    %v1977 = vmul.f32 %v1777, 0.35355338
    %v1978 = vmul.f32 %v1825, 0.35355338
    %v1979 = vmul.f32 %v1873, 0.35355338
    %v1980 = vmul.f32 %v1921, 0.35355338
    %v1981 = vmul.f32 %v1969, 0.35355338
    %v1982 = vsel %vm707, %v1974, -inf
    %1983 = vmax.xlane.f32.xlu0 %v1982
    %v1984 = vpop.xlane.xlu0 %1983
    %v1985 = vsel %vm707, %v1975, -inf
    %1986 = vmax.xlane.f32.xlu0 %v1985
    %v1987 = vpop.xlane.xlu0 %1986
    %v1988 = vsel %vm707, %v1976, -inf
    %1989 = vmax.xlane.f32.xlu0 %v1988
    %v1990 = vpop.xlane.xlu0 %1989
    %v1991 = vsel %vm707, %v1977, -inf
    %1992 = vmax.xlane.f32.xlu0 %v1991
    %v1993 = vpop.xlane.xlu0 %1992
    %v1994 = vsel %vm707, %v1978, -inf
    %1995 = vmax.xlane.f32.xlu0 %v1994
    %v1996 = vpop.xlane.xlu0 %1995
    %v1997 = vsel %vm707, %v1979, -inf
    %1998 = vmax.xlane.f32.xlu0 %v1997
    %v1999 = vpop.xlane.xlu0 %1998
    %v2000 = vsel %vm707, %v1980, -inf
    %2001 = vmax.xlane.f32.xlu0 %v2000
    %v2002 = vpop.xlane.xlu0 %2001
    %v2003 = vsel %vm707, %v1981, -inf
    %2004 = vmax.xlane.f32.xlu0 %v2003
    %v2005 = vpop.xlane.xlu0 %2004
    %v2006 = vsub.f32 %v1974, %v1984
    %v2007 = vsub.f32 %v1975, %v1987
    %v2008 = vsub.f32 %v1976, %v1990
    %v2009 = vsub.f32 %v1977, %v1993
    %v2010 = vsub.f32 %v1978, %v1996
    %v2011 = vsub.f32 %v1979, %v1999
    %v2012 = vsub.f32 %v1980, %v2002
    %v2013 = vsub.f32 %v1981, %v2005
    %v2014 = vmul.f32 %v2006, 1.442695
    %v2015 = vpow.pop %v2014
    %v2016 = vmul.f32 %v2007, 1.442695
    %v2017 = vpow.pop %v2016
    %v2018 = vmul.f32 %v2008, 1.442695
    %v2019 = vpow.pop %v2018
    %v2020 = vmul.f32 %v2009, 1.442695
    %v2021 = vpow.pop %v2020
    %v2022 = vmul.f32 %v2010, 1.442695
    %v2023 = vpow.pop %v2022
    %v2024 = vmul.f32 %v2011, 1.442695
    %v2025 = vpow.pop %v2024
    %v2026 = vmul.f32 %v2012, 1.442695
    %v2027 = vpow.pop %v2026
    %v2028 = vmul.f32 %v2013, 1.442695
    %v2029 = vpow.pop %v2028
    %v2030 = vsel %vm707, %v2015, 0.0
    %2031 = vadd.xlane.f32.xlu0 %v2030
    %v2032 = vpop.xlane.xlu0 %2031
    %v2033 = vsel %vm707, %v2017, 0.0
    %2034 = vadd.xlane.f32.xlu0 %v2033
    %v2035 = vpop.xlane.xlu0 %2034
    %v2036 = vsel %vm707, %v2019, 0.0
    %2037 = vadd.xlane.f32.xlu0 %v2036
    %v2038 = vpop.xlane.xlu0 %2037
    %v2039 = vsel %vm707, %v2021, 0.0
    %2040 = vadd.xlane.f32.xlu0 %v2039
    %v2041 = vpop.xlane.xlu0 %2040
    %v2042 = vsel %vm707, %v2023, 0.0
    %2043 = vadd.xlane.f32.xlu0 %v2042
    %v2044 = vpop.xlane.xlu0 %2043
    %v2045 = vsel %vm707, %v2025, 0.0
    %2046 = vadd.xlane.f32.xlu0 %v2045
    %v2047 = vpop.xlane.xlu0 %2046
    %v2048 = vsel %vm707, %v2027, 0.0
    %2049 = vadd.xlane.f32.xlu0 %v2048
    %v2050 = vpop.xlane.xlu0 %2049
    %v2051 = vsel %vm707, %v2029, 0.0
    %2052 = vadd.xlane.f32.xlu0 %v2051
    %v2053 = vpop.xlane.xlu0 %2052
    %v2054 = vrcp.pop %v2032
    %v2055 = vrcp.pop %v2035
    %v2056 = vrcp.pop %v2038
    %v2057 = vrcp.pop %v2041
    %v2058 = vrcp.pop %v2044
    %v2059 = vrcp.pop %v2047
    %v2060 = vrcp.pop %v2050
    %v2061 = vrcp.pop %v2053
    %v2062 = vmul.f32 %v2015, %v2054
    %v2063 = vmul.f32 %v2017, %v2055
    %v2064 = vmul.f32 %v2019, %v2056
    %v2065 = vmul.f32 %v2021, %v2057
    %v2066 = vmul.f32 %v2023, %v2058
    %v2067 = vmul.f32 %v2025, %v2059
    %v2068 = vmul.f32 %v2027, %v2060
    %v2069 = vmul.f32 %v2029, %v2061
    %v2070 = vpack.c.bf16 %v2062, %v2062
    %v2071 = vpack.c.bf16 %v2063, %v2063
    %v2072 = vpack.c.bf16 %v2064, %v2064
    %v2073 = vpack.c.bf16 %v2065, %v2065
    %v2074 = vpack.c.bf16 %v2066, %v2066
    %v2075 = vpack.c.bf16 %v2067, %v2067
    %v2076 = vpack.c.bf16 %v2068, %v2068
    %v2077 = vpack.c.bf16 %v2069, %v2069
    %2078 = vrot.lane.b32.xlu0 %v1575, 64
    %v2079 = vpop.permute.xlu0 %2078
    %v2081 = vsel %vm806, %v2070, 0
    %v2084 = vsel %vm810, %v2079, 0
    %2086 = vmatprep.subr.bf16.mxu0 0
    %2087 = vmatpush1.bf16.msra.mxu0 0
    %2088 = vmatprep.subr.bf16.mxu0 0
    %2089 = vmatpush1.bf16.msra.mxu0 0
    %2090 = vmatprep.subr.bf16.mxu0 0
    %2091 = vmatpush1.bf16.msra.mxu0 0
    %2092 = vmatprep.subr.bf16.mxu0 0
    %2093 = vmatpush1.bf16.msra.mxu0 0
    %2094 = vmatprep.subr.bf16.mxu0 0
    %2095 = vmatpush1.bf16.msra.mxu0 0
    %2096 = vmatprep.subr.bf16.mxu0 0
    %2097 = vmatpush1.bf16.msra.mxu0 0
    %2098 = vmatprep.subr.bf16.mxu0 0
    %2099 = vmatpush1.bf16.msra.mxu0 0
    %2100 = vmatprep.subr.bf16.mxu0 0
    %2101 = vmatpush1.bf16.msra.mxu0 %v2084
    %2102 = vmatprep.subr.bf16.mxu0 0
    %2103 = vmatpush2.bf16.msra.mxu0 0
    %2104 = vmatprep.subr.bf16.mxu0 0
    %2105 = vmatpush2.bf16.msra.mxu0 0
    %2106 = vmatprep.subr.bf16.mxu0 0
    %2107 = vmatpush2.bf16.msra.mxu0 0
    %2108 = vmatprep.subr.bf16.mxu0 0
    %2109 = vmatpush2.bf16.msra.mxu0 0
    %2110 = vmatprep.subr.bf16.mxu0 0
    %2111 = vmatpush2.bf16.msra.mxu0 0
    %2112 = vmatprep.subr.bf16.mxu0 0
    %2113 = vmatpush2.bf16.msra.mxu0 0
    %2114 = vmatprep.subr.bf16.mxu0 0
    %2115 = vmatpush2.bf16.msra.mxu0 0
    %2116 = vmatprep.subr.bf16.mxu0 0
    %2117 = vmatpush2.bf16.msra.mxu0 0
    %2118 = vmatprep.mubr.bf16.mxu0 0
    %2119 = vmatmul.mubr.bf16.gmra.mxu0 %v2081
    %v2120 = vpop.f32.mrf.mxu0
    %v2121 = vadd.f32 0.0, %v2120
    %v2122 = vpop.f32.mrf.mxu0
    %v2123 = vpop.f32.mrf.mxu0
    %v2124 = vpop.f32.mrf.mxu0
    %2125 = vdwg.mxu0
    %2126 = vrot.lane.b32.xlu0 %v1578, 64
    %v2127 = vpop.permute.xlu0 %2126
    %v2129 = vsel %vm806, %v2071, 0
    %v2132 = vsel %vm810, %v2127, 0
    %2134 = vmatprep.subr.bf16.mxu0 0
    %2135 = vmatpush1.bf16.msra.mxu0 0
    %2136 = vmatprep.subr.bf16.mxu0 0
    %2137 = vmatpush1.bf16.msra.mxu0 0
    %2138 = vmatprep.subr.bf16.mxu0 0
    %2139 = vmatpush1.bf16.msra.mxu0 0
    %2140 = vmatprep.subr.bf16.mxu0 0
    %2141 = vmatpush1.bf16.msra.mxu0 0
    %2142 = vmatprep.subr.bf16.mxu0 0
    %2143 = vmatpush1.bf16.msra.mxu0 0
    %2144 = vmatprep.subr.bf16.mxu0 0
    %2145 = vmatpush1.bf16.msra.mxu0 0
    %2146 = vmatprep.subr.bf16.mxu0 0
    %2147 = vmatpush1.bf16.msra.mxu0 0
    %2148 = vmatprep.subr.bf16.mxu0 0
    %2149 = vmatpush1.bf16.msra.mxu0 %v2132
    %2150 = vmatprep.subr.bf16.mxu0 0
    %2151 = vmatpush2.bf16.msra.mxu0 0
    %2152 = vmatprep.subr.bf16.mxu0 0
    %2153 = vmatpush2.bf16.msra.mxu0 0
    %2154 = vmatprep.subr.bf16.mxu0 0
    %2155 = vmatpush2.bf16.msra.mxu0 0
    %2156 = vmatprep.subr.bf16.mxu0 0
    %2157 = vmatpush2.bf16.msra.mxu0 0
    %2158 = vmatprep.subr.bf16.mxu0 0
    %2159 = vmatpush2.bf16.msra.mxu0 0
    %2160 = vmatprep.subr.bf16.mxu0 0
    %2161 = vmatpush2.bf16.msra.mxu0 0
    %2162 = vmatprep.subr.bf16.mxu0 0
    %2163 = vmatpush2.bf16.msra.mxu0 0
    %2164 = vmatprep.subr.bf16.mxu0 0
    %2165 = vmatpush2.bf16.msra.mxu0 0
    %2166 = vmatprep.mubr.bf16.mxu0 0
    %2167 = vmatmul.mubr.bf16.gmra.mxu0 %v2129
    %v2168 = vpop.f32.mrf.mxu0
    %v2169 = vadd.f32 0.0, %v2168
    %v2170 = vpop.f32.mrf.mxu0
    %v2171 = vpop.f32.mrf.mxu0
    %v2172 = vpop.f32.mrf.mxu0
    %2173 = vdwg.mxu0
    %2174 = vrot.lane.b32.xlu0 %v1580, 64
    %v2175 = vpop.permute.xlu0 %2174
    %v2177 = vsel %vm806, %v2072, 0
    %v2180 = vsel %vm810, %v2175, 0
    %2182 = vmatprep.subr.bf16.mxu0 0
    %2183 = vmatpush1.bf16.msra.mxu0 0
    %2184 = vmatprep.subr.bf16.mxu0 0
    %2185 = vmatpush1.bf16.msra.mxu0 0
    %2186 = vmatprep.subr.bf16.mxu0 0
    %2187 = vmatpush1.bf16.msra.mxu0 0
    %2188 = vmatprep.subr.bf16.mxu0 0
    %2189 = vmatpush1.bf16.msra.mxu0 0
    %2190 = vmatprep.subr.bf16.mxu0 0
    %2191 = vmatpush1.bf16.msra.mxu0 0
    %2192 = vmatprep.subr.bf16.mxu0 0
    %2193 = vmatpush1.bf16.msra.mxu0 0
    %2194 = vmatprep.subr.bf16.mxu0 0
    %2195 = vmatpush1.bf16.msra.mxu0 0
    %2196 = vmatprep.subr.bf16.mxu0 0
    %2197 = vmatpush1.bf16.msra.mxu0 %v2180
    %2198 = vmatprep.subr.bf16.mxu0 0
    %2199 = vmatpush2.bf16.msra.mxu0 0
    %2200 = vmatprep.subr.bf16.mxu0 0
    %2201 = vmatpush2.bf16.msra.mxu0 0
    %2202 = vmatprep.subr.bf16.mxu0 0
    %2203 = vmatpush2.bf16.msra.mxu0 0
    %2204 = vmatprep.subr.bf16.mxu0 0
    %2205 = vmatpush2.bf16.msra.mxu0 0
    %2206 = vmatprep.subr.bf16.mxu0 0
    %2207 = vmatpush2.bf16.msra.mxu0 0
    %2208 = vmatprep.subr.bf16.mxu0 0
    %2209 = vmatpush2.bf16.msra.mxu0 0
    %2210 = vmatprep.subr.bf16.mxu0 0
    %2211 = vmatpush2.bf16.msra.mxu0 0
    %2212 = vmatprep.subr.bf16.mxu0 0
    %2213 = vmatpush2.bf16.msra.mxu0 0
    %2214 = vmatprep.mubr.bf16.mxu0 0
    %2215 = vmatmul.mubr.bf16.gmra.mxu0 %v2177
    %v2216 = vpop.f32.mrf.mxu0
    %v2217 = vadd.f32 0.0, %v2216
    %v2218 = vpop.f32.mrf.mxu0
    %v2219 = vpop.f32.mrf.mxu0
    %v2220 = vpop.f32.mrf.mxu0
    %2221 = vdwg.mxu0
    %2222 = vrot.lane.b32.xlu0 %v1582, 64
    %v2223 = vpop.permute.xlu0 %2222
    %v2225 = vsel %vm806, %v2073, 0
    %v2228 = vsel %vm810, %v2223, 0
    %2230 = vmatprep.subr.bf16.mxu0 0
    %2231 = vmatpush1.bf16.msra.mxu0 0
    %2232 = vmatprep.subr.bf16.mxu0 0
    %2233 = vmatpush1.bf16.msra.mxu0 0
    %2234 = vmatprep.subr.bf16.mxu0 0
    %2235 = vmatpush1.bf16.msra.mxu0 0
    %2236 = vmatprep.subr.bf16.mxu0 0
    %2237 = vmatpush1.bf16.msra.mxu0 0
    %2238 = vmatprep.subr.bf16.mxu0 0
    %2239 = vmatpush1.bf16.msra.mxu0 0
    %2240 = vmatprep.subr.bf16.mxu0 0
    %2241 = vmatpush1.bf16.msra.mxu0 0
    %2242 = vmatprep.subr.bf16.mxu0 0
    %2243 = vmatpush1.bf16.msra.mxu0 0
    %2244 = vmatprep.subr.bf16.mxu0 0
    %2245 = vmatpush1.bf16.msra.mxu0 %v2228
    %2246 = vmatprep.subr.bf16.mxu0 0
    %2247 = vmatpush2.bf16.msra.mxu0 0
    %2248 = vmatprep.subr.bf16.mxu0 0
    %2249 = vmatpush2.bf16.msra.mxu0 0
    %2250 = vmatprep.subr.bf16.mxu0 0
    %2251 = vmatpush2.bf16.msra.mxu0 0
    %2252 = vmatprep.subr.bf16.mxu0 0
    %2253 = vmatpush2.bf16.msra.mxu0 0
    %2254 = vmatprep.subr.bf16.mxu0 0
    %2255 = vmatpush2.bf16.msra.mxu0 0
    %2256 = vmatprep.subr.bf16.mxu0 0
    %2257 = vmatpush2.bf16.msra.mxu0 0
    %2258 = vmatprep.subr.bf16.mxu0 0
    %2259 = vmatpush2.bf16.msra.mxu0 0
    %2260 = vmatprep.subr.bf16.mxu0 0
    %2261 = vmatpush2.bf16.msra.mxu0 0
    %2262 = vmatprep.mubr.bf16.mxu0 0
    %2263 = vmatmul.mubr.bf16.gmra.mxu0 %v2225
    %v2264 = vpop.f32.mrf.mxu0
    %v2265 = vadd.f32 0.0, %v2264
    %v2266 = vpop.f32.mrf.mxu0
    %v2267 = vpop.f32.mrf.mxu0
    %v2268 = vpop.f32.mrf.mxu0
    %2269 = vdwg.mxu0
    %2270 = vrot.lane.b32.xlu0 %v1583, 64
    %v2271 = vpop.permute.xlu0 %2270
    %v2273 = vsel %vm806, %v2074, 0
    %v2276 = vsel %vm810, %v2271, 0
    %2278 = vmatprep.subr.bf16.mxu0 0
    %2279 = vmatpush1.bf16.msra.mxu0 0
    %2280 = vmatprep.subr.bf16.mxu0 0
    %2281 = vmatpush1.bf16.msra.mxu0 0
    %2282 = vmatprep.subr.bf16.mxu0 0
    %2283 = vmatpush1.bf16.msra.mxu0 0
    %2284 = vmatprep.subr.bf16.mxu0 0
    %2285 = vmatpush1.bf16.msra.mxu0 0
    %2286 = vmatprep.subr.bf16.mxu0 0
    %2287 = vmatpush1.bf16.msra.mxu0 0
    %2288 = vmatprep.subr.bf16.mxu0 0
    %2289 = vmatpush1.bf16.msra.mxu0 0
    %2290 = vmatprep.subr.bf16.mxu0 0
    %2291 = vmatpush1.bf16.msra.mxu0 0
    %2292 = vmatprep.subr.bf16.mxu0 0
    %2293 = vmatpush1.bf16.msra.mxu0 %v2276
    %2294 = vmatprep.subr.bf16.mxu0 0
    %2295 = vmatpush2.bf16.msra.mxu0 0
    %2296 = vmatprep.subr.bf16.mxu0 0
    %2297 = vmatpush2.bf16.msra.mxu0 0
    %2298 = vmatprep.subr.bf16.mxu0 0
    %2299 = vmatpush2.bf16.msra.mxu0 0
    %2300 = vmatprep.subr.bf16.mxu0 0
    %2301 = vmatpush2.bf16.msra.mxu0 0
    %2302 = vmatprep.subr.bf16.mxu0 0
    %2303 = vmatpush2.bf16.msra.mxu0 0
    %2304 = vmatprep.subr.bf16.mxu0 0
    %2305 = vmatpush2.bf16.msra.mxu0 0
    %2306 = vmatprep.subr.bf16.mxu0 0
    %2307 = vmatpush2.bf16.msra.mxu0 0
    %2308 = vmatprep.subr.bf16.mxu0 0
    %2309 = vmatpush2.bf16.msra.mxu0 0
    %2310 = vmatprep.mubr.bf16.mxu0 0
    %2311 = vmatmul.mubr.bf16.gmra.mxu0 %v2273
    %v2312 = vpop.f32.mrf.mxu0
    %v2313 = vadd.f32 0.0, %v2312
    %v2314 = vpop.f32.mrf.mxu0
    %v2315 = vpop.f32.mrf.mxu0
    %v2316 = vpop.f32.mrf.mxu0
    %2317 = vdwg.mxu0
    %2318 = vrot.lane.b32.xlu0 %v1585, 64
    %v2319 = vpop.permute.xlu0 %2318
    %v2321 = vsel %vm806, %v2075, 0
    %v2324 = vsel %vm810, %v2319, 0
    %2326 = vmatprep.subr.bf16.mxu0 0
    %2327 = vmatpush1.bf16.msra.mxu0 0
    %2328 = vmatprep.subr.bf16.mxu0 0
    %2329 = vmatpush1.bf16.msra.mxu0 0
    %2330 = vmatprep.subr.bf16.mxu0 0
    %2331 = vmatpush1.bf16.msra.mxu0 0
    %2332 = vmatprep.subr.bf16.mxu0 0
    %2333 = vmatpush1.bf16.msra.mxu0 0
    %2334 = vmatprep.subr.bf16.mxu0 0
    %2335 = vmatpush1.bf16.msra.mxu0 0
    %2336 = vmatprep.subr.bf16.mxu0 0
    %2337 = vmatpush1.bf16.msra.mxu0 0
    %2338 = vmatprep.subr.bf16.mxu0 0
    %2339 = vmatpush1.bf16.msra.mxu0 0
    %2340 = vmatprep.subr.bf16.mxu0 0
    %2341 = vmatpush1.bf16.msra.mxu0 %v2324
    %2342 = vmatprep.subr.bf16.mxu0 0
    %2343 = vmatpush2.bf16.msra.mxu0 0
    %2344 = vmatprep.subr.bf16.mxu0 0
    %2345 = vmatpush2.bf16.msra.mxu0 0
    %2346 = vmatprep.subr.bf16.mxu0 0
    %2347 = vmatpush2.bf16.msra.mxu0 0
    %2348 = vmatprep.subr.bf16.mxu0 0
    %2349 = vmatpush2.bf16.msra.mxu0 0
    %2350 = vmatprep.subr.bf16.mxu0 0
    %2351 = vmatpush2.bf16.msra.mxu0 0
    %2352 = vmatprep.subr.bf16.mxu0 0
    %2353 = vmatpush2.bf16.msra.mxu0 0
    %2354 = vmatprep.subr.bf16.mxu0 0
    %2355 = vmatpush2.bf16.msra.mxu0 0
    %2356 = vmatprep.subr.bf16.mxu0 0
    %2357 = vmatpush2.bf16.msra.mxu0 0
    %2358 = vmatprep.mubr.bf16.mxu0 0
    %2359 = vmatmul.mubr.bf16.gmra.mxu0 %v2321
    %v2360 = vpop.f32.mrf.mxu0
    %v2361 = vadd.f32 0.0, %v2360
    %v2362 = vpop.f32.mrf.mxu0
    %v2363 = vpop.f32.mrf.mxu0
    %v2364 = vpop.f32.mrf.mxu0
    %2365 = vdwg.mxu0
    %2366 = vrot.lane.b32.xlu0 %v1587, 64
    %v2367 = vpop.permute.xlu0 %2366
    %v2369 = vsel %vm806, %v2076, 0
    %v2372 = vsel %vm810, %v2367, 0
    %2374 = vmatprep.subr.bf16.mxu0 0
    %2375 = vmatpush1.bf16.msra.mxu0 0
    %2376 = vmatprep.subr.bf16.mxu0 0
    %2377 = vmatpush1.bf16.msra.mxu0 0
    %2378 = vmatprep.subr.bf16.mxu0 0
    %2379 = vmatpush1.bf16.msra.mxu0 0
    %2380 = vmatprep.subr.bf16.mxu0 0
    %2381 = vmatpush1.bf16.msra.mxu0 0
    %2382 = vmatprep.subr.bf16.mxu0 0
    %2383 = vmatpush1.bf16.msra.mxu0 0
    %2384 = vmatprep.subr.bf16.mxu0 0
    %2385 = vmatpush1.bf16.msra.mxu0 0
    %2386 = vmatprep.subr.bf16.mxu0 0
    %2387 = vmatpush1.bf16.msra.mxu0 0
    %2388 = vmatprep.subr.bf16.mxu0 0
    %2389 = vmatpush1.bf16.msra.mxu0 %v2372
    %2390 = vmatprep.subr.bf16.mxu0 0
    %2391 = vmatpush2.bf16.msra.mxu0 0
    %2392 = vmatprep.subr.bf16.mxu0 0
    %2393 = vmatpush2.bf16.msra.mxu0 0
    %2394 = vmatprep.subr.bf16.mxu0 0
    %2395 = vmatpush2.bf16.msra.mxu0 0
    %2396 = vmatprep.subr.bf16.mxu0 0
    %2397 = vmatpush2.bf16.msra.mxu0 0
    %2398 = vmatprep.subr.bf16.mxu0 0
    %2399 = vmatpush2.bf16.msra.mxu0 0
    %2400 = vmatprep.subr.bf16.mxu0 0
    %2401 = vmatpush2.bf16.msra.mxu0 0
    %2402 = vmatprep.subr.bf16.mxu0 0
    %2403 = vmatpush2.bf16.msra.mxu0 0
    %2404 = vmatprep.subr.bf16.mxu0 0
    %2405 = vmatpush2.bf16.msra.mxu0 0
    %2406 = vmatprep.mubr.bf16.mxu0 0
    %2407 = vmatmul.mubr.bf16.gmra.mxu0 %v2369
    %v2408 = vpop.f32.mrf.mxu0
    %v2409 = vadd.f32 0.0, %v2408
    %v2410 = vpop.f32.mrf.mxu0
    %v2411 = vpop.f32.mrf.mxu0
    %v2412 = vpop.f32.mrf.mxu0
    %2413 = vdwg.mxu0
    %2414 = vrot.lane.b32.xlu0 %v1589, 64
    %v2415 = vpop.permute.xlu0 %2414
    %v2417 = vsel %vm806, %v2077, 0
    %v2420 = vsel %vm810, %v2415, 0
    %2422 = vmatprep.subr.bf16.mxu0 0
    %2423 = vmatpush1.bf16.msra.mxu0 0
    %2424 = vmatprep.subr.bf16.mxu0 0
    %2425 = vmatpush1.bf16.msra.mxu0 0
    %2426 = vmatprep.subr.bf16.mxu0 0
    %2427 = vmatpush1.bf16.msra.mxu0 0
    %2428 = vmatprep.subr.bf16.mxu0 0
    %2429 = vmatpush1.bf16.msra.mxu0 0
    %2430 = vmatprep.subr.bf16.mxu0 0
    %2431 = vmatpush1.bf16.msra.mxu0 0
    %2432 = vmatprep.subr.bf16.mxu0 0
    %2433 = vmatpush1.bf16.msra.mxu0 0
    %2434 = vmatprep.subr.bf16.mxu0 0
    %2435 = vmatpush1.bf16.msra.mxu0 0
    %2436 = vmatprep.subr.bf16.mxu0 0
    %2437 = vmatpush1.bf16.msra.mxu0 %v2420
    %2438 = vmatprep.subr.bf16.mxu0 0
    %2439 = vmatpush2.bf16.msra.mxu0 0
    %2440 = vmatprep.subr.bf16.mxu0 0
    %2441 = vmatpush2.bf16.msra.mxu0 0
    %2442 = vmatprep.subr.bf16.mxu0 0
    %2443 = vmatpush2.bf16.msra.mxu0 0
    %2444 = vmatprep.subr.bf16.mxu0 0
    %2445 = vmatpush2.bf16.msra.mxu0 0
    %2446 = vmatprep.subr.bf16.mxu0 0
    %2447 = vmatpush2.bf16.msra.mxu0 0
    %2448 = vmatprep.subr.bf16.mxu0 0
    %2449 = vmatpush2.bf16.msra.mxu0 0
    %2450 = vmatprep.subr.bf16.mxu0 0
    %2451 = vmatpush2.bf16.msra.mxu0 0
    %2452 = vmatprep.subr.bf16.mxu0 0
    %2453 = vmatpush2.bf16.msra.mxu0 0
    %2454 = vmatprep.mubr.bf16.mxu0 0
    %2455 = vmatmul.mubr.bf16.gmra.mxu0 %v2417
    %v2456 = vpop.f32.mrf.mxu0
    %v2457 = vadd.f32 0.0, %v2456
    %v2458 = vpop.f32.mrf.mxu0
    %v2459 = vpop.f32.mrf.mxu0
    %v2460 = vpop.f32.mrf.mxu0
    %2461 = vdwg.mxu0
    %2463 = vrot.lane.b32.xlu0 %v2169, 8
    %v2464 = vpop.permute.xlu0 %2463
    %2467 = vrot.lane.b32.xlu0 %v2217, 16
    %v2468 = vpop.permute.xlu0 %2467
    %2471 = vrot.lane.b32.xlu0 %v2265, 24
    %v2472 = vpop.permute.xlu0 %2471
    %v2474 = vsel %vm316, %v2121, %v2464
    %v2475 = vsel %vm1203, %v2474, %v2468
    %v2476 = vsel %vm1205, %v2475, %v2472
    %2478 = vrot.lane.b32.xlu0 %v2361, 8
    %v2479 = vpop.permute.xlu0 %2478
    %2482 = vrot.lane.b32.xlu0 %v2409, 16
    %v2483 = vpop.permute.xlu0 %2482
    %2486 = vrot.lane.b32.xlu0 %v2457, 24
    %v2487 = vpop.permute.xlu0 %2486
    %v2489 = vsel %vm316, %v2313, %v2479
    %v2490 = vsel %vm1203, %v2489, %v2483
    %v2491 = vsel %vm1205, %v2490, %v2487
    %v2493 = vrot.slane %v2491, 6
    %v2495 = vsel %vm229, %v2476, %v2493
    %v2496 = vpack.c.bf16 %v2495, %v2495
    %s2497 = scalar_lea.vmem %s7, 16
    %v2498 = vld [vmem:[%s2497] sm:$0xf]
    %v2499 = vld [vmem:[%s2497 + $0x4] sm:$0xf]
    %v2500 = vld [vmem:[%s2497 + $0x8] sm:$0xf]
    %v2501 = vld [vmem:[%s2497 + $0xc] sm:$0xf]
    %s2502 = scalar_lea.vmem %s8, 1
    %v2503 = vld [vmem:[%s2502] sm:$0x1]
    %v2505 = vlaneseq
    %v2506 = vshrl.u32 %v2505, 7
    %v2507 = vsub.s32 0, %v2506
    %v2508 = vrot.slane %v2503, %v2507
    %v2514 = vunpack.c.l.b16 %v2498
    %v2515 = vunpack.c.l.b16 %v2499
    %v2516 = vunpack.c.l.b16 %v2500
    %v2517 = vunpack.c.l.b16 %v2501
    %v2518 = vpack.c.b16 %v2515, %v2514
    %v2519 = vpack.c.b16 %v2517, %v2516
    %v2523 = vsel %vm255, %v2496, 0
    %2525 = vmatprep.subr.bf16.mxu0 0
    %2526 = vmatpush1.bf16.msra.mxu0 0
    %2527 = vmatprep.subr.bf16.mxu0 0
    %2528 = vmatpush1.bf16.msra.mxu0 0
    %2529 = vmatprep.subr.bf16.mxu0 0
    %2530 = vmatpush1.bf16.msra.mxu0 0
    %2531 = vmatprep.subr.bf16.mxu0 0
    %2532 = vmatpush1.bf16.msra.mxu0 0
    %2533 = vmatprep.subr.bf16.mxu0 0
    %2534 = vmatpush1.bf16.msra.mxu0 0
    %2535 = vmatprep.subr.bf16.mxu0 0
    %2536 = vmatpush1.bf16.msra.mxu0 0
    %2537 = vmatprep.subr.bf16.mxu0 0
    %2538 = vmatpush1.bf16.msra.mxu0 %v2519
    %2539 = vmatprep.subr.bf16.mxu0 0
    %2540 = vmatpush1.bf16.msra.mxu0 %v2518
    %2541 = vmatprep.subr.bf16.mxu0 0
    %2542 = vmatpush2.bf16.msra.mxu0 0
    %2543 = vmatprep.subr.bf16.mxu0 0
    %2544 = vmatpush2.bf16.msra.mxu0 0
    %2545 = vmatprep.subr.bf16.mxu0 0
    %2546 = vmatpush2.bf16.msra.mxu0 0
    %2547 = vmatprep.subr.bf16.mxu0 0
    %2548 = vmatpush2.bf16.msra.mxu0 0
    %2549 = vmatprep.subr.bf16.mxu0 0
    %2550 = vmatpush2.bf16.msra.mxu0 0
    %2551 = vmatprep.subr.bf16.mxu0 0
    %2552 = vmatpush2.bf16.msra.mxu0 0
    %2553 = vmatprep.subr.bf16.mxu0 0
    %2554 = vmatpush2.bf16.msra.mxu0 0
    %2555 = vmatprep.subr.bf16.mxu0 0
    %2556 = vmatpush2.bf16.msra.mxu0 0
    %2557 = vmatprep.mubr.bf16.mxu0 0
    %2558 = vmatmul.mubr.bf16.gmra.mxu0 %v2523
    %v2559 = vpop.f32.mrf.mxu0
    %v2560 = vadd.f32 %v2508, %v2559
    %v2561 = vpop.f32.mrf.mxu0
    %v2562 = vpop.f32.mrf.mxu0
    %v2563 = vpop.f32.mrf.mxu0
    %2564 = vdwg.mxu0
    %v2565 = vadd.f32 %v1505, %v2560
    %s2566 = scalar_lea.vmem %s9, 1
    %v2567 = vld [vmem:[%s2566] sm:$0x1]
    %s2568 = scalar_lea.vmem %s10, 1
    %v2569 = vld [vmem:[%s2568] sm:$0x1]
    %v2570 = vsel %vm1296, %v2565, 0.0
    %2571 = vadd.xlane.f32.xlu0 %v2570
    %v2572 = vpop.xlane.xlu0 %2571
    %v2573 = vmul.f32 %v2572, %v1300
    %v2574 = vsub.f32 %v2565, %v2573
    %v2575 = vmul.f32 %v2574, %v2574
    %v2576 = vsel %vm1296, %v2575, 0.0
    %2577 = vadd.xlane.f32.xlu0 %v2576
    %v2578 = vpop.xlane.xlu0 %2577
    %v2579 = vmul.f32 %v2578, %v1300
    %v2580 = vadd.f32 %v2579, 1e-05
    %v2581 = vrsqrt.pop %v2580
    %v2582 = vmul.f32 %v2574, %v2581
    %v2584 = vlaneseq
    %v2585 = vshrl.u32 %v2584, 7
    %v2586 = vsub.s32 0, %v2585
    %v2587 = vrot.slane %v2567, %v2586
    %v2589 = vmul.f32 %v2582, %v2587
    %v2591 = vlaneseq
    %v2592 = vshrl.u32 %v2591, 7
    %v2593 = vsub.s32 0, %v2592
    %v2594 = vrot.slane %v2569, %v2593
    %v2596 = vadd.f32 %v2589, %v2594
    %v2597 = vpack.c.bf16 %v2596, %v2596
    %s2598 = scalar_lea.vmem [#allocation4], 16
    %v2599 = vld [vmem:[%s2598] sm:$0xf]
    %v2600 = vld [vmem:[%s2598 + $0x4] sm:$0xf]
    %v2601 = vld [vmem:[%s2598 + $0x8] sm:$0xf]
    %v2602 = vld [vmem:[%s2598 + $0xc] sm:$0xf]
    %s2603 = scalar_lea.vmem %s12, 1
    %v2604 = vld [vmem:[%s2603] sm:$0x1]
    %v2606 = vlaneseq
    %v2607 = vshrl.u32 %v2606, 7
    %v2608 = vsub.s32 0, %v2607
    %v2609 = vrot.slane %v2604, %v2608
    %v2615 = vunpack.c.l.b16 %v2599
    %v2616 = vunpack.c.l.b16 %v2600
    %v2617 = vunpack.c.l.b16 %v2601
    %v2618 = vunpack.c.l.b16 %v2602
    %v2619 = vpack.c.b16 %v2616, %v2615
    %v2620 = vpack.c.b16 %v2618, %v2617
    %v2624 = vsel %vm255, %v2597, 0
    %2626 = vmatprep.subr.bf16.mxu0 0
    %2627 = vmatpush1.bf16.msra.mxu0 0
    %2628 = vmatprep.subr.bf16.mxu0 0
    %2629 = vmatpush1.bf16.msra.mxu0 0
    %2630 = vmatprep.subr.bf16.mxu0 0
    %2631 = vmatpush1.bf16.msra.mxu0 0
    %2632 = vmatprep.subr.bf16.mxu0 0
    %2633 = vmatpush1.bf16.msra.mxu0 0
    %2634 = vmatprep.subr.bf16.mxu0 0
    %2635 = vmatpush1.bf16.msra.mxu0 0
    %2636 = vmatprep.subr.bf16.mxu0 0
    %2637 = vmatpush1.bf16.msra.mxu0 0
    %2638 = vmatprep.subr.bf16.mxu0 0
    %2639 = vmatpush1.bf16.msra.mxu0 %v2620
    %2640 = vmatprep.subr.bf16.mxu0 0
    %2641 = vmatpush1.bf16.msra.mxu0 %v2619
    %2642 = vmatprep.subr.bf16.mxu0 0
    %2643 = vmatpush2.bf16.msra.mxu0 0
    %2644 = vmatprep.subr.bf16.mxu0 0
    %2645 = vmatpush2.bf16.msra.mxu0 0
    %2646 = vmatprep.subr.bf16.mxu0 0
    %2647 = vmatpush2.bf16.msra.mxu0 0
    %2648 = vmatprep.subr.bf16.mxu0 0
    %2649 = vmatpush2.bf16.msra.mxu0 0
    %2650 = vmatprep.subr.bf16.mxu0 0
    %2651 = vmatpush2.bf16.msra.mxu0 0
    %2652 = vmatprep.subr.bf16.mxu0 0
    %2653 = vmatpush2.bf16.msra.mxu0 0
    %2654 = vmatprep.subr.bf16.mxu0 0
    %2655 = vmatpush2.bf16.msra.mxu0 0
    %2656 = vmatprep.subr.bf16.mxu0 0
    %2657 = vmatpush2.bf16.msra.mxu0 0
    %2658 = vmatprep.mubr.bf16.mxu0 0
    %2659 = vmatmul.mubr.bf16.gmra.mxu0 %v2624
    %v2660 = vpop.f32.mrf.mxu0
    %v2661 = vadd.f32 %v2609, %v2660
    %v2662 = vpop.f32.mrf.mxu0
    %v2663 = vpop.f32.mrf.mxu0
    %v2664 = vpop.f32.mrf.mxu0
    %2665 = vdwg.mxu0
    %v2666 = vmax.f32 %v2661, 0.0
    %v2667 = vpack.c.bf16 %v2666, %v2666
    %s2668 = scalar_lea.vmem %s13, 32
    %v2669 = vld [vmem:[%s2668] sm:$0xf]
    %v2670 = vld [vmem:[%s2668 + $0x4] sm:$0xf]
    %v2671 = vld [vmem:[%s2668 + $0x8] sm:$0xf]
    %v2672 = vld [vmem:[%s2668 + $0xc] sm:$0xf]
    %v2673 = vld [vmem:[%s2668 + $0x10] sm:$0xf]
    %v2674 = vld [vmem:[%s2668 + $0x14] sm:$0xf]
    %v2675 = vld [vmem:[%s2668 + $0x18] sm:$0xf]
    %v2676 = vld [vmem:[%s2668 + $0x1c] sm:$0xf]
    %s2677 = scalar_lea.vmem %s14, 1
    %v2678 = vld [vmem:[%s2677] sm:$0x1]
    %v2680 = vlaneseq
    %v2681 = vshrl.u32 %v2680, 7
    %v2682 = vsub.s32 0, %v2681
    %v2683 = vrot.slane %v2678, %v2682
    %v2693 = vunpack.c.l.b16 %v2669
    %v2694 = vunpack.c.l.b16 %v2670
    %v2695 = vunpack.c.l.b16 %v2671
    %v2696 = vunpack.c.l.b16 %v2672
    %v2697 = vunpack.c.l.b16 %v2673
    %v2698 = vunpack.c.l.b16 %v2674
    %v2699 = vunpack.c.l.b16 %v2675
    %v2700 = vunpack.c.l.b16 %v2676
    %v2701 = vpack.c.b16 %v2694, %v2693
    %v2702 = vpack.c.b16 %v2696, %v2695
    %v2703 = vpack.c.b16 %v2698, %v2697
    %v2704 = vpack.c.b16 %v2700, %v2699
    %v2710 = vsel %vm165, %v2667, 0
    %2712 = vmatprep.subr.bf16.mxu0 0
    %2713 = vmatpush1.bf16.msra.mxu0 0
    %2714 = vmatprep.subr.bf16.mxu0 0
    %2715 = vmatpush1.bf16.msra.mxu0 0
    %2716 = vmatprep.subr.bf16.mxu0 0
    %2717 = vmatpush1.bf16.msra.mxu0 0
    %2718 = vmatprep.subr.bf16.mxu0 0
    %2719 = vmatpush1.bf16.msra.mxu0 0
    %2720 = vmatprep.subr.bf16.mxu0 0
    %2721 = vmatpush1.bf16.msra.mxu0 %v2704
    %2722 = vmatprep.subr.bf16.mxu0 0
    %2723 = vmatpush1.bf16.msra.mxu0 %v2703
    %2724 = vmatprep.subr.bf16.mxu0 0
    %2725 = vmatpush1.bf16.msra.mxu0 %v2702
    %2726 = vmatprep.subr.bf16.mxu0 0
    %2727 = vmatpush1.bf16.msra.mxu0 %v2701
    %2728 = vmatprep.subr.bf16.mxu0 0
    %2729 = vmatpush2.bf16.msra.mxu0 0
    %2730 = vmatprep.subr.bf16.mxu0 0
    %2731 = vmatpush2.bf16.msra.mxu0 0
    %2732 = vmatprep.subr.bf16.mxu0 0
    %2733 = vmatpush2.bf16.msra.mxu0 0
    %2734 = vmatprep.subr.bf16.mxu0 0
    %2735 = vmatpush2.bf16.msra.mxu0 0
    %2736 = vmatprep.subr.bf16.mxu0 0
    %2737 = vmatpush2.bf16.msra.mxu0 0
    %2738 = vmatprep.subr.bf16.mxu0 0
    %2739 = vmatpush2.bf16.msra.mxu0 0
    %2740 = vmatprep.subr.bf16.mxu0 0
    %2741 = vmatpush2.bf16.msra.mxu0 0
    %2742 = vmatprep.subr.bf16.mxu0 0
    %2743 = vmatpush2.bf16.msra.mxu0 0
    %2744 = vmatprep.mubr.bf16.mxu0 0
    %2745 = vmatmul.mubr.bf16.gmra.mxu0 %v2710
    %v2746 = vpop.f32.mrf.mxu0
    %v2747 = vadd.f32 %v2683, %v2746
    %v2748 = vpop.f32.mrf.mxu0
    %v2749 = vpop.f32.mrf.mxu0
    %v2750 = vpop.f32.mrf.mxu0
    %2751 = vdwg.mxu0
    %v2752 = vadd.f32 %v2596, %v2747
    %s2753 = scalar_lea.vmem %s15, 1
    %v2754 = vld [vmem:[%s2753] sm:$0x1]
    %s2755 = scalar_lea.vmem %s16, 1
    %v2756 = vld [vmem:[%s2755] sm:$0x1]
    %v2757 = vsel %vm1296, %v2752, 0.0
    %2758 = vadd.xlane.f32.xlu0 %v2757
    %v2759 = vpop.xlane.xlu0 %2758
    %v2760 = vmul.f32 %v2759, %v1300
    %v2761 = vsub.f32 %v2752, %v2760
    %v2762 = vmul.f32 %v2761, %v2761
    %v2763 = vsel %vm1296, %v2762, 0.0
    %2764 = vadd.xlane.f32.xlu0 %v2763
    %v2765 = vpop.xlane.xlu0 %2764
    %v2766 = vmul.f32 %v2765, %v1300
    %v2767 = vadd.f32 %v2766, 1e-05
    %v2768 = vrsqrt.pop %v2767
    %v2769 = vmul.f32 %v2761, %v2768
    %v2771 = vlaneseq
    %v2772 = vshrl.u32 %v2771, 7
    %v2773 = vsub.s32 0, %v2772
    %v2774 = vrot.slane %v2754, %v2773
    %v2776 = vmul.f32 %v2769, %v2774
    %v2778 = vlaneseq
    %v2779 = vshrl.u32 %v2778, 7
    %v2780 = vsub.s32 0, %v2779
    %v2781 = vrot.slane %v2756, %v2780
    %v2783 = vadd.f32 %v2776, %v2781
    %v2784 = vsel %vm255, %v2783, 0.0
    %2785 = vst [vmem:[%s21] sm:$0x3] %v2784
    // Predicated region
    $region102: #{_forward_impl.3} parent=1 // pred_check
      _
    $region103: #{_forward_impl.3} parent=1 // pred_check_branch
      %2787 = sbr.rel (0) target = $region105
    $region104: #{_forward_impl.3} parent=1 // pred_region
      _
    $region105: #{_forward_impl.3} parent=1 // pred_fallthru
      _
    // Predicated region
    $region106: #{_forward_impl.3} parent=1 // pred_check
      _
    $region107: #{_forward_impl.3} parent=1 // pred_check_branch
      %2789 = sbr.rel (0) target = $region109
    $region108: #{_forward_impl.3} parent=1 // pred_region
      _
    $region109: #{_forward_impl.3} parent=1 // pred_fallthru
      _
    %2790 = vsyncpa [#allocation3], 1
    %2791 = vsyncpa [#allocation5], 1
    %2792 = vsyncpa [#allocation8], 1

// kernel: _forward_impl.4
$region0: #{_forward_impl.4}
  #allocation0 [shape = 'u32[]', space=smem, size = 0x4, offset = 0x4, fixed_abs, tag = 'smem constant byte address 0x4 - core index']
  #allocation1 [shape = 'u32[144,128]{1,0:T(1,128)}', space=vmem, size = 0x12000, scoped, tag = 'internal scratch']
  %s0 = inlined_call_operand.vmem [shape: f32[2,576], index: 0, kind: input, shape index: {}]
  %s1 = inlined_call_operand.vmem [shape: bf16[576,32], index: 1, kind: input, shape index: {}]
  %s2 = inlined_call_operand.vmem [shape: f32[1,32], index: 2, kind: input, shape index: {}, may-alias: {2,18}]
  %s3 = inlined_call_operand.vmem [shape: f32[2,1], index: 3, kind: input, shape index: {}]
  %s4 = inlined_call_operand.vmem [shape: f32[2,32], index: 4, kind: input, shape index: {}]
  %s5 = inlined_call_operand.vmem [shape: bf16[2,32,96], index: 5, kind: input, shape index: {}]
  %s6 = inlined_call_operand.vmem [shape: f32[2,1,96], index: 6, kind: input, shape index: {}]
  %s7 = inlined_call_operand.vmem [shape: bf16[2,32,32], index: 7, kind: input, shape index: {}]
  %s8 = inlined_call_operand.vmem [shape: f32[2,1,32], index: 8, kind: input, shape index: {}, may-alias: {8,10,14,16}]
  %s9 = inlined_call_operand.vmem [shape: f32[2,1,32], index: 9, kind: input, shape index: {}, may-alias: {9,15}]
  %s10 = inlined_call_operand.vmem [shape: f32[2,1,32], index: 10, kind: input, shape index: {}, may-alias: {8,10,14,16}]
  %s11 = inlined_call_operand.vmem [shape: bf16[2,32,64], index: 11, kind: input, shape index: {}]
  %s12 = inlined_call_operand.vmem [shape: f32[2,1,64], index: 12, kind: input, shape index: {}]
  %s13 = inlined_call_operand.vmem [shape: bf16[2,64,32], index: 13, kind: input, shape index: {}]
  %s14 = inlined_call_operand.vmem [shape: f32[2,1,32], index: 14, kind: input, shape index: {}, may-alias: {8,10,14,16}]
  %s15 = inlined_call_operand.vmem [shape: f32[2,1,32], index: 15, kind: input, shape index: {}, may-alias: {9,15}]
  %s16 = inlined_call_operand.vmem [shape: f32[2,1,32], index: 16, kind: input, shape index: {}, may-alias: {8,10,14,16}]
  %s17 = inlined_call_operand.vmem [shape: bf16[32,32], index: 17, kind: input, shape index: {}]
  %s18 = inlined_call_operand.vmem [shape: f32[1,32], index: 18, kind: input, shape index: {}, may-alias: {2,18}]
  %s19 = inlined_call_operand.vmem [shape: bf16[32,128], index: 19, kind: input, shape index: {}]
  %s20 = inlined_call_operand.vmem [shape: f32[1,128], index: 20, kind: input, shape index: {}]
  %s21 = inlined_call_operand.vmem [shape: f32[2,128], index: 21, kind: output, shape index: {}]
  %s22 = sld [smem:[#allocation0]]
  $region94: #{_forward_impl.4} parent=0
    _
  %s24 = ssub.s32 1, %s22
  %s25 = scalar_select 0, %s24, %s22
  // Predicated region
  $region2: #{_forward_impl.4} parent=0 // pred_check
    _
  $region3: #{_forward_impl.4} parent=0 // pred_check_branch
    %27 = sbr.rel (0) target = $region5
  $region4: #{_forward_impl.4} parent=0 // pred_region
    _
  $region5: #{_forward_impl.4} parent=0 // pred_fallthru
    _
  // Predicated region
  $region6: #{_forward_impl.4} parent=0 // pred_check
    _
  $region7: #{_forward_impl.4} parent=0 // pred_check_branch
    %29 = sbr.rel (0) target = $region9
  $region8: #{_forward_impl.4} parent=0 // pred_region
    _
  $region9: #{_forward_impl.4} parent=0 // pred_fallthru
    _
  // Predicated region
  $region10: #{_forward_impl.4} parent=0 // pred_check
    _
  $region11: #{_forward_impl.4} parent=0 // pred_check_branch
    %31 = sbr.rel (0) target = $region13
  $region12: #{_forward_impl.4} parent=0 // pred_region
    _
  $region13: #{_forward_impl.4} parent=0 // pred_fallthru
    _
  // Predicated region
  $region14: #{_forward_impl.4} parent=0 // pred_check
    _
  $region15: #{_forward_impl.4} parent=0 // pred_check_branch
    %33 = sbr.rel (0) target = $region17
  $region16: #{_forward_impl.4} parent=0 // pred_region
    _
  $region17: #{_forward_impl.4} parent=0 // pred_fallthru
    _
  // Predicated region
  $region18: #{_forward_impl.4} parent=0 // pred_check
    _
  $region19: #{_forward_impl.4} parent=0 // pred_check_branch
    %35 = sbr.rel (0) target = $region21
  $region20: #{_forward_impl.4} parent=0 // pred_region
    _
  $region21: #{_forward_impl.4} parent=0 // pred_fallthru
    _
  // Predicated region
  $region22: #{_forward_impl.4} parent=0 // pred_check
    _
  $region23: #{_forward_impl.4} parent=0 // pred_check_branch
    %37 = sbr.rel (0) target = $region25
  $region24: #{_forward_impl.4} parent=0 // pred_region
    _
  $region25: #{_forward_impl.4} parent=0 // pred_fallthru
    _
  // Predicated region
  $region26: #{_forward_impl.4} parent=0 // pred_check
    _
  $region27: #{_forward_impl.4} parent=0 // pred_check_branch
    %39 = sbr.rel (0) target = $region29
  $region28: #{_forward_impl.4} parent=0 // pred_region
    _
  $region29: #{_forward_impl.4} parent=0 // pred_fallthru
    _
  // Predicated region
  $region30: #{_forward_impl.4} parent=0 // pred_check
    _
  $region31: #{_forward_impl.4} parent=0 // pred_check_branch
    %41 = sbr.rel (0) target = $region33
  $region32: #{_forward_impl.4} parent=0 // pred_region
    _
  $region33: #{_forward_impl.4} parent=0 // pred_fallthru
    _
  // Predicated region
  $region34: #{_forward_impl.4} parent=0 // pred_check
    _
  $region35: #{_forward_impl.4} parent=0 // pred_check_branch
    %43 = sbr.rel (0) target = $region37
  $region36: #{_forward_impl.4} parent=0 // pred_region
    _
  $region37: #{_forward_impl.4} parent=0 // pred_fallthru
    _
  // Predicated region
  $region38: #{_forward_impl.4} parent=0 // pred_check
    _
  $region39: #{_forward_impl.4} parent=0 // pred_check_branch
    %45 = sbr.rel (0) target = $region41
  $region40: #{_forward_impl.4} parent=0 // pred_region
    _
  $region41: #{_forward_impl.4} parent=0 // pred_fallthru
    _
  // Predicated region
  $region42: #{_forward_impl.4} parent=0 // pred_check
    _
  $region43: #{_forward_impl.4} parent=0 // pred_check_branch
    %47 = sbr.rel (0) target = $region45
  $region44: #{_forward_impl.4} parent=0 // pred_region
    _
  $region45: #{_forward_impl.4} parent=0 // pred_fallthru
    _
  // Predicated region
  $region46: #{_forward_impl.4} parent=0 // pred_check
    _
  $region47: #{_forward_impl.4} parent=0 // pred_check_branch
    %49 = sbr.rel (0) target = $region49
  $region48: #{_forward_impl.4} parent=0 // pred_region
    _
  $region49: #{_forward_impl.4} parent=0 // pred_fallthru
    _
  // Predicated region
  $region50: #{_forward_impl.4} parent=0 // pred_check
    _
  $region51: #{_forward_impl.4} parent=0 // pred_check_branch
    %51 = sbr.rel (0) target = $region53
  $region52: #{_forward_impl.4} parent=0 // pred_region
    _
  $region53: #{_forward_impl.4} parent=0 // pred_fallthru
    _
  // Predicated region
  $region54: #{_forward_impl.4} parent=0 // pred_check
    _
  $region55: #{_forward_impl.4} parent=0 // pred_check_branch
    %53 = sbr.rel (0) target = $region57
  $region56: #{_forward_impl.4} parent=0 // pred_region
    _
  $region57: #{_forward_impl.4} parent=0 // pred_fallthru
    _
  // Predicated region
  $region58: #{_forward_impl.4} parent=0 // pred_check
    _
  $region59: #{_forward_impl.4} parent=0 // pred_check_branch
    %55 = sbr.rel (0) target = $region61
  $region60: #{_forward_impl.4} parent=0 // pred_region
    _
  $region61: #{_forward_impl.4} parent=0 // pred_fallthru
    _
  // Predicated region
  $region62: #{_forward_impl.4} parent=0 // pred_check
    _
  $region63: #{_forward_impl.4} parent=0 // pred_check_branch
    %57 = sbr.rel (0) target = $region65
  $region64: #{_forward_impl.4} parent=0 // pred_region
    _
  $region65: #{_forward_impl.4} parent=0 // pred_fallthru
    _
  // Predicated region
  $region66: #{_forward_impl.4} parent=0 // pred_check
    _
  $region67: #{_forward_impl.4} parent=0 // pred_check_branch
    %59 = sbr.rel (0) target = $region69
  $region68: #{_forward_impl.4} parent=0 // pred_region
    _
  $region69: #{_forward_impl.4} parent=0 // pred_fallthru
    _
  // Predicated region
  $region70: #{_forward_impl.4} parent=0 // pred_check
    _
  $region71: #{_forward_impl.4} parent=0 // pred_check_branch
    %61 = sbr.rel (0) target = $region73
  $region72: #{_forward_impl.4} parent=0 // pred_region
    _
  $region73: #{_forward_impl.4} parent=0 // pred_fallthru
    _
  // Predicated region
  $region74: #{_forward_impl.4} parent=0 // pred_check
    _
  $region75: #{_forward_impl.4} parent=0 // pred_check_branch
    %63 = sbr.rel (0) target = $region77
  $region76: #{_forward_impl.4} parent=0 // pred_region
    _
  $region77: #{_forward_impl.4} parent=0 // pred_fallthru
    _
  // Predicated region
  $region78: #{_forward_impl.4} parent=0 // pred_check
    _
  $region79: #{_forward_impl.4} parent=0 // pred_check_branch
    %65 = sbr.rel (0) target = $region81
  $region80: #{_forward_impl.4} parent=0 // pred_region
    _
  $region81: #{_forward_impl.4} parent=0 // pred_fallthru
    _
  // Predicated region
  $region82: #{_forward_impl.4} parent=0 // pred_check
    _
  $region83: #{_forward_impl.4} parent=0 // pred_check_branch
    %67 = sbr.rel (0) target = $region85
  $region84: #{_forward_impl.4} parent=0 // pred_region
    _
  $region85: #{_forward_impl.4} parent=0 // pred_fallthru
    _
  %v69 = vld [vmem:[%s0] sm:$0xff]
  %v70 = vld [vmem:[%s0 + $0x8] sm:$0x3]
  %v73 = vcombine.high %v69, %v69
  %v75 = vunpack.c.l.s4 1983009808
  %v76 = vunpack.c.0.s8 %v75
  %v77 = vlaneseq
  %v78 = vshrl.u32 %v77, 7
  %v79 = vsub.s32 %v76, %v78
  %v80 = vrot.slane %v69, %v79
  %v82 = vunpack.c.l.s4 1983009808
  %v83 = vunpack.c.0.s8 %v82
  %v84 = vlaneseq
  %v85 = vshrl.u32 %v84, 7
  %v86 = vsub.s32 %v83, %v85
  %v87 = vrot.slane %v73, %v86
  %v88 = vcombine.high %v80, %v80
  %v89 = vcombine.high %v87, %v87
  %v91 = vunpack.c.l.s4 1983009808
  %v92 = vunpack.c.0.s8 %v91
  %v93 = vlaneseq
  %v94 = vshrl.u32 %v93, 7
  %v95 = vsub.s32 %v92, %v94
  %v96 = vrot.slane %v70, %v95
  %v102 = vpack.c.bf16 %v80, %v80
  %v103 = vpack.c.bf16 %v88, %v88
  %v104 = vpack.c.bf16 %v87, %v87
  %v105 = vpack.c.bf16 %v89, %v89
  %v106 = vpack.c.bf16 %v96, %v96
  %v107 = vld [vmem:[%s1] sm:$0xf]
  %v108 = vld [vmem:[%s1 + $0x4] sm:$0xf]
  %v109 = vld [vmem:[%s1 + $0x8] sm:$0xf]
  %v110 = vld [vmem:[%s1 + $0xc] sm:$0xf]
  %v111 = vld [vmem:[%s1 + $0x10] sm:$0xf]
  %v112 = vld [vmem:[%s1 + $0x14] sm:$0xf]
  %v113 = vld [vmem:[%s1 + $0x18] sm:$0xf]
  %v114 = vld [vmem:[%s1 + $0x1c] sm:$0xf]
  %v115 = vld [vmem:[%s1 + $0x20] sm:$0xf]
  %v116 = vld [vmem:[%s1 + $0x24] sm:$0xf]
  %v117 = vld [vmem:[%s1 + $0x28] sm:$0xf]
  %v118 = vld [vmem:[%s1 + $0x2c] sm:$0xf]
  %v119 = vld [vmem:[%s1 + $0x30] sm:$0xf]
  %v120 = vld [vmem:[%s1 + $0x34] sm:$0xf]
  %v121 = vld [vmem:[%s1 + $0x38] sm:$0xf]
  %v122 = vld [vmem:[%s1 + $0x3c] sm:$0xf]
  %v123 = vld [vmem:[%s1 + $0x40] sm:$0xf]
  %v124 = vld [vmem:[%s1 + $0x44] sm:$0xf]
  %v125 = vld [vmem:[%s1 + $0x48] sm:$0xf]
  %v126 = vld [vmem:[%s1 + $0x4c] sm:$0xf]
  %v127 = vld [vmem:[%s1 + $0x50] sm:$0xf]
  %v128 = vld [vmem:[%s1 + $0x54] sm:$0xf]
  %v129 = vld [vmem:[%s1 + $0x58] sm:$0xf]
  %v130 = vld [vmem:[%s1 + $0x5c] sm:$0xf]
  %v131 = vld [vmem:[%s1 + $0x60] sm:$0xf]
  %v132 = vld [vmem:[%s1 + $0x64] sm:$0xf]
  %v133 = vld [vmem:[%s1 + $0x68] sm:$0xf]
  %v134 = vld [vmem:[%s1 + $0x6c] sm:$0xf]
  %v135 = vld [vmem:[%s1 + $0x70] sm:$0xf]
  %v136 = vld [vmem:[%s1 + $0x74] sm:$0xf]
  %v137 = vld [vmem:[%s1 + $0x78] sm:$0xf]
  %v138 = vld [vmem:[%s1 + $0x7c] sm:$0xf]
  %v139 = vld [vmem:[%s1 + $0x80] sm:$0xf]
  %v140 = vld [vmem:[%s1 + $0x84] sm:$0xf]
  %v141 = vld [vmem:[%s1 + $0x88] sm:$0xf]
  %v142 = vld [vmem:[%s1 + $0x8c] sm:$0xf]
  %v143 = vld [vmem:[%s1 + $0x90] sm:$0xf]
  %v144 = vld [vmem:[%s1 + $0x94] sm:$0xf]
  %v145 = vld [vmem:[%s1 + $0x98] sm:$0xf]
  %v146 = vld [vmem:[%s1 + $0x9c] sm:$0xf]
  %v147 = vld [vmem:[%s1 + $0xa0] sm:$0xf]
  %v148 = vld [vmem:[%s1 + $0xa4] sm:$0xf]
  %v149 = vld [vmem:[%s1 + $0xa8] sm:$0xf]
  %v150 = vld [vmem:[%s1 + $0xac] sm:$0xf]
  %v151 = vld [vmem:[%s1 + $0xb0] sm:$0xf]
  %v152 = vld [vmem:[%s1 + $0xb4] sm:$0xf]
  %v153 = vld [vmem:[%s1 + $0xb8] sm:$0xf]
  %v154 = vld [vmem:[%s1 + $0xbc] sm:$0xf]
  %v155 = vld [vmem:[%s1 + $0xc0] sm:$0xf]
  %v156 = vld [vmem:[%s1 + $0xc4] sm:$0xf]
  %v157 = vld [vmem:[%s1 + $0xc8] sm:$0xf]
  %v158 = vld [vmem:[%s1 + $0xcc] sm:$0xf]
  %v159 = vld [vmem:[%s1 + $0xd0] sm:$0xf]
  %v160 = vld [vmem:[%s1 + $0xd4] sm:$0xf]
  %v161 = vld [vmem:[%s1 + $0xd8] sm:$0xf]
  %v162 = vld [vmem:[%s1 + $0xdc] sm:$0xf]
  %v163 = vld [vmem:[%s1 + $0xe0] sm:$0xf]
  %v164 = vld [vmem:[%s1 + $0xe4] sm:$0xf]
  %v165 = vld [vmem:[%s1 + $0xe8] sm:$0xf]
  %v166 = vld [vmem:[%s1 + $0xec] sm:$0xf]
  %v167 = vld [vmem:[%s1 + $0xf0] sm:$0xf]
  %v168 = vld [vmem:[%s1 + $0xf4] sm:$0xf]
  %v169 = vld [vmem:[%s1 + $0xf8] sm:$0xf]
  %v170 = vld [vmem:[%s1 + $0xfc] sm:$0xf]
  %v171 = vld [vmem:[%s1 + $0x100] sm:$0xf]
  %v172 = vld [vmem:[%s1 + $0x104] sm:$0xf]
  %v173 = vld [vmem:[%s1 + $0x108] sm:$0xf]
  %v174 = vld [vmem:[%s1 + $0x10c] sm:$0xf]
  %v175 = vld [vmem:[%s1 + $0x110] sm:$0xf]
  %v176 = vld [vmem:[%s1 + $0x114] sm:$0xf]
  %v177 = vld [vmem:[%s1 + $0x118] sm:$0xf]
  %v178 = vld [vmem:[%s1 + $0x11c] sm:$0xf]
  %v179 = vld [vmem:[%s2] sm:$0x1]
  %v181 = vlaneseq
  %v182 = vshrl.u32 %v181, 7
  %v183 = vsub.s32 0, %v182
  %v184 = vrot.slane %v179, %v183
  %v258 = vunpack.c.l.b16 %v107
  %v259 = vunpack.c.l.b16 %v108
  %v260 = vunpack.c.l.b16 %v109
  %v261 = vunpack.c.l.b16 %v110
  %v262 = vunpack.c.l.b16 %v111
  %v263 = vunpack.c.l.b16 %v112
  %v264 = vunpack.c.l.b16 %v113
  %v265 = vunpack.c.l.b16 %v114
  %v266 = vunpack.c.l.b16 %v115
  %v267 = vunpack.c.l.b16 %v116
  %v268 = vunpack.c.l.b16 %v117
  %v269 = vunpack.c.l.b16 %v118
  %v270 = vunpack.c.l.b16 %v119
  %v271 = vunpack.c.l.b16 %v120
  %v272 = vunpack.c.l.b16 %v121
  %v273 = vunpack.c.l.b16 %v122
  %v274 = vunpack.c.l.b16 %v123
  %v275 = vunpack.c.l.b16 %v124
  %v276 = vunpack.c.l.b16 %v125
  %v277 = vunpack.c.l.b16 %v126
  %v278 = vunpack.c.l.b16 %v127
  %v279 = vunpack.c.l.b16 %v128
  %v280 = vunpack.c.l.b16 %v129
  %v281 = vunpack.c.l.b16 %v130
  %v282 = vunpack.c.l.b16 %v131
  %v283 = vunpack.c.l.b16 %v132
  %v284 = vunpack.c.l.b16 %v133
  %v285 = vunpack.c.l.b16 %v134
  %v286 = vunpack.c.l.b16 %v135
  %v287 = vunpack.c.l.b16 %v136
  %v288 = vunpack.c.l.b16 %v137
  %v289 = vunpack.c.l.b16 %v138
  %v290 = vunpack.c.l.b16 %v139
  %v291 = vunpack.c.l.b16 %v140
  %v292 = vunpack.c.l.b16 %v141
  %v293 = vunpack.c.l.b16 %v142
  %v294 = vunpack.c.l.b16 %v143
  %v295 = vunpack.c.l.b16 %v144
  %v296 = vunpack.c.l.b16 %v145
  %v297 = vunpack.c.l.b16 %v146
  %v298 = vunpack.c.l.b16 %v147
  %v299 = vunpack.c.l.b16 %v148
  %v300 = vunpack.c.l.b16 %v149
  %v301 = vunpack.c.l.b16 %v150
  %v302 = vunpack.c.l.b16 %v151
  %v303 = vunpack.c.l.b16 %v152
  %v304 = vunpack.c.l.b16 %v153
  %v305 = vunpack.c.l.b16 %v154
  %v306 = vunpack.c.l.b16 %v155
  %v307 = vunpack.c.l.b16 %v156
  %v308 = vunpack.c.l.b16 %v157
  %v309 = vunpack.c.l.b16 %v158
  %v310 = vunpack.c.l.b16 %v159
  %v311 = vunpack.c.l.b16 %v160
  %v312 = vunpack.c.l.b16 %v161
  %v313 = vunpack.c.l.b16 %v162
  %v314 = vunpack.c.l.b16 %v163
  %v315 = vunpack.c.l.b16 %v164
  %v316 = vunpack.c.l.b16 %v165
  %v317 = vunpack.c.l.b16 %v166
  %v318 = vunpack.c.l.b16 %v167
  %v319 = vunpack.c.l.b16 %v168
  %v320 = vunpack.c.l.b16 %v169
  %v321 = vunpack.c.l.b16 %v170
  %v322 = vunpack.c.l.b16 %v171
  %v323 = vunpack.c.l.b16 %v172
  %v324 = vunpack.c.l.b16 %v173
  %v325 = vunpack.c.l.b16 %v174
  %v326 = vunpack.c.l.b16 %v175
  %v327 = vunpack.c.l.b16 %v176
  %v328 = vunpack.c.l.b16 %v177
  %v329 = vunpack.c.l.b16 %v178
  %v330 = vpack.c.b16 %v259, %v258
  %v331 = vpack.c.b16 %v261, %v260
  %v332 = vpack.c.b16 %v263, %v262
  %v333 = vpack.c.b16 %v265, %v264
  %v334 = vpack.c.b16 %v267, %v266
  %v335 = vpack.c.b16 %v269, %v268
  %v336 = vpack.c.b16 %v271, %v270
  %v337 = vpack.c.b16 %v273, %v272
  %v338 = vpack.c.b16 %v275, %v274
  %v339 = vpack.c.b16 %v277, %v276
  %v340 = vpack.c.b16 %v279, %v278
  %v341 = vpack.c.b16 %v281, %v280
  %v342 = vpack.c.b16 %v283, %v282
  %v343 = vpack.c.b16 %v285, %v284
  %v344 = vpack.c.b16 %v287, %v286
  %v345 = vpack.c.b16 %v289, %v288
  %v346 = vpack.c.b16 %v291, %v290
  %v347 = vpack.c.b16 %v293, %v292
  %v348 = vpack.c.b16 %v295, %v294
  %v349 = vpack.c.b16 %v297, %v296
  %v350 = vpack.c.b16 %v299, %v298
  %v351 = vpack.c.b16 %v301, %v300
  %v352 = vpack.c.b16 %v303, %v302
  %v353 = vpack.c.b16 %v305, %v304
  %v354 = vpack.c.b16 %v307, %v306
  %v355 = vpack.c.b16 %v309, %v308
  %v356 = vpack.c.b16 %v311, %v310
  %v357 = vpack.c.b16 %v313, %v312
  %v358 = vpack.c.b16 %v315, %v314
  %v359 = vpack.c.b16 %v317, %v316
  %v360 = vpack.c.b16 %v319, %v318
  %v361 = vpack.c.b16 %v321, %v320
  %v362 = vpack.c.b16 %v323, %v322
  %v363 = vpack.c.b16 %v325, %v324
  %v364 = vpack.c.b16 %v327, %v326
  %v365 = vpack.c.b16 %v329, %v328
  %vm402 = vcmask 523264
  %v404 = vsel %vm402, %v106, 0
  %406 = vmatprep.subr.bf16.mxu0 0
  %407 = vmatpush1.bf16.msra.mxu0 %v337
  %408 = vmatprep.subr.bf16.mxu0 0
  %409 = vmatpush1.bf16.msra.mxu0 %v336
  %410 = vmatprep.subr.bf16.mxu0 0
  %411 = vmatpush1.bf16.msra.mxu0 %v335
  %412 = vmatprep.subr.bf16.mxu0 0
  %413 = vmatpush1.bf16.msra.mxu0 %v334
  %414 = vmatprep.subr.bf16.mxu0 0
  %415 = vmatpush1.bf16.msra.mxu0 %v333
  %416 = vmatprep.subr.bf16.mxu0 0
  %417 = vmatpush1.bf16.msra.mxu0 %v332
  %418 = vmatprep.subr.bf16.mxu0 0
  %419 = vmatpush1.bf16.msra.mxu0 %v331
  %420 = vmatprep.subr.bf16.mxu0 0
  %421 = vmatpush1.bf16.msra.mxu0 %v330
  %422 = vmatprep.subr.bf16.mxu0 0
  %423 = vmatpush2.bf16.msra.mxu0 %v345
  %424 = vmatprep.subr.bf16.mxu0 0
  %425 = vmatpush2.bf16.msra.mxu0 %v344
  %426 = vmatprep.subr.bf16.mxu0 0
  %427 = vmatpush2.bf16.msra.mxu0 %v343
  %428 = vmatprep.subr.bf16.mxu0 0
  %429 = vmatpush2.bf16.msra.mxu0 %v342
  %430 = vmatprep.subr.bf16.mxu0 0
  %431 = vmatpush2.bf16.msra.mxu0 %v341
  %432 = vmatprep.subr.bf16.mxu0 0
  %433 = vmatpush2.bf16.msra.mxu0 %v340
  %434 = vmatprep.subr.bf16.mxu0 0
  %435 = vmatpush2.bf16.msra.mxu0 %v339
  %436 = vmatprep.subr.bf16.mxu0 0
  %437 = vmatpush2.bf16.msra.mxu0 %v338
  %438 = vmatprep.mubr.bf16.mxu0 %v103
  %439 = vmatmul.mubr.bf16.gmra.mxu0 %v102
  %v440 = vpop.f32.mrf.mxu0
  %v441 = vadd.f32 %v184, %v440
  %v442 = vpop.f32.mrf.mxu0
  %v443 = vpop.f32.mrf.mxu0
  %v444 = vpop.f32.mrf.mxu0
  %445 = vdwg.mxu0
  %446 = vmatprep.subr.bf16.mxu0 0
  %447 = vmatpush1.bf16.msra.mxu0 %v353
  %448 = vmatprep.subr.bf16.mxu0 0
  %449 = vmatpush1.bf16.msra.mxu0 %v352
  %450 = vmatprep.subr.bf16.mxu0 0
  %451 = vmatpush1.bf16.msra.mxu0 %v351
  %452 = vmatprep.subr.bf16.mxu0 0
  %453 = vmatpush1.bf16.msra.mxu0 %v350
  %454 = vmatprep.subr.bf16.mxu0 0
  %455 = vmatpush1.bf16.msra.mxu0 %v349
  %456 = vmatprep.subr.bf16.mxu0 0
  %457 = vmatpush1.bf16.msra.mxu0 %v348
  %458 = vmatprep.subr.bf16.mxu0 0
  %459 = vmatpush1.bf16.msra.mxu0 %v347
  %460 = vmatprep.subr.bf16.mxu0 0
  %461 = vmatpush1.bf16.msra.mxu0 %v346
  %462 = vmatprep.subr.bf16.mxu0 0
  %463 = vmatpush2.bf16.msra.mxu0 %v361
  %464 = vmatprep.subr.bf16.mxu0 0
  %465 = vmatpush2.bf16.msra.mxu0 %v360
  %466 = vmatprep.subr.bf16.mxu0 0
  %467 = vmatpush2.bf16.msra.mxu0 %v359
  %468 = vmatprep.subr.bf16.mxu0 0
  %469 = vmatpush2.bf16.msra.mxu0 %v358
  %470 = vmatprep.subr.bf16.mxu0 0
  %471 = vmatpush2.bf16.msra.mxu0 %v357
  %472 = vmatprep.subr.bf16.mxu0 0
  %473 = vmatpush2.bf16.msra.mxu0 %v356
  %474 = vmatprep.subr.bf16.mxu0 0
  %475 = vmatpush2.bf16.msra.mxu0 %v355
  %476 = vmatprep.subr.bf16.mxu0 0
  %477 = vmatpush2.bf16.msra.mxu0 %v354
  %478 = vmatprep.mubr.bf16.mxu0 %v105
  %479 = vmatmul.mubr.bf16.gmra.mxu0 %v104
  %v480 = vpop.f32.mrf.mxu0
  %v481 = vadd.f32 %v441, %v480
  %v482 = vpop.f32.mrf.mxu0
  %v483 = vpop.f32.mrf.mxu0
  %v484 = vpop.f32.mrf.mxu0
  %485 = vdwg.mxu0
  %486 = vmatprep.subr.bf16.mxu0 0
  %487 = vmatpush1.bf16.msra.mxu0 0
  %488 = vmatprep.subr.bf16.mxu0 0
  %489 = vmatpush1.bf16.msra.mxu0 0
  %490 = vmatprep.subr.bf16.mxu0 0
  %491 = vmatpush1.bf16.msra.mxu0 0
  %492 = vmatprep.subr.bf16.mxu0 0
  %493 = vmatpush1.bf16.msra.mxu0 0
  %494 = vmatprep.subr.bf16.mxu0 0
  %495 = vmatpush1.bf16.msra.mxu0 %v365
  %496 = vmatprep.subr.bf16.mxu0 0
  %497 = vmatpush1.bf16.msra.mxu0 %v364
  %498 = vmatprep.subr.bf16.mxu0 0
  %499 = vmatpush1.bf16.msra.mxu0 %v363
  %500 = vmatprep.subr.bf16.mxu0 0
  %501 = vmatpush1.bf16.msra.mxu0 %v362
  %502 = vmatprep.subr.bf16.mxu0 0
  %503 = vmatpush2.bf16.msra.mxu0 0
  %504 = vmatprep.subr.bf16.mxu0 0
  %505 = vmatpush2.bf16.msra.mxu0 0
  %506 = vmatprep.subr.bf16.mxu0 0
  %507 = vmatpush2.bf16.msra.mxu0 0
  %508 = vmatprep.subr.bf16.mxu0 0
  %509 = vmatpush2.bf16.msra.mxu0 0
  %510 = vmatprep.subr.bf16.mxu0 0
  %511 = vmatpush2.bf16.msra.mxu0 0
  %512 = vmatprep.subr.bf16.mxu0 0
  %513 = vmatpush2.bf16.msra.mxu0 0
  %514 = vmatprep.subr.bf16.mxu0 0
  %515 = vmatpush2.bf16.msra.mxu0 0
  %516 = vmatprep.subr.bf16.mxu0 0
  %517 = vmatpush2.bf16.msra.mxu0 0
  %518 = vmatprep.mubr.bf16.mxu0 0
  %519 = vmatmul.mubr.bf16.gmra.mxu0 %v404
  %v520 = vpop.f32.mrf.mxu0
  %v521 = vadd.f32 %v481, %v520
  %v522 = vpop.f32.mrf.mxu0
  %v523 = vpop.f32.mrf.mxu0
  %v524 = vpop.f32.mrf.mxu0
  %525 = vdwg.mxu0
  %v526 = vld [vmem:[%s3] sm:$0x3]
  %528 = vset.pattern.permute.xlu0 0
  %529 = vperm.xlu0 %528, %v526
  %v530 = vpop.permute.xlu0 %529
  %v532 = vmul.f32 %v521, %v530
  %v533 = vld [vmem:[%s4] sm:$0x3]
  %v534 = vlaneseq
  %v535 = vshrl.u32 %v534, 7
  %v536 = vsub.s32 0, %v535
  %v537 = vrot.slane %v533, %v536
  %v538 = vlaneseq
  %v539 = vshrl.u32 %v538, 7
  %v540 = vsub.s32 1, %v539
  %v541 = vrot.slane %v533, %v540
  %v542 = vadd.f32 %v532, %v541
  %v544 = vrot.slane %v542, 6
  %vm546 = vcmask 1041408
  %v547 = vsel %vm546, %v537, %v544
  %v548 = vpack.c.bf16 %v547, %v547
  %v549 = vld [vmem:[%s5] sm:$0xf]
  %v550 = vld [vmem:[%s5 + $0x4] sm:$0xf]
  %v551 = vld [vmem:[%s5 + $0x8] sm:$0xf]
  %v552 = vld [vmem:[%s5 + $0xc] sm:$0xf]
  %v553 = vld [vmem:[%s6] sm:$0x1]
  %v555 = vlaneseq
  %v556 = vshrl.u32 %v555, 7
  %v557 = vsub.s32 0, %v556
  %v558 = vrot.slane %v553, %v557
  %v564 = vunpack.c.l.b16 %v549
  %v565 = vunpack.c.l.b16 %v550
  %v566 = vunpack.c.l.b16 %v551
  %v567 = vunpack.c.l.b16 %v552
  %v568 = vpack.c.b16 %v565, %v564
  %v569 = vpack.c.b16 %v567, %v566
  %vm572 = vcmask 261120
  %v574 = vsel %vm572, %v548, 0
  %576 = vmatprep.subr.bf16.mxu0 0
  %577 = vmatpush1.bf16.msra.mxu0 0
  %578 = vmatprep.subr.bf16.mxu0 0
  %579 = vmatpush1.bf16.msra.mxu0 0
  %580 = vmatprep.subr.bf16.mxu0 0
  %581 = vmatpush1.bf16.msra.mxu0 0
  %582 = vmatprep.subr.bf16.mxu0 0
  %583 = vmatpush1.bf16.msra.mxu0 0
  %584 = vmatprep.subr.bf16.mxu0 0
  %585 = vmatpush1.bf16.msra.mxu0 0
  %586 = vmatprep.subr.bf16.mxu0 0
  %587 = vmatpush1.bf16.msra.mxu0 0
  %588 = vmatprep.subr.bf16.mxu0 0
  %589 = vmatpush1.bf16.msra.mxu0 %v569
  %590 = vmatprep.subr.bf16.mxu0 0
  %591 = vmatpush1.bf16.msra.mxu0 %v568
  %592 = vmatprep.subr.bf16.mxu0 0
  %593 = vmatpush2.bf16.msra.mxu0 0
  %594 = vmatprep.subr.bf16.mxu0 0
  %595 = vmatpush2.bf16.msra.mxu0 0
  %596 = vmatprep.subr.bf16.mxu0 0
  %597 = vmatpush2.bf16.msra.mxu0 0
  %598 = vmatprep.subr.bf16.mxu0 0
  %599 = vmatpush2.bf16.msra.mxu0 0
  %600 = vmatprep.subr.bf16.mxu0 0
  %601 = vmatpush2.bf16.msra.mxu0 0
  %602 = vmatprep.subr.bf16.mxu0 0
  %603 = vmatpush2.bf16.msra.mxu0 0
  %604 = vmatprep.subr.bf16.mxu0 0
  %605 = vmatpush2.bf16.msra.mxu0 0
  %606 = vmatprep.subr.bf16.mxu0 0
  %607 = vmatpush2.bf16.msra.mxu0 0
  %608 = vmatprep.mubr.bf16.mxu0 0
  %609 = vmatmul.mubr.bf16.gmra.mxu0 %v574
  %v610 = vpop.f32.mrf.mxu0
  %v611 = vadd.f32 %v558, %v610
  %v612 = vpop.f32.mrf.mxu0
  %v613 = vpop.f32.mrf.mxu0
  %v614 = vpop.f32.mrf.mxu0
  %615 = vdwg.mxu0
  %v616 = vpack.c.bf16 %v611, %v611
  %618 = vrot.lane.b32.xlu0 %v616, 120
  %v619 = vpop.permute.xlu0 %618
  %620 = vrot.lane.b32.xlu0 %v616, 112
  %v621 = vpop.permute.xlu0 %620
  %622 = vrot.lane.b32.xlu0 %v616, 104
  %v623 = vpop.permute.xlu0 %622
  %v624 = vrot.slane %v616, 1
  %625 = vrot.lane.b32.xlu0 %v624, 120
  %v626 = vpop.permute.xlu0 %625
  %627 = vrot.lane.b32.xlu0 %v624, 112
  %v628 = vpop.permute.xlu0 %627
  %629 = vrot.lane.b32.xlu0 %v624, 104
  %v630 = vpop.permute.xlu0 %629
  %631 = vrot.lane.b32.xlu0 %v616, 96
  %v632 = vpop.permute.xlu0 %631
  %vm633 = vcmask 64512
  %v635 = vsel %vm633, %v616, 0
  %v638 = vsel %vm633, %v632, 0
  %640 = vmatprep.subr.bf16.mxu0 0
  %641 = vmatpush1.bf16.xpose.msra.mxu0 0
  %642 = vmatprep.subr.bf16.mxu0 0
  %643 = vmatpush1.bf16.xpose.msra.mxu0 0
  %644 = vmatprep.subr.bf16.mxu0 0
  %645 = vmatpush1.bf16.xpose.msra.mxu0 0
  %646 = vmatprep.subr.bf16.mxu0 0
  %647 = vmatpush1.bf16.xpose.msra.mxu0 0
  %648 = vmatprep.subr.bf16.mxu0 0
  %649 = vmatpush1.bf16.xpose.msra.mxu0 0
  %650 = vmatprep.subr.bf16.mxu0 0
  %651 = vmatpush1.bf16.xpose.msra.mxu0 0
  %652 = vmatprep.subr.bf16.mxu0 0
  %653 = vmatpush1.bf16.xpose.msra.mxu0 0
  %654 = vmatprep.subr.bf16.mxu0 0
  %655 = vmatpush1.bf16.xpose.msra.mxu0 %v638
  %656 = vmatprep.subr.bf16.mxu0 0
  %657 = vmatpush2.bf16.xpose.msra.mxu0 0
  %658 = vmatprep.subr.bf16.mxu0 0
  %659 = vmatpush2.bf16.xpose.msra.mxu0 0
  %660 = vmatprep.subr.bf16.mxu0 0
  %661 = vmatpush2.bf16.xpose.msra.mxu0 0
  %662 = vmatprep.subr.bf16.mxu0 0
  %663 = vmatpush2.bf16.xpose.msra.mxu0 0
  %664 = vmatprep.subr.bf16.mxu0 0
  %665 = vmatpush2.bf16.xpose.msra.mxu0 0
  %666 = vmatprep.subr.bf16.mxu0 0
  %667 = vmatpush2.bf16.xpose.msra.mxu0 0
  %668 = vmatprep.subr.bf16.mxu0 0
  %669 = vmatpush2.bf16.xpose.msra.mxu0 0
  %670 = vmatprep.subr.bf16.mxu0 0
  %671 = vmatpush2.bf16.xpose.msra.mxu0 0
  %672 = vmatprep.mubr.bf16.mxu0 0
  %673 = vmatmul.mubr.bf16.gmra.mxu0 %v635
  %v674 = vpop.f32.mrf.mxu0
  %v675 = vadd.f32 0.0, %v674
  %v676 = vpop.f32.mrf.mxu0
  %v677 = vpop.f32.mrf.mxu0
  %v678 = vpop.f32.mrf.mxu0
  %679 = vdwg.mxu0
  %680 = vrot.lane.b32.xlu0 %v619, 96
  %v681 = vpop.permute.xlu0 %680
  %v683 = vsel %vm633, %v619, 0
  %v686 = vsel %vm633, %v681, 0
  %688 = vmatprep.subr.bf16.mxu0 0
  %689 = vmatpush1.bf16.xpose.msra.mxu0 0
  %690 = vmatprep.subr.bf16.mxu0 0
  %691 = vmatpush1.bf16.xpose.msra.mxu0 0
  %692 = vmatprep.subr.bf16.mxu0 0
  %693 = vmatpush1.bf16.xpose.msra.mxu0 0
  %694 = vmatprep.subr.bf16.mxu0 0
  %695 = vmatpush1.bf16.xpose.msra.mxu0 0
  %696 = vmatprep.subr.bf16.mxu0 0
  %697 = vmatpush1.bf16.xpose.msra.mxu0 0
  %698 = vmatprep.subr.bf16.mxu0 0
  %699 = vmatpush1.bf16.xpose.msra.mxu0 0
  %700 = vmatprep.subr.bf16.mxu0 0
  %701 = vmatpush1.bf16.xpose.msra.mxu0 0
  %702 = vmatprep.subr.bf16.mxu0 0
  %703 = vmatpush1.bf16.xpose.msra.mxu0 %v686
  %704 = vmatprep.subr.bf16.mxu0 0
  %705 = vmatpush2.bf16.xpose.msra.mxu0 0
  %706 = vmatprep.subr.bf16.mxu0 0
  %707 = vmatpush2.bf16.xpose.msra.mxu0 0
  %708 = vmatprep.subr.bf16.mxu0 0
  %709 = vmatpush2.bf16.xpose.msra.mxu0 0
  %710 = vmatprep.subr.bf16.mxu0 0
  %711 = vmatpush2.bf16.xpose.msra.mxu0 0
  %712 = vmatprep.subr.bf16.mxu0 0
  %713 = vmatpush2.bf16.xpose.msra.mxu0 0
  %714 = vmatprep.subr.bf16.mxu0 0
  %715 = vmatpush2.bf16.xpose.msra.mxu0 0
  %716 = vmatprep.subr.bf16.mxu0 0
  %717 = vmatpush2.bf16.xpose.msra.mxu0 0
  %718 = vmatprep.subr.bf16.mxu0 0
  %719 = vmatpush2.bf16.xpose.msra.mxu0 0
  %720 = vmatprep.mubr.bf16.mxu0 0
  %721 = vmatmul.mubr.bf16.gmra.mxu0 %v683
  %v722 = vpop.f32.mrf.mxu0
  %v723 = vadd.f32 0.0, %v722
  %v724 = vpop.f32.mrf.mxu0
  %v725 = vpop.f32.mrf.mxu0
  %v726 = vpop.f32.mrf.mxu0
  %727 = vdwg.mxu0
  %728 = vrot.lane.b32.xlu0 %v621, 96
  %v729 = vpop.permute.xlu0 %728
  %v731 = vsel %vm633, %v621, 0
  %v734 = vsel %vm633, %v729, 0
  %736 = vmatprep.subr.bf16.mxu0 0
  %737 = vmatpush1.bf16.xpose.msra.mxu0 0
  %738 = vmatprep.subr.bf16.mxu0 0
  %739 = vmatpush1.bf16.xpose.msra.mxu0 0
  %740 = vmatprep.subr.bf16.mxu0 0
  %741 = vmatpush1.bf16.xpose.msra.mxu0 0
  %742 = vmatprep.subr.bf16.mxu0 0
  %743 = vmatpush1.bf16.xpose.msra.mxu0 0
  %744 = vmatprep.subr.bf16.mxu0 0
  %745 = vmatpush1.bf16.xpose.msra.mxu0 0
  %746 = vmatprep.subr.bf16.mxu0 0
  %747 = vmatpush1.bf16.xpose.msra.mxu0 0
  %748 = vmatprep.subr.bf16.mxu0 0
  %749 = vmatpush1.bf16.xpose.msra.mxu0 0
  %750 = vmatprep.subr.bf16.mxu0 0
  %751 = vmatpush1.bf16.xpose.msra.mxu0 %v734
  %752 = vmatprep.subr.bf16.mxu0 0
  %753 = vmatpush2.bf16.xpose.msra.mxu0 0
  %754 = vmatprep.subr.bf16.mxu0 0
  %755 = vmatpush2.bf16.xpose.msra.mxu0 0
  %756 = vmatprep.subr.bf16.mxu0 0
  %757 = vmatpush2.bf16.xpose.msra.mxu0 0
  %758 = vmatprep.subr.bf16.mxu0 0
  %759 = vmatpush2.bf16.xpose.msra.mxu0 0
  %760 = vmatprep.subr.bf16.mxu0 0
  %761 = vmatpush2.bf16.xpose.msra.mxu0 0
  %762 = vmatprep.subr.bf16.mxu0 0
  %763 = vmatpush2.bf16.xpose.msra.mxu0 0
  %764 = vmatprep.subr.bf16.mxu0 0
  %765 = vmatpush2.bf16.xpose.msra.mxu0 0
  %766 = vmatprep.subr.bf16.mxu0 0
  %767 = vmatpush2.bf16.xpose.msra.mxu0 0
  %768 = vmatprep.mubr.bf16.mxu0 0
  %769 = vmatmul.mubr.bf16.gmra.mxu0 %v731
  %v770 = vpop.f32.mrf.mxu0
  %v771 = vadd.f32 0.0, %v770
  %v772 = vpop.f32.mrf.mxu0
  %v773 = vpop.f32.mrf.mxu0
  %v774 = vpop.f32.mrf.mxu0
  %775 = vdwg.mxu0
  %776 = vrot.lane.b32.xlu0 %v623, 96
  %v777 = vpop.permute.xlu0 %776
  %v779 = vsel %vm633, %v623, 0
  %v782 = vsel %vm633, %v777, 0
  %784 = vmatprep.subr.bf16.mxu0 0
  %785 = vmatpush1.bf16.xpose.msra.mxu0 0
  %786 = vmatprep.subr.bf16.mxu0 0
  %787 = vmatpush1.bf16.xpose.msra.mxu0 0
  %788 = vmatprep.subr.bf16.mxu0 0
  %789 = vmatpush1.bf16.xpose.msra.mxu0 0
  %790 = vmatprep.subr.bf16.mxu0 0
  %791 = vmatpush1.bf16.xpose.msra.mxu0 0
  %792 = vmatprep.subr.bf16.mxu0 0
  %793 = vmatpush1.bf16.xpose.msra.mxu0 0
  %794 = vmatprep.subr.bf16.mxu0 0
  %795 = vmatpush1.bf16.xpose.msra.mxu0 0
  %796 = vmatprep.subr.bf16.mxu0 0
  %797 = vmatpush1.bf16.xpose.msra.mxu0 0
  %798 = vmatprep.subr.bf16.mxu0 0
  %799 = vmatpush1.bf16.xpose.msra.mxu0 %v782
  %800 = vmatprep.subr.bf16.mxu0 0
  %801 = vmatpush2.bf16.xpose.msra.mxu0 0
  %802 = vmatprep.subr.bf16.mxu0 0
  %803 = vmatpush2.bf16.xpose.msra.mxu0 0
  %804 = vmatprep.subr.bf16.mxu0 0
  %805 = vmatpush2.bf16.xpose.msra.mxu0 0
  %806 = vmatprep.subr.bf16.mxu0 0
  %807 = vmatpush2.bf16.xpose.msra.mxu0 0
  %808 = vmatprep.subr.bf16.mxu0 0
  %809 = vmatpush2.bf16.xpose.msra.mxu0 0
  %810 = vmatprep.subr.bf16.mxu0 0
  %811 = vmatpush2.bf16.xpose.msra.mxu0 0
  %812 = vmatprep.subr.bf16.mxu0 0
  %813 = vmatpush2.bf16.xpose.msra.mxu0 0
  %814 = vmatprep.subr.bf16.mxu0 0
  %815 = vmatpush2.bf16.xpose.msra.mxu0 0
  %816 = vmatprep.mubr.bf16.mxu0 0
  %817 = vmatmul.mubr.bf16.gmra.mxu0 %v779
  %v818 = vpop.f32.mrf.mxu0
  %v819 = vadd.f32 0.0, %v818
  %v820 = vpop.f32.mrf.mxu0
  %v821 = vpop.f32.mrf.mxu0
  %v822 = vpop.f32.mrf.mxu0
  %823 = vdwg.mxu0
  %824 = vrot.lane.b32.xlu0 %v624, 96
  %v825 = vpop.permute.xlu0 %824
  %v827 = vsel %vm633, %v624, 0
  %v830 = vsel %vm633, %v825, 0
  %832 = vmatprep.subr.bf16.mxu0 0
  %833 = vmatpush1.bf16.xpose.msra.mxu0 0
  %834 = vmatprep.subr.bf16.mxu0 0
  %835 = vmatpush1.bf16.xpose.msra.mxu0 0
  %836 = vmatprep.subr.bf16.mxu0 0
  %837 = vmatpush1.bf16.xpose.msra.mxu0 0
  %838 = vmatprep.subr.bf16.mxu0 0
  %839 = vmatpush1.bf16.xpose.msra.mxu0 0
  %840 = vmatprep.subr.bf16.mxu0 0
  %841 = vmatpush1.bf16.xpose.msra.mxu0 0
  %842 = vmatprep.subr.bf16.mxu0 0
  %843 = vmatpush1.bf16.xpose.msra.mxu0 0
  %844 = vmatprep.subr.bf16.mxu0 0
  %845 = vmatpush1.bf16.xpose.msra.mxu0 0
  %846 = vmatprep.subr.bf16.mxu0 0
  %847 = vmatpush1.bf16.xpose.msra.mxu0 %v830
  %848 = vmatprep.subr.bf16.mxu0 0
  %849 = vmatpush2.bf16.xpose.msra.mxu0 0
  %850 = vmatprep.subr.bf16.mxu0 0
  %851 = vmatpush2.bf16.xpose.msra.mxu0 0
  %852 = vmatprep.subr.bf16.mxu0 0
  %853 = vmatpush2.bf16.xpose.msra.mxu0 0
  %854 = vmatprep.subr.bf16.mxu0 0
  %855 = vmatpush2.bf16.xpose.msra.mxu0 0
  %856 = vmatprep.subr.bf16.mxu0 0
  %857 = vmatpush2.bf16.xpose.msra.mxu0 0
  %858 = vmatprep.subr.bf16.mxu0 0
  %859 = vmatpush2.bf16.xpose.msra.mxu0 0
  %860 = vmatprep.subr.bf16.mxu0 0
  %861 = vmatpush2.bf16.xpose.msra.mxu0 0
  %862 = vmatprep.subr.bf16.mxu0 0
  %863 = vmatpush2.bf16.xpose.msra.mxu0 0
  %864 = vmatprep.mubr.bf16.mxu0 0
  %865 = vmatmul.mubr.bf16.gmra.mxu0 %v827
  %v866 = vpop.f32.mrf.mxu0
  %v867 = vadd.f32 0.0, %v866
  %v868 = vpop.f32.mrf.mxu0
  %v869 = vpop.f32.mrf.mxu0
  %v870 = vpop.f32.mrf.mxu0
  %871 = vdwg.mxu0
  %872 = vrot.lane.b32.xlu0 %v626, 96
  %v873 = vpop.permute.xlu0 %872
  %v875 = vsel %vm633, %v626, 0
  %v878 = vsel %vm633, %v873, 0
  %880 = vmatprep.subr.bf16.mxu0 0
  %881 = vmatpush1.bf16.xpose.msra.mxu0 0
  %882 = vmatprep.subr.bf16.mxu0 0
  %883 = vmatpush1.bf16.xpose.msra.mxu0 0
  %884 = vmatprep.subr.bf16.mxu0 0
  %885 = vmatpush1.bf16.xpose.msra.mxu0 0
  %886 = vmatprep.subr.bf16.mxu0 0
  %887 = vmatpush1.bf16.xpose.msra.mxu0 0
  %888 = vmatprep.subr.bf16.mxu0 0
  %889 = vmatpush1.bf16.xpose.msra.mxu0 0
  %890 = vmatprep.subr.bf16.mxu0 0
  %891 = vmatpush1.bf16.xpose.msra.mxu0 0
  %892 = vmatprep.subr.bf16.mxu0 0
  %893 = vmatpush1.bf16.xpose.msra.mxu0 0
  %894 = vmatprep.subr.bf16.mxu0 0
  %895 = vmatpush1.bf16.xpose.msra.mxu0 %v878
  %896 = vmatprep.subr.bf16.mxu0 0
  %897 = vmatpush2.bf16.xpose.msra.mxu0 0
  %898 = vmatprep.subr.bf16.mxu0 0
  %899 = vmatpush2.bf16.xpose.msra.mxu0 0
  %900 = vmatprep.subr.bf16.mxu0 0
  %901 = vmatpush2.bf16.xpose.msra.mxu0 0
  %902 = vmatprep.subr.bf16.mxu0 0
  %903 = vmatpush2.bf16.xpose.msra.mxu0 0
  %904 = vmatprep.subr.bf16.mxu0 0
  %905 = vmatpush2.bf16.xpose.msra.mxu0 0
  %906 = vmatprep.subr.bf16.mxu0 0
  %907 = vmatpush2.bf16.xpose.msra.mxu0 0
  %908 = vmatprep.subr.bf16.mxu0 0
  %909 = vmatpush2.bf16.xpose.msra.mxu0 0
  %910 = vmatprep.subr.bf16.mxu0 0
  %911 = vmatpush2.bf16.xpose.msra.mxu0 0
  %912 = vmatprep.mubr.bf16.mxu0 0
  %913 = vmatmul.mubr.bf16.gmra.mxu0 %v875
  %v914 = vpop.f32.mrf.mxu0
  %v915 = vadd.f32 0.0, %v914
  %v916 = vpop.f32.mrf.mxu0
  %v917 = vpop.f32.mrf.mxu0
  %v918 = vpop.f32.mrf.mxu0
  %919 = vdwg.mxu0
  %920 = vrot.lane.b32.xlu0 %v628, 96
  %v921 = vpop.permute.xlu0 %920
  %v923 = vsel %vm633, %v628, 0
  %v926 = vsel %vm633, %v921, 0
  %928 = vmatprep.subr.bf16.mxu0 0
  %929 = vmatpush1.bf16.xpose.msra.mxu0 0
  %930 = vmatprep.subr.bf16.mxu0 0
  %931 = vmatpush1.bf16.xpose.msra.mxu0 0
  %932 = vmatprep.subr.bf16.mxu0 0
  %933 = vmatpush1.bf16.xpose.msra.mxu0 0
  %934 = vmatprep.subr.bf16.mxu0 0
  %935 = vmatpush1.bf16.xpose.msra.mxu0 0
  %936 = vmatprep.subr.bf16.mxu0 0
  %937 = vmatpush1.bf16.xpose.msra.mxu0 0
  %938 = vmatprep.subr.bf16.mxu0 0
  %939 = vmatpush1.bf16.xpose.msra.mxu0 0
  %940 = vmatprep.subr.bf16.mxu0 0
  %941 = vmatpush1.bf16.xpose.msra.mxu0 0
  %942 = vmatprep.subr.bf16.mxu0 0
  %943 = vmatpush1.bf16.xpose.msra.mxu0 %v926
  %944 = vmatprep.subr.bf16.mxu0 0
  %945 = vmatpush2.bf16.xpose.msra.mxu0 0
  %946 = vmatprep.subr.bf16.mxu0 0
  %947 = vmatpush2.bf16.xpose.msra.mxu0 0
  %948 = vmatprep.subr.bf16.mxu0 0
  %949 = vmatpush2.bf16.xpose.msra.mxu0 0
  %950 = vmatprep.subr.bf16.mxu0 0
  %951 = vmatpush2.bf16.xpose.msra.mxu0 0
  %952 = vmatprep.subr.bf16.mxu0 0
  %953 = vmatpush2.bf16.xpose.msra.mxu0 0
  %954 = vmatprep.subr.bf16.mxu0 0
  %955 = vmatpush2.bf16.xpose.msra.mxu0 0
  %956 = vmatprep.subr.bf16.mxu0 0
  %957 = vmatpush2.bf16.xpose.msra.mxu0 0
  %958 = vmatprep.subr.bf16.mxu0 0
  %959 = vmatpush2.bf16.xpose.msra.mxu0 0
  %960 = vmatprep.mubr.bf16.mxu0 0
  %961 = vmatmul.mubr.bf16.gmra.mxu0 %v923
  %v962 = vpop.f32.mrf.mxu0
  %v963 = vadd.f32 0.0, %v962
  %v964 = vpop.f32.mrf.mxu0
  %v965 = vpop.f32.mrf.mxu0
  %v966 = vpop.f32.mrf.mxu0
  %967 = vdwg.mxu0
  %968 = vrot.lane.b32.xlu0 %v630, 96
  %v969 = vpop.permute.xlu0 %968
  %v971 = vsel %vm633, %v630, 0
  %v974 = vsel %vm633, %v969, 0
  %976 = vmatprep.subr.bf16.mxu0 0
  %977 = vmatpush1.bf16.xpose.msra.mxu0 0
  %978 = vmatprep.subr.bf16.mxu0 0
  %979 = vmatpush1.bf16.xpose.msra.mxu0 0
  %980 = vmatprep.subr.bf16.mxu0 0
  %981 = vmatpush1.bf16.xpose.msra.mxu0 0
  %982 = vmatprep.subr.bf16.mxu0 0
  %983 = vmatpush1.bf16.xpose.msra.mxu0 0
  %984 = vmatprep.subr.bf16.mxu0 0
  %985 = vmatpush1.bf16.xpose.msra.mxu0 0
  %986 = vmatprep.subr.bf16.mxu0 0
  %987 = vmatpush1.bf16.xpose.msra.mxu0 0
  %988 = vmatprep.subr.bf16.mxu0 0
  %989 = vmatpush1.bf16.xpose.msra.mxu0 0
  %990 = vmatprep.subr.bf16.mxu0 0
  %991 = vmatpush1.bf16.xpose.msra.mxu0 %v974
  %992 = vmatprep.subr.bf16.mxu0 0
  %993 = vmatpush2.bf16.xpose.msra.mxu0 0
  %994 = vmatprep.subr.bf16.mxu0 0
  %995 = vmatpush2.bf16.xpose.msra.mxu0 0
  %996 = vmatprep.subr.bf16.mxu0 0
  %997 = vmatpush2.bf16.xpose.msra.mxu0 0
  %998 = vmatprep.subr.bf16.mxu0 0
  %999 = vmatpush2.bf16.xpose.msra.mxu0 0
  %1000 = vmatprep.subr.bf16.mxu0 0
  %1001 = vmatpush2.bf16.xpose.msra.mxu0 0
  %1002 = vmatprep.subr.bf16.mxu0 0
  %1003 = vmatpush2.bf16.xpose.msra.mxu0 0
  %1004 = vmatprep.subr.bf16.mxu0 0
  %1005 = vmatpush2.bf16.xpose.msra.mxu0 0
  %1006 = vmatprep.subr.bf16.mxu0 0
  %1007 = vmatpush2.bf16.xpose.msra.mxu0 0
  %1008 = vmatprep.mubr.bf16.mxu0 0
  %1009 = vmatmul.mubr.bf16.gmra.mxu0 %v971
  %v1010 = vpop.f32.mrf.mxu0
  %v1011 = vadd.f32 0.0, %v1010
  %v1012 = vpop.f32.mrf.mxu0
  %v1013 = vpop.f32.mrf.mxu0
  %v1014 = vpop.f32.mrf.mxu0
  %1015 = vdwg.mxu0
  %v1016 = vmul.f32 %v675, 0.35355338
  %v1017 = vmul.f32 %v723, 0.35355338
  %v1018 = vmul.f32 %v771, 0.35355338
  %v1019 = vmul.f32 %v819, 0.35355338
  %v1020 = vmul.f32 %v867, 0.35355338
  %v1021 = vmul.f32 %v915, 0.35355338
  %v1022 = vmul.f32 %v963, 0.35355338
  %v1023 = vmul.f32 %v1011, 0.35355338
  %vm1024 = vcmask 9216
  %v1025 = vsel %vm1024, %v1016, -inf
  %1026 = vmax.xlane.f32.xlu0 %v1025
  %v1027 = vpop.xlane.xlu0 %1026
  %v1028 = vsel %vm1024, %v1017, -inf
  %1029 = vmax.xlane.f32.xlu0 %v1028
  %v1030 = vpop.xlane.xlu0 %1029
  %v1031 = vsel %vm1024, %v1018, -inf
  %1032 = vmax.xlane.f32.xlu0 %v1031
  %v1033 = vpop.xlane.xlu0 %1032
  %v1034 = vsel %vm1024, %v1019, -inf
  %1035 = vmax.xlane.f32.xlu0 %v1034
  %v1036 = vpop.xlane.xlu0 %1035
  %v1037 = vsel %vm1024, %v1020, -inf
  %1038 = vmax.xlane.f32.xlu0 %v1037
  %v1039 = vpop.xlane.xlu0 %1038
  %v1040 = vsel %vm1024, %v1021, -inf
  %1041 = vmax.xlane.f32.xlu0 %v1040
  %v1042 = vpop.xlane.xlu0 %1041
  %v1043 = vsel %vm1024, %v1022, -inf
  %1044 = vmax.xlane.f32.xlu0 %v1043
  %v1045 = vpop.xlane.xlu0 %1044
  %v1046 = vsel %vm1024, %v1023, -inf
  %1047 = vmax.xlane.f32.xlu0 %v1046
  %v1048 = vpop.xlane.xlu0 %1047
  %v1049 = vsub.f32 %v1016, %v1027
  %v1050 = vsub.f32 %v1017, %v1030
  %v1051 = vsub.f32 %v1018, %v1033
  %v1052 = vsub.f32 %v1019, %v1036
  %v1053 = vsub.f32 %v1020, %v1039
  %v1054 = vsub.f32 %v1021, %v1042
  %v1055 = vsub.f32 %v1022, %v1045
  %v1056 = vsub.f32 %v1023, %v1048
  %v1057 = vmul.f32 %v1049, 1.442695
  %v1058 = vpow.pop %v1057
  %v1059 = vmul.f32 %v1050, 1.442695
  %v1060 = vpow.pop %v1059
  %v1061 = vmul.f32 %v1051, 1.442695
  %v1062 = vpow.pop %v1061
  %v1063 = vmul.f32 %v1052, 1.442695
  %v1064 = vpow.pop %v1063
  %v1065 = vmul.f32 %v1053, 1.442695
  %v1066 = vpow.pop %v1065
  %v1067 = vmul.f32 %v1054, 1.442695
  %v1068 = vpow.pop %v1067
  %v1069 = vmul.f32 %v1055, 1.442695
  %v1070 = vpow.pop %v1069
  %v1071 = vmul.f32 %v1056, 1.442695
  %v1072 = vpow.pop %v1071
  %v1073 = vsel %vm1024, %v1058, 0.0
  %1074 = vadd.xlane.f32.xlu0 %v1073
  %v1075 = vpop.xlane.xlu0 %1074
  %v1076 = vsel %vm1024, %v1060, 0.0
  %1077 = vadd.xlane.f32.xlu0 %v1076
  %v1078 = vpop.xlane.xlu0 %1077
  %v1079 = vsel %vm1024, %v1062, 0.0
  %1080 = vadd.xlane.f32.xlu0 %v1079
  %v1081 = vpop.xlane.xlu0 %1080
  %v1082 = vsel %vm1024, %v1064, 0.0
  %1083 = vadd.xlane.f32.xlu0 %v1082
  %v1084 = vpop.xlane.xlu0 %1083
  %v1085 = vsel %vm1024, %v1066, 0.0
  %1086 = vadd.xlane.f32.xlu0 %v1085
  %v1087 = vpop.xlane.xlu0 %1086
  %v1088 = vsel %vm1024, %v1068, 0.0
  %1089 = vadd.xlane.f32.xlu0 %v1088
  %v1090 = vpop.xlane.xlu0 %1089
  %v1091 = vsel %vm1024, %v1070, 0.0
  %1092 = vadd.xlane.f32.xlu0 %v1091
  %v1093 = vpop.xlane.xlu0 %1092
  %v1094 = vsel %vm1024, %v1072, 0.0
  %1095 = vadd.xlane.f32.xlu0 %v1094
  %v1096 = vpop.xlane.xlu0 %1095
  %v1097 = vrcp.pop %v1075
  %v1098 = vrcp.pop %v1078
  %v1099 = vrcp.pop %v1081
  %v1100 = vrcp.pop %v1084
  %v1101 = vrcp.pop %v1087
  %v1102 = vrcp.pop %v1090
  %v1103 = vrcp.pop %v1093
  %v1104 = vrcp.pop %v1096
  %v1105 = vmul.f32 %v1058, %v1097
  %v1106 = vmul.f32 %v1060, %v1098
  %v1107 = vmul.f32 %v1062, %v1099
  %v1108 = vmul.f32 %v1064, %v1100
  %v1109 = vmul.f32 %v1066, %v1101
  %v1110 = vmul.f32 %v1068, %v1102
  %v1111 = vmul.f32 %v1070, %v1103
  %v1112 = vmul.f32 %v1072, %v1104
  %v1113 = vpack.c.bf16 %v1105, %v1105
  %v1114 = vpack.c.bf16 %v1106, %v1106
  %v1115 = vpack.c.bf16 %v1107, %v1107
  %v1116 = vpack.c.bf16 %v1108, %v1108
  %v1117 = vpack.c.bf16 %v1109, %v1109
  %v1118 = vpack.c.bf16 %v1110, %v1110
  %v1119 = vpack.c.bf16 %v1111, %v1111
  %v1120 = vpack.c.bf16 %v1112, %v1112
  %1121 = vrot.lane.b32.xlu0 %v616, 64
  %v1122 = vpop.permute.xlu0 %1121
  %vm1123 = vcmask 15360
  %v1125 = vsel %vm1123, %v1113, 0
  %vm1127 = vcmask 1040384
  %v1129 = vsel %vm1127, %v1122, 0
  %1131 = vmatprep.subr.bf16.mxu0 0
  %1132 = vmatpush1.bf16.msra.mxu0 0
  %1133 = vmatprep.subr.bf16.mxu0 0
  %1134 = vmatpush1.bf16.msra.mxu0 0
  %1135 = vmatprep.subr.bf16.mxu0 0
  %1136 = vmatpush1.bf16.msra.mxu0 0
  %1137 = vmatprep.subr.bf16.mxu0 0
  %1138 = vmatpush1.bf16.msra.mxu0 0
  %1139 = vmatprep.subr.bf16.mxu0 0
  %1140 = vmatpush1.bf16.msra.mxu0 0
  %1141 = vmatprep.subr.bf16.mxu0 0
  %1142 = vmatpush1.bf16.msra.mxu0 0
  %1143 = vmatprep.subr.bf16.mxu0 0
  %1144 = vmatpush1.bf16.msra.mxu0 0
  %1145 = vmatprep.subr.bf16.mxu0 0
  %1146 = vmatpush1.bf16.msra.mxu0 %v1129
  %1147 = vmatprep.subr.bf16.mxu0 0
  %1148 = vmatpush2.bf16.msra.mxu0 0
  %1149 = vmatprep.subr.bf16.mxu0 0
  %1150 = vmatpush2.bf16.msra.mxu0 0
  %1151 = vmatprep.subr.bf16.mxu0 0
  %1152 = vmatpush2.bf16.msra.mxu0 0
  %1153 = vmatprep.subr.bf16.mxu0 0
  %1154 = vmatpush2.bf16.msra.mxu0 0
  %1155 = vmatprep.subr.bf16.mxu0 0
  %1156 = vmatpush2.bf16.msra.mxu0 0
  %1157 = vmatprep.subr.bf16.mxu0 0
  %1158 = vmatpush2.bf16.msra.mxu0 0
  %1159 = vmatprep.subr.bf16.mxu0 0
  %1160 = vmatpush2.bf16.msra.mxu0 0
  %1161 = vmatprep.subr.bf16.mxu0 0
  %1162 = vmatpush2.bf16.msra.mxu0 0
  %1163 = vmatprep.mubr.bf16.mxu0 0
  %1164 = vmatmul.mubr.bf16.gmra.mxu0 %v1125
  %v1165 = vpop.f32.mrf.mxu0
  %v1166 = vadd.f32 0.0, %v1165
  %v1167 = vpop.f32.mrf.mxu0
  %v1168 = vpop.f32.mrf.mxu0
  %v1169 = vpop.f32.mrf.mxu0
  %1170 = vdwg.mxu0
  %1171 = vrot.lane.b32.xlu0 %v619, 64
  %v1172 = vpop.permute.xlu0 %1171
  %v1174 = vsel %vm1123, %v1114, 0
  %v1177 = vsel %vm1127, %v1172, 0
  %1179 = vmatprep.subr.bf16.mxu0 0
  %1180 = vmatpush1.bf16.msra.mxu0 0
  %1181 = vmatprep.subr.bf16.mxu0 0
  %1182 = vmatpush1.bf16.msra.mxu0 0
  %1183 = vmatprep.subr.bf16.mxu0 0
  %1184 = vmatpush1.bf16.msra.mxu0 0
  %1185 = vmatprep.subr.bf16.mxu0 0
  %1186 = vmatpush1.bf16.msra.mxu0 0
  %1187 = vmatprep.subr.bf16.mxu0 0
  %1188 = vmatpush1.bf16.msra.mxu0 0
  %1189 = vmatprep.subr.bf16.mxu0 0
  %1190 = vmatpush1.bf16.msra.mxu0 0
  %1191 = vmatprep.subr.bf16.mxu0 0
  %1192 = vmatpush1.bf16.msra.mxu0 0
  %1193 = vmatprep.subr.bf16.mxu0 0
  %1194 = vmatpush1.bf16.msra.mxu0 %v1177
  %1195 = vmatprep.subr.bf16.mxu0 0
  %1196 = vmatpush2.bf16.msra.mxu0 0
  %1197 = vmatprep.subr.bf16.mxu0 0
  %1198 = vmatpush2.bf16.msra.mxu0 0
  %1199 = vmatprep.subr.bf16.mxu0 0
  %1200 = vmatpush2.bf16.msra.mxu0 0
  %1201 = vmatprep.subr.bf16.mxu0 0
  %1202 = vmatpush2.bf16.msra.mxu0 0
  %1203 = vmatprep.subr.bf16.mxu0 0
  %1204 = vmatpush2.bf16.msra.mxu0 0
  %1205 = vmatprep.subr.bf16.mxu0 0
  %1206 = vmatpush2.bf16.msra.mxu0 0
  %1207 = vmatprep.subr.bf16.mxu0 0
  %1208 = vmatpush2.bf16.msra.mxu0 0
  %1209 = vmatprep.subr.bf16.mxu0 0
  %1210 = vmatpush2.bf16.msra.mxu0 0
  %1211 = vmatprep.mubr.bf16.mxu0 0
  %1212 = vmatmul.mubr.bf16.gmra.mxu0 %v1174
  %v1213 = vpop.f32.mrf.mxu0
  %v1214 = vadd.f32 0.0, %v1213
  %v1215 = vpop.f32.mrf.mxu0
  %v1216 = vpop.f32.mrf.mxu0
  %v1217 = vpop.f32.mrf.mxu0
  %1218 = vdwg.mxu0
  %1219 = vrot.lane.b32.xlu0 %v621, 64
  %v1220 = vpop.permute.xlu0 %1219
  %v1222 = vsel %vm1123, %v1115, 0
  %v1225 = vsel %vm1127, %v1220, 0
  %1227 = vmatprep.subr.bf16.mxu0 0
  %1228 = vmatpush1.bf16.msra.mxu0 0
  %1229 = vmatprep.subr.bf16.mxu0 0
  %1230 = vmatpush1.bf16.msra.mxu0 0
  %1231 = vmatprep.subr.bf16.mxu0 0
  %1232 = vmatpush1.bf16.msra.mxu0 0
  %1233 = vmatprep.subr.bf16.mxu0 0
  %1234 = vmatpush1.bf16.msra.mxu0 0
  %1235 = vmatprep.subr.bf16.mxu0 0
  %1236 = vmatpush1.bf16.msra.mxu0 0
  %1237 = vmatprep.subr.bf16.mxu0 0
  %1238 = vmatpush1.bf16.msra.mxu0 0
  %1239 = vmatprep.subr.bf16.mxu0 0
  %1240 = vmatpush1.bf16.msra.mxu0 0
  %1241 = vmatprep.subr.bf16.mxu0 0
  %1242 = vmatpush1.bf16.msra.mxu0 %v1225
  %1243 = vmatprep.subr.bf16.mxu0 0
  %1244 = vmatpush2.bf16.msra.mxu0 0
  %1245 = vmatprep.subr.bf16.mxu0 0
  %1246 = vmatpush2.bf16.msra.mxu0 0
  %1247 = vmatprep.subr.bf16.mxu0 0
  %1248 = vmatpush2.bf16.msra.mxu0 0
  %1249 = vmatprep.subr.bf16.mxu0 0
  %1250 = vmatpush2.bf16.msra.mxu0 0
  %1251 = vmatprep.subr.bf16.mxu0 0
  %1252 = vmatpush2.bf16.msra.mxu0 0
  %1253 = vmatprep.subr.bf16.mxu0 0
  %1254 = vmatpush2.bf16.msra.mxu0 0
  %1255 = vmatprep.subr.bf16.mxu0 0
  %1256 = vmatpush2.bf16.msra.mxu0 0
  %1257 = vmatprep.subr.bf16.mxu0 0
  %1258 = vmatpush2.bf16.msra.mxu0 0
  %1259 = vmatprep.mubr.bf16.mxu0 0
  %1260 = vmatmul.mubr.bf16.gmra.mxu0 %v1222
  %v1261 = vpop.f32.mrf.mxu0
  %v1262 = vadd.f32 0.0, %v1261
  %v1263 = vpop.f32.mrf.mxu0
  %v1264 = vpop.f32.mrf.mxu0
  %v1265 = vpop.f32.mrf.mxu0
  %1266 = vdwg.mxu0
  %1267 = vrot.lane.b32.xlu0 %v623, 64
  %v1268 = vpop.permute.xlu0 %1267
  %v1270 = vsel %vm1123, %v1116, 0
  %v1273 = vsel %vm1127, %v1268, 0
  %1275 = vmatprep.subr.bf16.mxu0 0
  %1276 = vmatpush1.bf16.msra.mxu0 0
  %1277 = vmatprep.subr.bf16.mxu0 0
  %1278 = vmatpush1.bf16.msra.mxu0 0
  %1279 = vmatprep.subr.bf16.mxu0 0
  %1280 = vmatpush1.bf16.msra.mxu0 0
  %1281 = vmatprep.subr.bf16.mxu0 0
  %1282 = vmatpush1.bf16.msra.mxu0 0
  %1283 = vmatprep.subr.bf16.mxu0 0
  %1284 = vmatpush1.bf16.msra.mxu0 0
  %1285 = vmatprep.subr.bf16.mxu0 0
  %1286 = vmatpush1.bf16.msra.mxu0 0
  %1287 = vmatprep.subr.bf16.mxu0 0
  %1288 = vmatpush1.bf16.msra.mxu0 0
  %1289 = vmatprep.subr.bf16.mxu0 0
  %1290 = vmatpush1.bf16.msra.mxu0 %v1273
  %1291 = vmatprep.subr.bf16.mxu0 0
  %1292 = vmatpush2.bf16.msra.mxu0 0
  %1293 = vmatprep.subr.bf16.mxu0 0
  %1294 = vmatpush2.bf16.msra.mxu0 0
  %1295 = vmatprep.subr.bf16.mxu0 0
  %1296 = vmatpush2.bf16.msra.mxu0 0
  %1297 = vmatprep.subr.bf16.mxu0 0
  %1298 = vmatpush2.bf16.msra.mxu0 0
  %1299 = vmatprep.subr.bf16.mxu0 0
  %1300 = vmatpush2.bf16.msra.mxu0 0
  %1301 = vmatprep.subr.bf16.mxu0 0
  %1302 = vmatpush2.bf16.msra.mxu0 0
  %1303 = vmatprep.subr.bf16.mxu0 0
  %1304 = vmatpush2.bf16.msra.mxu0 0
  %1305 = vmatprep.subr.bf16.mxu0 0
  %1306 = vmatpush2.bf16.msra.mxu0 0
  %1307 = vmatprep.mubr.bf16.mxu0 0
  %1308 = vmatmul.mubr.bf16.gmra.mxu0 %v1270
  %v1309 = vpop.f32.mrf.mxu0
  %v1310 = vadd.f32 0.0, %v1309
  %v1311 = vpop.f32.mrf.mxu0
  %v1312 = vpop.f32.mrf.mxu0
  %v1313 = vpop.f32.mrf.mxu0
  %1314 = vdwg.mxu0
  %1315 = vrot.lane.b32.xlu0 %v624, 64
  %v1316 = vpop.permute.xlu0 %1315
  %v1318 = vsel %vm1123, %v1117, 0
  %v1321 = vsel %vm1127, %v1316, 0
  %1323 = vmatprep.subr.bf16.mxu0 0
  %1324 = vmatpush1.bf16.msra.mxu0 0
  %1325 = vmatprep.subr.bf16.mxu0 0
  %1326 = vmatpush1.bf16.msra.mxu0 0
  %1327 = vmatprep.subr.bf16.mxu0 0
  %1328 = vmatpush1.bf16.msra.mxu0 0
  %1329 = vmatprep.subr.bf16.mxu0 0
  %1330 = vmatpush1.bf16.msra.mxu0 0
  %1331 = vmatprep.subr.bf16.mxu0 0
  %1332 = vmatpush1.bf16.msra.mxu0 0
  %1333 = vmatprep.subr.bf16.mxu0 0
  %1334 = vmatpush1.bf16.msra.mxu0 0
  %1335 = vmatprep.subr.bf16.mxu0 0
  %1336 = vmatpush1.bf16.msra.mxu0 0
  %1337 = vmatprep.subr.bf16.mxu0 0
  %1338 = vmatpush1.bf16.msra.mxu0 %v1321
  %1339 = vmatprep.subr.bf16.mxu0 0
  %1340 = vmatpush2.bf16.msra.mxu0 0
  %1341 = vmatprep.subr.bf16.mxu0 0
  %1342 = vmatpush2.bf16.msra.mxu0 0
  %1343 = vmatprep.subr.bf16.mxu0 0
  %1344 = vmatpush2.bf16.msra.mxu0 0
  %1345 = vmatprep.subr.bf16.mxu0 0
  %1346 = vmatpush2.bf16.msra.mxu0 0
  %1347 = vmatprep.subr.bf16.mxu0 0
  %1348 = vmatpush2.bf16.msra.mxu0 0
  %1349 = vmatprep.subr.bf16.mxu0 0
  %1350 = vmatpush2.bf16.msra.mxu0 0
  %1351 = vmatprep.subr.bf16.mxu0 0
  %1352 = vmatpush2.bf16.msra.mxu0 0
  %1353 = vmatprep.subr.bf16.mxu0 0
  %1354 = vmatpush2.bf16.msra.mxu0 0
  %1355 = vmatprep.mubr.bf16.mxu0 0
  %1356 = vmatmul.mubr.bf16.gmra.mxu0 %v1318
  %v1357 = vpop.f32.mrf.mxu0
  %v1358 = vadd.f32 0.0, %v1357
  %v1359 = vpop.f32.mrf.mxu0
  %v1360 = vpop.f32.mrf.mxu0
  %v1361 = vpop.f32.mrf.mxu0
  %1362 = vdwg.mxu0
  %1363 = vrot.lane.b32.xlu0 %v626, 64
  %v1364 = vpop.permute.xlu0 %1363
  %v1366 = vsel %vm1123, %v1118, 0
  %v1369 = vsel %vm1127, %v1364, 0
  %1371 = vmatprep.subr.bf16.mxu0 0
  %1372 = vmatpush1.bf16.msra.mxu0 0
  %1373 = vmatprep.subr.bf16.mxu0 0
  %1374 = vmatpush1.bf16.msra.mxu0 0
  %1375 = vmatprep.subr.bf16.mxu0 0
  %1376 = vmatpush1.bf16.msra.mxu0 0
  %1377 = vmatprep.subr.bf16.mxu0 0
  %1378 = vmatpush1.bf16.msra.mxu0 0
  %1379 = vmatprep.subr.bf16.mxu0 0
  %1380 = vmatpush1.bf16.msra.mxu0 0
  %1381 = vmatprep.subr.bf16.mxu0 0
  %1382 = vmatpush1.bf16.msra.mxu0 0
  %1383 = vmatprep.subr.bf16.mxu0 0
  %1384 = vmatpush1.bf16.msra.mxu0 0
  %1385 = vmatprep.subr.bf16.mxu0 0
  %1386 = vmatpush1.bf16.msra.mxu0 %v1369
  %1387 = vmatprep.subr.bf16.mxu0 0
  %1388 = vmatpush2.bf16.msra.mxu0 0
  %1389 = vmatprep.subr.bf16.mxu0 0
  %1390 = vmatpush2.bf16.msra.mxu0 0
  %1391 = vmatprep.subr.bf16.mxu0 0
  %1392 = vmatpush2.bf16.msra.mxu0 0
  %1393 = vmatprep.subr.bf16.mxu0 0
  %1394 = vmatpush2.bf16.msra.mxu0 0
  %1395 = vmatprep.subr.bf16.mxu0 0
  %1396 = vmatpush2.bf16.msra.mxu0 0
  %1397 = vmatprep.subr.bf16.mxu0 0
  %1398 = vmatpush2.bf16.msra.mxu0 0
  %1399 = vmatprep.subr.bf16.mxu0 0
  %1400 = vmatpush2.bf16.msra.mxu0 0
  %1401 = vmatprep.subr.bf16.mxu0 0
  %1402 = vmatpush2.bf16.msra.mxu0 0
  %1403 = vmatprep.mubr.bf16.mxu0 0
  %1404 = vmatmul.mubr.bf16.gmra.mxu0 %v1366
  %v1405 = vpop.f32.mrf.mxu0
  %v1406 = vadd.f32 0.0, %v1405
  %v1407 = vpop.f32.mrf.mxu0
  %v1408 = vpop.f32.mrf.mxu0
  %v1409 = vpop.f32.mrf.mxu0
  %1410 = vdwg.mxu0
  %1411 = vrot.lane.b32.xlu0 %v628, 64
  %v1412 = vpop.permute.xlu0 %1411
  %v1414 = vsel %vm1123, %v1119, 0
  %v1417 = vsel %vm1127, %v1412, 0
  %1419 = vmatprep.subr.bf16.mxu0 0
  %1420 = vmatpush1.bf16.msra.mxu0 0
  %1421 = vmatprep.subr.bf16.mxu0 0
  %1422 = vmatpush1.bf16.msra.mxu0 0
  %1423 = vmatprep.subr.bf16.mxu0 0
  %1424 = vmatpush1.bf16.msra.mxu0 0
  %1425 = vmatprep.subr.bf16.mxu0 0
  %1426 = vmatpush1.bf16.msra.mxu0 0
  %1427 = vmatprep.subr.bf16.mxu0 0
  %1428 = vmatpush1.bf16.msra.mxu0 0
  %1429 = vmatprep.subr.bf16.mxu0 0
  %1430 = vmatpush1.bf16.msra.mxu0 0
  %1431 = vmatprep.subr.bf16.mxu0 0
  %1432 = vmatpush1.bf16.msra.mxu0 0
  %1433 = vmatprep.subr.bf16.mxu0 0
  %1434 = vmatpush1.bf16.msra.mxu0 %v1417
  %1435 = vmatprep.subr.bf16.mxu0 0
  %1436 = vmatpush2.bf16.msra.mxu0 0
  %1437 = vmatprep.subr.bf16.mxu0 0
  %1438 = vmatpush2.bf16.msra.mxu0 0
  %1439 = vmatprep.subr.bf16.mxu0 0
  %1440 = vmatpush2.bf16.msra.mxu0 0
  %1441 = vmatprep.subr.bf16.mxu0 0
  %1442 = vmatpush2.bf16.msra.mxu0 0
  %1443 = vmatprep.subr.bf16.mxu0 0
  %1444 = vmatpush2.bf16.msra.mxu0 0
  %1445 = vmatprep.subr.bf16.mxu0 0
  %1446 = vmatpush2.bf16.msra.mxu0 0
  %1447 = vmatprep.subr.bf16.mxu0 0
  %1448 = vmatpush2.bf16.msra.mxu0 0
  %1449 = vmatprep.subr.bf16.mxu0 0
  %1450 = vmatpush2.bf16.msra.mxu0 0
  %1451 = vmatprep.mubr.bf16.mxu0 0
  %1452 = vmatmul.mubr.bf16.gmra.mxu0 %v1414
  %v1453 = vpop.f32.mrf.mxu0
  %v1454 = vadd.f32 0.0, %v1453
  %v1455 = vpop.f32.mrf.mxu0
  %v1456 = vpop.f32.mrf.mxu0
  %v1457 = vpop.f32.mrf.mxu0
  %1458 = vdwg.mxu0
  %1459 = vrot.lane.b32.xlu0 %v630, 64
  %v1460 = vpop.permute.xlu0 %1459
  %v1462 = vsel %vm1123, %v1120, 0
  %v1465 = vsel %vm1127, %v1460, 0
  %1467 = vmatprep.subr.bf16.mxu0 0
  %1468 = vmatpush1.bf16.msra.mxu0 0
  %1469 = vmatprep.subr.bf16.mxu0 0
  %1470 = vmatpush1.bf16.msra.mxu0 0
  %1471 = vmatprep.subr.bf16.mxu0 0
  %1472 = vmatpush1.bf16.msra.mxu0 0
  %1473 = vmatprep.subr.bf16.mxu0 0
  %1474 = vmatpush1.bf16.msra.mxu0 0
  %1475 = vmatprep.subr.bf16.mxu0 0
  %1476 = vmatpush1.bf16.msra.mxu0 0
  %1477 = vmatprep.subr.bf16.mxu0 0
  %1478 = vmatpush1.bf16.msra.mxu0 0
  %1479 = vmatprep.subr.bf16.mxu0 0
  %1480 = vmatpush1.bf16.msra.mxu0 0
  %1481 = vmatprep.subr.bf16.mxu0 0
  %1482 = vmatpush1.bf16.msra.mxu0 %v1465
  %1483 = vmatprep.subr.bf16.mxu0 0
  %1484 = vmatpush2.bf16.msra.mxu0 0
  %1485 = vmatprep.subr.bf16.mxu0 0
  %1486 = vmatpush2.bf16.msra.mxu0 0
  %1487 = vmatprep.subr.bf16.mxu0 0
  %1488 = vmatpush2.bf16.msra.mxu0 0
  %1489 = vmatprep.subr.bf16.mxu0 0
  %1490 = vmatpush2.bf16.msra.mxu0 0
  %1491 = vmatprep.subr.bf16.mxu0 0
  %1492 = vmatpush2.bf16.msra.mxu0 0
  %1493 = vmatprep.subr.bf16.mxu0 0
  %1494 = vmatpush2.bf16.msra.mxu0 0
  %1495 = vmatprep.subr.bf16.mxu0 0
  %1496 = vmatpush2.bf16.msra.mxu0 0
  %1497 = vmatprep.subr.bf16.mxu0 0
  %1498 = vmatpush2.bf16.msra.mxu0 0
  %1499 = vmatprep.mubr.bf16.mxu0 0
  %1500 = vmatmul.mubr.bf16.gmra.mxu0 %v1462
  %v1501 = vpop.f32.mrf.mxu0
  %v1502 = vadd.f32 0.0, %v1501
  %v1503 = vpop.f32.mrf.mxu0
  %v1504 = vpop.f32.mrf.mxu0
  %v1505 = vpop.f32.mrf.mxu0
  %1506 = vdwg.mxu0
  %1508 = vrot.lane.b32.xlu0 %v1214, 8
  %v1509 = vpop.permute.xlu0 %1508
  %1512 = vrot.lane.b32.xlu0 %v1262, 16
  %v1513 = vpop.permute.xlu0 %1512
  %1516 = vrot.lane.b32.xlu0 %v1310, 24
  %v1517 = vpop.permute.xlu0 %1516
  %v1519 = vsel %vm633, %v1166, %v1509
  %vm1520 = vcmask 130048
  %v1521 = vsel %vm1520, %v1519, %v1513
  %vm1522 = vcmask 195584
  %v1523 = vsel %vm1522, %v1521, %v1517
  %1525 = vrot.lane.b32.xlu0 %v1406, 8
  %v1526 = vpop.permute.xlu0 %1525
  %1529 = vrot.lane.b32.xlu0 %v1454, 16
  %v1530 = vpop.permute.xlu0 %1529
  %1533 = vrot.lane.b32.xlu0 %v1502, 24
  %v1534 = vpop.permute.xlu0 %1533
  %v1536 = vsel %vm633, %v1358, %v1526
  %v1537 = vsel %vm1520, %v1536, %v1530
  %v1538 = vsel %vm1522, %v1537, %v1534
  %v1540 = vrot.slane %v1538, 6
  %v1542 = vsel %vm546, %v1523, %v1540
  %v1543 = vpack.c.bf16 %v1542, %v1542
  %v1544 = vld [vmem:[%s7] sm:$0xf]
  %v1545 = vld [vmem:[%s7 + $0x4] sm:$0xf]
  %v1546 = vld [vmem:[%s7 + $0x8] sm:$0xf]
  %v1547 = vld [vmem:[%s7 + $0xc] sm:$0xf]
  %v1548 = vld [vmem:[%s8] sm:$0x1]
  %v1550 = vlaneseq
  %v1551 = vshrl.u32 %v1550, 7
  %v1552 = vsub.s32 0, %v1551
  %v1553 = vrot.slane %v1548, %v1552
  %v1559 = vunpack.c.l.b16 %v1544
  %v1560 = vunpack.c.l.b16 %v1545
  %v1561 = vunpack.c.l.b16 %v1546
  %v1562 = vunpack.c.l.b16 %v1547
  %v1563 = vpack.c.b16 %v1560, %v1559
  %v1564 = vpack.c.b16 %v1562, %v1561
  %v1568 = vsel %vm572, %v1543, 0
  %1570 = vmatprep.subr.bf16.mxu0 0
  %1571 = vmatpush1.bf16.msra.mxu0 0
  %1572 = vmatprep.subr.bf16.mxu0 0
  %1573 = vmatpush1.bf16.msra.mxu0 0
  %1574 = vmatprep.subr.bf16.mxu0 0
  %1575 = vmatpush1.bf16.msra.mxu0 0
  %1576 = vmatprep.subr.bf16.mxu0 0
  %1577 = vmatpush1.bf16.msra.mxu0 0
  %1578 = vmatprep.subr.bf16.mxu0 0
  %1579 = vmatpush1.bf16.msra.mxu0 0
  %1580 = vmatprep.subr.bf16.mxu0 0
  %1581 = vmatpush1.bf16.msra.mxu0 0
  %1582 = vmatprep.subr.bf16.mxu0 0
  %1583 = vmatpush1.bf16.msra.mxu0 %v1564
  %1584 = vmatprep.subr.bf16.mxu0 0
  %1585 = vmatpush1.bf16.msra.mxu0 %v1563
  %1586 = vmatprep.subr.bf16.mxu0 0
  %1587 = vmatpush2.bf16.msra.mxu0 0
  %1588 = vmatprep.subr.bf16.mxu0 0
  %1589 = vmatpush2.bf16.msra.mxu0 0
  %1590 = vmatprep.subr.bf16.mxu0 0
  %1591 = vmatpush2.bf16.msra.mxu0 0
  %1592 = vmatprep.subr.bf16.mxu0 0
  %1593 = vmatpush2.bf16.msra.mxu0 0
  %1594 = vmatprep.subr.bf16.mxu0 0
  %1595 = vmatpush2.bf16.msra.mxu0 0
  %1596 = vmatprep.subr.bf16.mxu0 0
  %1597 = vmatpush2.bf16.msra.mxu0 0
  %1598 = vmatprep.subr.bf16.mxu0 0
  %1599 = vmatpush2.bf16.msra.mxu0 0
  %1600 = vmatprep.subr.bf16.mxu0 0
  %1601 = vmatpush2.bf16.msra.mxu0 0
  %1602 = vmatprep.mubr.bf16.mxu0 0
  %1603 = vmatmul.mubr.bf16.gmra.mxu0 %v1568
  %v1604 = vpop.f32.mrf.mxu0
  %v1605 = vadd.f32 %v1553, %v1604
  %v1606 = vpop.f32.mrf.mxu0
  %v1607 = vpop.f32.mrf.mxu0
  %v1608 = vpop.f32.mrf.mxu0
  %1609 = vdwg.mxu0
  %v1610 = vadd.f32 %v547, %v1605
  %v1611 = vld [vmem:[%s9] sm:$0x1]
  %v1612 = vld [vmem:[%s10] sm:$0x1]
  %vm1613 = vcmask 257024
  %v1614 = vsel %vm1613, %v1610, 0.0
  %1615 = vadd.xlane.f32.xlu0 %v1614
  %v1616 = vpop.xlane.xlu0 %1615
  %v1617 = vrcp.pop 32.0
  %v1618 = vmul.f32 %v1616, %v1617
  %v1619 = vsub.f32 %v1610, %v1618
  %v1620 = vmul.f32 %v1619, %v1619
  %v1621 = vsel %vm1613, %v1620, 0.0
  %1622 = vadd.xlane.f32.xlu0 %v1621
  %v1623 = vpop.xlane.xlu0 %1622
  %v1624 = vmul.f32 %v1623, %v1617
  %v1625 = vadd.f32 %v1624, 1e-05
  %v1626 = vrsqrt.pop %v1625
  %v1627 = vmul.f32 %v1619, %v1626
  %v1629 = vlaneseq
  %v1630 = vshrl.u32 %v1629, 7
  %v1631 = vsub.s32 0, %v1630
  %v1632 = vrot.slane %v1611, %v1631
  %v1634 = vmul.f32 %v1627, %v1632
  %v1636 = vlaneseq
  %v1637 = vshrl.u32 %v1636, 7
  %v1638 = vsub.s32 0, %v1637
  %v1639 = vrot.slane %v1612, %v1638
  %v1641 = vadd.f32 %v1634, %v1639
  %v1642 = vpack.c.bf16 %v1641, %v1641
  %v1643 = vld [vmem:[%s11] sm:$0xf]
  %v1644 = vld [vmem:[%s11 + $0x4] sm:$0xf]
  %v1645 = vld [vmem:[%s11 + $0x8] sm:$0xf]
  %v1646 = vld [vmem:[%s11 + $0xc] sm:$0xf]
  %v1647 = vld [vmem:[%s12] sm:$0x1]
  %v1649 = vlaneseq
  %v1650 = vshrl.u32 %v1649, 7
  %v1651 = vsub.s32 0, %v1650
  %v1652 = vrot.slane %v1647, %v1651
  %v1658 = vunpack.c.l.b16 %v1643
  %v1659 = vunpack.c.l.b16 %v1644
  %v1660 = vunpack.c.l.b16 %v1645
  %v1661 = vunpack.c.l.b16 %v1646
  %v1662 = vpack.c.b16 %v1659, %v1658
  %v1663 = vpack.c.b16 %v1661, %v1660
  %v1667 = vsel %vm572, %v1642, 0
  %1669 = vmatprep.subr.bf16.mxu0 0
  %1670 = vmatpush1.bf16.msra.mxu0 0
  %1671 = vmatprep.subr.bf16.mxu0 0
  %1672 = vmatpush1.bf16.msra.mxu0 0
  %1673 = vmatprep.subr.bf16.mxu0 0
  %1674 = vmatpush1.bf16.msra.mxu0 0
  %1675 = vmatprep.subr.bf16.mxu0 0
  %1676 = vmatpush1.bf16.msra.mxu0 0
  %1677 = vmatprep.subr.bf16.mxu0 0
  %1678 = vmatpush1.bf16.msra.mxu0 0
  %1679 = vmatprep.subr.bf16.mxu0 0
  %1680 = vmatpush1.bf16.msra.mxu0 0
  %1681 = vmatprep.subr.bf16.mxu0 0
  %1682 = vmatpush1.bf16.msra.mxu0 %v1663
  %1683 = vmatprep.subr.bf16.mxu0 0
  %1684 = vmatpush1.bf16.msra.mxu0 %v1662
  %1685 = vmatprep.subr.bf16.mxu0 0
  %1686 = vmatpush2.bf16.msra.mxu0 0
  %1687 = vmatprep.subr.bf16.mxu0 0
  %1688 = vmatpush2.bf16.msra.mxu0 0
  %1689 = vmatprep.subr.bf16.mxu0 0
  %1690 = vmatpush2.bf16.msra.mxu0 0
  %1691 = vmatprep.subr.bf16.mxu0 0
  %1692 = vmatpush2.bf16.msra.mxu0 0
  %1693 = vmatprep.subr.bf16.mxu0 0
  %1694 = vmatpush2.bf16.msra.mxu0 0
  %1695 = vmatprep.subr.bf16.mxu0 0
  %1696 = vmatpush2.bf16.msra.mxu0 0
  %1697 = vmatprep.subr.bf16.mxu0 0
  %1698 = vmatpush2.bf16.msra.mxu0 0
  %1699 = vmatprep.subr.bf16.mxu0 0
  %1700 = vmatpush2.bf16.msra.mxu0 0
  %1701 = vmatprep.mubr.bf16.mxu0 0
  %1702 = vmatmul.mubr.bf16.gmra.mxu0 %v1667
  %v1703 = vpop.f32.mrf.mxu0
  %v1704 = vadd.f32 %v1652, %v1703
  %v1705 = vpop.f32.mrf.mxu0
  %v1706 = vpop.f32.mrf.mxu0
  %v1707 = vpop.f32.mrf.mxu0
  %1708 = vdwg.mxu0
  %v1709 = vmax.f32 %v1704, 0.0
  %v1710 = vpack.c.bf16 %v1709, %v1709
  %v1711 = vld [vmem:[%s13] sm:$0xf]
  %v1712 = vld [vmem:[%s13 + $0x4] sm:$0xf]
  %v1713 = vld [vmem:[%s13 + $0x8] sm:$0xf]
  %v1714 = vld [vmem:[%s13 + $0xc] sm:$0xf]
  %v1715 = vld [vmem:[%s13 + $0x10] sm:$0xf]
  %v1716 = vld [vmem:[%s13 + $0x14] sm:$0xf]
  %v1717 = vld [vmem:[%s13 + $0x18] sm:$0xf]
  %v1718 = vld [vmem:[%s13 + $0x1c] sm:$0xf]
  %v1719 = vld [vmem:[%s14] sm:$0x1]
  %v1721 = vlaneseq
  %v1722 = vshrl.u32 %v1721, 7
  %v1723 = vsub.s32 0, %v1722
  %v1724 = vrot.slane %v1719, %v1723
  %v1734 = vunpack.c.l.b16 %v1711
  %v1735 = vunpack.c.l.b16 %v1712
  %v1736 = vunpack.c.l.b16 %v1713
  %v1737 = vunpack.c.l.b16 %v1714
  %v1738 = vunpack.c.l.b16 %v1715
  %v1739 = vunpack.c.l.b16 %v1716
  %v1740 = vunpack.c.l.b16 %v1717
  %v1741 = vunpack.c.l.b16 %v1718
  %v1742 = vpack.c.b16 %v1735, %v1734
  %v1743 = vpack.c.b16 %v1737, %v1736
  %v1744 = vpack.c.b16 %v1739, %v1738
  %v1745 = vpack.c.b16 %v1741, %v1740
  %v1751 = vsel %vm402, %v1710, 0
  %1753 = vmatprep.subr.bf16.mxu0 0
  %1754 = vmatpush1.bf16.msra.mxu0 0
  %1755 = vmatprep.subr.bf16.mxu0 0
  %1756 = vmatpush1.bf16.msra.mxu0 0
  %1757 = vmatprep.subr.bf16.mxu0 0
  %1758 = vmatpush1.bf16.msra.mxu0 0
  %1759 = vmatprep.subr.bf16.mxu0 0
  %1760 = vmatpush1.bf16.msra.mxu0 0
  %1761 = vmatprep.subr.bf16.mxu0 0
  %1762 = vmatpush1.bf16.msra.mxu0 %v1745
  %1763 = vmatprep.subr.bf16.mxu0 0
  %1764 = vmatpush1.bf16.msra.mxu0 %v1744
  %1765 = vmatprep.subr.bf16.mxu0 0
  %1766 = vmatpush1.bf16.msra.mxu0 %v1743
  %1767 = vmatprep.subr.bf16.mxu0 0
  %1768 = vmatpush1.bf16.msra.mxu0 %v1742
  %1769 = vmatprep.subr.bf16.mxu0 0
  %1770 = vmatpush2.bf16.msra.mxu0 0
  %1771 = vmatprep.subr.bf16.mxu0 0
  %1772 = vmatpush2.bf16.msra.mxu0 0
  %1773 = vmatprep.subr.bf16.mxu0 0
  %1774 = vmatpush2.bf16.msra.mxu0 0
  %1775 = vmatprep.subr.bf16.mxu0 0
  %1776 = vmatpush2.bf16.msra.mxu0 0
  %1777 = vmatprep.subr.bf16.mxu0 0
  %1778 = vmatpush2.bf16.msra.mxu0 0
  %1779 = vmatprep.subr.bf16.mxu0 0
  %1780 = vmatpush2.bf16.msra.mxu0 0
  %1781 = vmatprep.subr.bf16.mxu0 0
  %1782 = vmatpush2.bf16.msra.mxu0 0
  %1783 = vmatprep.subr.bf16.mxu0 0
  %1784 = vmatpush2.bf16.msra.mxu0 0
  %1785 = vmatprep.mubr.bf16.mxu0 0
  %1786 = vmatmul.mubr.bf16.gmra.mxu0 %v1751
  %v1787 = vpop.f32.mrf.mxu0
  %v1788 = vadd.f32 %v1724, %v1787
  %v1789 = vpop.f32.mrf.mxu0
  %v1790 = vpop.f32.mrf.mxu0
  %v1791 = vpop.f32.mrf.mxu0
  %1792 = vdwg.mxu0
  %v1793 = vadd.f32 %v1641, %v1788
  %v1794 = vld [vmem:[%s15] sm:$0x1]
  %v1795 = vld [vmem:[%s16] sm:$0x1]
  %v1796 = vsel %vm1613, %v1793, 0.0
  %1797 = vadd.xlane.f32.xlu0 %v1796
  %v1798 = vpop.xlane.xlu0 %1797
  %v1799 = vmul.f32 %v1798, %v1617
  %v1800 = vsub.f32 %v1793, %v1799
  %v1801 = vmul.f32 %v1800, %v1800
  %v1802 = vsel %vm1613, %v1801, 0.0
  %1803 = vadd.xlane.f32.xlu0 %v1802
  %v1804 = vpop.xlane.xlu0 %1803
  %v1805 = vmul.f32 %v1804, %v1617
  %v1806 = vadd.f32 %v1805, 1e-05
  %v1807 = vrsqrt.pop %v1806
  %v1808 = vmul.f32 %v1800, %v1807
  %v1810 = vlaneseq
  %v1811 = vshrl.u32 %v1810, 7
  %v1812 = vsub.s32 0, %v1811
  %v1813 = vrot.slane %v1794, %v1812
  %v1815 = vmul.f32 %v1808, %v1813
  %v1817 = vlaneseq
  %v1818 = vshrl.u32 %v1817, 7
  %v1819 = vsub.s32 0, %v1818
  %v1820 = vrot.slane %v1795, %v1819
  %v1822 = vadd.f32 %v1815, %v1820
  %v1823 = vpack.c.bf16 %v1822, %v1822
  %s1824 = scalar_lea.vmem %s5, 16
  %v1825 = vld [vmem:[%s1824] sm:$0xf]
  %v1826 = vld [vmem:[%s1824 + $0x4] sm:$0xf]
  %v1827 = vld [vmem:[%s1824 + $0x8] sm:$0xf]
  %v1828 = vld [vmem:[%s1824 + $0xc] sm:$0xf]
  %s1829 = scalar_lea.vmem %s6, 1
  %v1830 = vld [vmem:[%s1829] sm:$0x1]
  %v1832 = vlaneseq
  %v1833 = vshrl.u32 %v1832, 7
  %v1834 = vsub.s32 0, %v1833
  %v1835 = vrot.slane %v1830, %v1834
  %v1841 = vunpack.c.l.b16 %v1825
  %v1842 = vunpack.c.l.b16 %v1826
  %v1843 = vunpack.c.l.b16 %v1827
  %v1844 = vunpack.c.l.b16 %v1828
  %v1845 = vpack.c.b16 %v1842, %v1841
  %v1846 = vpack.c.b16 %v1844, %v1843
  %v1850 = vsel %vm572, %v1823, 0
  %1852 = vmatprep.subr.bf16.mxu0 0
  %1853 = vmatpush1.bf16.msra.mxu0 0
  %1854 = vmatprep.subr.bf16.mxu0 0
  %1855 = vmatpush1.bf16.msra.mxu0 0
  %1856 = vmatprep.subr.bf16.mxu0 0
  %1857 = vmatpush1.bf16.msra.mxu0 0
  %1858 = vmatprep.subr.bf16.mxu0 0
  %1859 = vmatpush1.bf16.msra.mxu0 0
  %1860 = vmatprep.subr.bf16.mxu0 0
  %1861 = vmatpush1.bf16.msra.mxu0 0
  %1862 = vmatprep.subr.bf16.mxu0 0
  %1863 = vmatpush1.bf16.msra.mxu0 0
  %1864 = vmatprep.subr.bf16.mxu0 0
  %1865 = vmatpush1.bf16.msra.mxu0 %v1846
  %1866 = vmatprep.subr.bf16.mxu0 0
  %1867 = vmatpush1.bf16.msra.mxu0 %v1845
  %1868 = vmatprep.subr.bf16.mxu0 0
  %1869 = vmatpush2.bf16.msra.mxu0 0
  %1870 = vmatprep.subr.bf16.mxu0 0
  %1871 = vmatpush2.bf16.msra.mxu0 0
  %1872 = vmatprep.subr.bf16.mxu0 0
  %1873 = vmatpush2.bf16.msra.mxu0 0
  %1874 = vmatprep.subr.bf16.mxu0 0
  %1875 = vmatpush2.bf16.msra.mxu0 0
  %1876 = vmatprep.subr.bf16.mxu0 0
  %1877 = vmatpush2.bf16.msra.mxu0 0
  %1878 = vmatprep.subr.bf16.mxu0 0
  %1879 = vmatpush2.bf16.msra.mxu0 0
  %1880 = vmatprep.subr.bf16.mxu0 0
  %1881 = vmatpush2.bf16.msra.mxu0 0
  %1882 = vmatprep.subr.bf16.mxu0 0
  %1883 = vmatpush2.bf16.msra.mxu0 0
  %1884 = vmatprep.mubr.bf16.mxu0 0
  %1885 = vmatmul.mubr.bf16.gmra.mxu0 %v1850
  %v1886 = vpop.f32.mrf.mxu0
  %v1887 = vadd.f32 %v1835, %v1886
  %v1888 = vpop.f32.mrf.mxu0
  %v1889 = vpop.f32.mrf.mxu0
  %v1890 = vpop.f32.mrf.mxu0
  %1891 = vdwg.mxu0
  %v1892 = vpack.c.bf16 %v1887, %v1887
  %1894 = vrot.lane.b32.xlu0 %v1892, 120
  %v1895 = vpop.permute.xlu0 %1894
  %1896 = vrot.lane.b32.xlu0 %v1892, 112
  %v1897 = vpop.permute.xlu0 %1896
  %1898 = vrot.lane.b32.xlu0 %v1892, 104
  %v1899 = vpop.permute.xlu0 %1898
  %v1900 = vrot.slane %v1892, 1
  %1901 = vrot.lane.b32.xlu0 %v1900, 120
  %v1902 = vpop.permute.xlu0 %1901
  %1903 = vrot.lane.b32.xlu0 %v1900, 112
  %v1904 = vpop.permute.xlu0 %1903
  %1905 = vrot.lane.b32.xlu0 %v1900, 104
  %v1906 = vpop.permute.xlu0 %1905
  %1907 = vrot.lane.b32.xlu0 %v1892, 96
  %v1908 = vpop.permute.xlu0 %1907
  %v1910 = vsel %vm633, %v1892, 0
  %v1913 = vsel %vm633, %v1908, 0
  %1915 = vmatprep.subr.bf16.mxu0 0
  %1916 = vmatpush1.bf16.xpose.msra.mxu0 0
  %1917 = vmatprep.subr.bf16.mxu0 0
  %1918 = vmatpush1.bf16.xpose.msra.mxu0 0
  %1919 = vmatprep.subr.bf16.mxu0 0
  %1920 = vmatpush1.bf16.xpose.msra.mxu0 0
  %1921 = vmatprep.subr.bf16.mxu0 0
  %1922 = vmatpush1.bf16.xpose.msra.mxu0 0
  %1923 = vmatprep.subr.bf16.mxu0 0
  %1924 = vmatpush1.bf16.xpose.msra.mxu0 0
  %1925 = vmatprep.subr.bf16.mxu0 0
  %1926 = vmatpush1.bf16.xpose.msra.mxu0 0
  %1927 = vmatprep.subr.bf16.mxu0 0
  %1928 = vmatpush1.bf16.xpose.msra.mxu0 0
  %1929 = vmatprep.subr.bf16.mxu0 0
  %1930 = vmatpush1.bf16.xpose.msra.mxu0 %v1913
  %1931 = vmatprep.subr.bf16.mxu0 0
  %1932 = vmatpush2.bf16.xpose.msra.mxu0 0
  %1933 = vmatprep.subr.bf16.mxu0 0
  %1934 = vmatpush2.bf16.xpose.msra.mxu0 0
  %1935 = vmatprep.subr.bf16.mxu0 0
  %1936 = vmatpush2.bf16.xpose.msra.mxu0 0
  %1937 = vmatprep.subr.bf16.mxu0 0
  %1938 = vmatpush2.bf16.xpose.msra.mxu0 0
  %1939 = vmatprep.subr.bf16.mxu0 0
  %1940 = vmatpush2.bf16.xpose.msra.mxu0 0
  %1941 = vmatprep.subr.bf16.mxu0 0
  %1942 = vmatpush2.bf16.xpose.msra.mxu0 0
  %1943 = vmatprep.subr.bf16.mxu0 0
  %1944 = vmatpush2.bf16.xpose.msra.mxu0 0
  %1945 = vmatprep.subr.bf16.mxu0 0
  %1946 = vmatpush2.bf16.xpose.msra.mxu0 0
  %1947 = vmatprep.mubr.bf16.mxu0 0
  %1948 = vmatmul.mubr.bf16.gmra.mxu0 %v1910
  %v1949 = vpop.f32.mrf.mxu0
  %v1950 = vadd.f32 0.0, %v1949
  %v1951 = vpop.f32.mrf.mxu0
  %v1952 = vpop.f32.mrf.mxu0
  %v1953 = vpop.f32.mrf.mxu0
  %1954 = vdwg.mxu0
  %1955 = vrot.lane.b32.xlu0 %v1895, 96
  %v1956 = vpop.permute.xlu0 %1955
  %v1958 = vsel %vm633, %v1895, 0
  %v1961 = vsel %vm633, %v1956, 0
  %1963 = vmatprep.subr.bf16.mxu0 0
  %1964 = vmatpush1.bf16.xpose.msra.mxu0 0
  %1965 = vmatprep.subr.bf16.mxu0 0
  %1966 = vmatpush1.bf16.xpose.msra.mxu0 0
  %1967 = vmatprep.subr.bf16.mxu0 0
  %1968 = vmatpush1.bf16.xpose.msra.mxu0 0
  %1969 = vmatprep.subr.bf16.mxu0 0
  %1970 = vmatpush1.bf16.xpose.msra.mxu0 0
  %1971 = vmatprep.subr.bf16.mxu0 0
  %1972 = vmatpush1.bf16.xpose.msra.mxu0 0
  %1973 = vmatprep.subr.bf16.mxu0 0
  %1974 = vmatpush1.bf16.xpose.msra.mxu0 0
  %1975 = vmatprep.subr.bf16.mxu0 0
  %1976 = vmatpush1.bf16.xpose.msra.mxu0 0
  %1977 = vmatprep.subr.bf16.mxu0 0
  %1978 = vmatpush1.bf16.xpose.msra.mxu0 %v1961
  %1979 = vmatprep.subr.bf16.mxu0 0
  %1980 = vmatpush2.bf16.xpose.msra.mxu0 0
  %1981 = vmatprep.subr.bf16.mxu0 0
  %1982 = vmatpush2.bf16.xpose.msra.mxu0 0
  %1983 = vmatprep.subr.bf16.mxu0 0
  %1984 = vmatpush2.bf16.xpose.msra.mxu0 0
  %1985 = vmatprep.subr.bf16.mxu0 0
  %1986 = vmatpush2.bf16.xpose.msra.mxu0 0
  %1987 = vmatprep.subr.bf16.mxu0 0
  %1988 = vmatpush2.bf16.xpose.msra.mxu0 0
  %1989 = vmatprep.subr.bf16.mxu0 0
  %1990 = vmatpush2.bf16.xpose.msra.mxu0 0
  %1991 = vmatprep.subr.bf16.mxu0 0
  %1992 = vmatpush2.bf16.xpose.msra.mxu0 0
  %1993 = vmatprep.subr.bf16.mxu0 0
  %1994 = vmatpush2.bf16.xpose.msra.mxu0 0
  %1995 = vmatprep.mubr.bf16.mxu0 0
  %1996 = vmatmul.mubr.bf16.gmra.mxu0 %v1958
  %v1997 = vpop.f32.mrf.mxu0
  %v1998 = vadd.f32 0.0, %v1997
  %v1999 = vpop.f32.mrf.mxu0
  %v2000 = vpop.f32.mrf.mxu0
  %v2001 = vpop.f32.mrf.mxu0
  %2002 = vdwg.mxu0
  %2003 = vrot.lane.b32.xlu0 %v1897, 96
  %v2004 = vpop.permute.xlu0 %2003
  %v2006 = vsel %vm633, %v1897, 0
  %v2009 = vsel %vm633, %v2004, 0
  %2011 = vmatprep.subr.bf16.mxu0 0
  %2012 = vmatpush1.bf16.xpose.msra.mxu0 0
  %2013 = vmatprep.subr.bf16.mxu0 0
  %2014 = vmatpush1.bf16.xpose.msra.mxu0 0
  %2015 = vmatprep.subr.bf16.mxu0 0
  %2016 = vmatpush1.bf16.xpose.msra.mxu0 0
  %2017 = vmatprep.subr.bf16.mxu0 0
  %2018 = vmatpush1.bf16.xpose.msra.mxu0 0
  %2019 = vmatprep.subr.bf16.mxu0 0
  %2020 = vmatpush1.bf16.xpose.msra.mxu0 0
  %2021 = vmatprep.subr.bf16.mxu0 0
  %2022 = vmatpush1.bf16.xpose.msra.mxu0 0
  %2023 = vmatprep.subr.bf16.mxu0 0
  %2024 = vmatpush1.bf16.xpose.msra.mxu0 0
  %2025 = vmatprep.subr.bf16.mxu0 0
  %2026 = vmatpush1.bf16.xpose.msra.mxu0 %v2009
  %2027 = vmatprep.subr.bf16.mxu0 0
  %2028 = vmatpush2.bf16.xpose.msra.mxu0 0
  %2029 = vmatprep.subr.bf16.mxu0 0
  %2030 = vmatpush2.bf16.xpose.msra.mxu0 0
  %2031 = vmatprep.subr.bf16.mxu0 0
  %2032 = vmatpush2.bf16.xpose.msra.mxu0 0
  %2033 = vmatprep.subr.bf16.mxu0 0
  %2034 = vmatpush2.bf16.xpose.msra.mxu0 0
  %2035 = vmatprep.subr.bf16.mxu0 0
  %2036 = vmatpush2.bf16.xpose.msra.mxu0 0
  %2037 = vmatprep.subr.bf16.mxu0 0
  %2038 = vmatpush2.bf16.xpose.msra.mxu0 0
  %2039 = vmatprep.subr.bf16.mxu0 0
  %2040 = vmatpush2.bf16.xpose.msra.mxu0 0
  %2041 = vmatprep.subr.bf16.mxu0 0
  %2042 = vmatpush2.bf16.xpose.msra.mxu0 0
  %2043 = vmatprep.mubr.bf16.mxu0 0
  %2044 = vmatmul.mubr.bf16.gmra.mxu0 %v2006
  %v2045 = vpop.f32.mrf.mxu0
  %v2046 = vadd.f32 0.0, %v2045
  %v2047 = vpop.f32.mrf.mxu0
  %v2048 = vpop.f32.mrf.mxu0
  %v2049 = vpop.f32.mrf.mxu0
  %2050 = vdwg.mxu0
  %2051 = vrot.lane.b32.xlu0 %v1899, 96
  %v2052 = vpop.permute.xlu0 %2051
  %v2054 = vsel %vm633, %v1899, 0
  %v2057 = vsel %vm633, %v2052, 0
  %2059 = vmatprep.subr.bf16.mxu0 0
  %2060 = vmatpush1.bf16.xpose.msra.mxu0 0
  %2061 = vmatprep.subr.bf16.mxu0 0
  %2062 = vmatpush1.bf16.xpose.msra.mxu0 0
  %2063 = vmatprep.subr.bf16.mxu0 0
  %2064 = vmatpush1.bf16.xpose.msra.mxu0 0
  %2065 = vmatprep.subr.bf16.mxu0 0
  %2066 = vmatpush1.bf16.xpose.msra.mxu0 0
  %2067 = vmatprep.subr.bf16.mxu0 0
  %2068 = vmatpush1.bf16.xpose.msra.mxu0 0
  %2069 = vmatprep.subr.bf16.mxu0 0
  %2070 = vmatpush1.bf16.xpose.msra.mxu0 0
  %2071 = vmatprep.subr.bf16.mxu0 0
  %2072 = vmatpush1.bf16.xpose.msra.mxu0 0
  %2073 = vmatprep.subr.bf16.mxu0 0
  %2074 = vmatpush1.bf16.xpose.msra.mxu0 %v2057
  %2075 = vmatprep.subr.bf16.mxu0 0
  %2076 = vmatpush2.bf16.xpose.msra.mxu0 0
  %2077 = vmatprep.subr.bf16.mxu0 0
  %2078 = vmatpush2.bf16.xpose.msra.mxu0 0
  %2079 = vmatprep.subr.bf16.mxu0 0
  %2080 = vmatpush2.bf16.xpose.msra.mxu0 0
  %2081 = vmatprep.subr.bf16.mxu0 0
  %2082 = vmatpush2.bf16.xpose.msra.mxu0 0
  %2083 = vmatprep.subr.bf16.mxu0 0
  %2084 = vmatpush2.bf16.xpose.msra.mxu0 0
  %2085 = vmatprep.subr.bf16.mxu0 0
  %2086 = vmatpush2.bf16.xpose.msra.mxu0 0
  %2087 = vmatprep.subr.bf16.mxu0 0
  %2088 = vmatpush2.bf16.xpose.msra.mxu0 0
  %2089 = vmatprep.subr.bf16.mxu0 0
  %2090 = vmatpush2.bf16.xpose.msra.mxu0 0
  %2091 = vmatprep.mubr.bf16.mxu0 0
  %2092 = vmatmul.mubr.bf16.gmra.mxu0 %v2054
  %v2093 = vpop.f32.mrf.mxu0
  %v2094 = vadd.f32 0.0, %v2093
  %v2095 = vpop.f32.mrf.mxu0
  %v2096 = vpop.f32.mrf.mxu0
  %v2097 = vpop.f32.mrf.mxu0
  %2098 = vdwg.mxu0
  %2099 = vrot.lane.b32.xlu0 %v1900, 96
  %v2100 = vpop.permute.xlu0 %2099
  %v2102 = vsel %vm633, %v1900, 0
  %v2105 = vsel %vm633, %v2100, 0
  %2107 = vmatprep.subr.bf16.mxu0 0
  %2108 = vmatpush1.bf16.xpose.msra.mxu0 0
  %2109 = vmatprep.subr.bf16.mxu0 0
  %2110 = vmatpush1.bf16.xpose.msra.mxu0 0
  %2111 = vmatprep.subr.bf16.mxu0 0
  %2112 = vmatpush1.bf16.xpose.msra.mxu0 0
  %2113 = vmatprep.subr.bf16.mxu0 0
  %2114 = vmatpush1.bf16.xpose.msra.mxu0 0
  %2115 = vmatprep.subr.bf16.mxu0 0
  %2116 = vmatpush1.bf16.xpose.msra.mxu0 0
  %2117 = vmatprep.subr.bf16.mxu0 0
  %2118 = vmatpush1.bf16.xpose.msra.mxu0 0
  %2119 = vmatprep.subr.bf16.mxu0 0
  %2120 = vmatpush1.bf16.xpose.msra.mxu0 0
  %2121 = vmatprep.subr.bf16.mxu0 0
  %2122 = vmatpush1.bf16.xpose.msra.mxu0 %v2105
  %2123 = vmatprep.subr.bf16.mxu0 0
  %2124 = vmatpush2.bf16.xpose.msra.mxu0 0
  %2125 = vmatprep.subr.bf16.mxu0 0
  %2126 = vmatpush2.bf16.xpose.msra.mxu0 0
  %2127 = vmatprep.subr.bf16.mxu0 0
  %2128 = vmatpush2.bf16.xpose.msra.mxu0 0
  %2129 = vmatprep.subr.bf16.mxu0 0
  %2130 = vmatpush2.bf16.xpose.msra.mxu0 0
  %2131 = vmatprep.subr.bf16.mxu0 0
  %2132 = vmatpush2.bf16.xpose.msra.mxu0 0
  %2133 = vmatprep.subr.bf16.mxu0 0
  %2134 = vmatpush2.bf16.xpose.msra.mxu0 0
  %2135 = vmatprep.subr.bf16.mxu0 0
  %2136 = vmatpush2.bf16.xpose.msra.mxu0 0
  %2137 = vmatprep.subr.bf16.mxu0 0
  %2138 = vmatpush2.bf16.xpose.msra.mxu0 0
  %2139 = vmatprep.mubr.bf16.mxu0 0
  %2140 = vmatmul.mubr.bf16.gmra.mxu0 %v2102
  %v2141 = vpop.f32.mrf.mxu0
  %v2142 = vadd.f32 0.0, %v2141
  %v2143 = vpop.f32.mrf.mxu0
  %v2144 = vpop.f32.mrf.mxu0
  %v2145 = vpop.f32.mrf.mxu0
  %2146 = vdwg.mxu0
  %2147 = vrot.lane.b32.xlu0 %v1902, 96
  %v2148 = vpop.permute.xlu0 %2147
  %v2150 = vsel %vm633, %v1902, 0
  %v2153 = vsel %vm633, %v2148, 0
  %2155 = vmatprep.subr.bf16.mxu0 0
  %2156 = vmatpush1.bf16.xpose.msra.mxu0 0
  %2157 = vmatprep.subr.bf16.mxu0 0
  %2158 = vmatpush1.bf16.xpose.msra.mxu0 0
  %2159 = vmatprep.subr.bf16.mxu0 0
  %2160 = vmatpush1.bf16.xpose.msra.mxu0 0
  %2161 = vmatprep.subr.bf16.mxu0 0
  %2162 = vmatpush1.bf16.xpose.msra.mxu0 0
  %2163 = vmatprep.subr.bf16.mxu0 0
  %2164 = vmatpush1.bf16.xpose.msra.mxu0 0
  %2165 = vmatprep.subr.bf16.mxu0 0
  %2166 = vmatpush1.bf16.xpose.msra.mxu0 0
  %2167 = vmatprep.subr.bf16.mxu0 0
  %2168 = vmatpush1.bf16.xpose.msra.mxu0 0
  %2169 = vmatprep.subr.bf16.mxu0 0
  %2170 = vmatpush1.bf16.xpose.msra.mxu0 %v2153
  %2171 = vmatprep.subr.bf16.mxu0 0
  %2172 = vmatpush2.bf16.xpose.msra.mxu0 0
  %2173 = vmatprep.subr.bf16.mxu0 0
  %2174 = vmatpush2.bf16.xpose.msra.mxu0 0
  %2175 = vmatprep.subr.bf16.mxu0 0
  %2176 = vmatpush2.bf16.xpose.msra.mxu0 0
  %2177 = vmatprep.subr.bf16.mxu0 0
  %2178 = vmatpush2.bf16.xpose.msra.mxu0 0
  %2179 = vmatprep.subr.bf16.mxu0 0
  %2180 = vmatpush2.bf16.xpose.msra.mxu0 0
  %2181 = vmatprep.subr.bf16.mxu0 0
  %2182 = vmatpush2.bf16.xpose.msra.mxu0 0
  %2183 = vmatprep.subr.bf16.mxu0 0
  %2184 = vmatpush2.bf16.xpose.msra.mxu0 0
  %2185 = vmatprep.subr.bf16.mxu0 0
  %2186 = vmatpush2.bf16.xpose.msra.mxu0 0
  %2187 = vmatprep.mubr.bf16.mxu0 0
  %2188 = vmatmul.mubr.bf16.gmra.mxu0 %v2150
  %v2189 = vpop.f32.mrf.mxu0
  %v2190 = vadd.f32 0.0, %v2189
  %v2191 = vpop.f32.mrf.mxu0
  %v2192 = vpop.f32.mrf.mxu0
  %v2193 = vpop.f32.mrf.mxu0
  %2194 = vdwg.mxu0
  %2195 = vrot.lane.b32.xlu0 %v1904, 96
  %v2196 = vpop.permute.xlu0 %2195
  %v2198 = vsel %vm633, %v1904, 0
  %v2201 = vsel %vm633, %v2196, 0
  %2203 = vmatprep.subr.bf16.mxu0 0
  %2204 = vmatpush1.bf16.xpose.msra.mxu0 0
  %2205 = vmatprep.subr.bf16.mxu0 0
  %2206 = vmatpush1.bf16.xpose.msra.mxu0 0
  %2207 = vmatprep.subr.bf16.mxu0 0
  %2208 = vmatpush1.bf16.xpose.msra.mxu0 0
  %2209 = vmatprep.subr.bf16.mxu0 0
  %2210 = vmatpush1.bf16.xpose.msra.mxu0 0
  %2211 = vmatprep.subr.bf16.mxu0 0
  %2212 = vmatpush1.bf16.xpose.msra.mxu0 0
  %2213 = vmatprep.subr.bf16.mxu0 0
  %2214 = vmatpush1.bf16.xpose.msra.mxu0 0
  %2215 = vmatprep.subr.bf16.mxu0 0
  %2216 = vmatpush1.bf16.xpose.msra.mxu0 0
  %2217 = vmatprep.subr.bf16.mxu0 0
  %2218 = vmatpush1.bf16.xpose.msra.mxu0 %v2201
  %2219 = vmatprep.subr.bf16.mxu0 0
  %2220 = vmatpush2.bf16.xpose.msra.mxu0 0
  %2221 = vmatprep.subr.bf16.mxu0 0
  %2222 = vmatpush2.bf16.xpose.msra.mxu0 0
  %2223 = vmatprep.subr.bf16.mxu0 0
  %2224 = vmatpush2.bf16.xpose.msra.mxu0 0
  %2225 = vmatprep.subr.bf16.mxu0 0
  %2226 = vmatpush2.bf16.xpose.msra.mxu0 0
  %2227 = vmatprep.subr.bf16.mxu0 0
  %2228 = vmatpush2.bf16.xpose.msra.mxu0 0
  %2229 = vmatprep.subr.bf16.mxu0 0
  %2230 = vmatpush2.bf16.xpose.msra.mxu0 0
  %2231 = vmatprep.subr.bf16.mxu0 0
  %2232 = vmatpush2.bf16.xpose.msra.mxu0 0
  %2233 = vmatprep.subr.bf16.mxu0 0
  %2234 = vmatpush2.bf16.xpose.msra.mxu0 0
  %2235 = vmatprep.mubr.bf16.mxu0 0
  %2236 = vmatmul.mubr.bf16.gmra.mxu0 %v2198
  %v2237 = vpop.f32.mrf.mxu0
  %v2238 = vadd.f32 0.0, %v2237
  %v2239 = vpop.f32.mrf.mxu0
  %v2240 = vpop.f32.mrf.mxu0
  %v2241 = vpop.f32.mrf.mxu0
  %2242 = vdwg.mxu0
  %2243 = vrot.lane.b32.xlu0 %v1906, 96
  %v2244 = vpop.permute.xlu0 %2243
  %v2246 = vsel %vm633, %v1906, 0
  %v2249 = vsel %vm633, %v2244, 0
  %2251 = vmatprep.subr.bf16.mxu0 0
  %2252 = vmatpush1.bf16.xpose.msra.mxu0 0
  %2253 = vmatprep.subr.bf16.mxu0 0
  %2254 = vmatpush1.bf16.xpose.msra.mxu0 0
  %2255 = vmatprep.subr.bf16.mxu0 0
  %2256 = vmatpush1.bf16.xpose.msra.mxu0 0
  %2257 = vmatprep.subr.bf16.mxu0 0
  %2258 = vmatpush1.bf16.xpose.msra.mxu0 0
  %2259 = vmatprep.subr.bf16.mxu0 0
  %2260 = vmatpush1.bf16.xpose.msra.mxu0 0
  %2261 = vmatprep.subr.bf16.mxu0 0
  %2262 = vmatpush1.bf16.xpose.msra.mxu0 0
  %2263 = vmatprep.subr.bf16.mxu0 0
  %2264 = vmatpush1.bf16.xpose.msra.mxu0 0
  %2265 = vmatprep.subr.bf16.mxu0 0
  %2266 = vmatpush1.bf16.xpose.msra.mxu0 %v2249
  %2267 = vmatprep.subr.bf16.mxu0 0
  %2268 = vmatpush2.bf16.xpose.msra.mxu0 0
  %2269 = vmatprep.subr.bf16.mxu0 0
  %2270 = vmatpush2.bf16.xpose.msra.mxu0 0
  %2271 = vmatprep.subr.bf16.mxu0 0
  %2272 = vmatpush2.bf16.xpose.msra.mxu0 0
  %2273 = vmatprep.subr.bf16.mxu0 0
  %2274 = vmatpush2.bf16.xpose.msra.mxu0 0
  %2275 = vmatprep.subr.bf16.mxu0 0
  %2276 = vmatpush2.bf16.xpose.msra.mxu0 0
  %2277 = vmatprep.subr.bf16.mxu0 0
  %2278 = vmatpush2.bf16.xpose.msra.mxu0 0
  %2279 = vmatprep.subr.bf16.mxu0 0
  %2280 = vmatpush2.bf16.xpose.msra.mxu0 0
  %2281 = vmatprep.subr.bf16.mxu0 0
  %2282 = vmatpush2.bf16.xpose.msra.mxu0 0
  %2283 = vmatprep.mubr.bf16.mxu0 0
  %2284 = vmatmul.mubr.bf16.gmra.mxu0 %v2246
  %v2285 = vpop.f32.mrf.mxu0
  %v2286 = vadd.f32 0.0, %v2285
  %v2287 = vpop.f32.mrf.mxu0
  %v2288 = vpop.f32.mrf.mxu0
  %v2289 = vpop.f32.mrf.mxu0
  %2290 = vdwg.mxu0
  %v2291 = vmul.f32 %v1950, 0.35355338
  %v2292 = vmul.f32 %v1998, 0.35355338
  %v2293 = vmul.f32 %v2046, 0.35355338
  %v2294 = vmul.f32 %v2094, 0.35355338
  %v2295 = vmul.f32 %v2142, 0.35355338
  %v2296 = vmul.f32 %v2190, 0.35355338
  %v2297 = vmul.f32 %v2238, 0.35355338
  %v2298 = vmul.f32 %v2286, 0.35355338
  %v2299 = vsel %vm1024, %v2291, -inf
  %2300 = vmax.xlane.f32.xlu0 %v2299
  %v2301 = vpop.xlane.xlu0 %2300
  %v2302 = vsel %vm1024, %v2292, -inf
  %2303 = vmax.xlane.f32.xlu0 %v2302
  %v2304 = vpop.xlane.xlu0 %2303
  %v2305 = vsel %vm1024, %v2293, -inf
  %2306 = vmax.xlane.f32.xlu0 %v2305
  %v2307 = vpop.xlane.xlu0 %2306
  %v2308 = vsel %vm1024, %v2294, -inf
  %2309 = vmax.xlane.f32.xlu0 %v2308
  %v2310 = vpop.xlane.xlu0 %2309
  %v2311 = vsel %vm1024, %v2295, -inf
  %2312 = vmax.xlane.f32.xlu0 %v2311
  %v2313 = vpop.xlane.xlu0 %2312
  %v2314 = vsel %vm1024, %v2296, -inf
  %2315 = vmax.xlane.f32.xlu0 %v2314
  %v2316 = vpop.xlane.xlu0 %2315
  %v2317 = vsel %vm1024, %v2297, -inf
  %2318 = vmax.xlane.f32.xlu0 %v2317
  %v2319 = vpop.xlane.xlu0 %2318
  %v2320 = vsel %vm1024, %v2298, -inf
  %2321 = vmax.xlane.f32.xlu0 %v2320
  %v2322 = vpop.xlane.xlu0 %2321
  %v2323 = vsub.f32 %v2291, %v2301
  %v2324 = vsub.f32 %v2292, %v2304
  %v2325 = vsub.f32 %v2293, %v2307
  %v2326 = vsub.f32 %v2294, %v2310
  %v2327 = vsub.f32 %v2295, %v2313
  %v2328 = vsub.f32 %v2296, %v2316
  %v2329 = vsub.f32 %v2297, %v2319
  %v2330 = vsub.f32 %v2298, %v2322
  %v2331 = vmul.f32 %v2323, 1.442695
  %v2332 = vpow.pop %v2331
  %v2333 = vmul.f32 %v2324, 1.442695
  %v2334 = vpow.pop %v2333
  %v2335 = vmul.f32 %v2325, 1.442695
  %v2336 = vpow.pop %v2335
  %v2337 = vmul.f32 %v2326, 1.442695
  %v2338 = vpow.pop %v2337
  %v2339 = vmul.f32 %v2327, 1.442695
  %v2340 = vpow.pop %v2339
  %v2341 = vmul.f32 %v2328, 1.442695
  %v2342 = vpow.pop %v2341
  %v2343 = vmul.f32 %v2329, 1.442695
  %v2344 = vpow.pop %v2343
  %v2345 = vmul.f32 %v2330, 1.442695
  %v2346 = vpow.pop %v2345
  %v2347 = vsel %vm1024, %v2332, 0.0
  %2348 = vadd.xlane.f32.xlu0 %v2347
  %v2349 = vpop.xlane.xlu0 %2348
  %v2350 = vsel %vm1024, %v2334, 0.0
  %2351 = vadd.xlane.f32.xlu0 %v2350
  %v2352 = vpop.xlane.xlu0 %2351
  %v2353 = vsel %vm1024, %v2336, 0.0
  %2354 = vadd.xlane.f32.xlu0 %v2353
  %v2355 = vpop.xlane.xlu0 %2354
  %v2356 = vsel %vm1024, %v2338, 0.0
  %2357 = vadd.xlane.f32.xlu0 %v2356
  %v2358 = vpop.xlane.xlu0 %2357
  %v2359 = vsel %vm1024, %v2340, 0.0
  %2360 = vadd.xlane.f32.xlu0 %v2359
  %v2361 = vpop.xlane.xlu0 %2360
  %v2362 = vsel %vm1024, %v2342, 0.0
  %2363 = vadd.xlane.f32.xlu0 %v2362
  %v2364 = vpop.xlane.xlu0 %2363
  %v2365 = vsel %vm1024, %v2344, 0.0
  %2366 = vadd.xlane.f32.xlu0 %v2365
  %v2367 = vpop.xlane.xlu0 %2366
  %v2368 = vsel %vm1024, %v2346, 0.0
  %2369 = vadd.xlane.f32.xlu0 %v2368
  %v2370 = vpop.xlane.xlu0 %2369
  %v2371 = vrcp.pop %v2349
  %v2372 = vrcp.pop %v2352
  %v2373 = vrcp.pop %v2355
  %v2374 = vrcp.pop %v2358
  %v2375 = vrcp.pop %v2361
  %v2376 = vrcp.pop %v2364
  %v2377 = vrcp.pop %v2367
  %v2378 = vrcp.pop %v2370
  %v2379 = vmul.f32 %v2332, %v2371
  %v2380 = vmul.f32 %v2334, %v2372
  %v2381 = vmul.f32 %v2336, %v2373
  %v2382 = vmul.f32 %v2338, %v2374
  %v2383 = vmul.f32 %v2340, %v2375
  %v2384 = vmul.f32 %v2342, %v2376
  %v2385 = vmul.f32 %v2344, %v2377
  %v2386 = vmul.f32 %v2346, %v2378
  %v2387 = vpack.c.bf16 %v2379, %v2379
  %v2388 = vpack.c.bf16 %v2380, %v2380
  %v2389 = vpack.c.bf16 %v2381, %v2381
  %v2390 = vpack.c.bf16 %v2382, %v2382
  %v2391 = vpack.c.bf16 %v2383, %v2383
  %v2392 = vpack.c.bf16 %v2384, %v2384
  %v2393 = vpack.c.bf16 %v2385, %v2385
  %v2394 = vpack.c.bf16 %v2386, %v2386
  %2395 = vrot.lane.b32.xlu0 %v1892, 64
  %v2396 = vpop.permute.xlu0 %2395
  %v2398 = vsel %vm1123, %v2387, 0
  %v2401 = vsel %vm1127, %v2396, 0
  %2403 = vmatprep.subr.bf16.mxu0 0
  %2404 = vmatpush1.bf16.msra.mxu0 0
  %2405 = vmatprep.subr.bf16.mxu0 0
  %2406 = vmatpush1.bf16.msra.mxu0 0
  %2407 = vmatprep.subr.bf16.mxu0 0
  %2408 = vmatpush1.bf16.msra.mxu0 0
  %2409 = vmatprep.subr.bf16.mxu0 0
  %2410 = vmatpush1.bf16.msra.mxu0 0
  %2411 = vmatprep.subr.bf16.mxu0 0
  %2412 = vmatpush1.bf16.msra.mxu0 0
  %2413 = vmatprep.subr.bf16.mxu0 0
  %2414 = vmatpush1.bf16.msra.mxu0 0
  %2415 = vmatprep.subr.bf16.mxu0 0
  %2416 = vmatpush1.bf16.msra.mxu0 0
  %2417 = vmatprep.subr.bf16.mxu0 0
  %2418 = vmatpush1.bf16.msra.mxu0 %v2401
  %2419 = vmatprep.subr.bf16.mxu0 0
  %2420 = vmatpush2.bf16.msra.mxu0 0
  %2421 = vmatprep.subr.bf16.mxu0 0
  %2422 = vmatpush2.bf16.msra.mxu0 0
  %2423 = vmatprep.subr.bf16.mxu0 0
  %2424 = vmatpush2.bf16.msra.mxu0 0
  %2425 = vmatprep.subr.bf16.mxu0 0
  %2426 = vmatpush2.bf16.msra.mxu0 0
  %2427 = vmatprep.subr.bf16.mxu0 0
  %2428 = vmatpush2.bf16.msra.mxu0 0
  %2429 = vmatprep.subr.bf16.mxu0 0
  %2430 = vmatpush2.bf16.msra.mxu0 0
  %2431 = vmatprep.subr.bf16.mxu0 0
  %2432 = vmatpush2.bf16.msra.mxu0 0
  %2433 = vmatprep.subr.bf16.mxu0 0
  %2434 = vmatpush2.bf16.msra.mxu0 0
  %2435 = vmatprep.mubr.bf16.mxu0 0
  %2436 = vmatmul.mubr.bf16.gmra.mxu0 %v2398
  %v2437 = vpop.f32.mrf.mxu0
  %v2438 = vadd.f32 0.0, %v2437
  %v2439 = vpop.f32.mrf.mxu0
  %v2440 = vpop.f32.mrf.mxu0
  %v2441 = vpop.f32.mrf.mxu0
  %2442 = vdwg.mxu0
  %2443 = vrot.lane.b32.xlu0 %v1895, 64
  %v2444 = vpop.permute.xlu0 %2443
  %v2446 = vsel %vm1123, %v2388, 0
  %v2449 = vsel %vm1127, %v2444, 0
  %2451 = vmatprep.subr.bf16.mxu0 0
  %2452 = vmatpush1.bf16.msra.mxu0 0
  %2453 = vmatprep.subr.bf16.mxu0 0
  %2454 = vmatpush1.bf16.msra.mxu0 0
  %2455 = vmatprep.subr.bf16.mxu0 0
  %2456 = vmatpush1.bf16.msra.mxu0 0
  %2457 = vmatprep.subr.bf16.mxu0 0
  %2458 = vmatpush1.bf16.msra.mxu0 0
  %2459 = vmatprep.subr.bf16.mxu0 0
  %2460 = vmatpush1.bf16.msra.mxu0 0
  %2461 = vmatprep.subr.bf16.mxu0 0
  %2462 = vmatpush1.bf16.msra.mxu0 0
  %2463 = vmatprep.subr.bf16.mxu0 0
  %2464 = vmatpush1.bf16.msra.mxu0 0
  %2465 = vmatprep.subr.bf16.mxu0 0
  %2466 = vmatpush1.bf16.msra.mxu0 %v2449
  %2467 = vmatprep.subr.bf16.mxu0 0
  %2468 = vmatpush2.bf16.msra.mxu0 0
  %2469 = vmatprep.subr.bf16.mxu0 0
  %2470 = vmatpush2.bf16.msra.mxu0 0
  %2471 = vmatprep.subr.bf16.mxu0 0
  %2472 = vmatpush2.bf16.msra.mxu0 0
  %2473 = vmatprep.subr.bf16.mxu0 0
  %2474 = vmatpush2.bf16.msra.mxu0 0
  %2475 = vmatprep.subr.bf16.mxu0 0
  %2476 = vmatpush2.bf16.msra.mxu0 0
  %2477 = vmatprep.subr.bf16.mxu0 0
  %2478 = vmatpush2.bf16.msra.mxu0 0
  %2479 = vmatprep.subr.bf16.mxu0 0
  %2480 = vmatpush2.bf16.msra.mxu0 0
  %2481 = vmatprep.subr.bf16.mxu0 0
  %2482 = vmatpush2.bf16.msra.mxu0 0
  %2483 = vmatprep.mubr.bf16.mxu0 0
  %2484 = vmatmul.mubr.bf16.gmra.mxu0 %v2446
  %v2485 = vpop.f32.mrf.mxu0
  %v2486 = vadd.f32 0.0, %v2485
  %v2487 = vpop.f32.mrf.mxu0
  %v2488 = vpop.f32.mrf.mxu0
  %v2489 = vpop.f32.mrf.mxu0
  %2490 = vdwg.mxu0
  %2491 = vrot.lane.b32.xlu0 %v1897, 64
  %v2492 = vpop.permute.xlu0 %2491
  %v2494 = vsel %vm1123, %v2389, 0
  %v2497 = vsel %vm1127, %v2492, 0
  %2499 = vmatprep.subr.bf16.mxu0 0
  %2500 = vmatpush1.bf16.msra.mxu0 0
  %2501 = vmatprep.subr.bf16.mxu0 0
  %2502 = vmatpush1.bf16.msra.mxu0 0
  %2503 = vmatprep.subr.bf16.mxu0 0
  %2504 = vmatpush1.bf16.msra.mxu0 0
  %2505 = vmatprep.subr.bf16.mxu0 0
  %2506 = vmatpush1.bf16.msra.mxu0 0
  %2507 = vmatprep.subr.bf16.mxu0 0
  %2508 = vmatpush1.bf16.msra.mxu0 0
  %2509 = vmatprep.subr.bf16.mxu0 0
  %2510 = vmatpush1.bf16.msra.mxu0 0
  %2511 = vmatprep.subr.bf16.mxu0 0
  %2512 = vmatpush1.bf16.msra.mxu0 0
  %2513 = vmatprep.subr.bf16.mxu0 0
  %2514 = vmatpush1.bf16.msra.mxu0 %v2497
  %2515 = vmatprep.subr.bf16.mxu0 0
  %2516 = vmatpush2.bf16.msra.mxu0 0
  %2517 = vmatprep.subr.bf16.mxu0 0
  %2518 = vmatpush2.bf16.msra.mxu0 0
  %2519 = vmatprep.subr.bf16.mxu0 0
  %2520 = vmatpush2.bf16.msra.mxu0 0
  %2521 = vmatprep.subr.bf16.mxu0 0
  %2522 = vmatpush2.bf16.msra.mxu0 0
  %2523 = vmatprep.subr.bf16.mxu0 0
  %2524 = vmatpush2.bf16.msra.mxu0 0
  %2525 = vmatprep.subr.bf16.mxu0 0
  %2526 = vmatpush2.bf16.msra.mxu0 0
  %2527 = vmatprep.subr.bf16.mxu0 0
  %2528 = vmatpush2.bf16.msra.mxu0 0
  %2529 = vmatprep.subr.bf16.mxu0 0
  %2530 = vmatpush2.bf16.msra.mxu0 0
  %2531 = vmatprep.mubr.bf16.mxu0 0
  %2532 = vmatmul.mubr.bf16.gmra.mxu0 %v2494
  %v2533 = vpop.f32.mrf.mxu0
  %v2534 = vadd.f32 0.0, %v2533
  %v2535 = vpop.f32.mrf.mxu0
  %v2536 = vpop.f32.mrf.mxu0
  %v2537 = vpop.f32.mrf.mxu0
  %2538 = vdwg.mxu0
  %2539 = vrot.lane.b32.xlu0 %v1899, 64
  %v2540 = vpop.permute.xlu0 %2539
  %v2542 = vsel %vm1123, %v2390, 0
  %v2545 = vsel %vm1127, %v2540, 0
  %2547 = vmatprep.subr.bf16.mxu0 0
  %2548 = vmatpush1.bf16.msra.mxu0 0
  %2549 = vmatprep.subr.bf16.mxu0 0
  %2550 = vmatpush1.bf16.msra.mxu0 0
  %2551 = vmatprep.subr.bf16.mxu0 0
  %2552 = vmatpush1.bf16.msra.mxu0 0
  %2553 = vmatprep.subr.bf16.mxu0 0
  %2554 = vmatpush1.bf16.msra.mxu0 0
  %2555 = vmatprep.subr.bf16.mxu0 0
  %2556 = vmatpush1.bf16.msra.mxu0 0
  %2557 = vmatprep.subr.bf16.mxu0 0
  %2558 = vmatpush1.bf16.msra.mxu0 0
  %2559 = vmatprep.subr.bf16.mxu0 0
  %2560 = vmatpush1.bf16.msra.mxu0 0
  %2561 = vmatprep.subr.bf16.mxu0 0
  %2562 = vmatpush1.bf16.msra.mxu0 %v2545
  %2563 = vmatprep.subr.bf16.mxu0 0
  %2564 = vmatpush2.bf16.msra.mxu0 0
  %2565 = vmatprep.subr.bf16.mxu0 0
  %2566 = vmatpush2.bf16.msra.mxu0 0
  %2567 = vmatprep.subr.bf16.mxu0 0
  %2568 = vmatpush2.bf16.msra.mxu0 0
  %2569 = vmatprep.subr.bf16.mxu0 0
  %2570 = vmatpush2.bf16.msra.mxu0 0
  %2571 = vmatprep.subr.bf16.mxu0 0
  %2572 = vmatpush2.bf16.msra.mxu0 0
  %2573 = vmatprep.subr.bf16.mxu0 0
  %2574 = vmatpush2.bf16.msra.mxu0 0
  %2575 = vmatprep.subr.bf16.mxu0 0
  %2576 = vmatpush2.bf16.msra.mxu0 0
  %2577 = vmatprep.subr.bf16.mxu0 0
  %2578 = vmatpush2.bf16.msra.mxu0 0
  %2579 = vmatprep.mubr.bf16.mxu0 0
  %2580 = vmatmul.mubr.bf16.gmra.mxu0 %v2542
  %v2581 = vpop.f32.mrf.mxu0
  %v2582 = vadd.f32 0.0, %v2581
  %v2583 = vpop.f32.mrf.mxu0
  %v2584 = vpop.f32.mrf.mxu0
  %v2585 = vpop.f32.mrf.mxu0
  %2586 = vdwg.mxu0
  %2587 = vrot.lane.b32.xlu0 %v1900, 64
  %v2588 = vpop.permute.xlu0 %2587
  %v2590 = vsel %vm1123, %v2391, 0
  %v2593 = vsel %vm1127, %v2588, 0
  %2595 = vmatprep.subr.bf16.mxu0 0
  %2596 = vmatpush1.bf16.msra.mxu0 0
  %2597 = vmatprep.subr.bf16.mxu0 0
  %2598 = vmatpush1.bf16.msra.mxu0 0
  %2599 = vmatprep.subr.bf16.mxu0 0
  %2600 = vmatpush1.bf16.msra.mxu0 0
  %2601 = vmatprep.subr.bf16.mxu0 0
  %2602 = vmatpush1.bf16.msra.mxu0 0
  %2603 = vmatprep.subr.bf16.mxu0 0
  %2604 = vmatpush1.bf16.msra.mxu0 0
  %2605 = vmatprep.subr.bf16.mxu0 0
  %2606 = vmatpush1.bf16.msra.mxu0 0
  %2607 = vmatprep.subr.bf16.mxu0 0
  %2608 = vmatpush1.bf16.msra.mxu0 0
  %2609 = vmatprep.subr.bf16.mxu0 0
  %2610 = vmatpush1.bf16.msra.mxu0 %v2593
  %2611 = vmatprep.subr.bf16.mxu0 0
  %2612 = vmatpush2.bf16.msra.mxu0 0
  %2613 = vmatprep.subr.bf16.mxu0 0
  %2614 = vmatpush2.bf16.msra.mxu0 0
  %2615 = vmatprep.subr.bf16.mxu0 0
  %2616 = vmatpush2.bf16.msra.mxu0 0
  %2617 = vmatprep.subr.bf16.mxu0 0
  %2618 = vmatpush2.bf16.msra.mxu0 0
  %2619 = vmatprep.subr.bf16.mxu0 0
  %2620 = vmatpush2.bf16.msra.mxu0 0
  %2621 = vmatprep.subr.bf16.mxu0 0
  %2622 = vmatpush2.bf16.msra.mxu0 0
  %2623 = vmatprep.subr.bf16.mxu0 0
  %2624 = vmatpush2.bf16.msra.mxu0 0
  %2625 = vmatprep.subr.bf16.mxu0 0
  %2626 = vmatpush2.bf16.msra.mxu0 0
  %2627 = vmatprep.mubr.bf16.mxu0 0
  %2628 = vmatmul.mubr.bf16.gmra.mxu0 %v2590
  %v2629 = vpop.f32.mrf.mxu0
  %v2630 = vadd.f32 0.0, %v2629
  %v2631 = vpop.f32.mrf.mxu0
  %v2632 = vpop.f32.mrf.mxu0
  %v2633 = vpop.f32.mrf.mxu0
  %2634 = vdwg.mxu0
  %2635 = vrot.lane.b32.xlu0 %v1902, 64
  %v2636 = vpop.permute.xlu0 %2635
  %v2638 = vsel %vm1123, %v2392, 0
  %v2641 = vsel %vm1127, %v2636, 0
  %2643 = vmatprep.subr.bf16.mxu0 0
  %2644 = vmatpush1.bf16.msra.mxu0 0
  %2645 = vmatprep.subr.bf16.mxu0 0
  %2646 = vmatpush1.bf16.msra.mxu0 0
  %2647 = vmatprep.subr.bf16.mxu0 0
  %2648 = vmatpush1.bf16.msra.mxu0 0
  %2649 = vmatprep.subr.bf16.mxu0 0
  %2650 = vmatpush1.bf16.msra.mxu0 0
  %2651 = vmatprep.subr.bf16.mxu0 0
  %2652 = vmatpush1.bf16.msra.mxu0 0
  %2653 = vmatprep.subr.bf16.mxu0 0
  %2654 = vmatpush1.bf16.msra.mxu0 0
  %2655 = vmatprep.subr.bf16.mxu0 0
  %2656 = vmatpush1.bf16.msra.mxu0 0
  %2657 = vmatprep.subr.bf16.mxu0 0
  %2658 = vmatpush1.bf16.msra.mxu0 %v2641
  %2659 = vmatprep.subr.bf16.mxu0 0
  %2660 = vmatpush2.bf16.msra.mxu0 0
  %2661 = vmatprep.subr.bf16.mxu0 0
  %2662 = vmatpush2.bf16.msra.mxu0 0
  %2663 = vmatprep.subr.bf16.mxu0 0
  %2664 = vmatpush2.bf16.msra.mxu0 0
  %2665 = vmatprep.subr.bf16.mxu0 0
  %2666 = vmatpush2.bf16.msra.mxu0 0
  %2667 = vmatprep.subr.bf16.mxu0 0
  %2668 = vmatpush2.bf16.msra.mxu0 0
  %2669 = vmatprep.subr.bf16.mxu0 0
  %2670 = vmatpush2.bf16.msra.mxu0 0
  %2671 = vmatprep.subr.bf16.mxu0 0
  %2672 = vmatpush2.bf16.msra.mxu0 0
  %2673 = vmatprep.subr.bf16.mxu0 0
  %2674 = vmatpush2.bf16.msra.mxu0 0
  %2675 = vmatprep.mubr.bf16.mxu0 0
  %2676 = vmatmul.mubr.bf16.gmra.mxu0 %v2638
  %v2677 = vpop.f32.mrf.mxu0
  %v2678 = vadd.f32 0.0, %v2677
  %v2679 = vpop.f32.mrf.mxu0
  %v2680 = vpop.f32.mrf.mxu0
  %v2681 = vpop.f32.mrf.mxu0
  %2682 = vdwg.mxu0
  %2683 = vrot.lane.b32.xlu0 %v1904, 64
  %v2684 = vpop.permute.xlu0 %2683
  %v2686 = vsel %vm1123, %v2393, 0
  %v2689 = vsel %vm1127, %v2684, 0
  %2691 = vmatprep.subr.bf16.mxu0 0
  %2692 = vmatpush1.bf16.msra.mxu0 0
  %2693 = vmatprep.subr.bf16.mxu0 0
  %2694 = vmatpush1.bf16.msra.mxu0 0
  %2695 = vmatprep.subr.bf16.mxu0 0
  %2696 = vmatpush1.bf16.msra.mxu0 0
  %2697 = vmatprep.subr.bf16.mxu0 0
  %2698 = vmatpush1.bf16.msra.mxu0 0
  %2699 = vmatprep.subr.bf16.mxu0 0
  %2700 = vmatpush1.bf16.msra.mxu0 0
  %2701 = vmatprep.subr.bf16.mxu0 0
  %2702 = vmatpush1.bf16.msra.mxu0 0
  %2703 = vmatprep.subr.bf16.mxu0 0
  %2704 = vmatpush1.bf16.msra.mxu0 0
  %2705 = vmatprep.subr.bf16.mxu0 0
  %2706 = vmatpush1.bf16.msra.mxu0 %v2689
  %2707 = vmatprep.subr.bf16.mxu0 0
  %2708 = vmatpush2.bf16.msra.mxu0 0
  %2709 = vmatprep.subr.bf16.mxu0 0
  %2710 = vmatpush2.bf16.msra.mxu0 0
  %2711 = vmatprep.subr.bf16.mxu0 0
  %2712 = vmatpush2.bf16.msra.mxu0 0
  %2713 = vmatprep.subr.bf16.mxu0 0
  %2714 = vmatpush2.bf16.msra.mxu0 0
  %2715 = vmatprep.subr.bf16.mxu0 0
  %2716 = vmatpush2.bf16.msra.mxu0 0
  %2717 = vmatprep.subr.bf16.mxu0 0
  %2718 = vmatpush2.bf16.msra.mxu0 0
  %2719 = vmatprep.subr.bf16.mxu0 0
  %2720 = vmatpush2.bf16.msra.mxu0 0
  %2721 = vmatprep.subr.bf16.mxu0 0
  %2722 = vmatpush2.bf16.msra.mxu0 0
  %2723 = vmatprep.mubr.bf16.mxu0 0
  %2724 = vmatmul.mubr.bf16.gmra.mxu0 %v2686
  %v2725 = vpop.f32.mrf.mxu0
  %v2726 = vadd.f32 0.0, %v2725
  %v2727 = vpop.f32.mrf.mxu0
  %v2728 = vpop.f32.mrf.mxu0
  %v2729 = vpop.f32.mrf.mxu0
  %2730 = vdwg.mxu0
  %2731 = vrot.lane.b32.xlu0 %v1906, 64
  %v2732 = vpop.permute.xlu0 %2731
  %v2734 = vsel %vm1123, %v2394, 0
  %v2737 = vsel %vm1127, %v2732, 0
  %2739 = vmatprep.subr.bf16.mxu0 0
  %2740 = vmatpush1.bf16.msra.mxu0 0
  %2741 = vmatprep.subr.bf16.mxu0 0
  %2742 = vmatpush1.bf16.msra.mxu0 0
  %2743 = vmatprep.subr.bf16.mxu0 0
  %2744 = vmatpush1.bf16.msra.mxu0 0
  %2745 = vmatprep.subr.bf16.mxu0 0
  %2746 = vmatpush1.bf16.msra.mxu0 0
  %2747 = vmatprep.subr.bf16.mxu0 0
  %2748 = vmatpush1.bf16.msra.mxu0 0
  %2749 = vmatprep.subr.bf16.mxu0 0
  %2750 = vmatpush1.bf16.msra.mxu0 0
  %2751 = vmatprep.subr.bf16.mxu0 0
  %2752 = vmatpush1.bf16.msra.mxu0 0
  %2753 = vmatprep.subr.bf16.mxu0 0
  %2754 = vmatpush1.bf16.msra.mxu0 %v2737
  %2755 = vmatprep.subr.bf16.mxu0 0
  %2756 = vmatpush2.bf16.msra.mxu0 0
  %2757 = vmatprep.subr.bf16.mxu0 0
  %2758 = vmatpush2.bf16.msra.mxu0 0
  %2759 = vmatprep.subr.bf16.mxu0 0
  %2760 = vmatpush2.bf16.msra.mxu0 0
  %2761 = vmatprep.subr.bf16.mxu0 0
  %2762 = vmatpush2.bf16.msra.mxu0 0
  %2763 = vmatprep.subr.bf16.mxu0 0
  %2764 = vmatpush2.bf16.msra.mxu0 0
  %2765 = vmatprep.subr.bf16.mxu0 0
  %2766 = vmatpush2.bf16.msra.mxu0 0
  %2767 = vmatprep.subr.bf16.mxu0 0
  %2768 = vmatpush2.bf16.msra.mxu0 0
  %2769 = vmatprep.subr.bf16.mxu0 0
  %2770 = vmatpush2.bf16.msra.mxu0 0
  %2771 = vmatprep.mubr.bf16.mxu0 0
  %2772 = vmatmul.mubr.bf16.gmra.mxu0 %v2734
  %v2773 = vpop.f32.mrf.mxu0
  %v2774 = vadd.f32 0.0, %v2773
  %v2775 = vpop.f32.mrf.mxu0
  %v2776 = vpop.f32.mrf.mxu0
  %v2777 = vpop.f32.mrf.mxu0
  %2778 = vdwg.mxu0
  %2780 = vrot.lane.b32.xlu0 %v2486, 8
  %v2781 = vpop.permute.xlu0 %2780
  %2784 = vrot.lane.b32.xlu0 %v2534, 16
  %v2785 = vpop.permute.xlu0 %2784
  %2788 = vrot.lane.b32.xlu0 %v2582, 24
  %v2789 = vpop.permute.xlu0 %2788
  %v2791 = vsel %vm633, %v2438, %v2781
  %v2792 = vsel %vm1520, %v2791, %v2785
  %v2793 = vsel %vm1522, %v2792, %v2789
  %2795 = vrot.lane.b32.xlu0 %v2678, 8
  %v2796 = vpop.permute.xlu0 %2795
  %2799 = vrot.lane.b32.xlu0 %v2726, 16
  %v2800 = vpop.permute.xlu0 %2799
  %2803 = vrot.lane.b32.xlu0 %v2774, 24
  %v2804 = vpop.permute.xlu0 %2803
  %v2806 = vsel %vm633, %v2630, %v2796
  %v2807 = vsel %vm1520, %v2806, %v2800
  %v2808 = vsel %vm1522, %v2807, %v2804
  %v2810 = vrot.slane %v2808, 6
  %v2812 = vsel %vm546, %v2793, %v2810
  %v2813 = vpack.c.bf16 %v2812, %v2812
  %s2814 = scalar_lea.vmem %s7, 16
  %v2815 = vld [vmem:[%s2814] sm:$0xf]
  %v2816 = vld [vmem:[%s2814 + $0x4] sm:$0xf]
  %v2817 = vld [vmem:[%s2814 + $0x8] sm:$0xf]
  %v2818 = vld [vmem:[%s2814 + $0xc] sm:$0xf]
  %s2819 = scalar_lea.vmem %s8, 1
  %v2820 = vld [vmem:[%s2819] sm:$0x1]
  %v2822 = vlaneseq
  %v2823 = vshrl.u32 %v2822, 7
  %v2824 = vsub.s32 0, %v2823
  %v2825 = vrot.slane %v2820, %v2824
  %v2831 = vunpack.c.l.b16 %v2815
  %v2832 = vunpack.c.l.b16 %v2816
  %v2833 = vunpack.c.l.b16 %v2817
  %v2834 = vunpack.c.l.b16 %v2818
  %v2835 = vpack.c.b16 %v2832, %v2831
  %v2836 = vpack.c.b16 %v2834, %v2833
  %v2840 = vsel %vm572, %v2813, 0
  %2842 = vmatprep.subr.bf16.mxu0 0
  %2843 = vmatpush1.bf16.msra.mxu0 0
  %2844 = vmatprep.subr.bf16.mxu0 0
  %2845 = vmatpush1.bf16.msra.mxu0 0
  %2846 = vmatprep.subr.bf16.mxu0 0
  %2847 = vmatpush1.bf16.msra.mxu0 0
  %2848 = vmatprep.subr.bf16.mxu0 0
  %2849 = vmatpush1.bf16.msra.mxu0 0
  %2850 = vmatprep.subr.bf16.mxu0 0
  %2851 = vmatpush1.bf16.msra.mxu0 0
  %2852 = vmatprep.subr.bf16.mxu0 0
  %2853 = vmatpush1.bf16.msra.mxu0 0
  %2854 = vmatprep.subr.bf16.mxu0 0
  %2855 = vmatpush1.bf16.msra.mxu0 %v2836
  %2856 = vmatprep.subr.bf16.mxu0 0
  %2857 = vmatpush1.bf16.msra.mxu0 %v2835
  %2858 = vmatprep.subr.bf16.mxu0 0
  %2859 = vmatpush2.bf16.msra.mxu0 0
  %2860 = vmatprep.subr.bf16.mxu0 0
  %2861 = vmatpush2.bf16.msra.mxu0 0
  %2862 = vmatprep.subr.bf16.mxu0 0
  %2863 = vmatpush2.bf16.msra.mxu0 0
  %2864 = vmatprep.subr.bf16.mxu0 0
  %2865 = vmatpush2.bf16.msra.mxu0 0
  %2866 = vmatprep.subr.bf16.mxu0 0
  %2867 = vmatpush2.bf16.msra.mxu0 0
  %2868 = vmatprep.subr.bf16.mxu0 0
  %2869 = vmatpush2.bf16.msra.mxu0 0
  %2870 = vmatprep.subr.bf16.mxu0 0
  %2871 = vmatpush2.bf16.msra.mxu0 0
  %2872 = vmatprep.subr.bf16.mxu0 0
  %2873 = vmatpush2.bf16.msra.mxu0 0
  %2874 = vmatprep.mubr.bf16.mxu0 0
  %2875 = vmatmul.mubr.bf16.gmra.mxu0 %v2840
  %v2876 = vpop.f32.mrf.mxu0
  %v2877 = vadd.f32 %v2825, %v2876
  %v2878 = vpop.f32.mrf.mxu0
  %v2879 = vpop.f32.mrf.mxu0
  %v2880 = vpop.f32.mrf.mxu0
  %2881 = vdwg.mxu0
  %v2882 = vadd.f32 %v1822, %v2877
  %s2883 = scalar_lea.vmem %s9, 1
  %v2884 = vld [vmem:[%s2883] sm:$0x1]
  %s2885 = scalar_lea.vmem %s10, 1
  %v2886 = vld [vmem:[%s2885] sm:$0x1]
  %v2887 = vsel %vm1613, %v2882, 0.0
  %2888 = vadd.xlane.f32.xlu0 %v2887
  %v2889 = vpop.xlane.xlu0 %2888
  %v2890 = vmul.f32 %v2889, %v1617
  %v2891 = vsub.f32 %v2882, %v2890
  %v2892 = vmul.f32 %v2891, %v2891
  %v2893 = vsel %vm1613, %v2892, 0.0
  %2894 = vadd.xlane.f32.xlu0 %v2893
  %v2895 = vpop.xlane.xlu0 %2894
  %v2896 = vmul.f32 %v2895, %v1617
  %v2897 = vadd.f32 %v2896, 1e-05
  %v2898 = vrsqrt.pop %v2897
  %v2899 = vmul.f32 %v2891, %v2898
  %v2901 = vlaneseq
  %v2902 = vshrl.u32 %v2901, 7
  %v2903 = vsub.s32 0, %v2902
  %v2904 = vrot.slane %v2884, %v2903
  %v2906 = vmul.f32 %v2899, %v2904
  %v2908 = vlaneseq
  %v2909 = vshrl.u32 %v2908, 7
  %v2910 = vsub.s32 0, %v2909
  %v2911 = vrot.slane %v2886, %v2910
  %v2913 = vadd.f32 %v2906, %v2911
  %v2914 = vpack.c.bf16 %v2913, %v2913
  %s2915 = scalar_lea.vmem %s11, 16
  %v2916 = vld [vmem:[%s2915] sm:$0xf]
  %v2917 = vld [vmem:[%s2915 + $0x4] sm:$0xf]
  %v2918 = vld [vmem:[%s2915 + $0x8] sm:$0xf]
  %v2919 = vld [vmem:[%s2915 + $0xc] sm:$0xf]
  %s2920 = scalar_lea.vmem %s12, 1
  %v2921 = vld [vmem:[%s2920] sm:$0x1]
  %v2923 = vlaneseq
  %v2924 = vshrl.u32 %v2923, 7
  %v2925 = vsub.s32 0, %v2924
  %v2926 = vrot.slane %v2921, %v2925
  %v2932 = vunpack.c.l.b16 %v2916
  %v2933 = vunpack.c.l.b16 %v2917
  %v2934 = vunpack.c.l.b16 %v2918
  %v2935 = vunpack.c.l.b16 %v2919
  %v2936 = vpack.c.b16 %v2933, %v2932
  %v2937 = vpack.c.b16 %v2935, %v2934
  %v2941 = vsel %vm572, %v2914, 0
  %2943 = vmatprep.subr.bf16.mxu0 0
  %2944 = vmatpush1.bf16.msra.mxu0 0
  %2945 = vmatprep.subr.bf16.mxu0 0
  %2946 = vmatpush1.bf16.msra.mxu0 0
  %2947 = vmatprep.subr.bf16.mxu0 0
  %2948 = vmatpush1.bf16.msra.mxu0 0
  %2949 = vmatprep.subr.bf16.mxu0 0
  %2950 = vmatpush1.bf16.msra.mxu0 0
  %2951 = vmatprep.subr.bf16.mxu0 0
  %2952 = vmatpush1.bf16.msra.mxu0 0
  %2953 = vmatprep.subr.bf16.mxu0 0
  %2954 = vmatpush1.bf16.msra.mxu0 0
  %2955 = vmatprep.subr.bf16.mxu0 0
  %2956 = vmatpush1.bf16.msra.mxu0 %v2937
  %2957 = vmatprep.subr.bf16.mxu0 0
  %2958 = vmatpush1.bf16.msra.mxu0 %v2936
  %2959 = vmatprep.subr.bf16.mxu0 0
  %2960 = vmatpush2.bf16.msra.mxu0 0
  %2961 = vmatprep.subr.bf16.mxu0 0
  %2962 = vmatpush2.bf16.msra.mxu0 0
  %2963 = vmatprep.subr.bf16.mxu0 0
  %2964 = vmatpush2.bf16.msra.mxu0 0
  %2965 = vmatprep.subr.bf16.mxu0 0
  %2966 = vmatpush2.bf16.msra.mxu0 0
  %2967 = vmatprep.subr.bf16.mxu0 0
  %2968 = vmatpush2.bf16.msra.mxu0 0
  %2969 = vmatprep.subr.bf16.mxu0 0
  %2970 = vmatpush2.bf16.msra.mxu0 0
  %2971 = vmatprep.subr.bf16.mxu0 0
  %2972 = vmatpush2.bf16.msra.mxu0 0
  %2973 = vmatprep.subr.bf16.mxu0 0
  %2974 = vmatpush2.bf16.msra.mxu0 0
  %2975 = vmatprep.mubr.bf16.mxu0 0
  %2976 = vmatmul.mubr.bf16.gmra.mxu0 %v2941
  %v2977 = vpop.f32.mrf.mxu0
  %v2978 = vadd.f32 %v2926, %v2977
  %v2979 = vpop.f32.mrf.mxu0
  %v2980 = vpop.f32.mrf.mxu0
  %v2981 = vpop.f32.mrf.mxu0
  %2982 = vdwg.mxu0
  %v2983 = vmax.f32 %v2978, 0.0
  %v2984 = vpack.c.bf16 %v2983, %v2983
  %s2985 = scalar_lea.vmem %s13, 32
  %v2986 = vld [vmem:[%s2985] sm:$0xf]
  %v2987 = vld [vmem:[%s2985 + $0x4] sm:$0xf]
  %v2988 = vld [vmem:[%s2985 + $0x8] sm:$0xf]
  %v2989 = vld [vmem:[%s2985 + $0xc] sm:$0xf]
  %v2990 = vld [vmem:[%s2985 + $0x10] sm:$0xf]
  %v2991 = vld [vmem:[%s2985 + $0x14] sm:$0xf]
  %v2992 = vld [vmem:[%s2985 + $0x18] sm:$0xf]
  %v2993 = vld [vmem:[%s2985 + $0x1c] sm:$0xf]
  %s2994 = scalar_lea.vmem %s14, 1
  %v2995 = vld [vmem:[%s2994] sm:$0x1]
  %v2997 = vlaneseq
  %v2998 = vshrl.u32 %v2997, 7
  %v2999 = vsub.s32 0, %v2998
  %v3000 = vrot.slane %v2995, %v2999
  %v3010 = vunpack.c.l.b16 %v2986
  %v3011 = vunpack.c.l.b16 %v2987
  %v3012 = vunpack.c.l.b16 %v2988
  %v3013 = vunpack.c.l.b16 %v2989
  %v3014 = vunpack.c.l.b16 %v2990
  %v3015 = vunpack.c.l.b16 %v2991
  %v3016 = vunpack.c.l.b16 %v2992
  %v3017 = vunpack.c.l.b16 %v2993
  %v3018 = vpack.c.b16 %v3011, %v3010
  %v3019 = vpack.c.b16 %v3013, %v3012
  %v3020 = vpack.c.b16 %v3015, %v3014
  %v3021 = vpack.c.b16 %v3017, %v3016
  %v3027 = vsel %vm402, %v2984, 0
  %3029 = vmatprep.subr.bf16.mxu0 0
  %3030 = vmatpush1.bf16.msra.mxu0 0
  %3031 = vmatprep.subr.bf16.mxu0 0
  %3032 = vmatpush1.bf16.msra.mxu0 0
  %3033 = vmatprep.subr.bf16.mxu0 0
  %3034 = vmatpush1.bf16.msra.mxu0 0
  %3035 = vmatprep.subr.bf16.mxu0 0
  %3036 = vmatpush1.bf16.msra.mxu0 0
  %3037 = vmatprep.subr.bf16.mxu0 0
  %3038 = vmatpush1.bf16.msra.mxu0 %v3021
  %3039 = vmatprep.subr.bf16.mxu0 0
  %3040 = vmatpush1.bf16.msra.mxu0 %v3020
  %3041 = vmatprep.subr.bf16.mxu0 0
  %3042 = vmatpush1.bf16.msra.mxu0 %v3019
  %3043 = vmatprep.subr.bf16.mxu0 0
  %3044 = vmatpush1.bf16.msra.mxu0 %v3018
  %3045 = vmatprep.subr.bf16.mxu0 0
  %3046 = vmatpush2.bf16.msra.mxu0 0
  %3047 = vmatprep.subr.bf16.mxu0 0
  %3048 = vmatpush2.bf16.msra.mxu0 0
  %3049 = vmatprep.subr.bf16.mxu0 0
  %3050 = vmatpush2.bf16.msra.mxu0 0
  %3051 = vmatprep.subr.bf16.mxu0 0
  %3052 = vmatpush2.bf16.msra.mxu0 0
  %3053 = vmatprep.subr.bf16.mxu0 0
  %3054 = vmatpush2.bf16.msra.mxu0 0
  %3055 = vmatprep.subr.bf16.mxu0 0
  %3056 = vmatpush2.bf16.msra.mxu0 0
  %3057 = vmatprep.subr.bf16.mxu0 0
  %3058 = vmatpush2.bf16.msra.mxu0 0
  %3059 = vmatprep.subr.bf16.mxu0 0
  %3060 = vmatpush2.bf16.msra.mxu0 0
  %3061 = vmatprep.mubr.bf16.mxu0 0
  %3062 = vmatmul.mubr.bf16.gmra.mxu0 %v3027
  %v3063 = vpop.f32.mrf.mxu0
  %v3064 = vadd.f32 %v3000, %v3063
  %v3065 = vpop.f32.mrf.mxu0
  %v3066 = vpop.f32.mrf.mxu0
  %v3067 = vpop.f32.mrf.mxu0
  %3068 = vdwg.mxu0
  %v3069 = vadd.f32 %v2913, %v3064
  %s3070 = scalar_lea.vmem %s15, 1
  %v3071 = vld [vmem:[%s3070] sm:$0x1]
  %s3072 = scalar_lea.vmem %s16, 1
  %v3073 = vld [vmem:[%s3072] sm:$0x1]
  %v3074 = vsel %vm1613, %v3069, 0.0
  %3075 = vadd.xlane.f32.xlu0 %v3074
  %v3076 = vpop.xlane.xlu0 %3075
  %v3077 = vmul.f32 %v3076, %v1617
  %v3078 = vsub.f32 %v3069, %v3077
  %v3079 = vmul.f32 %v3078, %v3078
  %v3080 = vsel %vm1613, %v3079, 0.0
  %3081 = vadd.xlane.f32.xlu0 %v3080
  %v3082 = vpop.xlane.xlu0 %3081
  %v3083 = vmul.f32 %v3082, %v1617
  %v3084 = vadd.f32 %v3083, 1e-05
  %v3085 = vrsqrt.pop %v3084
  %v3086 = vmul.f32 %v3078, %v3085
  %v3088 = vlaneseq
  %v3089 = vshrl.u32 %v3088, 7
  %v3090 = vsub.s32 0, %v3089
  %v3091 = vrot.slane %v3071, %v3090
  %v3093 = vmul.f32 %v3086, %v3091
  %v3095 = vlaneseq
  %v3096 = vshrl.u32 %v3095, 7
  %v3097 = vsub.s32 0, %v3096
  %v3098 = vrot.slane %v3073, %v3097
  %v3100 = vadd.f32 %v3093, %v3098
  %v3101 = vsel %vm572, %v3100, 0.0
  %3102 = vst [vmem:[%s21] sm:$0x3] %v3101
  // Predicated region
  $region86: #{_forward_impl.4} parent=0 // pred_check
    _
  $region87: #{_forward_impl.4} parent=0 // pred_check_branch
    %3104 = sbr.rel (0) target = $region89
  $region88: #{_forward_impl.4} parent=0 // pred_region
    _
  $region89: #{_forward_impl.4} parent=0 // pred_fallthru
    _
  // Predicated region
  $region90: #{_forward_impl.4} parent=0 // pred_check
    _
  $region91: #{_forward_impl.4} parent=0 // pred_check_branch
    %3106 = sbr.rel (0) target = $region93
  $region92: #{_forward_impl.4} parent=0 // pred_region
    _
  $region93: #{_forward_impl.4} parent=0 // pred_fallthru
    _

// kernel: _forward_impl.5
$region0: #{_forward_impl.5}
  #allocation0 [shape = 'u32[]', space=smem, size = 0x4, offset = 0x4, fixed_abs, tag = 'smem constant byte address 0x4 - core index']
  #allocation1 [shape = 'u32[144,128]{1,0:T(1,128)}', space=vmem, size = 0x12000, scoped, tag = 'internal scratch']
  %s0 = inlined_call_operand.vmem [shape: f32[2,576], index: 0, kind: input, shape index: {}]
  %s1 = inlined_call_operand.vmem [shape: bf16[576,32], index: 1, kind: input, shape index: {}]
  %s2 = inlined_call_operand.vmem [shape: f32[1,32], index: 2, kind: input, shape index: {}, may-alias: {2,18}]
  %s3 = inlined_call_operand.vmem [shape: f32[2,1], index: 3, kind: input, shape index: {}]
  %s4 = inlined_call_operand.vmem [shape: f32[2,32], index: 4, kind: input, shape index: {}]
  %s5 = inlined_call_operand.vmem [shape: bf16[2,32,96], index: 5, kind: input, shape index: {}]
  %s6 = inlined_call_operand.vmem [shape: f32[2,1,96], index: 6, kind: input, shape index: {}]
  %s7 = inlined_call_operand.vmem [shape: bf16[2,32,32], index: 7, kind: input, shape index: {}]
  %s8 = inlined_call_operand.vmem [shape: f32[2,1,32], index: 8, kind: input, shape index: {}, may-alias: {8,10,14,16}]
  %s9 = inlined_call_operand.vmem [shape: f32[2,1,32], index: 9, kind: input, shape index: {}, may-alias: {9,15}]
  %s10 = inlined_call_operand.vmem [shape: f32[2,1,32], index: 10, kind: input, shape index: {}, may-alias: {8,10,14,16}]
  %s11 = inlined_call_operand.vmem [shape: bf16[2,32,64], index: 11, kind: input, shape index: {}]
  %s12 = inlined_call_operand.vmem [shape: f32[2,1,64], index: 12, kind: input, shape index: {}]
  %s13 = inlined_call_operand.vmem [shape: bf16[2,64,32], index: 13, kind: input, shape index: {}]
  %s14 = inlined_call_operand.vmem [shape: f32[2,1,32], index: 14, kind: input, shape index: {}, may-alias: {8,10,14,16}]
  %s15 = inlined_call_operand.vmem [shape: f32[2,1,32], index: 15, kind: input, shape index: {}, may-alias: {9,15}]
  %s16 = inlined_call_operand.vmem [shape: f32[2,1,32], index: 16, kind: input, shape index: {}, may-alias: {8,10,14,16}]
  %s17 = inlined_call_operand.vmem [shape: bf16[32,32], index: 17, kind: input, shape index: {}]
  %s18 = inlined_call_operand.vmem [shape: f32[1,32], index: 18, kind: input, shape index: {}, may-alias: {2,18}]
  %s19 = inlined_call_operand.vmem [shape: bf16[32,128], index: 19, kind: input, shape index: {}]
  %s20 = inlined_call_operand.vmem [shape: f32[1,128], index: 20, kind: input, shape index: {}]
  %s21 = inlined_call_operand.hbm [shape: f32[2,128], index: 21, kind: output, shape index: {}]
  %s22 = sld [smem:[#allocation0]]
  $region94: #{_forward_impl.5} parent=0
    _
  %s24 = ssub.s32 1, %s22
  %s25 = scalar_select 0, %s24, %s22
  $region1: #{_forward_impl.5} parent=0
    #allocation2 [shape = 'u8[1024]{0}', space=vmem, size = 0x400, scoped, tag = 'output window, operand 0, single buffered']
    #allocation3 [shape = 's32[1]{0}', space=sflag, size = 0x4, scoped, tag = 'scoped memory for _forward_impl.5']
    %26 = vsyncpa [#allocation3], 0
    // Predicated region
    $region2: #{_forward_impl.5} parent=1 // pred_check
      _
    $region3: #{_forward_impl.5} parent=1 // pred_check_branch
      %28 = sbr.rel (0) target = $region5
    $region4: #{_forward_impl.5} parent=1 // pred_region
      _
    $region5: #{_forward_impl.5} parent=1 // pred_fallthru
      _
    // Predicated region
    $region6: #{_forward_impl.5} parent=1 // pred_check
      _
    $region7: #{_forward_impl.5} parent=1 // pred_check_branch
      %30 = sbr.rel (0) target = $region9
    $region8: #{_forward_impl.5} parent=1 // pred_region
      _
    $region9: #{_forward_impl.5} parent=1 // pred_fallthru
      _
    // Predicated region
    $region10: #{_forward_impl.5} parent=1 // pred_check
      _
    $region11: #{_forward_impl.5} parent=1 // pred_check_branch
      %32 = sbr.rel (0) target = $region13
    $region12: #{_forward_impl.5} parent=1 // pred_region
      _
    $region13: #{_forward_impl.5} parent=1 // pred_fallthru
      _
    // Predicated region
    $region14: #{_forward_impl.5} parent=1 // pred_check
      _
    $region15: #{_forward_impl.5} parent=1 // pred_check_branch
      %34 = sbr.rel (0) target = $region17
    $region16: #{_forward_impl.5} parent=1 // pred_region
      _
    $region17: #{_forward_impl.5} parent=1 // pred_fallthru
      _
    // Predicated region
    $region18: #{_forward_impl.5} parent=1 // pred_check
      _
    $region19: #{_forward_impl.5} parent=1 // pred_check_branch
      %36 = sbr.rel (0) target = $region21
    $region20: #{_forward_impl.5} parent=1 // pred_region
      _
    $region21: #{_forward_impl.5} parent=1 // pred_fallthru
      _
    // Predicated region
    $region22: #{_forward_impl.5} parent=1 // pred_check
      _
    $region23: #{_forward_impl.5} parent=1 // pred_check_branch
      %38 = sbr.rel (0) target = $region25
    $region24: #{_forward_impl.5} parent=1 // pred_region
      _
    $region25: #{_forward_impl.5} parent=1 // pred_fallthru
      _
    // Predicated region
    $region26: #{_forward_impl.5} parent=1 // pred_check
      _
    $region27: #{_forward_impl.5} parent=1 // pred_check_branch
      %40 = sbr.rel (0) target = $region29
    $region28: #{_forward_impl.5} parent=1 // pred_region
      _
    $region29: #{_forward_impl.5} parent=1 // pred_fallthru
      _
    // Predicated region
    $region30: #{_forward_impl.5} parent=1 // pred_check
      _
    $region31: #{_forward_impl.5} parent=1 // pred_check_branch
      %42 = sbr.rel (0) target = $region33
    $region32: #{_forward_impl.5} parent=1 // pred_region
      _
    $region33: #{_forward_impl.5} parent=1 // pred_fallthru
      _
    // Predicated region
    $region34: #{_forward_impl.5} parent=1 // pred_check
      _
    $region35: #{_forward_impl.5} parent=1 // pred_check_branch
      %44 = sbr.rel (0) target = $region37
    $region36: #{_forward_impl.5} parent=1 // pred_region
      _
    $region37: #{_forward_impl.5} parent=1 // pred_fallthru
      _
    // Predicated region
    $region38: #{_forward_impl.5} parent=1 // pred_check
      _
    $region39: #{_forward_impl.5} parent=1 // pred_check_branch
      %46 = sbr.rel (0) target = $region41
    $region40: #{_forward_impl.5} parent=1 // pred_region
      _
    $region41: #{_forward_impl.5} parent=1 // pred_fallthru
      _
    // Predicated region
    $region42: #{_forward_impl.5} parent=1 // pred_check
      _
    $region43: #{_forward_impl.5} parent=1 // pred_check_branch
      %48 = sbr.rel (0) target = $region45
    $region44: #{_forward_impl.5} parent=1 // pred_region
      _
    $region45: #{_forward_impl.5} parent=1 // pred_fallthru
      _
    // Predicated region
    $region46: #{_forward_impl.5} parent=1 // pred_check
      _
    $region47: #{_forward_impl.5} parent=1 // pred_check_branch
      %50 = sbr.rel (0) target = $region49
    $region48: #{_forward_impl.5} parent=1 // pred_region
      _
    $region49: #{_forward_impl.5} parent=1 // pred_fallthru
      _
    // Predicated region
    $region50: #{_forward_impl.5} parent=1 // pred_check
      _
    $region51: #{_forward_impl.5} parent=1 // pred_check_branch
      %52 = sbr.rel (0) target = $region53
    $region52: #{_forward_impl.5} parent=1 // pred_region
      _
    $region53: #{_forward_impl.5} parent=1 // pred_fallthru
      _
    // Predicated region
    $region54: #{_forward_impl.5} parent=1 // pred_check
      _
    $region55: #{_forward_impl.5} parent=1 // pred_check_branch
      %54 = sbr.rel (0) target = $region57
    $region56: #{_forward_impl.5} parent=1 // pred_region
      _
    $region57: #{_forward_impl.5} parent=1 // pred_fallthru
      _
    // Predicated region
    $region58: #{_forward_impl.5} parent=1 // pred_check
      _
    $region59: #{_forward_impl.5} parent=1 // pred_check_branch
      %56 = sbr.rel (0) target = $region61
    $region60: #{_forward_impl.5} parent=1 // pred_region
      _
    $region61: #{_forward_impl.5} parent=1 // pred_fallthru
      _
    // Predicated region
    $region62: #{_forward_impl.5} parent=1 // pred_check
      _
    $region63: #{_forward_impl.5} parent=1 // pred_check_branch
      %58 = sbr.rel (0) target = $region65
    $region64: #{_forward_impl.5} parent=1 // pred_region
      _
    $region65: #{_forward_impl.5} parent=1 // pred_fallthru
      _
    // Predicated region
    $region66: #{_forward_impl.5} parent=1 // pred_check
      _
    $region67: #{_forward_impl.5} parent=1 // pred_check_branch
      %60 = sbr.rel (0) target = $region69
    $region68: #{_forward_impl.5} parent=1 // pred_region
      _
    $region69: #{_forward_impl.5} parent=1 // pred_fallthru
      _
    // Predicated region
    $region70: #{_forward_impl.5} parent=1 // pred_check
      _
    $region71: #{_forward_impl.5} parent=1 // pred_check_branch
      %62 = sbr.rel (0) target = $region73
    $region72: #{_forward_impl.5} parent=1 // pred_region
      _
    $region73: #{_forward_impl.5} parent=1 // pred_fallthru
      _
    // Predicated region
    $region74: #{_forward_impl.5} parent=1 // pred_check
      _
    $region75: #{_forward_impl.5} parent=1 // pred_check_branch
      %64 = sbr.rel (0) target = $region77
    $region76: #{_forward_impl.5} parent=1 // pred_region
      _
    $region77: #{_forward_impl.5} parent=1 // pred_fallthru
      _
    // Predicated region
    $region78: #{_forward_impl.5} parent=1 // pred_check
      _
    $region79: #{_forward_impl.5} parent=1 // pred_check_branch
      %66 = sbr.rel (0) target = $region81
    $region80: #{_forward_impl.5} parent=1 // pred_region
      _
    $region81: #{_forward_impl.5} parent=1 // pred_fallthru
      _
    // Predicated region
    $region82: #{_forward_impl.5} parent=1 // pred_check
      _
    $region83: #{_forward_impl.5} parent=1 // pred_check_branch
      %68 = sbr.rel (0) target = $region85
    $region84: #{_forward_impl.5} parent=1 // pred_region
      _
    $region85: #{_forward_impl.5} parent=1 // pred_fallthru
      _
    %v70 = vld [vmem:[%s0] sm:$0xff]
    %v71 = vld [vmem:[%s0 + $0x8] sm:$0x3]
    %v74 = vcombine.high %v70, %v70
    %v76 = vunpack.c.l.s4 1983009808
    %v77 = vunpack.c.0.s8 %v76
    %v78 = vlaneseq
    %v79 = vshrl.u32 %v78, 7
    %v80 = vsub.s32 %v77, %v79
    %v81 = vrot.slane %v70, %v80
    %v83 = vunpack.c.l.s4 1983009808
    %v84 = vunpack.c.0.s8 %v83
    %v85 = vlaneseq
    %v86 = vshrl.u32 %v85, 7
    %v87 = vsub.s32 %v84, %v86
    %v88 = vrot.slane %v74, %v87
    %v89 = vcombine.high %v81, %v81
    %v90 = vcombine.high %v88, %v88
    %v92 = vunpack.c.l.s4 1983009808
    %v93 = vunpack.c.0.s8 %v92
    %v94 = vlaneseq
    %v95 = vshrl.u32 %v94, 7
    %v96 = vsub.s32 %v93, %v95
    %v97 = vrot.slane %v71, %v96
    %v103 = vpack.c.bf16 %v81, %v81
    %v104 = vpack.c.bf16 %v89, %v89
    %v105 = vpack.c.bf16 %v88, %v88
    %v106 = vpack.c.bf16 %v90, %v90
    %v107 = vpack.c.bf16 %v97, %v97
    %v108 = vld [vmem:[%s1] sm:$0xf]
    %v109 = vld [vmem:[%s1 + $0x4] sm:$0xf]
    %v110 = vld [vmem:[%s1 + $0x8] sm:$0xf]
    %v111 = vld [vmem:[%s1 + $0xc] sm:$0xf]
    %v112 = vld [vmem:[%s1 + $0x10] sm:$0xf]
    %v113 = vld [vmem:[%s1 + $0x14] sm:$0xf]
    %v114 = vld [vmem:[%s1 + $0x18] sm:$0xf]
    %v115 = vld [vmem:[%s1 + $0x1c] sm:$0xf]
    %v116 = vld [vmem:[%s1 + $0x20] sm:$0xf]
    %v117 = vld [vmem:[%s1 + $0x24] sm:$0xf]
    %v118 = vld [vmem:[%s1 + $0x28] sm:$0xf]
    %v119 = vld [vmem:[%s1 + $0x2c] sm:$0xf]
    %v120 = vld [vmem:[%s1 + $0x30] sm:$0xf]
    %v121 = vld [vmem:[%s1 + $0x34] sm:$0xf]
    %v122 = vld [vmem:[%s1 + $0x38] sm:$0xf]
    %v123 = vld [vmem:[%s1 + $0x3c] sm:$0xf]
    %v124 = vld [vmem:[%s1 + $0x40] sm:$0xf]
    %v125 = vld [vmem:[%s1 + $0x44] sm:$0xf]
    %v126 = vld [vmem:[%s1 + $0x48] sm:$0xf]
    %v127 = vld [vmem:[%s1 + $0x4c] sm:$0xf]
    %v128 = vld [vmem:[%s1 + $0x50] sm:$0xf]
    %v129 = vld [vmem:[%s1 + $0x54] sm:$0xf]
    %v130 = vld [vmem:[%s1 + $0x58] sm:$0xf]
    %v131 = vld [vmem:[%s1 + $0x5c] sm:$0xf]
    %v132 = vld [vmem:[%s1 + $0x60] sm:$0xf]
    %v133 = vld [vmem:[%s1 + $0x64] sm:$0xf]
    %v134 = vld [vmem:[%s1 + $0x68] sm:$0xf]
    %v135 = vld [vmem:[%s1 + $0x6c] sm:$0xf]
    %v136 = vld [vmem:[%s1 + $0x70] sm:$0xf]
    %v137 = vld [vmem:[%s1 + $0x74] sm:$0xf]
    %v138 = vld [vmem:[%s1 + $0x78] sm:$0xf]
    %v139 = vld [vmem:[%s1 + $0x7c] sm:$0xf]
    %v140 = vld [vmem:[%s1 + $0x80] sm:$0xf]
    %v141 = vld [vmem:[%s1 + $0x84] sm:$0xf]
    %v142 = vld [vmem:[%s1 + $0x88] sm:$0xf]
    %v143 = vld [vmem:[%s1 + $0x8c] sm:$0xf]
    %v144 = vld [vmem:[%s1 + $0x90] sm:$0xf]
    %v145 = vld [vmem:[%s1 + $0x94] sm:$0xf]
    %v146 = vld [vmem:[%s1 + $0x98] sm:$0xf]
    %v147 = vld [vmem:[%s1 + $0x9c] sm:$0xf]
    %v148 = vld [vmem:[%s1 + $0xa0] sm:$0xf]
    %v149 = vld [vmem:[%s1 + $0xa4] sm:$0xf]
    %v150 = vld [vmem:[%s1 + $0xa8] sm:$0xf]
    %v151 = vld [vmem:[%s1 + $0xac] sm:$0xf]
    %v152 = vld [vmem:[%s1 + $0xb0] sm:$0xf]
    %v153 = vld [vmem:[%s1 + $0xb4] sm:$0xf]
    %v154 = vld [vmem:[%s1 + $0xb8] sm:$0xf]
    %v155 = vld [vmem:[%s1 + $0xbc] sm:$0xf]
    %v156 = vld [vmem:[%s1 + $0xc0] sm:$0xf]
    %v157 = vld [vmem:[%s1 + $0xc4] sm:$0xf]
    %v158 = vld [vmem:[%s1 + $0xc8] sm:$0xf]
    %v159 = vld [vmem:[%s1 + $0xcc] sm:$0xf]
    %v160 = vld [vmem:[%s1 + $0xd0] sm:$0xf]
    %v161 = vld [vmem:[%s1 + $0xd4] sm:$0xf]
    %v162 = vld [vmem:[%s1 + $0xd8] sm:$0xf]
    %v163 = vld [vmem:[%s1 + $0xdc] sm:$0xf]
    %v164 = vld [vmem:[%s1 + $0xe0] sm:$0xf]
    %v165 = vld [vmem:[%s1 + $0xe4] sm:$0xf]
    %v166 = vld [vmem:[%s1 + $0xe8] sm:$0xf]
    %v167 = vld [vmem:[%s1 + $0xec] sm:$0xf]
    %v168 = vld [vmem:[%s1 + $0xf0] sm:$0xf]
    %v169 = vld [vmem:[%s1 + $0xf4] sm:$0xf]
    %v170 = vld [vmem:[%s1 + $0xf8] sm:$0xf]
    %v171 = vld [vmem:[%s1 + $0xfc] sm:$0xf]
    %v172 = vld [vmem:[%s1 + $0x100] sm:$0xf]
    %v173 = vld [vmem:[%s1 + $0x104] sm:$0xf]
    %v174 = vld [vmem:[%s1 + $0x108] sm:$0xf]
    %v175 = vld [vmem:[%s1 + $0x10c] sm:$0xf]
    %v176 = vld [vmem:[%s1 + $0x110] sm:$0xf]
    %v177 = vld [vmem:[%s1 + $0x114] sm:$0xf]
    %v178 = vld [vmem:[%s1 + $0x118] sm:$0xf]
    %v179 = vld [vmem:[%s1 + $0x11c] sm:$0xf]
    %v180 = vld [vmem:[%s2] sm:$0x1]
    %v182 = vlaneseq
    %v183 = vshrl.u32 %v182, 7
    %v184 = vsub.s32 0, %v183
    %v185 = vrot.slane %v180, %v184
    %v259 = vunpack.c.l.b16 %v108
    %v260 = vunpack.c.l.b16 %v109
    %v261 = vunpack.c.l.b16 %v110
    %v262 = vunpack.c.l.b16 %v111
    %v263 = vunpack.c.l.b16 %v112
    %v264 = vunpack.c.l.b16 %v113
    %v265 = vunpack.c.l.b16 %v114
    %v266 = vunpack.c.l.b16 %v115
    %v267 = vunpack.c.l.b16 %v116
    %v268 = vunpack.c.l.b16 %v117
    %v269 = vunpack.c.l.b16 %v118
    %v270 = vunpack.c.l.b16 %v119
    %v271 = vunpack.c.l.b16 %v120
    %v272 = vunpack.c.l.b16 %v121
    %v273 = vunpack.c.l.b16 %v122
    %v274 = vunpack.c.l.b16 %v123
    %v275 = vunpack.c.l.b16 %v124
    %v276 = vunpack.c.l.b16 %v125
    %v277 = vunpack.c.l.b16 %v126
    %v278 = vunpack.c.l.b16 %v127
    %v279 = vunpack.c.l.b16 %v128
    %v280 = vunpack.c.l.b16 %v129
    %v281 = vunpack.c.l.b16 %v130
    %v282 = vunpack.c.l.b16 %v131
    %v283 = vunpack.c.l.b16 %v132
    %v284 = vunpack.c.l.b16 %v133
    %v285 = vunpack.c.l.b16 %v134
    %v286 = vunpack.c.l.b16 %v135
    %v287 = vunpack.c.l.b16 %v136
    %v288 = vunpack.c.l.b16 %v137
    %v289 = vunpack.c.l.b16 %v138
    %v290 = vunpack.c.l.b16 %v139
    %v291 = vunpack.c.l.b16 %v140
    %v292 = vunpack.c.l.b16 %v141
    %v293 = vunpack.c.l.b16 %v142
    %v294 = vunpack.c.l.b16 %v143
    %v295 = vunpack.c.l.b16 %v144
    %v296 = vunpack.c.l.b16 %v145
    %v297 = vunpack.c.l.b16 %v146
    %v298 = vunpack.c.l.b16 %v147
    %v299 = vunpack.c.l.b16 %v148
    %v300 = vunpack.c.l.b16 %v149
    %v301 = vunpack.c.l.b16 %v150
    %v302 = vunpack.c.l.b16 %v151
    %v303 = vunpack.c.l.b16 %v152
    %v304 = vunpack.c.l.b16 %v153
    %v305 = vunpack.c.l.b16 %v154
    %v306 = vunpack.c.l.b16 %v155
    %v307 = vunpack.c.l.b16 %v156
    %v308 = vunpack.c.l.b16 %v157
    %v309 = vunpack.c.l.b16 %v158
    %v310 = vunpack.c.l.b16 %v159
    %v311 = vunpack.c.l.b16 %v160
    %v312 = vunpack.c.l.b16 %v161
    %v313 = vunpack.c.l.b16 %v162
    %v314 = vunpack.c.l.b16 %v163
    %v315 = vunpack.c.l.b16 %v164
    %v316 = vunpack.c.l.b16 %v165
    %v317 = vunpack.c.l.b16 %v166
    %v318 = vunpack.c.l.b16 %v167
    %v319 = vunpack.c.l.b16 %v168
    %v320 = vunpack.c.l.b16 %v169
    %v321 = vunpack.c.l.b16 %v170
    %v322 = vunpack.c.l.b16 %v171
    %v323 = vunpack.c.l.b16 %v172
    %v324 = vunpack.c.l.b16 %v173
    %v325 = vunpack.c.l.b16 %v174
    %v326 = vunpack.c.l.b16 %v175
    %v327 = vunpack.c.l.b16 %v176
    %v328 = vunpack.c.l.b16 %v177
    %v329 = vunpack.c.l.b16 %v178
    %v330 = vunpack.c.l.b16 %v179
    %v331 = vpack.c.b16 %v260, %v259
    %v332 = vpack.c.b16 %v262, %v261
    %v333 = vpack.c.b16 %v264, %v263
    %v334 = vpack.c.b16 %v266, %v265
    %v335 = vpack.c.b16 %v268, %v267
    %v336 = vpack.c.b16 %v270, %v269
    %v337 = vpack.c.b16 %v272, %v271
    %v338 = vpack.c.b16 %v274, %v273
    %v339 = vpack.c.b16 %v276, %v275
    %v340 = vpack.c.b16 %v278, %v277
    %v341 = vpack.c.b16 %v280, %v279
    %v342 = vpack.c.b16 %v282, %v281
    %v343 = vpack.c.b16 %v284, %v283
    %v344 = vpack.c.b16 %v286, %v285
    %v345 = vpack.c.b16 %v288, %v287
    %v346 = vpack.c.b16 %v290, %v289
    %v347 = vpack.c.b16 %v292, %v291
    %v348 = vpack.c.b16 %v294, %v293
    %v349 = vpack.c.b16 %v296, %v295
    %v350 = vpack.c.b16 %v298, %v297
    %v351 = vpack.c.b16 %v300, %v299
    %v352 = vpack.c.b16 %v302, %v301
    %v353 = vpack.c.b16 %v304, %v303
    %v354 = vpack.c.b16 %v306, %v305
    %v355 = vpack.c.b16 %v308, %v307
    %v356 = vpack.c.b16 %v310, %v309
    %v357 = vpack.c.b16 %v312, %v311
    %v358 = vpack.c.b16 %v314, %v313
    %v359 = vpack.c.b16 %v316, %v315
    %v360 = vpack.c.b16 %v318, %v317
    %v361 = vpack.c.b16 %v320, %v319
    %v362 = vpack.c.b16 %v322, %v321
    %v363 = vpack.c.b16 %v324, %v323
    %v364 = vpack.c.b16 %v326, %v325
    %v365 = vpack.c.b16 %v328, %v327
    %v366 = vpack.c.b16 %v330, %v329
    %vm403 = vcmask 523264
    %v405 = vsel %vm403, %v107, 0
    %407 = vmatprep.subr.bf16.mxu0 0
    %408 = vmatpush1.bf16.msra.mxu0 %v338
    %409 = vmatprep.subr.bf16.mxu0 0
    %410 = vmatpush1.bf16.msra.mxu0 %v337
    %411 = vmatprep.subr.bf16.mxu0 0
    %412 = vmatpush1.bf16.msra.mxu0 %v336
    %413 = vmatprep.subr.bf16.mxu0 0
    %414 = vmatpush1.bf16.msra.mxu0 %v335
    %415 = vmatprep.subr.bf16.mxu0 0
    %416 = vmatpush1.bf16.msra.mxu0 %v334
    %417 = vmatprep.subr.bf16.mxu0 0
    %418 = vmatpush1.bf16.msra.mxu0 %v333
    %419 = vmatprep.subr.bf16.mxu0 0
    %420 = vmatpush1.bf16.msra.mxu0 %v332
    %421 = vmatprep.subr.bf16.mxu0 0
    %422 = vmatpush1.bf16.msra.mxu0 %v331
    %423 = vmatprep.subr.bf16.mxu0 0
    %424 = vmatpush2.bf16.msra.mxu0 %v346
    %425 = vmatprep.subr.bf16.mxu0 0
    %426 = vmatpush2.bf16.msra.mxu0 %v345
    %427 = vmatprep.subr.bf16.mxu0 0
    %428 = vmatpush2.bf16.msra.mxu0 %v344
    %429 = vmatprep.subr.bf16.mxu0 0
    %430 = vmatpush2.bf16.msra.mxu0 %v343
    %431 = vmatprep.subr.bf16.mxu0 0
    %432 = vmatpush2.bf16.msra.mxu0 %v342
    %433 = vmatprep.subr.bf16.mxu0 0
    %434 = vmatpush2.bf16.msra.mxu0 %v341
    %435 = vmatprep.subr.bf16.mxu0 0
    %436 = vmatpush2.bf16.msra.mxu0 %v340
    %437 = vmatprep.subr.bf16.mxu0 0
    %438 = vmatpush2.bf16.msra.mxu0 %v339
    %439 = vmatprep.mubr.bf16.mxu0 %v104
    %440 = vmatmul.mubr.bf16.gmra.mxu0 %v103
    %v441 = vpop.f32.mrf.mxu0
    %v442 = vadd.f32 %v185, %v441
    %v443 = vpop.f32.mrf.mxu0
    %v444 = vpop.f32.mrf.mxu0
    %v445 = vpop.f32.mrf.mxu0
    %446 = vdwg.mxu0
    %447 = vmatprep.subr.bf16.mxu0 0
    %448 = vmatpush1.bf16.msra.mxu0 %v354
    %449 = vmatprep.subr.bf16.mxu0 0
    %450 = vmatpush1.bf16.msra.mxu0 %v353
    %451 = vmatprep.subr.bf16.mxu0 0
    %452 = vmatpush1.bf16.msra.mxu0 %v352
    %453 = vmatprep.subr.bf16.mxu0 0
    %454 = vmatpush1.bf16.msra.mxu0 %v351
    %455 = vmatprep.subr.bf16.mxu0 0
    %456 = vmatpush1.bf16.msra.mxu0 %v350
    %457 = vmatprep.subr.bf16.mxu0 0
    %458 = vmatpush1.bf16.msra.mxu0 %v349
    %459 = vmatprep.subr.bf16.mxu0 0
    %460 = vmatpush1.bf16.msra.mxu0 %v348
    %461 = vmatprep.subr.bf16.mxu0 0
    %462 = vmatpush1.bf16.msra.mxu0 %v347
    %463 = vmatprep.subr.bf16.mxu0 0
    %464 = vmatpush2.bf16.msra.mxu0 %v362
    %465 = vmatprep.subr.bf16.mxu0 0
    %466 = vmatpush2.bf16.msra.mxu0 %v361
    %467 = vmatprep.subr.bf16.mxu0 0
    %468 = vmatpush2.bf16.msra.mxu0 %v360
    %469 = vmatprep.subr.bf16.mxu0 0
    %470 = vmatpush2.bf16.msra.mxu0 %v359
    %471 = vmatprep.subr.bf16.mxu0 0
    %472 = vmatpush2.bf16.msra.mxu0 %v358
    %473 = vmatprep.subr.bf16.mxu0 0
    %474 = vmatpush2.bf16.msra.mxu0 %v357
    %475 = vmatprep.subr.bf16.mxu0 0
    %476 = vmatpush2.bf16.msra.mxu0 %v356
    %477 = vmatprep.subr.bf16.mxu0 0
    %478 = vmatpush2.bf16.msra.mxu0 %v355
    %479 = vmatprep.mubr.bf16.mxu0 %v106
    %480 = vmatmul.mubr.bf16.gmra.mxu0 %v105
    %v481 = vpop.f32.mrf.mxu0
    %v482 = vadd.f32 %v442, %v481
    %v483 = vpop.f32.mrf.mxu0
    %v484 = vpop.f32.mrf.mxu0
    %v485 = vpop.f32.mrf.mxu0
    %486 = vdwg.mxu0
    %487 = vmatprep.subr.bf16.mxu0 0
    %488 = vmatpush1.bf16.msra.mxu0 0
    %489 = vmatprep.subr.bf16.mxu0 0
    %490 = vmatpush1.bf16.msra.mxu0 0
    %491 = vmatprep.subr.bf16.mxu0 0
    %492 = vmatpush1.bf16.msra.mxu0 0
    %493 = vmatprep.subr.bf16.mxu0 0
    %494 = vmatpush1.bf16.msra.mxu0 0
    %495 = vmatprep.subr.bf16.mxu0 0
    %496 = vmatpush1.bf16.msra.mxu0 %v366
    %497 = vmatprep.subr.bf16.mxu0 0
    %498 = vmatpush1.bf16.msra.mxu0 %v365
    %499 = vmatprep.subr.bf16.mxu0 0
    %500 = vmatpush1.bf16.msra.mxu0 %v364
    %501 = vmatprep.subr.bf16.mxu0 0
    %502 = vmatpush1.bf16.msra.mxu0 %v363
    %503 = vmatprep.subr.bf16.mxu0 0
    %504 = vmatpush2.bf16.msra.mxu0 0
    %505 = vmatprep.subr.bf16.mxu0 0
    %506 = vmatpush2.bf16.msra.mxu0 0
    %507 = vmatprep.subr.bf16.mxu0 0
    %508 = vmatpush2.bf16.msra.mxu0 0
    %509 = vmatprep.subr.bf16.mxu0 0
    %510 = vmatpush2.bf16.msra.mxu0 0
    %511 = vmatprep.subr.bf16.mxu0 0
    %512 = vmatpush2.bf16.msra.mxu0 0
    %513 = vmatprep.subr.bf16.mxu0 0
    %514 = vmatpush2.bf16.msra.mxu0 0
    %515 = vmatprep.subr.bf16.mxu0 0
    %516 = vmatpush2.bf16.msra.mxu0 0
    %517 = vmatprep.subr.bf16.mxu0 0
    %518 = vmatpush2.bf16.msra.mxu0 0
    %519 = vmatprep.mubr.bf16.mxu0 0
    %520 = vmatmul.mubr.bf16.gmra.mxu0 %v405
    %v521 = vpop.f32.mrf.mxu0
    %v522 = vadd.f32 %v482, %v521
    %v523 = vpop.f32.mrf.mxu0
    %v524 = vpop.f32.mrf.mxu0
    %v525 = vpop.f32.mrf.mxu0
    %526 = vdwg.mxu0
    %v527 = vld [vmem:[%s3] sm:$0x3]
    %529 = vset.pattern.permute.xlu0 0
    %530 = vperm.xlu0 %529, %v527
    %v531 = vpop.permute.xlu0 %530
    %v533 = vmul.f32 %v522, %v531
    %v534 = vld [vmem:[%s4] sm:$0x3]
    %v535 = vlaneseq
    %v536 = vshrl.u32 %v535, 7
    %v537 = vsub.s32 0, %v536
    %v538 = vrot.slane %v534, %v537
    %v539 = vlaneseq
    %v540 = vshrl.u32 %v539, 7
    %v541 = vsub.s32 1, %v540
    %v542 = vrot.slane %v534, %v541
    %v543 = vadd.f32 %v533, %v542
    %v545 = vrot.slane %v543, 6
    %vm547 = vcmask 1041408
    %v548 = vsel %vm547, %v538, %v545
    %v549 = vpack.c.bf16 %v548, %v548
    %v550 = vld [vmem:[%s5] sm:$0xf]
    %v551 = vld [vmem:[%s5 + $0x4] sm:$0xf]
    %v552 = vld [vmem:[%s5 + $0x8] sm:$0xf]
    %v553 = vld [vmem:[%s5 + $0xc] sm:$0xf]
    %v554 = vld [vmem:[%s6] sm:$0x1]
    %v556 = vlaneseq
    %v557 = vshrl.u32 %v556, 7
    %v558 = vsub.s32 0, %v557
    %v559 = vrot.slane %v554, %v558
    %v565 = vunpack.c.l.b16 %v550
    %v566 = vunpack.c.l.b16 %v551
    %v567 = vunpack.c.l.b16 %v552
    %v568 = vunpack.c.l.b16 %v553
    %v569 = vpack.c.b16 %v566, %v565
    %v570 = vpack.c.b16 %v568, %v567
    %vm573 = vcmask 261120
    %v575 = vsel %vm573, %v549, 0
    %577 = vmatprep.subr.bf16.mxu0 0
    %578 = vmatpush1.bf16.msra.mxu0 0
    %579 = vmatprep.subr.bf16.mxu0 0
    %580 = vmatpush1.bf16.msra.mxu0 0
    %581 = vmatprep.subr.bf16.mxu0 0
    %582 = vmatpush1.bf16.msra.mxu0 0
    %583 = vmatprep.subr.bf16.mxu0 0
    %584 = vmatpush1.bf16.msra.mxu0 0
    %585 = vmatprep.subr.bf16.mxu0 0
    %586 = vmatpush1.bf16.msra.mxu0 0
    %587 = vmatprep.subr.bf16.mxu0 0
    %588 = vmatpush1.bf16.msra.mxu0 0
    %589 = vmatprep.subr.bf16.mxu0 0
    %590 = vmatpush1.bf16.msra.mxu0 %v570
    %591 = vmatprep.subr.bf16.mxu0 0
    %592 = vmatpush1.bf16.msra.mxu0 %v569
    %593 = vmatprep.subr.bf16.mxu0 0
    %594 = vmatpush2.bf16.msra.mxu0 0
    %595 = vmatprep.subr.bf16.mxu0 0
    %596 = vmatpush2.bf16.msra.mxu0 0
    %597 = vmatprep.subr.bf16.mxu0 0
    %598 = vmatpush2.bf16.msra.mxu0 0
    %599 = vmatprep.subr.bf16.mxu0 0
    %600 = vmatpush2.bf16.msra.mxu0 0
    %601 = vmatprep.subr.bf16.mxu0 0
    %602 = vmatpush2.bf16.msra.mxu0 0
    %603 = vmatprep.subr.bf16.mxu0 0
    %604 = vmatpush2.bf16.msra.mxu0 0
    %605 = vmatprep.subr.bf16.mxu0 0
    %606 = vmatpush2.bf16.msra.mxu0 0
    %607 = vmatprep.subr.bf16.mxu0 0
    %608 = vmatpush2.bf16.msra.mxu0 0
    %609 = vmatprep.mubr.bf16.mxu0 0
    %610 = vmatmul.mubr.bf16.gmra.mxu0 %v575
    %v611 = vpop.f32.mrf.mxu0
    %v612 = vadd.f32 %v559, %v611
    %v613 = vpop.f32.mrf.mxu0
    %v614 = vpop.f32.mrf.mxu0
    %v615 = vpop.f32.mrf.mxu0
    %616 = vdwg.mxu0
    %v617 = vpack.c.bf16 %v612, %v612
    %619 = vrot.lane.b32.xlu0 %v617, 120
    %v620 = vpop.permute.xlu0 %619
    %621 = vrot.lane.b32.xlu0 %v617, 112
    %v622 = vpop.permute.xlu0 %621
    %623 = vrot.lane.b32.xlu0 %v617, 104
    %v624 = vpop.permute.xlu0 %623
    %v625 = vrot.slane %v617, 1
    %626 = vrot.lane.b32.xlu0 %v625, 120
    %v627 = vpop.permute.xlu0 %626
    %628 = vrot.lane.b32.xlu0 %v625, 112
    %v629 = vpop.permute.xlu0 %628
    %630 = vrot.lane.b32.xlu0 %v625, 104
    %v631 = vpop.permute.xlu0 %630
    %632 = vrot.lane.b32.xlu0 %v617, 96
    %v633 = vpop.permute.xlu0 %632
    %vm634 = vcmask 64512
    %v636 = vsel %vm634, %v617, 0
    %v639 = vsel %vm634, %v633, 0
    %641 = vmatprep.subr.bf16.mxu0 0
    %642 = vmatpush1.bf16.xpose.msra.mxu0 0
    %643 = vmatprep.subr.bf16.mxu0 0
    %644 = vmatpush1.bf16.xpose.msra.mxu0 0
    %645 = vmatprep.subr.bf16.mxu0 0
    %646 = vmatpush1.bf16.xpose.msra.mxu0 0
    %647 = vmatprep.subr.bf16.mxu0 0
    %648 = vmatpush1.bf16.xpose.msra.mxu0 0
    %649 = vmatprep.subr.bf16.mxu0 0
    %650 = vmatpush1.bf16.xpose.msra.mxu0 0
    %651 = vmatprep.subr.bf16.mxu0 0
    %652 = vmatpush1.bf16.xpose.msra.mxu0 0
    %653 = vmatprep.subr.bf16.mxu0 0
    %654 = vmatpush1.bf16.xpose.msra.mxu0 0
    %655 = vmatprep.subr.bf16.mxu0 0
    %656 = vmatpush1.bf16.xpose.msra.mxu0 %v639
    %657 = vmatprep.subr.bf16.mxu0 0
    %658 = vmatpush2.bf16.xpose.msra.mxu0 0
    %659 = vmatprep.subr.bf16.mxu0 0
    %660 = vmatpush2.bf16.xpose.msra.mxu0 0
    %661 = vmatprep.subr.bf16.mxu0 0
    %662 = vmatpush2.bf16.xpose.msra.mxu0 0
    %663 = vmatprep.subr.bf16.mxu0 0
    %664 = vmatpush2.bf16.xpose.msra.mxu0 0
    %665 = vmatprep.subr.bf16.mxu0 0
    %666 = vmatpush2.bf16.xpose.msra.mxu0 0
    %667 = vmatprep.subr.bf16.mxu0 0
    %668 = vmatpush2.bf16.xpose.msra.mxu0 0
    %669 = vmatprep.subr.bf16.mxu0 0
    %670 = vmatpush2.bf16.xpose.msra.mxu0 0
    %671 = vmatprep.subr.bf16.mxu0 0
    %672 = vmatpush2.bf16.xpose.msra.mxu0 0
    %673 = vmatprep.mubr.bf16.mxu0 0
    %674 = vmatmul.mubr.bf16.gmra.mxu0 %v636
    %v675 = vpop.f32.mrf.mxu0
    %v676 = vadd.f32 0.0, %v675
    %v677 = vpop.f32.mrf.mxu0
    %v678 = vpop.f32.mrf.mxu0
    %v679 = vpop.f32.mrf.mxu0
    %680 = vdwg.mxu0
    %681 = vrot.lane.b32.xlu0 %v620, 96
    %v682 = vpop.permute.xlu0 %681
    %v684 = vsel %vm634, %v620, 0
    %v687 = vsel %vm634, %v682, 0
    %689 = vmatprep.subr.bf16.mxu0 0
    %690 = vmatpush1.bf16.xpose.msra.mxu0 0
    %691 = vmatprep.subr.bf16.mxu0 0
    %692 = vmatpush1.bf16.xpose.msra.mxu0 0
    %693 = vmatprep.subr.bf16.mxu0 0
    %694 = vmatpush1.bf16.xpose.msra.mxu0 0
    %695 = vmatprep.subr.bf16.mxu0 0
    %696 = vmatpush1.bf16.xpose.msra.mxu0 0
    %697 = vmatprep.subr.bf16.mxu0 0
    %698 = vmatpush1.bf16.xpose.msra.mxu0 0
    %699 = vmatprep.subr.bf16.mxu0 0
    %700 = vmatpush1.bf16.xpose.msra.mxu0 0
    %701 = vmatprep.subr.bf16.mxu0 0
    %702 = vmatpush1.bf16.xpose.msra.mxu0 0
    %703 = vmatprep.subr.bf16.mxu0 0
    %704 = vmatpush1.bf16.xpose.msra.mxu0 %v687
    %705 = vmatprep.subr.bf16.mxu0 0
    %706 = vmatpush2.bf16.xpose.msra.mxu0 0
    %707 = vmatprep.subr.bf16.mxu0 0
    %708 = vmatpush2.bf16.xpose.msra.mxu0 0
    %709 = vmatprep.subr.bf16.mxu0 0
    %710 = vmatpush2.bf16.xpose.msra.mxu0 0
    %711 = vmatprep.subr.bf16.mxu0 0
    %712 = vmatpush2.bf16.xpose.msra.mxu0 0
    %713 = vmatprep.subr.bf16.mxu0 0
    %714 = vmatpush2.bf16.xpose.msra.mxu0 0
    %715 = vmatprep.subr.bf16.mxu0 0
    %716 = vmatpush2.bf16.xpose.msra.mxu0 0
    %717 = vmatprep.subr.bf16.mxu0 0
    %718 = vmatpush2.bf16.xpose.msra.mxu0 0
    %719 = vmatprep.subr.bf16.mxu0 0
    %720 = vmatpush2.bf16.xpose.msra.mxu0 0
    %721 = vmatprep.mubr.bf16.mxu0 0
    %722 = vmatmul.mubr.bf16.gmra.mxu0 %v684
    %v723 = vpop.f32.mrf.mxu0
    %v724 = vadd.f32 0.0, %v723
    %v725 = vpop.f32.mrf.mxu0
    %v726 = vpop.f32.mrf.mxu0
    %v727 = vpop.f32.mrf.mxu0
    %728 = vdwg.mxu0
    %729 = vrot.lane.b32.xlu0 %v622, 96
    %v730 = vpop.permute.xlu0 %729
    %v732 = vsel %vm634, %v622, 0
    %v735 = vsel %vm634, %v730, 0
    %737 = vmatprep.subr.bf16.mxu0 0
    %738 = vmatpush1.bf16.xpose.msra.mxu0 0
    %739 = vmatprep.subr.bf16.mxu0 0
    %740 = vmatpush1.bf16.xpose.msra.mxu0 0
    %741 = vmatprep.subr.bf16.mxu0 0
    %742 = vmatpush1.bf16.xpose.msra.mxu0 0
    %743 = vmatprep.subr.bf16.mxu0 0
    %744 = vmatpush1.bf16.xpose.msra.mxu0 0
    %745 = vmatprep.subr.bf16.mxu0 0
    %746 = vmatpush1.bf16.xpose.msra.mxu0 0
    %747 = vmatprep.subr.bf16.mxu0 0
    %748 = vmatpush1.bf16.xpose.msra.mxu0 0
    %749 = vmatprep.subr.bf16.mxu0 0
    %750 = vmatpush1.bf16.xpose.msra.mxu0 0
    %751 = vmatprep.subr.bf16.mxu0 0
    %752 = vmatpush1.bf16.xpose.msra.mxu0 %v735
    %753 = vmatprep.subr.bf16.mxu0 0
    %754 = vmatpush2.bf16.xpose.msra.mxu0 0
    %755 = vmatprep.subr.bf16.mxu0 0
    %756 = vmatpush2.bf16.xpose.msra.mxu0 0
    %757 = vmatprep.subr.bf16.mxu0 0
    %758 = vmatpush2.bf16.xpose.msra.mxu0 0
    %759 = vmatprep.subr.bf16.mxu0 0
    %760 = vmatpush2.bf16.xpose.msra.mxu0 0
    %761 = vmatprep.subr.bf16.mxu0 0
    %762 = vmatpush2.bf16.xpose.msra.mxu0 0
    %763 = vmatprep.subr.bf16.mxu0 0
    %764 = vmatpush2.bf16.xpose.msra.mxu0 0
    %765 = vmatprep.subr.bf16.mxu0 0
    %766 = vmatpush2.bf16.xpose.msra.mxu0 0
    %767 = vmatprep.subr.bf16.mxu0 0
    %768 = vmatpush2.bf16.xpose.msra.mxu0 0
    %769 = vmatprep.mubr.bf16.mxu0 0
    %770 = vmatmul.mubr.bf16.gmra.mxu0 %v732
    %v771 = vpop.f32.mrf.mxu0
    %v772 = vadd.f32 0.0, %v771
    %v773 = vpop.f32.mrf.mxu0
    %v774 = vpop.f32.mrf.mxu0
    %v775 = vpop.f32.mrf.mxu0
    %776 = vdwg.mxu0
    %777 = vrot.lane.b32.xlu0 %v624, 96
    %v778 = vpop.permute.xlu0 %777
    %v780 = vsel %vm634, %v624, 0
    %v783 = vsel %vm634, %v778, 0
    %785 = vmatprep.subr.bf16.mxu0 0
    %786 = vmatpush1.bf16.xpose.msra.mxu0 0
    %787 = vmatprep.subr.bf16.mxu0 0
    %788 = vmatpush1.bf16.xpose.msra.mxu0 0
    %789 = vmatprep.subr.bf16.mxu0 0
    %790 = vmatpush1.bf16.xpose.msra.mxu0 0
    %791 = vmatprep.subr.bf16.mxu0 0
    %792 = vmatpush1.bf16.xpose.msra.mxu0 0
    %793 = vmatprep.subr.bf16.mxu0 0
    %794 = vmatpush1.bf16.xpose.msra.mxu0 0
    %795 = vmatprep.subr.bf16.mxu0 0
    %796 = vmatpush1.bf16.xpose.msra.mxu0 0
    %797 = vmatprep.subr.bf16.mxu0 0
    %798 = vmatpush1.bf16.xpose.msra.mxu0 0
    %799 = vmatprep.subr.bf16.mxu0 0
    %800 = vmatpush1.bf16.xpose.msra.mxu0 %v783
    %801 = vmatprep.subr.bf16.mxu0 0
    %802 = vmatpush2.bf16.xpose.msra.mxu0 0
    %803 = vmatprep.subr.bf16.mxu0 0
    %804 = vmatpush2.bf16.xpose.msra.mxu0 0
    %805 = vmatprep.subr.bf16.mxu0 0
    %806 = vmatpush2.bf16.xpose.msra.mxu0 0
    %807 = vmatprep.subr.bf16.mxu0 0
    %808 = vmatpush2.bf16.xpose.msra.mxu0 0
    %809 = vmatprep.subr.bf16.mxu0 0
    %810 = vmatpush2.bf16.xpose.msra.mxu0 0
    %811 = vmatprep.subr.bf16.mxu0 0
    %812 = vmatpush2.bf16.xpose.msra.mxu0 0
    %813 = vmatprep.subr.bf16.mxu0 0
    %814 = vmatpush2.bf16.xpose.msra.mxu0 0
    %815 = vmatprep.subr.bf16.mxu0 0
    %816 = vmatpush2.bf16.xpose.msra.mxu0 0
    %817 = vmatprep.mubr.bf16.mxu0 0
    %818 = vmatmul.mubr.bf16.gmra.mxu0 %v780
    %v819 = vpop.f32.mrf.mxu0
    %v820 = vadd.f32 0.0, %v819
    %v821 = vpop.f32.mrf.mxu0
    %v822 = vpop.f32.mrf.mxu0
    %v823 = vpop.f32.mrf.mxu0
    %824 = vdwg.mxu0
    %825 = vrot.lane.b32.xlu0 %v625, 96
    %v826 = vpop.permute.xlu0 %825
    %v828 = vsel %vm634, %v625, 0
    %v831 = vsel %vm634, %v826, 0
    %833 = vmatprep.subr.bf16.mxu0 0
    %834 = vmatpush1.bf16.xpose.msra.mxu0 0
    %835 = vmatprep.subr.bf16.mxu0 0
    %836 = vmatpush1.bf16.xpose.msra.mxu0 0
    %837 = vmatprep.subr.bf16.mxu0 0
    %838 = vmatpush1.bf16.xpose.msra.mxu0 0
    %839 = vmatprep.subr.bf16.mxu0 0
    %840 = vmatpush1.bf16.xpose.msra.mxu0 0
    %841 = vmatprep.subr.bf16.mxu0 0
    %842 = vmatpush1.bf16.xpose.msra.mxu0 0
    %843 = vmatprep.subr.bf16.mxu0 0
    %844 = vmatpush1.bf16.xpose.msra.mxu0 0
    %845 = vmatprep.subr.bf16.mxu0 0
    %846 = vmatpush1.bf16.xpose.msra.mxu0 0
    %847 = vmatprep.subr.bf16.mxu0 0
    %848 = vmatpush1.bf16.xpose.msra.mxu0 %v831
    %849 = vmatprep.subr.bf16.mxu0 0
    %850 = vmatpush2.bf16.xpose.msra.mxu0 0
    %851 = vmatprep.subr.bf16.mxu0 0
    %852 = vmatpush2.bf16.xpose.msra.mxu0 0
    %853 = vmatprep.subr.bf16.mxu0 0
    %854 = vmatpush2.bf16.xpose.msra.mxu0 0
    %855 = vmatprep.subr.bf16.mxu0 0
    %856 = vmatpush2.bf16.xpose.msra.mxu0 0
    %857 = vmatprep.subr.bf16.mxu0 0
    %858 = vmatpush2.bf16.xpose.msra.mxu0 0
    %859 = vmatprep.subr.bf16.mxu0 0
    %860 = vmatpush2.bf16.xpose.msra.mxu0 0
    %861 = vmatprep.subr.bf16.mxu0 0
    %862 = vmatpush2.bf16.xpose.msra.mxu0 0
    %863 = vmatprep.subr.bf16.mxu0 0
    %864 = vmatpush2.bf16.xpose.msra.mxu0 0
    %865 = vmatprep.mubr.bf16.mxu0 0
    %866 = vmatmul.mubr.bf16.gmra.mxu0 %v828
    %v867 = vpop.f32.mrf.mxu0
    %v868 = vadd.f32 0.0, %v867
    %v869 = vpop.f32.mrf.mxu0
    %v870 = vpop.f32.mrf.mxu0
    %v871 = vpop.f32.mrf.mxu0
    %872 = vdwg.mxu0
    %873 = vrot.lane.b32.xlu0 %v627, 96
    %v874 = vpop.permute.xlu0 %873
    %v876 = vsel %vm634, %v627, 0
    %v879 = vsel %vm634, %v874, 0
    %881 = vmatprep.subr.bf16.mxu0 0
    %882 = vmatpush1.bf16.xpose.msra.mxu0 0
    %883 = vmatprep.subr.bf16.mxu0 0
    %884 = vmatpush1.bf16.xpose.msra.mxu0 0
    %885 = vmatprep.subr.bf16.mxu0 0
    %886 = vmatpush1.bf16.xpose.msra.mxu0 0
    %887 = vmatprep.subr.bf16.mxu0 0
    %888 = vmatpush1.bf16.xpose.msra.mxu0 0
    %889 = vmatprep.subr.bf16.mxu0 0
    %890 = vmatpush1.bf16.xpose.msra.mxu0 0
    %891 = vmatprep.subr.bf16.mxu0 0
    %892 = vmatpush1.bf16.xpose.msra.mxu0 0
    %893 = vmatprep.subr.bf16.mxu0 0
    %894 = vmatpush1.bf16.xpose.msra.mxu0 0
    %895 = vmatprep.subr.bf16.mxu0 0
    %896 = vmatpush1.bf16.xpose.msra.mxu0 %v879
    %897 = vmatprep.subr.bf16.mxu0 0
    %898 = vmatpush2.bf16.xpose.msra.mxu0 0
    %899 = vmatprep.subr.bf16.mxu0 0
    %900 = vmatpush2.bf16.xpose.msra.mxu0 0
    %901 = vmatprep.subr.bf16.mxu0 0
    %902 = vmatpush2.bf16.xpose.msra.mxu0 0
    %903 = vmatprep.subr.bf16.mxu0 0
    %904 = vmatpush2.bf16.xpose.msra.mxu0 0
    %905 = vmatprep.subr.bf16.mxu0 0
    %906 = vmatpush2.bf16.xpose.msra.mxu0 0
    %907 = vmatprep.subr.bf16.mxu0 0
    %908 = vmatpush2.bf16.xpose.msra.mxu0 0
    %909 = vmatprep.subr.bf16.mxu0 0
    %910 = vmatpush2.bf16.xpose.msra.mxu0 0
    %911 = vmatprep.subr.bf16.mxu0 0
    %912 = vmatpush2.bf16.xpose.msra.mxu0 0
    %913 = vmatprep.mubr.bf16.mxu0 0
    %914 = vmatmul.mubr.bf16.gmra.mxu0 %v876
    %v915 = vpop.f32.mrf.mxu0
    %v916 = vadd.f32 0.0, %v915
    %v917 = vpop.f32.mrf.mxu0
    %v918 = vpop.f32.mrf.mxu0
    %v919 = vpop.f32.mrf.mxu0
    %920 = vdwg.mxu0
    %921 = vrot.lane.b32.xlu0 %v629, 96
    %v922 = vpop.permute.xlu0 %921
    %v924 = vsel %vm634, %v629, 0
    %v927 = vsel %vm634, %v922, 0
    %929 = vmatprep.subr.bf16.mxu0 0
    %930 = vmatpush1.bf16.xpose.msra.mxu0 0
    %931 = vmatprep.subr.bf16.mxu0 0
    %932 = vmatpush1.bf16.xpose.msra.mxu0 0
    %933 = vmatprep.subr.bf16.mxu0 0
    %934 = vmatpush1.bf16.xpose.msra.mxu0 0
    %935 = vmatprep.subr.bf16.mxu0 0
    %936 = vmatpush1.bf16.xpose.msra.mxu0 0
    %937 = vmatprep.subr.bf16.mxu0 0
    %938 = vmatpush1.bf16.xpose.msra.mxu0 0
    %939 = vmatprep.subr.bf16.mxu0 0
    %940 = vmatpush1.bf16.xpose.msra.mxu0 0
    %941 = vmatprep.subr.bf16.mxu0 0
    %942 = vmatpush1.bf16.xpose.msra.mxu0 0
    %943 = vmatprep.subr.bf16.mxu0 0
    %944 = vmatpush1.bf16.xpose.msra.mxu0 %v927
    %945 = vmatprep.subr.bf16.mxu0 0
    %946 = vmatpush2.bf16.xpose.msra.mxu0 0
    %947 = vmatprep.subr.bf16.mxu0 0
    %948 = vmatpush2.bf16.xpose.msra.mxu0 0
    %949 = vmatprep.subr.bf16.mxu0 0
    %950 = vmatpush2.bf16.xpose.msra.mxu0 0
    %951 = vmatprep.subr.bf16.mxu0 0
    %952 = vmatpush2.bf16.xpose.msra.mxu0 0
    %953 = vmatprep.subr.bf16.mxu0 0
    %954 = vmatpush2.bf16.xpose.msra.mxu0 0
    %955 = vmatprep.subr.bf16.mxu0 0
    %956 = vmatpush2.bf16.xpose.msra.mxu0 0
    %957 = vmatprep.subr.bf16.mxu0 0
    %958 = vmatpush2.bf16.xpose.msra.mxu0 0
    %959 = vmatprep.subr.bf16.mxu0 0
    %960 = vmatpush2.bf16.xpose.msra.mxu0 0
    %961 = vmatprep.mubr.bf16.mxu0 0
    %962 = vmatmul.mubr.bf16.gmra.mxu0 %v924
    %v963 = vpop.f32.mrf.mxu0
    %v964 = vadd.f32 0.0, %v963
    %v965 = vpop.f32.mrf.mxu0
    %v966 = vpop.f32.mrf.mxu0
    %v967 = vpop.f32.mrf.mxu0
    %968 = vdwg.mxu0
    %969 = vrot.lane.b32.xlu0 %v631, 96
    %v970 = vpop.permute.xlu0 %969
    %v972 = vsel %vm634, %v631, 0
    %v975 = vsel %vm634, %v970, 0
    %977 = vmatprep.subr.bf16.mxu0 0
    %978 = vmatpush1.bf16.xpose.msra.mxu0 0
    %979 = vmatprep.subr.bf16.mxu0 0
    %980 = vmatpush1.bf16.xpose.msra.mxu0 0
    %981 = vmatprep.subr.bf16.mxu0 0
    %982 = vmatpush1.bf16.xpose.msra.mxu0 0
    %983 = vmatprep.subr.bf16.mxu0 0
    %984 = vmatpush1.bf16.xpose.msra.mxu0 0
    %985 = vmatprep.subr.bf16.mxu0 0
    %986 = vmatpush1.bf16.xpose.msra.mxu0 0
    %987 = vmatprep.subr.bf16.mxu0 0
    %988 = vmatpush1.bf16.xpose.msra.mxu0 0
    %989 = vmatprep.subr.bf16.mxu0 0
    %990 = vmatpush1.bf16.xpose.msra.mxu0 0
    %991 = vmatprep.subr.bf16.mxu0 0
    %992 = vmatpush1.bf16.xpose.msra.mxu0 %v975
    %993 = vmatprep.subr.bf16.mxu0 0
    %994 = vmatpush2.bf16.xpose.msra.mxu0 0
    %995 = vmatprep.subr.bf16.mxu0 0
    %996 = vmatpush2.bf16.xpose.msra.mxu0 0
    %997 = vmatprep.subr.bf16.mxu0 0
    %998 = vmatpush2.bf16.xpose.msra.mxu0 0
    %999 = vmatprep.subr.bf16.mxu0 0
    %1000 = vmatpush2.bf16.xpose.msra.mxu0 0
    %1001 = vmatprep.subr.bf16.mxu0 0
    %1002 = vmatpush2.bf16.xpose.msra.mxu0 0
    %1003 = vmatprep.subr.bf16.mxu0 0
    %1004 = vmatpush2.bf16.xpose.msra.mxu0 0
    %1005 = vmatprep.subr.bf16.mxu0 0
    %1006 = vmatpush2.bf16.xpose.msra.mxu0 0
    %1007 = vmatprep.subr.bf16.mxu0 0
    %1008 = vmatpush2.bf16.xpose.msra.mxu0 0
    %1009 = vmatprep.mubr.bf16.mxu0 0
    %1010 = vmatmul.mubr.bf16.gmra.mxu0 %v972
    %v1011 = vpop.f32.mrf.mxu0
    %v1012 = vadd.f32 0.0, %v1011
    %v1013 = vpop.f32.mrf.mxu0
    %v1014 = vpop.f32.mrf.mxu0
    %v1015 = vpop.f32.mrf.mxu0
    %1016 = vdwg.mxu0
    %v1017 = vmul.f32 %v676, 0.35355338
    %v1018 = vmul.f32 %v724, 0.35355338
    %v1019 = vmul.f32 %v772, 0.35355338
    %v1020 = vmul.f32 %v820, 0.35355338
    %v1021 = vmul.f32 %v868, 0.35355338
    %v1022 = vmul.f32 %v916, 0.35355338
    %v1023 = vmul.f32 %v964, 0.35355338
    %v1024 = vmul.f32 %v1012, 0.35355338
    %vm1025 = vcmask 9216
    %v1026 = vsel %vm1025, %v1017, -inf
    %1027 = vmax.xlane.f32.xlu0 %v1026
    %v1028 = vpop.xlane.xlu0 %1027
    %v1029 = vsel %vm1025, %v1018, -inf
    %1030 = vmax.xlane.f32.xlu0 %v1029
    %v1031 = vpop.xlane.xlu0 %1030
    %v1032 = vsel %vm1025, %v1019, -inf
    %1033 = vmax.xlane.f32.xlu0 %v1032
    %v1034 = vpop.xlane.xlu0 %1033
    %v1035 = vsel %vm1025, %v1020, -inf
    %1036 = vmax.xlane.f32.xlu0 %v1035
    %v1037 = vpop.xlane.xlu0 %1036
    %v1038 = vsel %vm1025, %v1021, -inf
    %1039 = vmax.xlane.f32.xlu0 %v1038
    %v1040 = vpop.xlane.xlu0 %1039
    %v1041 = vsel %vm1025, %v1022, -inf
    %1042 = vmax.xlane.f32.xlu0 %v1041
    %v1043 = vpop.xlane.xlu0 %1042
    %v1044 = vsel %vm1025, %v1023, -inf
    %1045 = vmax.xlane.f32.xlu0 %v1044
    %v1046 = vpop.xlane.xlu0 %1045
    %v1047 = vsel %vm1025, %v1024, -inf
    %1048 = vmax.xlane.f32.xlu0 %v1047
    %v1049 = vpop.xlane.xlu0 %1048
    %v1050 = vsub.f32 %v1017, %v1028
    %v1051 = vsub.f32 %v1018, %v1031
    %v1052 = vsub.f32 %v1019, %v1034
    %v1053 = vsub.f32 %v1020, %v1037
    %v1054 = vsub.f32 %v1021, %v1040
    %v1055 = vsub.f32 %v1022, %v1043
    %v1056 = vsub.f32 %v1023, %v1046
    %v1057 = vsub.f32 %v1024, %v1049
    %v1058 = vmul.f32 %v1050, 1.442695
    %v1059 = vpow.pop %v1058
    %v1060 = vmul.f32 %v1051, 1.442695
    %v1061 = vpow.pop %v1060
    %v1062 = vmul.f32 %v1052, 1.442695
    %v1063 = vpow.pop %v1062
    %v1064 = vmul.f32 %v1053, 1.442695
    %v1065 = vpow.pop %v1064
    %v1066 = vmul.f32 %v1054, 1.442695
    %v1067 = vpow.pop %v1066
    %v1068 = vmul.f32 %v1055, 1.442695
    %v1069 = vpow.pop %v1068
    %v1070 = vmul.f32 %v1056, 1.442695
    %v1071 = vpow.pop %v1070
    %v1072 = vmul.f32 %v1057, 1.442695
    %v1073 = vpow.pop %v1072
    %v1074 = vsel %vm1025, %v1059, 0.0
    %1075 = vadd.xlane.f32.xlu0 %v1074
    %v1076 = vpop.xlane.xlu0 %1075
    %v1077 = vsel %vm1025, %v1061, 0.0
    %1078 = vadd.xlane.f32.xlu0 %v1077
    %v1079 = vpop.xlane.xlu0 %1078
    %v1080 = vsel %vm1025, %v1063, 0.0
    %1081 = vadd.xlane.f32.xlu0 %v1080
    %v1082 = vpop.xlane.xlu0 %1081
    %v1083 = vsel %vm1025, %v1065, 0.0
    %1084 = vadd.xlane.f32.xlu0 %v1083
    %v1085 = vpop.xlane.xlu0 %1084
    %v1086 = vsel %vm1025, %v1067, 0.0
    %1087 = vadd.xlane.f32.xlu0 %v1086
    %v1088 = vpop.xlane.xlu0 %1087
    %v1089 = vsel %vm1025, %v1069, 0.0
    %1090 = vadd.xlane.f32.xlu0 %v1089
    %v1091 = vpop.xlane.xlu0 %1090
    %v1092 = vsel %vm1025, %v1071, 0.0
    %1093 = vadd.xlane.f32.xlu0 %v1092
    %v1094 = vpop.xlane.xlu0 %1093
    %v1095 = vsel %vm1025, %v1073, 0.0
    %1096 = vadd.xlane.f32.xlu0 %v1095
    %v1097 = vpop.xlane.xlu0 %1096
    %v1098 = vrcp.pop %v1076
    %v1099 = vrcp.pop %v1079
    %v1100 = vrcp.pop %v1082
    %v1101 = vrcp.pop %v1085
    %v1102 = vrcp.pop %v1088
    %v1103 = vrcp.pop %v1091
    %v1104 = vrcp.pop %v1094
    %v1105 = vrcp.pop %v1097
    %v1106 = vmul.f32 %v1059, %v1098
    %v1107 = vmul.f32 %v1061, %v1099
    %v1108 = vmul.f32 %v1063, %v1100
    %v1109 = vmul.f32 %v1065, %v1101
    %v1110 = vmul.f32 %v1067, %v1102
    %v1111 = vmul.f32 %v1069, %v1103
    %v1112 = vmul.f32 %v1071, %v1104
    %v1113 = vmul.f32 %v1073, %v1105
    %v1114 = vpack.c.bf16 %v1106, %v1106
    %v1115 = vpack.c.bf16 %v1107, %v1107
    %v1116 = vpack.c.bf16 %v1108, %v1108
    %v1117 = vpack.c.bf16 %v1109, %v1109
    %v1118 = vpack.c.bf16 %v1110, %v1110
    %v1119 = vpack.c.bf16 %v1111, %v1111
    %v1120 = vpack.c.bf16 %v1112, %v1112
    %v1121 = vpack.c.bf16 %v1113, %v1113
    %1122 = vrot.lane.b32.xlu0 %v617, 64
    %v1123 = vpop.permute.xlu0 %1122
    %vm1124 = vcmask 15360
    %v1126 = vsel %vm1124, %v1114, 0
    %vm1128 = vcmask 1040384
    %v1130 = vsel %vm1128, %v1123, 0
    %1132 = vmatprep.subr.bf16.mxu0 0
    %1133 = vmatpush1.bf16.msra.mxu0 0
    %1134 = vmatprep.subr.bf16.mxu0 0
    %1135 = vmatpush1.bf16.msra.mxu0 0
    %1136 = vmatprep.subr.bf16.mxu0 0
    %1137 = vmatpush1.bf16.msra.mxu0 0
    %1138 = vmatprep.subr.bf16.mxu0 0
    %1139 = vmatpush1.bf16.msra.mxu0 0
    %1140 = vmatprep.subr.bf16.mxu0 0
    %1141 = vmatpush1.bf16.msra.mxu0 0
    %1142 = vmatprep.subr.bf16.mxu0 0
    %1143 = vmatpush1.bf16.msra.mxu0 0
    %1144 = vmatprep.subr.bf16.mxu0 0
    %1145 = vmatpush1.bf16.msra.mxu0 0
    %1146 = vmatprep.subr.bf16.mxu0 0
    %1147 = vmatpush1.bf16.msra.mxu0 %v1130
    %1148 = vmatprep.subr.bf16.mxu0 0
    %1149 = vmatpush2.bf16.msra.mxu0 0
    %1150 = vmatprep.subr.bf16.mxu0 0
    %1151 = vmatpush2.bf16.msra.mxu0 0
    %1152 = vmatprep.subr.bf16.mxu0 0
    %1153 = vmatpush2.bf16.msra.mxu0 0
    %1154 = vmatprep.subr.bf16.mxu0 0
    %1155 = vmatpush2.bf16.msra.mxu0 0
    %1156 = vmatprep.subr.bf16.mxu0 0
    %1157 = vmatpush2.bf16.msra.mxu0 0
    %1158 = vmatprep.subr.bf16.mxu0 0
    %1159 = vmatpush2.bf16.msra.mxu0 0
    %1160 = vmatprep.subr.bf16.mxu0 0
    %1161 = vmatpush2.bf16.msra.mxu0 0
    %1162 = vmatprep.subr.bf16.mxu0 0
    %1163 = vmatpush2.bf16.msra.mxu0 0
    %1164 = vmatprep.mubr.bf16.mxu0 0
    %1165 = vmatmul.mubr.bf16.gmra.mxu0 %v1126
    %v1166 = vpop.f32.mrf.mxu0
    %v1167 = vadd.f32 0.0, %v1166
    %v1168 = vpop.f32.mrf.mxu0
    %v1169 = vpop.f32.mrf.mxu0
    %v1170 = vpop.f32.mrf.mxu0
    %1171 = vdwg.mxu0
    %1172 = vrot.lane.b32.xlu0 %v620, 64
    %v1173 = vpop.permute.xlu0 %1172
    %v1175 = vsel %vm1124, %v1115, 0
    %v1178 = vsel %vm1128, %v1173, 0
    %1180 = vmatprep.subr.bf16.mxu0 0
    %1181 = vmatpush1.bf16.msra.mxu0 0
    %1182 = vmatprep.subr.bf16.mxu0 0
    %1183 = vmatpush1.bf16.msra.mxu0 0
    %1184 = vmatprep.subr.bf16.mxu0 0
    %1185 = vmatpush1.bf16.msra.mxu0 0
    %1186 = vmatprep.subr.bf16.mxu0 0
    %1187 = vmatpush1.bf16.msra.mxu0 0
    %1188 = vmatprep.subr.bf16.mxu0 0
    %1189 = vmatpush1.bf16.msra.mxu0 0
    %1190 = vmatprep.subr.bf16.mxu0 0
    %1191 = vmatpush1.bf16.msra.mxu0 0
    %1192 = vmatprep.subr.bf16.mxu0 0
    %1193 = vmatpush1.bf16.msra.mxu0 0
    %1194 = vmatprep.subr.bf16.mxu0 0
    %1195 = vmatpush1.bf16.msra.mxu0 %v1178
    %1196 = vmatprep.subr.bf16.mxu0 0
    %1197 = vmatpush2.bf16.msra.mxu0 0
    %1198 = vmatprep.subr.bf16.mxu0 0
    %1199 = vmatpush2.bf16.msra.mxu0 0
    %1200 = vmatprep.subr.bf16.mxu0 0
    %1201 = vmatpush2.bf16.msra.mxu0 0
    %1202 = vmatprep.subr.bf16.mxu0 0
    %1203 = vmatpush2.bf16.msra.mxu0 0
    %1204 = vmatprep.subr.bf16.mxu0 0
    %1205 = vmatpush2.bf16.msra.mxu0 0
    %1206 = vmatprep.subr.bf16.mxu0 0
    %1207 = vmatpush2.bf16.msra.mxu0 0
    %1208 = vmatprep.subr.bf16.mxu0 0
    %1209 = vmatpush2.bf16.msra.mxu0 0
    %1210 = vmatprep.subr.bf16.mxu0 0
    %1211 = vmatpush2.bf16.msra.mxu0 0
    %1212 = vmatprep.mubr.bf16.mxu0 0
    %1213 = vmatmul.mubr.bf16.gmra.mxu0 %v1175
    %v1214 = vpop.f32.mrf.mxu0
    %v1215 = vadd.f32 0.0, %v1214
    %v1216 = vpop.f32.mrf.mxu0
    %v1217 = vpop.f32.mrf.mxu0
    %v1218 = vpop.f32.mrf.mxu0
    %1219 = vdwg.mxu0
    %1220 = vrot.lane.b32.xlu0 %v622, 64
    %v1221 = vpop.permute.xlu0 %1220
    %v1223 = vsel %vm1124, %v1116, 0
    %v1226 = vsel %vm1128, %v1221, 0
    %1228 = vmatprep.subr.bf16.mxu0 0
    %1229 = vmatpush1.bf16.msra.mxu0 0
    %1230 = vmatprep.subr.bf16.mxu0 0
    %1231 = vmatpush1.bf16.msra.mxu0 0
    %1232 = vmatprep.subr.bf16.mxu0 0
    %1233 = vmatpush1.bf16.msra.mxu0 0
    %1234 = vmatprep.subr.bf16.mxu0 0
    %1235 = vmatpush1.bf16.msra.mxu0 0
    %1236 = vmatprep.subr.bf16.mxu0 0
    %1237 = vmatpush1.bf16.msra.mxu0 0
    %1238 = vmatprep.subr.bf16.mxu0 0
    %1239 = vmatpush1.bf16.msra.mxu0 0
    %1240 = vmatprep.subr.bf16.mxu0 0
    %1241 = vmatpush1.bf16.msra.mxu0 0
    %1242 = vmatprep.subr.bf16.mxu0 0
    %1243 = vmatpush1.bf16.msra.mxu0 %v1226
    %1244 = vmatprep.subr.bf16.mxu0 0
    %1245 = vmatpush2.bf16.msra.mxu0 0
    %1246 = vmatprep.subr.bf16.mxu0 0
    %1247 = vmatpush2.bf16.msra.mxu0 0
    %1248 = vmatprep.subr.bf16.mxu0 0
    %1249 = vmatpush2.bf16.msra.mxu0 0
    %1250 = vmatprep.subr.bf16.mxu0 0
    %1251 = vmatpush2.bf16.msra.mxu0 0
    %1252 = vmatprep.subr.bf16.mxu0 0
    %1253 = vmatpush2.bf16.msra.mxu0 0
    %1254 = vmatprep.subr.bf16.mxu0 0
    %1255 = vmatpush2.bf16.msra.mxu0 0
    %1256 = vmatprep.subr.bf16.mxu0 0
    %1257 = vmatpush2.bf16.msra.mxu0 0
    %1258 = vmatprep.subr.bf16.mxu0 0
    %1259 = vmatpush2.bf16.msra.mxu0 0
    %1260 = vmatprep.mubr.bf16.mxu0 0
    %1261 = vmatmul.mubr.bf16.gmra.mxu0 %v1223
    %v1262 = vpop.f32.mrf.mxu0
    %v1263 = vadd.f32 0.0, %v1262
    %v1264 = vpop.f32.mrf.mxu0
    %v1265 = vpop.f32.mrf.mxu0
    %v1266 = vpop.f32.mrf.mxu0
    %1267 = vdwg.mxu0
    %1268 = vrot.lane.b32.xlu0 %v624, 64
    %v1269 = vpop.permute.xlu0 %1268
    %v1271 = vsel %vm1124, %v1117, 0
    %v1274 = vsel %vm1128, %v1269, 0
    %1276 = vmatprep.subr.bf16.mxu0 0
    %1277 = vmatpush1.bf16.msra.mxu0 0
    %1278 = vmatprep.subr.bf16.mxu0 0
    %1279 = vmatpush1.bf16.msra.mxu0 0
    %1280 = vmatprep.subr.bf16.mxu0 0
    %1281 = vmatpush1.bf16.msra.mxu0 0
    %1282 = vmatprep.subr.bf16.mxu0 0
    %1283 = vmatpush1.bf16.msra.mxu0 0
    %1284 = vmatprep.subr.bf16.mxu0 0
    %1285 = vmatpush1.bf16.msra.mxu0 0
    %1286 = vmatprep.subr.bf16.mxu0 0
    %1287 = vmatpush1.bf16.msra.mxu0 0
    %1288 = vmatprep.subr.bf16.mxu0 0
    %1289 = vmatpush1.bf16.msra.mxu0 0
    %1290 = vmatprep.subr.bf16.mxu0 0
    %1291 = vmatpush1.bf16.msra.mxu0 %v1274
    %1292 = vmatprep.subr.bf16.mxu0 0
    %1293 = vmatpush2.bf16.msra.mxu0 0
    %1294 = vmatprep.subr.bf16.mxu0 0
    %1295 = vmatpush2.bf16.msra.mxu0 0
    %1296 = vmatprep.subr.bf16.mxu0 0
    %1297 = vmatpush2.bf16.msra.mxu0 0
    %1298 = vmatprep.subr.bf16.mxu0 0
    %1299 = vmatpush2.bf16.msra.mxu0 0
    %1300 = vmatprep.subr.bf16.mxu0 0
    %1301 = vmatpush2.bf16.msra.mxu0 0
    %1302 = vmatprep.subr.bf16.mxu0 0
    %1303 = vmatpush2.bf16.msra.mxu0 0
    %1304 = vmatprep.subr.bf16.mxu0 0
    %1305 = vmatpush2.bf16.msra.mxu0 0
    %1306 = vmatprep.subr.bf16.mxu0 0
    %1307 = vmatpush2.bf16.msra.mxu0 0
    %1308 = vmatprep.mubr.bf16.mxu0 0
    %1309 = vmatmul.mubr.bf16.gmra.mxu0 %v1271
    %v1310 = vpop.f32.mrf.mxu0
    %v1311 = vadd.f32 0.0, %v1310
    %v1312 = vpop.f32.mrf.mxu0
    %v1313 = vpop.f32.mrf.mxu0
    %v1314 = vpop.f32.mrf.mxu0
    %1315 = vdwg.mxu0
    %1316 = vrot.lane.b32.xlu0 %v625, 64
    %v1317 = vpop.permute.xlu0 %1316
    %v1319 = vsel %vm1124, %v1118, 0
    %v1322 = vsel %vm1128, %v1317, 0
    %1324 = vmatprep.subr.bf16.mxu0 0
    %1325 = vmatpush1.bf16.msra.mxu0 0
    %1326 = vmatprep.subr.bf16.mxu0 0
    %1327 = vmatpush1.bf16.msra.mxu0 0
    %1328 = vmatprep.subr.bf16.mxu0 0
    %1329 = vmatpush1.bf16.msra.mxu0 0
    %1330 = vmatprep.subr.bf16.mxu0 0
    %1331 = vmatpush1.bf16.msra.mxu0 0
    %1332 = vmatprep.subr.bf16.mxu0 0
    %1333 = vmatpush1.bf16.msra.mxu0 0
    %1334 = vmatprep.subr.bf16.mxu0 0
    %1335 = vmatpush1.bf16.msra.mxu0 0
    %1336 = vmatprep.subr.bf16.mxu0 0
    %1337 = vmatpush1.bf16.msra.mxu0 0
    %1338 = vmatprep.subr.bf16.mxu0 0
    %1339 = vmatpush1.bf16.msra.mxu0 %v1322
    %1340 = vmatprep.subr.bf16.mxu0 0
    %1341 = vmatpush2.bf16.msra.mxu0 0
    %1342 = vmatprep.subr.bf16.mxu0 0
    %1343 = vmatpush2.bf16.msra.mxu0 0
    %1344 = vmatprep.subr.bf16.mxu0 0
    %1345 = vmatpush2.bf16.msra.mxu0 0
    %1346 = vmatprep.subr.bf16.mxu0 0
    %1347 = vmatpush2.bf16.msra.mxu0 0
    %1348 = vmatprep.subr.bf16.mxu0 0
    %1349 = vmatpush2.bf16.msra.mxu0 0
    %1350 = vmatprep.subr.bf16.mxu0 0
    %1351 = vmatpush2.bf16.msra.mxu0 0
    %1352 = vmatprep.subr.bf16.mxu0 0
    %1353 = vmatpush2.bf16.msra.mxu0 0
    %1354 = vmatprep.subr.bf16.mxu0 0
    %1355 = vmatpush2.bf16.msra.mxu0 0
    %1356 = vmatprep.mubr.bf16.mxu0 0
    %1357 = vmatmul.mubr.bf16.gmra.mxu0 %v1319
    %v1358 = vpop.f32.mrf.mxu0
    %v1359 = vadd.f32 0.0, %v1358
    %v1360 = vpop.f32.mrf.mxu0
    %v1361 = vpop.f32.mrf.mxu0
    %v1362 = vpop.f32.mrf.mxu0
    %1363 = vdwg.mxu0
    %1364 = vrot.lane.b32.xlu0 %v627, 64
    %v1365 = vpop.permute.xlu0 %1364
    %v1367 = vsel %vm1124, %v1119, 0
    %v1370 = vsel %vm1128, %v1365, 0
    %1372 = vmatprep.subr.bf16.mxu0 0
    %1373 = vmatpush1.bf16.msra.mxu0 0
    %1374 = vmatprep.subr.bf16.mxu0 0
    %1375 = vmatpush1.bf16.msra.mxu0 0
    %1376 = vmatprep.subr.bf16.mxu0 0
    %1377 = vmatpush1.bf16.msra.mxu0 0
    %1378 = vmatprep.subr.bf16.mxu0 0
    %1379 = vmatpush1.bf16.msra.mxu0 0
    %1380 = vmatprep.subr.bf16.mxu0 0
    %1381 = vmatpush1.bf16.msra.mxu0 0
    %1382 = vmatprep.subr.bf16.mxu0 0
    %1383 = vmatpush1.bf16.msra.mxu0 0
    %1384 = vmatprep.subr.bf16.mxu0 0
    %1385 = vmatpush1.bf16.msra.mxu0 0
    %1386 = vmatprep.subr.bf16.mxu0 0
    %1387 = vmatpush1.bf16.msra.mxu0 %v1370
    %1388 = vmatprep.subr.bf16.mxu0 0
    %1389 = vmatpush2.bf16.msra.mxu0 0
    %1390 = vmatprep.subr.bf16.mxu0 0
    %1391 = vmatpush2.bf16.msra.mxu0 0
    %1392 = vmatprep.subr.bf16.mxu0 0
    %1393 = vmatpush2.bf16.msra.mxu0 0
    %1394 = vmatprep.subr.bf16.mxu0 0
    %1395 = vmatpush2.bf16.msra.mxu0 0
    %1396 = vmatprep.subr.bf16.mxu0 0
    %1397 = vmatpush2.bf16.msra.mxu0 0
    %1398 = vmatprep.subr.bf16.mxu0 0
    %1399 = vmatpush2.bf16.msra.mxu0 0
    %1400 = vmatprep.subr.bf16.mxu0 0
    %1401 = vmatpush2.bf16.msra.mxu0 0
    %1402 = vmatprep.subr.bf16.mxu0 0
    %1403 = vmatpush2.bf16.msra.mxu0 0
    %1404 = vmatprep.mubr.bf16.mxu0 0
    %1405 = vmatmul.mubr.bf16.gmra.mxu0 %v1367
    %v1406 = vpop.f32.mrf.mxu0
    %v1407 = vadd.f32 0.0, %v1406
    %v1408 = vpop.f32.mrf.mxu0
    %v1409 = vpop.f32.mrf.mxu0
    %v1410 = vpop.f32.mrf.mxu0
    %1411 = vdwg.mxu0
    %1412 = vrot.lane.b32.xlu0 %v629, 64
    %v1413 = vpop.permute.xlu0 %1412
    %v1415 = vsel %vm1124, %v1120, 0
    %v1418 = vsel %vm1128, %v1413, 0
    %1420 = vmatprep.subr.bf16.mxu0 0
    %1421 = vmatpush1.bf16.msra.mxu0 0
    %1422 = vmatprep.subr.bf16.mxu0 0
    %1423 = vmatpush1.bf16.msra.mxu0 0
    %1424 = vmatprep.subr.bf16.mxu0 0
    %1425 = vmatpush1.bf16.msra.mxu0 0
    %1426 = vmatprep.subr.bf16.mxu0 0
    %1427 = vmatpush1.bf16.msra.mxu0 0
    %1428 = vmatprep.subr.bf16.mxu0 0
    %1429 = vmatpush1.bf16.msra.mxu0 0
    %1430 = vmatprep.subr.bf16.mxu0 0
    %1431 = vmatpush1.bf16.msra.mxu0 0
    %1432 = vmatprep.subr.bf16.mxu0 0
    %1433 = vmatpush1.bf16.msra.mxu0 0
    %1434 = vmatprep.subr.bf16.mxu0 0
    %1435 = vmatpush1.bf16.msra.mxu0 %v1418
    %1436 = vmatprep.subr.bf16.mxu0 0
    %1437 = vmatpush2.bf16.msra.mxu0 0
    %1438 = vmatprep.subr.bf16.mxu0 0
    %1439 = vmatpush2.bf16.msra.mxu0 0
    %1440 = vmatprep.subr.bf16.mxu0 0
    %1441 = vmatpush2.bf16.msra.mxu0 0
    %1442 = vmatprep.subr.bf16.mxu0 0
    %1443 = vmatpush2.bf16.msra.mxu0 0
    %1444 = vmatprep.subr.bf16.mxu0 0
    %1445 = vmatpush2.bf16.msra.mxu0 0
    %1446 = vmatprep.subr.bf16.mxu0 0
    %1447 = vmatpush2.bf16.msra.mxu0 0
    %1448 = vmatprep.subr.bf16.mxu0 0
    %1449 = vmatpush2.bf16.msra.mxu0 0
    %1450 = vmatprep.subr.bf16.mxu0 0
    %1451 = vmatpush2.bf16.msra.mxu0 0
    %1452 = vmatprep.mubr.bf16.mxu0 0
    %1453 = vmatmul.mubr.bf16.gmra.mxu0 %v1415
    %v1454 = vpop.f32.mrf.mxu0
    %v1455 = vadd.f32 0.0, %v1454
    %v1456 = vpop.f32.mrf.mxu0
    %v1457 = vpop.f32.mrf.mxu0
    %v1458 = vpop.f32.mrf.mxu0
    %1459 = vdwg.mxu0
    %1460 = vrot.lane.b32.xlu0 %v631, 64
    %v1461 = vpop.permute.xlu0 %1460
    %v1463 = vsel %vm1124, %v1121, 0
    %v1466 = vsel %vm1128, %v1461, 0
    %1468 = vmatprep.subr.bf16.mxu0 0
    %1469 = vmatpush1.bf16.msra.mxu0 0
    %1470 = vmatprep.subr.bf16.mxu0 0
    %1471 = vmatpush1.bf16.msra.mxu0 0
    %1472 = vmatprep.subr.bf16.mxu0 0
    %1473 = vmatpush1.bf16.msra.mxu0 0
    %1474 = vmatprep.subr.bf16.mxu0 0
    %1475 = vmatpush1.bf16.msra.mxu0 0
    %1476 = vmatprep.subr.bf16.mxu0 0
    %1477 = vmatpush1.bf16.msra.mxu0 0
    %1478 = vmatprep.subr.bf16.mxu0 0
    %1479 = vmatpush1.bf16.msra.mxu0 0
    %1480 = vmatprep.subr.bf16.mxu0 0
    %1481 = vmatpush1.bf16.msra.mxu0 0
    %1482 = vmatprep.subr.bf16.mxu0 0
    %1483 = vmatpush1.bf16.msra.mxu0 %v1466
    %1484 = vmatprep.subr.bf16.mxu0 0
    %1485 = vmatpush2.bf16.msra.mxu0 0
    %1486 = vmatprep.subr.bf16.mxu0 0
    %1487 = vmatpush2.bf16.msra.mxu0 0
    %1488 = vmatprep.subr.bf16.mxu0 0
    %1489 = vmatpush2.bf16.msra.mxu0 0
    %1490 = vmatprep.subr.bf16.mxu0 0
    %1491 = vmatpush2.bf16.msra.mxu0 0
    %1492 = vmatprep.subr.bf16.mxu0 0
    %1493 = vmatpush2.bf16.msra.mxu0 0
    %1494 = vmatprep.subr.bf16.mxu0 0
    %1495 = vmatpush2.bf16.msra.mxu0 0
    %1496 = vmatprep.subr.bf16.mxu0 0
    %1497 = vmatpush2.bf16.msra.mxu0 0
    %1498 = vmatprep.subr.bf16.mxu0 0
    %1499 = vmatpush2.bf16.msra.mxu0 0
    %1500 = vmatprep.mubr.bf16.mxu0 0
    %1501 = vmatmul.mubr.bf16.gmra.mxu0 %v1463
    %v1502 = vpop.f32.mrf.mxu0
    %v1503 = vadd.f32 0.0, %v1502
    %v1504 = vpop.f32.mrf.mxu0
    %v1505 = vpop.f32.mrf.mxu0
    %v1506 = vpop.f32.mrf.mxu0
    %1507 = vdwg.mxu0
    %1509 = vrot.lane.b32.xlu0 %v1215, 8
    %v1510 = vpop.permute.xlu0 %1509
    %1513 = vrot.lane.b32.xlu0 %v1263, 16
    %v1514 = vpop.permute.xlu0 %1513
    %1517 = vrot.lane.b32.xlu0 %v1311, 24
    %v1518 = vpop.permute.xlu0 %1517
    %v1520 = vsel %vm634, %v1167, %v1510
    %vm1521 = vcmask 130048
    %v1522 = vsel %vm1521, %v1520, %v1514
    %vm1523 = vcmask 195584
    %v1524 = vsel %vm1523, %v1522, %v1518
    %1526 = vrot.lane.b32.xlu0 %v1407, 8
    %v1527 = vpop.permute.xlu0 %1526
    %1530 = vrot.lane.b32.xlu0 %v1455, 16
    %v1531 = vpop.permute.xlu0 %1530
    %1534 = vrot.lane.b32.xlu0 %v1503, 24
    %v1535 = vpop.permute.xlu0 %1534
    %v1537 = vsel %vm634, %v1359, %v1527
    %v1538 = vsel %vm1521, %v1537, %v1531
    %v1539 = vsel %vm1523, %v1538, %v1535
    %v1541 = vrot.slane %v1539, 6
    %v1543 = vsel %vm547, %v1524, %v1541
    %v1544 = vpack.c.bf16 %v1543, %v1543
    %v1545 = vld [vmem:[%s7] sm:$0xf]
    %v1546 = vld [vmem:[%s7 + $0x4] sm:$0xf]
    %v1547 = vld [vmem:[%s7 + $0x8] sm:$0xf]
    %v1548 = vld [vmem:[%s7 + $0xc] sm:$0xf]
    %v1549 = vld [vmem:[%s8] sm:$0x1]
    %v1551 = vlaneseq
    %v1552 = vshrl.u32 %v1551, 7
    %v1553 = vsub.s32 0, %v1552
    %v1554 = vrot.slane %v1549, %v1553
    %v1560 = vunpack.c.l.b16 %v1545
    %v1561 = vunpack.c.l.b16 %v1546
    %v1562 = vunpack.c.l.b16 %v1547
    %v1563 = vunpack.c.l.b16 %v1548
    %v1564 = vpack.c.b16 %v1561, %v1560
    %v1565 = vpack.c.b16 %v1563, %v1562
    %v1569 = vsel %vm573, %v1544, 0
    %1571 = vmatprep.subr.bf16.mxu0 0
    %1572 = vmatpush1.bf16.msra.mxu0 0
    %1573 = vmatprep.subr.bf16.mxu0 0
    %1574 = vmatpush1.bf16.msra.mxu0 0
    %1575 = vmatprep.subr.bf16.mxu0 0
    %1576 = vmatpush1.bf16.msra.mxu0 0
    %1577 = vmatprep.subr.bf16.mxu0 0
    %1578 = vmatpush1.bf16.msra.mxu0 0
    %1579 = vmatprep.subr.bf16.mxu0 0
    %1580 = vmatpush1.bf16.msra.mxu0 0
    %1581 = vmatprep.subr.bf16.mxu0 0
    %1582 = vmatpush1.bf16.msra.mxu0 0
    %1583 = vmatprep.subr.bf16.mxu0 0
    %1584 = vmatpush1.bf16.msra.mxu0 %v1565
    %1585 = vmatprep.subr.bf16.mxu0 0
    %1586 = vmatpush1.bf16.msra.mxu0 %v1564
    %1587 = vmatprep.subr.bf16.mxu0 0
    %1588 = vmatpush2.bf16.msra.mxu0 0
    %1589 = vmatprep.subr.bf16.mxu0 0
    %1590 = vmatpush2.bf16.msra.mxu0 0
    %1591 = vmatprep.subr.bf16.mxu0 0
    %1592 = vmatpush2.bf16.msra.mxu0 0
    %1593 = vmatprep.subr.bf16.mxu0 0
    %1594 = vmatpush2.bf16.msra.mxu0 0
    %1595 = vmatprep.subr.bf16.mxu0 0
    %1596 = vmatpush2.bf16.msra.mxu0 0
    %1597 = vmatprep.subr.bf16.mxu0 0
    %1598 = vmatpush2.bf16.msra.mxu0 0
    %1599 = vmatprep.subr.bf16.mxu0 0
    %1600 = vmatpush2.bf16.msra.mxu0 0
    %1601 = vmatprep.subr.bf16.mxu0 0
    %1602 = vmatpush2.bf16.msra.mxu0 0
    %1603 = vmatprep.mubr.bf16.mxu0 0
    %1604 = vmatmul.mubr.bf16.gmra.mxu0 %v1569
    %v1605 = vpop.f32.mrf.mxu0
    %v1606 = vadd.f32 %v1554, %v1605
    %v1607 = vpop.f32.mrf.mxu0
    %v1608 = vpop.f32.mrf.mxu0
    %v1609 = vpop.f32.mrf.mxu0
    %1610 = vdwg.mxu0
    %v1611 = vadd.f32 %v548, %v1606
    %v1612 = vld [vmem:[%s9] sm:$0x1]
    %v1613 = vld [vmem:[%s10] sm:$0x1]
    %vm1614 = vcmask 257024
    %v1615 = vsel %vm1614, %v1611, 0.0
    %1616 = vadd.xlane.f32.xlu0 %v1615
    %v1617 = vpop.xlane.xlu0 %1616
    %v1618 = vrcp.pop 32.0
    %v1619 = vmul.f32 %v1617, %v1618
    %v1620 = vsub.f32 %v1611, %v1619
    %v1621 = vmul.f32 %v1620, %v1620
    %v1622 = vsel %vm1614, %v1621, 0.0
    %1623 = vadd.xlane.f32.xlu0 %v1622
    %v1624 = vpop.xlane.xlu0 %1623
    %v1625 = vmul.f32 %v1624, %v1618
    %v1626 = vadd.f32 %v1625, 1e-05
    %v1627 = vrsqrt.pop %v1626
    %v1628 = vmul.f32 %v1620, %v1627
    %v1630 = vlaneseq
    %v1631 = vshrl.u32 %v1630, 7
    %v1632 = vsub.s32 0, %v1631
    %v1633 = vrot.slane %v1612, %v1632
    %v1635 = vmul.f32 %v1628, %v1633
    %v1637 = vlaneseq
    %v1638 = vshrl.u32 %v1637, 7
    %v1639 = vsub.s32 0, %v1638
    %v1640 = vrot.slane %v1613, %v1639
    %v1642 = vadd.f32 %v1635, %v1640
    %v1643 = vpack.c.bf16 %v1642, %v1642
    %v1644 = vld [vmem:[%s11] sm:$0xf]
    %v1645 = vld [vmem:[%s11 + $0x4] sm:$0xf]
    %v1646 = vld [vmem:[%s11 + $0x8] sm:$0xf]
    %v1647 = vld [vmem:[%s11 + $0xc] sm:$0xf]
    %v1648 = vld [vmem:[%s12] sm:$0x1]
    %v1650 = vlaneseq
    %v1651 = vshrl.u32 %v1650, 7
    %v1652 = vsub.s32 0, %v1651
    %v1653 = vrot.slane %v1648, %v1652
    %v1659 = vunpack.c.l.b16 %v1644
    %v1660 = vunpack.c.l.b16 %v1645
    %v1661 = vunpack.c.l.b16 %v1646
    %v1662 = vunpack.c.l.b16 %v1647
    %v1663 = vpack.c.b16 %v1660, %v1659
    %v1664 = vpack.c.b16 %v1662, %v1661
    %v1668 = vsel %vm573, %v1643, 0
    %1670 = vmatprep.subr.bf16.mxu0 0
    %1671 = vmatpush1.bf16.msra.mxu0 0
    %1672 = vmatprep.subr.bf16.mxu0 0
    %1673 = vmatpush1.bf16.msra.mxu0 0
    %1674 = vmatprep.subr.bf16.mxu0 0
    %1675 = vmatpush1.bf16.msra.mxu0 0
    %1676 = vmatprep.subr.bf16.mxu0 0
    %1677 = vmatpush1.bf16.msra.mxu0 0
    %1678 = vmatprep.subr.bf16.mxu0 0
    %1679 = vmatpush1.bf16.msra.mxu0 0
    %1680 = vmatprep.subr.bf16.mxu0 0
    %1681 = vmatpush1.bf16.msra.mxu0 0
    %1682 = vmatprep.subr.bf16.mxu0 0
    %1683 = vmatpush1.bf16.msra.mxu0 %v1664
    %1684 = vmatprep.subr.bf16.mxu0 0
    %1685 = vmatpush1.bf16.msra.mxu0 %v1663
    %1686 = vmatprep.subr.bf16.mxu0 0
    %1687 = vmatpush2.bf16.msra.mxu0 0
    %1688 = vmatprep.subr.bf16.mxu0 0
    %1689 = vmatpush2.bf16.msra.mxu0 0
    %1690 = vmatprep.subr.bf16.mxu0 0
    %1691 = vmatpush2.bf16.msra.mxu0 0
    %1692 = vmatprep.subr.bf16.mxu0 0
    %1693 = vmatpush2.bf16.msra.mxu0 0
    %1694 = vmatprep.subr.bf16.mxu0 0
    %1695 = vmatpush2.bf16.msra.mxu0 0
    %1696 = vmatprep.subr.bf16.mxu0 0
    %1697 = vmatpush2.bf16.msra.mxu0 0
    %1698 = vmatprep.subr.bf16.mxu0 0
    %1699 = vmatpush2.bf16.msra.mxu0 0
    %1700 = vmatprep.subr.bf16.mxu0 0
    %1701 = vmatpush2.bf16.msra.mxu0 0
    %1702 = vmatprep.mubr.bf16.mxu0 0
    %1703 = vmatmul.mubr.bf16.gmra.mxu0 %v1668
    %v1704 = vpop.f32.mrf.mxu0
    %v1705 = vadd.f32 %v1653, %v1704
    %v1706 = vpop.f32.mrf.mxu0
    %v1707 = vpop.f32.mrf.mxu0
    %v1708 = vpop.f32.mrf.mxu0
    %1709 = vdwg.mxu0
    %v1710 = vmax.f32 %v1705, 0.0
    %v1711 = vpack.c.bf16 %v1710, %v1710
    %v1712 = vld [vmem:[%s13] sm:$0xf]
    %v1713 = vld [vmem:[%s13 + $0x4] sm:$0xf]
    %v1714 = vld [vmem:[%s13 + $0x8] sm:$0xf]
    %v1715 = vld [vmem:[%s13 + $0xc] sm:$0xf]
    %v1716 = vld [vmem:[%s13 + $0x10] sm:$0xf]
    %v1717 = vld [vmem:[%s13 + $0x14] sm:$0xf]
    %v1718 = vld [vmem:[%s13 + $0x18] sm:$0xf]
    %v1719 = vld [vmem:[%s13 + $0x1c] sm:$0xf]
    %v1720 = vld [vmem:[%s14] sm:$0x1]
    %v1722 = vlaneseq
    %v1723 = vshrl.u32 %v1722, 7
    %v1724 = vsub.s32 0, %v1723
    %v1725 = vrot.slane %v1720, %v1724
    %v1735 = vunpack.c.l.b16 %v1712
    %v1736 = vunpack.c.l.b16 %v1713
    %v1737 = vunpack.c.l.b16 %v1714
    %v1738 = vunpack.c.l.b16 %v1715
    %v1739 = vunpack.c.l.b16 %v1716
    %v1740 = vunpack.c.l.b16 %v1717
    %v1741 = vunpack.c.l.b16 %v1718
    %v1742 = vunpack.c.l.b16 %v1719
    %v1743 = vpack.c.b16 %v1736, %v1735
    %v1744 = vpack.c.b16 %v1738, %v1737
    %v1745 = vpack.c.b16 %v1740, %v1739
    %v1746 = vpack.c.b16 %v1742, %v1741
    %v1752 = vsel %vm403, %v1711, 0
    %1754 = vmatprep.subr.bf16.mxu0 0
    %1755 = vmatpush1.bf16.msra.mxu0 0
    %1756 = vmatprep.subr.bf16.mxu0 0
    %1757 = vmatpush1.bf16.msra.mxu0 0
    %1758 = vmatprep.subr.bf16.mxu0 0
    %1759 = vmatpush1.bf16.msra.mxu0 0
    %1760 = vmatprep.subr.bf16.mxu0 0
    %1761 = vmatpush1.bf16.msra.mxu0 0
    %1762 = vmatprep.subr.bf16.mxu0 0
    %1763 = vmatpush1.bf16.msra.mxu0 %v1746
    %1764 = vmatprep.subr.bf16.mxu0 0
    %1765 = vmatpush1.bf16.msra.mxu0 %v1745
    %1766 = vmatprep.subr.bf16.mxu0 0
    %1767 = vmatpush1.bf16.msra.mxu0 %v1744
    %1768 = vmatprep.subr.bf16.mxu0 0
    %1769 = vmatpush1.bf16.msra.mxu0 %v1743
    %1770 = vmatprep.subr.bf16.mxu0 0
    %1771 = vmatpush2.bf16.msra.mxu0 0
    %1772 = vmatprep.subr.bf16.mxu0 0
    %1773 = vmatpush2.bf16.msra.mxu0 0
    %1774 = vmatprep.subr.bf16.mxu0 0
    %1775 = vmatpush2.bf16.msra.mxu0 0
    %1776 = vmatprep.subr.bf16.mxu0 0
    %1777 = vmatpush2.bf16.msra.mxu0 0
    %1778 = vmatprep.subr.bf16.mxu0 0
    %1779 = vmatpush2.bf16.msra.mxu0 0
    %1780 = vmatprep.subr.bf16.mxu0 0
    %1781 = vmatpush2.bf16.msra.mxu0 0
    %1782 = vmatprep.subr.bf16.mxu0 0
    %1783 = vmatpush2.bf16.msra.mxu0 0
    %1784 = vmatprep.subr.bf16.mxu0 0
    %1785 = vmatpush2.bf16.msra.mxu0 0
    %1786 = vmatprep.mubr.bf16.mxu0 0
    %1787 = vmatmul.mubr.bf16.gmra.mxu0 %v1752
    %v1788 = vpop.f32.mrf.mxu0
    %v1789 = vadd.f32 %v1725, %v1788
    %v1790 = vpop.f32.mrf.mxu0
    %v1791 = vpop.f32.mrf.mxu0
    %v1792 = vpop.f32.mrf.mxu0
    %1793 = vdwg.mxu0
    %v1794 = vadd.f32 %v1642, %v1789
    %v1795 = vld [vmem:[%s15] sm:$0x1]
    %v1796 = vld [vmem:[%s16] sm:$0x1]
    %v1797 = vsel %vm1614, %v1794, 0.0
    %1798 = vadd.xlane.f32.xlu0 %v1797
    %v1799 = vpop.xlane.xlu0 %1798
    %v1800 = vmul.f32 %v1799, %v1618
    %v1801 = vsub.f32 %v1794, %v1800
    %v1802 = vmul.f32 %v1801, %v1801
    %v1803 = vsel %vm1614, %v1802, 0.0
    %1804 = vadd.xlane.f32.xlu0 %v1803
    %v1805 = vpop.xlane.xlu0 %1804
    %v1806 = vmul.f32 %v1805, %v1618
    %v1807 = vadd.f32 %v1806, 1e-05
    %v1808 = vrsqrt.pop %v1807
    %v1809 = vmul.f32 %v1801, %v1808
    %v1811 = vlaneseq
    %v1812 = vshrl.u32 %v1811, 7
    %v1813 = vsub.s32 0, %v1812
    %v1814 = vrot.slane %v1795, %v1813
    %v1816 = vmul.f32 %v1809, %v1814
    %v1818 = vlaneseq
    %v1819 = vshrl.u32 %v1818, 7
    %v1820 = vsub.s32 0, %v1819
    %v1821 = vrot.slane %v1796, %v1820
    %v1823 = vadd.f32 %v1816, %v1821
    %v1824 = vpack.c.bf16 %v1823, %v1823
    %s1825 = scalar_lea.vmem %s5, 16
    %v1826 = vld [vmem:[%s1825] sm:$0xf]
    %v1827 = vld [vmem:[%s1825 + $0x4] sm:$0xf]
    %v1828 = vld [vmem:[%s1825 + $0x8] sm:$0xf]
    %v1829 = vld [vmem:[%s1825 + $0xc] sm:$0xf]
    %s1830 = scalar_lea.vmem %s6, 1
    %v1831 = vld [vmem:[%s1830] sm:$0x1]
    %v1833 = vlaneseq
    %v1834 = vshrl.u32 %v1833, 7
    %v1835 = vsub.s32 0, %v1834
    %v1836 = vrot.slane %v1831, %v1835
    %v1842 = vunpack.c.l.b16 %v1826
    %v1843 = vunpack.c.l.b16 %v1827
    %v1844 = vunpack.c.l.b16 %v1828
    %v1845 = vunpack.c.l.b16 %v1829
    %v1846 = vpack.c.b16 %v1843, %v1842
    %v1847 = vpack.c.b16 %v1845, %v1844
    %v1851 = vsel %vm573, %v1824, 0
    %1853 = vmatprep.subr.bf16.mxu0 0
    %1854 = vmatpush1.bf16.msra.mxu0 0
    %1855 = vmatprep.subr.bf16.mxu0 0
    %1856 = vmatpush1.bf16.msra.mxu0 0
    %1857 = vmatprep.subr.bf16.mxu0 0
    %1858 = vmatpush1.bf16.msra.mxu0 0
    %1859 = vmatprep.subr.bf16.mxu0 0
    %1860 = vmatpush1.bf16.msra.mxu0 0
    %1861 = vmatprep.subr.bf16.mxu0 0
    %1862 = vmatpush1.bf16.msra.mxu0 0
    %1863 = vmatprep.subr.bf16.mxu0 0
    %1864 = vmatpush1.bf16.msra.mxu0 0
    %1865 = vmatprep.subr.bf16.mxu0 0
    %1866 = vmatpush1.bf16.msra.mxu0 %v1847
    %1867 = vmatprep.subr.bf16.mxu0 0
    %1868 = vmatpush1.bf16.msra.mxu0 %v1846
    %1869 = vmatprep.subr.bf16.mxu0 0
    %1870 = vmatpush2.bf16.msra.mxu0 0
    %1871 = vmatprep.subr.bf16.mxu0 0
    %1872 = vmatpush2.bf16.msra.mxu0 0
    %1873 = vmatprep.subr.bf16.mxu0 0
    %1874 = vmatpush2.bf16.msra.mxu0 0
    %1875 = vmatprep.subr.bf16.mxu0 0
    %1876 = vmatpush2.bf16.msra.mxu0 0
    %1877 = vmatprep.subr.bf16.mxu0 0
    %1878 = vmatpush2.bf16.msra.mxu0 0
    %1879 = vmatprep.subr.bf16.mxu0 0
    %1880 = vmatpush2.bf16.msra.mxu0 0
    %1881 = vmatprep.subr.bf16.mxu0 0
    %1882 = vmatpush2.bf16.msra.mxu0 0
    %1883 = vmatprep.subr.bf16.mxu0 0
    %1884 = vmatpush2.bf16.msra.mxu0 0
    %1885 = vmatprep.mubr.bf16.mxu0 0
    %1886 = vmatmul.mubr.bf16.gmra.mxu0 %v1851
    %v1887 = vpop.f32.mrf.mxu0
    %v1888 = vadd.f32 %v1836, %v1887
    %v1889 = vpop.f32.mrf.mxu0
    %v1890 = vpop.f32.mrf.mxu0
    %v1891 = vpop.f32.mrf.mxu0
    %1892 = vdwg.mxu0
    %v1893 = vpack.c.bf16 %v1888, %v1888
    %1895 = vrot.lane.b32.xlu0 %v1893, 120
    %v1896 = vpop.permute.xlu0 %1895
    %1897 = vrot.lane.b32.xlu0 %v1893, 112
    %v1898 = vpop.permute.xlu0 %1897
    %1899 = vrot.lane.b32.xlu0 %v1893, 104
    %v1900 = vpop.permute.xlu0 %1899
    %v1901 = vrot.slane %v1893, 1
    %1902 = vrot.lane.b32.xlu0 %v1901, 120
    %v1903 = vpop.permute.xlu0 %1902
    %1904 = vrot.lane.b32.xlu0 %v1901, 112
    %v1905 = vpop.permute.xlu0 %1904
    %1906 = vrot.lane.b32.xlu0 %v1901, 104
    %v1907 = vpop.permute.xlu0 %1906
    %1908 = vrot.lane.b32.xlu0 %v1893, 96
    %v1909 = vpop.permute.xlu0 %1908
    %v1911 = vsel %vm634, %v1893, 0
    %v1914 = vsel %vm634, %v1909, 0
    %1916 = vmatprep.subr.bf16.mxu0 0
    %1917 = vmatpush1.bf16.xpose.msra.mxu0 0
    %1918 = vmatprep.subr.bf16.mxu0 0
    %1919 = vmatpush1.bf16.xpose.msra.mxu0 0
    %1920 = vmatprep.subr.bf16.mxu0 0
    %1921 = vmatpush1.bf16.xpose.msra.mxu0 0
    %1922 = vmatprep.subr.bf16.mxu0 0
    %1923 = vmatpush1.bf16.xpose.msra.mxu0 0
    %1924 = vmatprep.subr.bf16.mxu0 0
    %1925 = vmatpush1.bf16.xpose.msra.mxu0 0
    %1926 = vmatprep.subr.bf16.mxu0 0
    %1927 = vmatpush1.bf16.xpose.msra.mxu0 0
    %1928 = vmatprep.subr.bf16.mxu0 0
    %1929 = vmatpush1.bf16.xpose.msra.mxu0 0
    %1930 = vmatprep.subr.bf16.mxu0 0
    %1931 = vmatpush1.bf16.xpose.msra.mxu0 %v1914
    %1932 = vmatprep.subr.bf16.mxu0 0
    %1933 = vmatpush2.bf16.xpose.msra.mxu0 0
    %1934 = vmatprep.subr.bf16.mxu0 0
    %1935 = vmatpush2.bf16.xpose.msra.mxu0 0
    %1936 = vmatprep.subr.bf16.mxu0 0
    %1937 = vmatpush2.bf16.xpose.msra.mxu0 0
    %1938 = vmatprep.subr.bf16.mxu0 0
    %1939 = vmatpush2.bf16.xpose.msra.mxu0 0
    %1940 = vmatprep.subr.bf16.mxu0 0
    %1941 = vmatpush2.bf16.xpose.msra.mxu0 0
    %1942 = vmatprep.subr.bf16.mxu0 0
    %1943 = vmatpush2.bf16.xpose.msra.mxu0 0
    %1944 = vmatprep.subr.bf16.mxu0 0
    %1945 = vmatpush2.bf16.xpose.msra.mxu0 0
    %1946 = vmatprep.subr.bf16.mxu0 0
    %1947 = vmatpush2.bf16.xpose.msra.mxu0 0
    %1948 = vmatprep.mubr.bf16.mxu0 0
    %1949 = vmatmul.mubr.bf16.gmra.mxu0 %v1911
    %v1950 = vpop.f32.mrf.mxu0
    %v1951 = vadd.f32 0.0, %v1950
    %v1952 = vpop.f32.mrf.mxu0
    %v1953 = vpop.f32.mrf.mxu0
    %v1954 = vpop.f32.mrf.mxu0
    %1955 = vdwg.mxu0
    %1956 = vrot.lane.b32.xlu0 %v1896, 96
    %v1957 = vpop.permute.xlu0 %1956
    %v1959 = vsel %vm634, %v1896, 0
    %v1962 = vsel %vm634, %v1957, 0
    %1964 = vmatprep.subr.bf16.mxu0 0
    %1965 = vmatpush1.bf16.xpose.msra.mxu0 0
    %1966 = vmatprep.subr.bf16.mxu0 0
    %1967 = vmatpush1.bf16.xpose.msra.mxu0 0
    %1968 = vmatprep.subr.bf16.mxu0 0
    %1969 = vmatpush1.bf16.xpose.msra.mxu0 0
    %1970 = vmatprep.subr.bf16.mxu0 0
    %1971 = vmatpush1.bf16.xpose.msra.mxu0 0
    %1972 = vmatprep.subr.bf16.mxu0 0
    %1973 = vmatpush1.bf16.xpose.msra.mxu0 0
    %1974 = vmatprep.subr.bf16.mxu0 0
    %1975 = vmatpush1.bf16.xpose.msra.mxu0 0
    %1976 = vmatprep.subr.bf16.mxu0 0
    %1977 = vmatpush1.bf16.xpose.msra.mxu0 0
    %1978 = vmatprep.subr.bf16.mxu0 0
    %1979 = vmatpush1.bf16.xpose.msra.mxu0 %v1962
    %1980 = vmatprep.subr.bf16.mxu0 0
    %1981 = vmatpush2.bf16.xpose.msra.mxu0 0
    %1982 = vmatprep.subr.bf16.mxu0 0
    %1983 = vmatpush2.bf16.xpose.msra.mxu0 0
    %1984 = vmatprep.subr.bf16.mxu0 0
    %1985 = vmatpush2.bf16.xpose.msra.mxu0 0
    %1986 = vmatprep.subr.bf16.mxu0 0
    %1987 = vmatpush2.bf16.xpose.msra.mxu0 0
    %1988 = vmatprep.subr.bf16.mxu0 0
    %1989 = vmatpush2.bf16.xpose.msra.mxu0 0
    %1990 = vmatprep.subr.bf16.mxu0 0
    %1991 = vmatpush2.bf16.xpose.msra.mxu0 0
    %1992 = vmatprep.subr.bf16.mxu0 0
    %1993 = vmatpush2.bf16.xpose.msra.mxu0 0
    %1994 = vmatprep.subr.bf16.mxu0 0
    %1995 = vmatpush2.bf16.xpose.msra.mxu0 0
    %1996 = vmatprep.mubr.bf16.mxu0 0
    %1997 = vmatmul.mubr.bf16.gmra.mxu0 %v1959
    %v1998 = vpop.f32.mrf.mxu0
    %v1999 = vadd.f32 0.0, %v1998
    %v2000 = vpop.f32.mrf.mxu0
    %v2001 = vpop.f32.mrf.mxu0
    %v2002 = vpop.f32.mrf.mxu0
    %2003 = vdwg.mxu0
    %2004 = vrot.lane.b32.xlu0 %v1898, 96
    %v2005 = vpop.permute.xlu0 %2004
    %v2007 = vsel %vm634, %v1898, 0
    %v2010 = vsel %vm634, %v2005, 0
    %2012 = vmatprep.subr.bf16.mxu0 0
    %2013 = vmatpush1.bf16.xpose.msra.mxu0 0
    %2014 = vmatprep.subr.bf16.mxu0 0
    %2015 = vmatpush1.bf16.xpose.msra.mxu0 0
    %2016 = vmatprep.subr.bf16.mxu0 0
    %2017 = vmatpush1.bf16.xpose.msra.mxu0 0
    %2018 = vmatprep.subr.bf16.mxu0 0
    %2019 = vmatpush1.bf16.xpose.msra.mxu0 0
    %2020 = vmatprep.subr.bf16.mxu0 0
    %2021 = vmatpush1.bf16.xpose.msra.mxu0 0
    %2022 = vmatprep.subr.bf16.mxu0 0
    %2023 = vmatpush1.bf16.xpose.msra.mxu0 0
    %2024 = vmatprep.subr.bf16.mxu0 0
    %2025 = vmatpush1.bf16.xpose.msra.mxu0 0
    %2026 = vmatprep.subr.bf16.mxu0 0
    %2027 = vmatpush1.bf16.xpose.msra.mxu0 %v2010
    %2028 = vmatprep.subr.bf16.mxu0 0
    %2029 = vmatpush2.bf16.xpose.msra.mxu0 0
    %2030 = vmatprep.subr.bf16.mxu0 0
    %2031 = vmatpush2.bf16.xpose.msra.mxu0 0
    %2032 = vmatprep.subr.bf16.mxu0 0
    %2033 = vmatpush2.bf16.xpose.msra.mxu0 0
    %2034 = vmatprep.subr.bf16.mxu0 0
    %2035 = vmatpush2.bf16.xpose.msra.mxu0 0
    %2036 = vmatprep.subr.bf16.mxu0 0
    %2037 = vmatpush2.bf16.xpose.msra.mxu0 0
    %2038 = vmatprep.subr.bf16.mxu0 0
    %2039 = vmatpush2.bf16.xpose.msra.mxu0 0
    %2040 = vmatprep.subr.bf16.mxu0 0
    %2041 = vmatpush2.bf16.xpose.msra.mxu0 0
    %2042 = vmatprep.subr.bf16.mxu0 0
    %2043 = vmatpush2.bf16.xpose.msra.mxu0 0
    %2044 = vmatprep.mubr.bf16.mxu0 0
    %2045 = vmatmul.mubr.bf16.gmra.mxu0 %v2007
    %v2046 = vpop.f32.mrf.mxu0
    %v2047 = vadd.f32 0.0, %v2046
    %v2048 = vpop.f32.mrf.mxu0
    %v2049 = vpop.f32.mrf.mxu0
    %v2050 = vpop.f32.mrf.mxu0
    %2051 = vdwg.mxu0
    %2052 = vrot.lane.b32.xlu0 %v1900, 96
    %v2053 = vpop.permute.xlu0 %2052
    %v2055 = vsel %vm634, %v1900, 0
    %v2058 = vsel %vm634, %v2053, 0
    %2060 = vmatprep.subr.bf16.mxu0 0
    %2061 = vmatpush1.bf16.xpose.msra.mxu0 0
    %2062 = vmatprep.subr.bf16.mxu0 0
    %2063 = vmatpush1.bf16.xpose.msra.mxu0 0
    %2064 = vmatprep.subr.bf16.mxu0 0
    %2065 = vmatpush1.bf16.xpose.msra.mxu0 0
    %2066 = vmatprep.subr.bf16.mxu0 0
    %2067 = vmatpush1.bf16.xpose.msra.mxu0 0
    %2068 = vmatprep.subr.bf16.mxu0 0
    %2069 = vmatpush1.bf16.xpose.msra.mxu0 0
    %2070 = vmatprep.subr.bf16.mxu0 0
    %2071 = vmatpush1.bf16.xpose.msra.mxu0 0
    %2072 = vmatprep.subr.bf16.mxu0 0
    %2073 = vmatpush1.bf16.xpose.msra.mxu0 0
    %2074 = vmatprep.subr.bf16.mxu0 0
    %2075 = vmatpush1.bf16.xpose.msra.mxu0 %v2058
    %2076 = vmatprep.subr.bf16.mxu0 0
    %2077 = vmatpush2.bf16.xpose.msra.mxu0 0
    %2078 = vmatprep.subr.bf16.mxu0 0
    %2079 = vmatpush2.bf16.xpose.msra.mxu0 0
    %2080 = vmatprep.subr.bf16.mxu0 0
    %2081 = vmatpush2.bf16.xpose.msra.mxu0 0
    %2082 = vmatprep.subr.bf16.mxu0 0
    %2083 = vmatpush2.bf16.xpose.msra.mxu0 0
    %2084 = vmatprep.subr.bf16.mxu0 0
    %2085 = vmatpush2.bf16.xpose.msra.mxu0 0
    %2086 = vmatprep.subr.bf16.mxu0 0
    %2087 = vmatpush2.bf16.xpose.msra.mxu0 0
    %2088 = vmatprep.subr.bf16.mxu0 0
    %2089 = vmatpush2.bf16.xpose.msra.mxu0 0
    %2090 = vmatprep.subr.bf16.mxu0 0
    %2091 = vmatpush2.bf16.xpose.msra.mxu0 0
    %2092 = vmatprep.mubr.bf16.mxu0 0
    %2093 = vmatmul.mubr.bf16.gmra.mxu0 %v2055
    %v2094 = vpop.f32.mrf.mxu0
    %v2095 = vadd.f32 0.0, %v2094
    %v2096 = vpop.f32.mrf.mxu0
    %v2097 = vpop.f32.mrf.mxu0
    %v2098 = vpop.f32.mrf.mxu0
    %2099 = vdwg.mxu0
    %2100 = vrot.lane.b32.xlu0 %v1901, 96
    %v2101 = vpop.permute.xlu0 %2100
    %v2103 = vsel %vm634, %v1901, 0
    %v2106 = vsel %vm634, %v2101, 0
    %2108 = vmatprep.subr.bf16.mxu0 0
    %2109 = vmatpush1.bf16.xpose.msra.mxu0 0
    %2110 = vmatprep.subr.bf16.mxu0 0
    %2111 = vmatpush1.bf16.xpose.msra.mxu0 0
    %2112 = vmatprep.subr.bf16.mxu0 0
    %2113 = vmatpush1.bf16.xpose.msra.mxu0 0
    %2114 = vmatprep.subr.bf16.mxu0 0
    %2115 = vmatpush1.bf16.xpose.msra.mxu0 0
    %2116 = vmatprep.subr.bf16.mxu0 0
    %2117 = vmatpush1.bf16.xpose.msra.mxu0 0
    %2118 = vmatprep.subr.bf16.mxu0 0
    %2119 = vmatpush1.bf16.xpose.msra.mxu0 0
    %2120 = vmatprep.subr.bf16.mxu0 0
    %2121 = vmatpush1.bf16.xpose.msra.mxu0 0
    %2122 = vmatprep.subr.bf16.mxu0 0
    %2123 = vmatpush1.bf16.xpose.msra.mxu0 %v2106
    %2124 = vmatprep.subr.bf16.mxu0 0
    %2125 = vmatpush2.bf16.xpose.msra.mxu0 0
    %2126 = vmatprep.subr.bf16.mxu0 0
    %2127 = vmatpush2.bf16.xpose.msra.mxu0 0
    %2128 = vmatprep.subr.bf16.mxu0 0
    %2129 = vmatpush2.bf16.xpose.msra.mxu0 0
    %2130 = vmatprep.subr.bf16.mxu0 0
    %2131 = vmatpush2.bf16.xpose.msra.mxu0 0
    %2132 = vmatprep.subr.bf16.mxu0 0
    %2133 = vmatpush2.bf16.xpose.msra.mxu0 0
    %2134 = vmatprep.subr.bf16.mxu0 0
    %2135 = vmatpush2.bf16.xpose.msra.mxu0 0
    %2136 = vmatprep.subr.bf16.mxu0 0
    %2137 = vmatpush2.bf16.xpose.msra.mxu0 0
    %2138 = vmatprep.subr.bf16.mxu0 0
    %2139 = vmatpush2.bf16.xpose.msra.mxu0 0
    %2140 = vmatprep.mubr.bf16.mxu0 0
    %2141 = vmatmul.mubr.bf16.gmra.mxu0 %v2103
    %v2142 = vpop.f32.mrf.mxu0
    %v2143 = vadd.f32 0.0, %v2142
    %v2144 = vpop.f32.mrf.mxu0
    %v2145 = vpop.f32.mrf.mxu0
    %v2146 = vpop.f32.mrf.mxu0
    %2147 = vdwg.mxu0
    %2148 = vrot.lane.b32.xlu0 %v1903, 96
    %v2149 = vpop.permute.xlu0 %2148
    %v2151 = vsel %vm634, %v1903, 0
    %v2154 = vsel %vm634, %v2149, 0
    %2156 = vmatprep.subr.bf16.mxu0 0
    %2157 = vmatpush1.bf16.xpose.msra.mxu0 0
    %2158 = vmatprep.subr.bf16.mxu0 0
    %2159 = vmatpush1.bf16.xpose.msra.mxu0 0
    %2160 = vmatprep.subr.bf16.mxu0 0
    %2161 = vmatpush1.bf16.xpose.msra.mxu0 0
    %2162 = vmatprep.subr.bf16.mxu0 0
    %2163 = vmatpush1.bf16.xpose.msra.mxu0 0
    %2164 = vmatprep.subr.bf16.mxu0 0
    %2165 = vmatpush1.bf16.xpose.msra.mxu0 0
    %2166 = vmatprep.subr.bf16.mxu0 0
    %2167 = vmatpush1.bf16.xpose.msra.mxu0 0
    %2168 = vmatprep.subr.bf16.mxu0 0
    %2169 = vmatpush1.bf16.xpose.msra.mxu0 0
    %2170 = vmatprep.subr.bf16.mxu0 0
    %2171 = vmatpush1.bf16.xpose.msra.mxu0 %v2154
    %2172 = vmatprep.subr.bf16.mxu0 0
    %2173 = vmatpush2.bf16.xpose.msra.mxu0 0
    %2174 = vmatprep.subr.bf16.mxu0 0
    %2175 = vmatpush2.bf16.xpose.msra.mxu0 0
    %2176 = vmatprep.subr.bf16.mxu0 0
    %2177 = vmatpush2.bf16.xpose.msra.mxu0 0
    %2178 = vmatprep.subr.bf16.mxu0 0
    %2179 = vmatpush2.bf16.xpose.msra.mxu0 0
    %2180 = vmatprep.subr.bf16.mxu0 0
    %2181 = vmatpush2.bf16.xpose.msra.mxu0 0
    %2182 = vmatprep.subr.bf16.mxu0 0
    %2183 = vmatpush2.bf16.xpose.msra.mxu0 0
    %2184 = vmatprep.subr.bf16.mxu0 0
    %2185 = vmatpush2.bf16.xpose.msra.mxu0 0
    %2186 = vmatprep.subr.bf16.mxu0 0
    %2187 = vmatpush2.bf16.xpose.msra.mxu0 0
    %2188 = vmatprep.mubr.bf16.mxu0 0
    %2189 = vmatmul.mubr.bf16.gmra.mxu0 %v2151
    %v2190 = vpop.f32.mrf.mxu0
    %v2191 = vadd.f32 0.0, %v2190
    %v2192 = vpop.f32.mrf.mxu0
    %v2193 = vpop.f32.mrf.mxu0
    %v2194 = vpop.f32.mrf.mxu0
    %2195 = vdwg.mxu0
    %2196 = vrot.lane.b32.xlu0 %v1905, 96
    %v2197 = vpop.permute.xlu0 %2196
    %v2199 = vsel %vm634, %v1905, 0
    %v2202 = vsel %vm634, %v2197, 0
    %2204 = vmatprep.subr.bf16.mxu0 0
    %2205 = vmatpush1.bf16.xpose.msra.mxu0 0
    %2206 = vmatprep.subr.bf16.mxu0 0
    %2207 = vmatpush1.bf16.xpose.msra.mxu0 0
    %2208 = vmatprep.subr.bf16.mxu0 0
    %2209 = vmatpush1.bf16.xpose.msra.mxu0 0
    %2210 = vmatprep.subr.bf16.mxu0 0
    %2211 = vmatpush1.bf16.xpose.msra.mxu0 0
    %2212 = vmatprep.subr.bf16.mxu0 0
    %2213 = vmatpush1.bf16.xpose.msra.mxu0 0
    %2214 = vmatprep.subr.bf16.mxu0 0
    %2215 = vmatpush1.bf16.xpose.msra.mxu0 0
    %2216 = vmatprep.subr.bf16.mxu0 0
    %2217 = vmatpush1.bf16.xpose.msra.mxu0 0
    %2218 = vmatprep.subr.bf16.mxu0 0
    %2219 = vmatpush1.bf16.xpose.msra.mxu0 %v2202
    %2220 = vmatprep.subr.bf16.mxu0 0
    %2221 = vmatpush2.bf16.xpose.msra.mxu0 0
    %2222 = vmatprep.subr.bf16.mxu0 0
    %2223 = vmatpush2.bf16.xpose.msra.mxu0 0
    %2224 = vmatprep.subr.bf16.mxu0 0
    %2225 = vmatpush2.bf16.xpose.msra.mxu0 0
    %2226 = vmatprep.subr.bf16.mxu0 0
    %2227 = vmatpush2.bf16.xpose.msra.mxu0 0
    %2228 = vmatprep.subr.bf16.mxu0 0
    %2229 = vmatpush2.bf16.xpose.msra.mxu0 0
    %2230 = vmatprep.subr.bf16.mxu0 0
    %2231 = vmatpush2.bf16.xpose.msra.mxu0 0
    %2232 = vmatprep.subr.bf16.mxu0 0
    %2233 = vmatpush2.bf16.xpose.msra.mxu0 0
    %2234 = vmatprep.subr.bf16.mxu0 0
    %2235 = vmatpush2.bf16.xpose.msra.mxu0 0
    %2236 = vmatprep.mubr.bf16.mxu0 0
    %2237 = vmatmul.mubr.bf16.gmra.mxu0 %v2199
    %v2238 = vpop.f32.mrf.mxu0
    %v2239 = vadd.f32 0.0, %v2238
    %v2240 = vpop.f32.mrf.mxu0
    %v2241 = vpop.f32.mrf.mxu0
    %v2242 = vpop.f32.mrf.mxu0
    %2243 = vdwg.mxu0
    %2244 = vrot.lane.b32.xlu0 %v1907, 96
    %v2245 = vpop.permute.xlu0 %2244
    %v2247 = vsel %vm634, %v1907, 0
    %v2250 = vsel %vm634, %v2245, 0
    %2252 = vmatprep.subr.bf16.mxu0 0
    %2253 = vmatpush1.bf16.xpose.msra.mxu0 0
    %2254 = vmatprep.subr.bf16.mxu0 0
    %2255 = vmatpush1.bf16.xpose.msra.mxu0 0
    %2256 = vmatprep.subr.bf16.mxu0 0
    %2257 = vmatpush1.bf16.xpose.msra.mxu0 0
    %2258 = vmatprep.subr.bf16.mxu0 0
    %2259 = vmatpush1.bf16.xpose.msra.mxu0 0
    %2260 = vmatprep.subr.bf16.mxu0 0
    %2261 = vmatpush1.bf16.xpose.msra.mxu0 0
    %2262 = vmatprep.subr.bf16.mxu0 0
    %2263 = vmatpush1.bf16.xpose.msra.mxu0 0
    %2264 = vmatprep.subr.bf16.mxu0 0
    %2265 = vmatpush1.bf16.xpose.msra.mxu0 0
    %2266 = vmatprep.subr.bf16.mxu0 0
    %2267 = vmatpush1.bf16.xpose.msra.mxu0 %v2250
    %2268 = vmatprep.subr.bf16.mxu0 0
    %2269 = vmatpush2.bf16.xpose.msra.mxu0 0
    %2270 = vmatprep.subr.bf16.mxu0 0
    %2271 = vmatpush2.bf16.xpose.msra.mxu0 0
    %2272 = vmatprep.subr.bf16.mxu0 0
    %2273 = vmatpush2.bf16.xpose.msra.mxu0 0
    %2274 = vmatprep.subr.bf16.mxu0 0
    %2275 = vmatpush2.bf16.xpose.msra.mxu0 0
    %2276 = vmatprep.subr.bf16.mxu0 0
    %2277 = vmatpush2.bf16.xpose.msra.mxu0 0
    %2278 = vmatprep.subr.bf16.mxu0 0
    %2279 = vmatpush2.bf16.xpose.msra.mxu0 0
    %2280 = vmatprep.subr.bf16.mxu0 0
    %2281 = vmatpush2.bf16.xpose.msra.mxu0 0
    %2282 = vmatprep.subr.bf16.mxu0 0
    %2283 = vmatpush2.bf16.xpose.msra.mxu0 0
    %2284 = vmatprep.mubr.bf16.mxu0 0
    %2285 = vmatmul.mubr.bf16.gmra.mxu0 %v2247
    %v2286 = vpop.f32.mrf.mxu0
    %v2287 = vadd.f32 0.0, %v2286
    %v2288 = vpop.f32.mrf.mxu0
    %v2289 = vpop.f32.mrf.mxu0
    %v2290 = vpop.f32.mrf.mxu0
    %2291 = vdwg.mxu0
    %v2292 = vmul.f32 %v1951, 0.35355338
    %v2293 = vmul.f32 %v1999, 0.35355338
    %v2294 = vmul.f32 %v2047, 0.35355338
    %v2295 = vmul.f32 %v2095, 0.35355338
    %v2296 = vmul.f32 %v2143, 0.35355338
    %v2297 = vmul.f32 %v2191, 0.35355338
    %v2298 = vmul.f32 %v2239, 0.35355338
    %v2299 = vmul.f32 %v2287, 0.35355338
    %v2300 = vsel %vm1025, %v2292, -inf
    %2301 = vmax.xlane.f32.xlu0 %v2300
    %v2302 = vpop.xlane.xlu0 %2301
    %v2303 = vsel %vm1025, %v2293, -inf
    %2304 = vmax.xlane.f32.xlu0 %v2303
    %v2305 = vpop.xlane.xlu0 %2304
    %v2306 = vsel %vm1025, %v2294, -inf
    %2307 = vmax.xlane.f32.xlu0 %v2306
    %v2308 = vpop.xlane.xlu0 %2307
    %v2309 = vsel %vm1025, %v2295, -inf
    %2310 = vmax.xlane.f32.xlu0 %v2309
    %v2311 = vpop.xlane.xlu0 %2310
    %v2312 = vsel %vm1025, %v2296, -inf
    %2313 = vmax.xlane.f32.xlu0 %v2312
    %v2314 = vpop.xlane.xlu0 %2313
    %v2315 = vsel %vm1025, %v2297, -inf
    %2316 = vmax.xlane.f32.xlu0 %v2315
    %v2317 = vpop.xlane.xlu0 %2316
    %v2318 = vsel %vm1025, %v2298, -inf
    %2319 = vmax.xlane.f32.xlu0 %v2318
    %v2320 = vpop.xlane.xlu0 %2319
    %v2321 = vsel %vm1025, %v2299, -inf
    %2322 = vmax.xlane.f32.xlu0 %v2321
    %v2323 = vpop.xlane.xlu0 %2322
    %v2324 = vsub.f32 %v2292, %v2302
    %v2325 = vsub.f32 %v2293, %v2305
    %v2326 = vsub.f32 %v2294, %v2308
    %v2327 = vsub.f32 %v2295, %v2311
    %v2328 = vsub.f32 %v2296, %v2314
    %v2329 = vsub.f32 %v2297, %v2317
    %v2330 = vsub.f32 %v2298, %v2320
    %v2331 = vsub.f32 %v2299, %v2323
    %v2332 = vmul.f32 %v2324, 1.442695
    %v2333 = vpow.pop %v2332
    %v2334 = vmul.f32 %v2325, 1.442695
    %v2335 = vpow.pop %v2334
    %v2336 = vmul.f32 %v2326, 1.442695
    %v2337 = vpow.pop %v2336
    %v2338 = vmul.f32 %v2327, 1.442695
    %v2339 = vpow.pop %v2338
    %v2340 = vmul.f32 %v2328, 1.442695
    %v2341 = vpow.pop %v2340
    %v2342 = vmul.f32 %v2329, 1.442695
    %v2343 = vpow.pop %v2342
    %v2344 = vmul.f32 %v2330, 1.442695
    %v2345 = vpow.pop %v2344
    %v2346 = vmul.f32 %v2331, 1.442695
    %v2347 = vpow.pop %v2346
    %v2348 = vsel %vm1025, %v2333, 0.0
    %2349 = vadd.xlane.f32.xlu0 %v2348
    %v2350 = vpop.xlane.xlu0 %2349
    %v2351 = vsel %vm1025, %v2335, 0.0
    %2352 = vadd.xlane.f32.xlu0 %v2351
    %v2353 = vpop.xlane.xlu0 %2352
    %v2354 = vsel %vm1025, %v2337, 0.0
    %2355 = vadd.xlane.f32.xlu0 %v2354
    %v2356 = vpop.xlane.xlu0 %2355
    %v2357 = vsel %vm1025, %v2339, 0.0
    %2358 = vadd.xlane.f32.xlu0 %v2357
    %v2359 = vpop.xlane.xlu0 %2358
    %v2360 = vsel %vm1025, %v2341, 0.0
    %2361 = vadd.xlane.f32.xlu0 %v2360
    %v2362 = vpop.xlane.xlu0 %2361
    %v2363 = vsel %vm1025, %v2343, 0.0
    %2364 = vadd.xlane.f32.xlu0 %v2363
    %v2365 = vpop.xlane.xlu0 %2364
    %v2366 = vsel %vm1025, %v2345, 0.0
    %2367 = vadd.xlane.f32.xlu0 %v2366
    %v2368 = vpop.xlane.xlu0 %2367
    %v2369 = vsel %vm1025, %v2347, 0.0
    %2370 = vadd.xlane.f32.xlu0 %v2369
    %v2371 = vpop.xlane.xlu0 %2370
    %v2372 = vrcp.pop %v2350
    %v2373 = vrcp.pop %v2353
    %v2374 = vrcp.pop %v2356
    %v2375 = vrcp.pop %v2359
    %v2376 = vrcp.pop %v2362
    %v2377 = vrcp.pop %v2365
    %v2378 = vrcp.pop %v2368
    %v2379 = vrcp.pop %v2371
    %v2380 = vmul.f32 %v2333, %v2372
    %v2381 = vmul.f32 %v2335, %v2373
    %v2382 = vmul.f32 %v2337, %v2374
    %v2383 = vmul.f32 %v2339, %v2375
    %v2384 = vmul.f32 %v2341, %v2376
    %v2385 = vmul.f32 %v2343, %v2377
    %v2386 = vmul.f32 %v2345, %v2378
    %v2387 = vmul.f32 %v2347, %v2379
    %v2388 = vpack.c.bf16 %v2380, %v2380
    %v2389 = vpack.c.bf16 %v2381, %v2381
    %v2390 = vpack.c.bf16 %v2382, %v2382
    %v2391 = vpack.c.bf16 %v2383, %v2383
    %v2392 = vpack.c.bf16 %v2384, %v2384
    %v2393 = vpack.c.bf16 %v2385, %v2385
    %v2394 = vpack.c.bf16 %v2386, %v2386
    %v2395 = vpack.c.bf16 %v2387, %v2387
    %2396 = vrot.lane.b32.xlu0 %v1893, 64
    %v2397 = vpop.permute.xlu0 %2396
    %v2399 = vsel %vm1124, %v2388, 0
    %v2402 = vsel %vm1128, %v2397, 0
    %2404 = vmatprep.subr.bf16.mxu0 0
    %2405 = vmatpush1.bf16.msra.mxu0 0
    %2406 = vmatprep.subr.bf16.mxu0 0
    %2407 = vmatpush1.bf16.msra.mxu0 0
    %2408 = vmatprep.subr.bf16.mxu0 0
    %2409 = vmatpush1.bf16.msra.mxu0 0
    %2410 = vmatprep.subr.bf16.mxu0 0
    %2411 = vmatpush1.bf16.msra.mxu0 0
    %2412 = vmatprep.subr.bf16.mxu0 0
    %2413 = vmatpush1.bf16.msra.mxu0 0
    %2414 = vmatprep.subr.bf16.mxu0 0
    %2415 = vmatpush1.bf16.msra.mxu0 0
    %2416 = vmatprep.subr.bf16.mxu0 0
    %2417 = vmatpush1.bf16.msra.mxu0 0
    %2418 = vmatprep.subr.bf16.mxu0 0
    %2419 = vmatpush1.bf16.msra.mxu0 %v2402
    %2420 = vmatprep.subr.bf16.mxu0 0
    %2421 = vmatpush2.bf16.msra.mxu0 0
    %2422 = vmatprep.subr.bf16.mxu0 0
    %2423 = vmatpush2.bf16.msra.mxu0 0
    %2424 = vmatprep.subr.bf16.mxu0 0
    %2425 = vmatpush2.bf16.msra.mxu0 0
    %2426 = vmatprep.subr.bf16.mxu0 0
    %2427 = vmatpush2.bf16.msra.mxu0 0
    %2428 = vmatprep.subr.bf16.mxu0 0
    %2429 = vmatpush2.bf16.msra.mxu0 0
    %2430 = vmatprep.subr.bf16.mxu0 0
    %2431 = vmatpush2.bf16.msra.mxu0 0
    %2432 = vmatprep.subr.bf16.mxu0 0
    %2433 = vmatpush2.bf16.msra.mxu0 0
    %2434 = vmatprep.subr.bf16.mxu0 0
    %2435 = vmatpush2.bf16.msra.mxu0 0
    %2436 = vmatprep.mubr.bf16.mxu0 0
    %2437 = vmatmul.mubr.bf16.gmra.mxu0 %v2399
    %v2438 = vpop.f32.mrf.mxu0
    %v2439 = vadd.f32 0.0, %v2438
    %v2440 = vpop.f32.mrf.mxu0
    %v2441 = vpop.f32.mrf.mxu0
    %v2442 = vpop.f32.mrf.mxu0
    %2443 = vdwg.mxu0
    %2444 = vrot.lane.b32.xlu0 %v1896, 64
    %v2445 = vpop.permute.xlu0 %2444
    %v2447 = vsel %vm1124, %v2389, 0
    %v2450 = vsel %vm1128, %v2445, 0
    %2452 = vmatprep.subr.bf16.mxu0 0
    %2453 = vmatpush1.bf16.msra.mxu0 0
    %2454 = vmatprep.subr.bf16.mxu0 0
    %2455 = vmatpush1.bf16.msra.mxu0 0
    %2456 = vmatprep.subr.bf16.mxu0 0
    %2457 = vmatpush1.bf16.msra.mxu0 0
    %2458 = vmatprep.subr.bf16.mxu0 0
    %2459 = vmatpush1.bf16.msra.mxu0 0
    %2460 = vmatprep.subr.bf16.mxu0 0
    %2461 = vmatpush1.bf16.msra.mxu0 0
    %2462 = vmatprep.subr.bf16.mxu0 0
    %2463 = vmatpush1.bf16.msra.mxu0 0
    %2464 = vmatprep.subr.bf16.mxu0 0
    %2465 = vmatpush1.bf16.msra.mxu0 0
    %2466 = vmatprep.subr.bf16.mxu0 0
    %2467 = vmatpush1.bf16.msra.mxu0 %v2450
    %2468 = vmatprep.subr.bf16.mxu0 0
    %2469 = vmatpush2.bf16.msra.mxu0 0
    %2470 = vmatprep.subr.bf16.mxu0 0
    %2471 = vmatpush2.bf16.msra.mxu0 0
    %2472 = vmatprep.subr.bf16.mxu0 0
    %2473 = vmatpush2.bf16.msra.mxu0 0
    %2474 = vmatprep.subr.bf16.mxu0 0
    %2475 = vmatpush2.bf16.msra.mxu0 0
    %2476 = vmatprep.subr.bf16.mxu0 0
    %2477 = vmatpush2.bf16.msra.mxu0 0
    %2478 = vmatprep.subr.bf16.mxu0 0
    %2479 = vmatpush2.bf16.msra.mxu0 0
    %2480 = vmatprep.subr.bf16.mxu0 0
    %2481 = vmatpush2.bf16.msra.mxu0 0
    %2482 = vmatprep.subr.bf16.mxu0 0
    %2483 = vmatpush2.bf16.msra.mxu0 0
    %2484 = vmatprep.mubr.bf16.mxu0 0
    %2485 = vmatmul.mubr.bf16.gmra.mxu0 %v2447
    %v2486 = vpop.f32.mrf.mxu0
    %v2487 = vadd.f32 0.0, %v2486
    %v2488 = vpop.f32.mrf.mxu0
    %v2489 = vpop.f32.mrf.mxu0
    %v2490 = vpop.f32.mrf.mxu0
    %2491 = vdwg.mxu0
    %2492 = vrot.lane.b32.xlu0 %v1898, 64
    %v2493 = vpop.permute.xlu0 %2492
    %v2495 = vsel %vm1124, %v2390, 0
    %v2498 = vsel %vm1128, %v2493, 0
    %2500 = vmatprep.subr.bf16.mxu0 0
    %2501 = vmatpush1.bf16.msra.mxu0 0
    %2502 = vmatprep.subr.bf16.mxu0 0
    %2503 = vmatpush1.bf16.msra.mxu0 0
    %2504 = vmatprep.subr.bf16.mxu0 0
    %2505 = vmatpush1.bf16.msra.mxu0 0
    %2506 = vmatprep.subr.bf16.mxu0 0
    %2507 = vmatpush1.bf16.msra.mxu0 0
    %2508 = vmatprep.subr.bf16.mxu0 0
    %2509 = vmatpush1.bf16.msra.mxu0 0
    %2510 = vmatprep.subr.bf16.mxu0 0
    %2511 = vmatpush1.bf16.msra.mxu0 0
    %2512 = vmatprep.subr.bf16.mxu0 0
    %2513 = vmatpush1.bf16.msra.mxu0 0
    %2514 = vmatprep.subr.bf16.mxu0 0
    %2515 = vmatpush1.bf16.msra.mxu0 %v2498
    %2516 = vmatprep.subr.bf16.mxu0 0
    %2517 = vmatpush2.bf16.msra.mxu0 0
    %2518 = vmatprep.subr.bf16.mxu0 0
    %2519 = vmatpush2.bf16.msra.mxu0 0
    %2520 = vmatprep.subr.bf16.mxu0 0
    %2521 = vmatpush2.bf16.msra.mxu0 0
    %2522 = vmatprep.subr.bf16.mxu0 0
    %2523 = vmatpush2.bf16.msra.mxu0 0
    %2524 = vmatprep.subr.bf16.mxu0 0
    %2525 = vmatpush2.bf16.msra.mxu0 0
    %2526 = vmatprep.subr.bf16.mxu0 0
    %2527 = vmatpush2.bf16.msra.mxu0 0
    %2528 = vmatprep.subr.bf16.mxu0 0
    %2529 = vmatpush2.bf16.msra.mxu0 0
    %2530 = vmatprep.subr.bf16.mxu0 0
    %2531 = vmatpush2.bf16.msra.mxu0 0
    %2532 = vmatprep.mubr.bf16.mxu0 0
    %2533 = vmatmul.mubr.bf16.gmra.mxu0 %v2495
    %v2534 = vpop.f32.mrf.mxu0
    %v2535 = vadd.f32 0.0, %v2534
    %v2536 = vpop.f32.mrf.mxu0
    %v2537 = vpop.f32.mrf.mxu0
    %v2538 = vpop.f32.mrf.mxu0
    %2539 = vdwg.mxu0
    %2540 = vrot.lane.b32.xlu0 %v1900, 64
    %v2541 = vpop.permute.xlu0 %2540
    %v2543 = vsel %vm1124, %v2391, 0
    %v2546 = vsel %vm1128, %v2541, 0
    %2548 = vmatprep.subr.bf16.mxu0 0
    %2549 = vmatpush1.bf16.msra.mxu0 0
    %2550 = vmatprep.subr.bf16.mxu0 0
    %2551 = vmatpush1.bf16.msra.mxu0 0
    %2552 = vmatprep.subr.bf16.mxu0 0
    %2553 = vmatpush1.bf16.msra.mxu0 0
    %2554 = vmatprep.subr.bf16.mxu0 0
    %2555 = vmatpush1.bf16.msra.mxu0 0
    %2556 = vmatprep.subr.bf16.mxu0 0
    %2557 = vmatpush1.bf16.msra.mxu0 0
    %2558 = vmatprep.subr.bf16.mxu0 0
    %2559 = vmatpush1.bf16.msra.mxu0 0
    %2560 = vmatprep.subr.bf16.mxu0 0
    %2561 = vmatpush1.bf16.msra.mxu0 0
    %2562 = vmatprep.subr.bf16.mxu0 0
    %2563 = vmatpush1.bf16.msra.mxu0 %v2546
    %2564 = vmatprep.subr.bf16.mxu0 0
    %2565 = vmatpush2.bf16.msra.mxu0 0
    %2566 = vmatprep.subr.bf16.mxu0 0
    %2567 = vmatpush2.bf16.msra.mxu0 0
    %2568 = vmatprep.subr.bf16.mxu0 0
    %2569 = vmatpush2.bf16.msra.mxu0 0
    %2570 = vmatprep.subr.bf16.mxu0 0
    %2571 = vmatpush2.bf16.msra.mxu0 0
    %2572 = vmatprep.subr.bf16.mxu0 0
    %2573 = vmatpush2.bf16.msra.mxu0 0
    %2574 = vmatprep.subr.bf16.mxu0 0
    %2575 = vmatpush2.bf16.msra.mxu0 0
    %2576 = vmatprep.subr.bf16.mxu0 0
    %2577 = vmatpush2.bf16.msra.mxu0 0
    %2578 = vmatprep.subr.bf16.mxu0 0
    %2579 = vmatpush2.bf16.msra.mxu0 0
    %2580 = vmatprep.mubr.bf16.mxu0 0
    %2581 = vmatmul.mubr.bf16.gmra.mxu0 %v2543
    %v2582 = vpop.f32.mrf.mxu0
    %v2583 = vadd.f32 0.0, %v2582
    %v2584 = vpop.f32.mrf.mxu0
    %v2585 = vpop.f32.mrf.mxu0
    %v2586 = vpop.f32.mrf.mxu0
    %2587 = vdwg.mxu0
    %2588 = vrot.lane.b32.xlu0 %v1901, 64
    %v2589 = vpop.permute.xlu0 %2588
    %v2591 = vsel %vm1124, %v2392, 0
    %v2594 = vsel %vm1128, %v2589, 0
    %2596 = vmatprep.subr.bf16.mxu0 0
    %2597 = vmatpush1.bf16.msra.mxu0 0
    %2598 = vmatprep.subr.bf16.mxu0 0
    %2599 = vmatpush1.bf16.msra.mxu0 0
    %2600 = vmatprep.subr.bf16.mxu0 0
    %2601 = vmatpush1.bf16.msra.mxu0 0
    %2602 = vmatprep.subr.bf16.mxu0 0
    %2603 = vmatpush1.bf16.msra.mxu0 0
    %2604 = vmatprep.subr.bf16.mxu0 0
    %2605 = vmatpush1.bf16.msra.mxu0 0
    %2606 = vmatprep.subr.bf16.mxu0 0
    %2607 = vmatpush1.bf16.msra.mxu0 0
    %2608 = vmatprep.subr.bf16.mxu0 0
    %2609 = vmatpush1.bf16.msra.mxu0 0
    %2610 = vmatprep.subr.bf16.mxu0 0
    %2611 = vmatpush1.bf16.msra.mxu0 %v2594
    %2612 = vmatprep.subr.bf16.mxu0 0
    %2613 = vmatpush2.bf16.msra.mxu0 0
    %2614 = vmatprep.subr.bf16.mxu0 0
    %2615 = vmatpush2.bf16.msra.mxu0 0
    %2616 = vmatprep.subr.bf16.mxu0 0
    %2617 = vmatpush2.bf16.msra.mxu0 0
    %2618 = vmatprep.subr.bf16.mxu0 0
    %2619 = vmatpush2.bf16.msra.mxu0 0
    %2620 = vmatprep.subr.bf16.mxu0 0
    %2621 = vmatpush2.bf16.msra.mxu0 0
    %2622 = vmatprep.subr.bf16.mxu0 0
    %2623 = vmatpush2.bf16.msra.mxu0 0
    %2624 = vmatprep.subr.bf16.mxu0 0
    %2625 = vmatpush2.bf16.msra.mxu0 0
    %2626 = vmatprep.subr.bf16.mxu0 0
    %2627 = vmatpush2.bf16.msra.mxu0 0
    %2628 = vmatprep.mubr.bf16.mxu0 0
    %2629 = vmatmul.mubr.bf16.gmra.mxu0 %v2591
    %v2630 = vpop.f32.mrf.mxu0
    %v2631 = vadd.f32 0.0, %v2630
    %v2632 = vpop.f32.mrf.mxu0
    %v2633 = vpop.f32.mrf.mxu0
    %v2634 = vpop.f32.mrf.mxu0
    %2635 = vdwg.mxu0
    %2636 = vrot.lane.b32.xlu0 %v1903, 64
    %v2637 = vpop.permute.xlu0 %2636
    %v2639 = vsel %vm1124, %v2393, 0
    %v2642 = vsel %vm1128, %v2637, 0
    %2644 = vmatprep.subr.bf16.mxu0 0
    %2645 = vmatpush1.bf16.msra.mxu0 0
    %2646 = vmatprep.subr.bf16.mxu0 0
    %2647 = vmatpush1.bf16.msra.mxu0 0
    %2648 = vmatprep.subr.bf16.mxu0 0
    %2649 = vmatpush1.bf16.msra.mxu0 0
    %2650 = vmatprep.subr.bf16.mxu0 0
    %2651 = vmatpush1.bf16.msra.mxu0 0
    %2652 = vmatprep.subr.bf16.mxu0 0
    %2653 = vmatpush1.bf16.msra.mxu0 0
    %2654 = vmatprep.subr.bf16.mxu0 0
    %2655 = vmatpush1.bf16.msra.mxu0 0
    %2656 = vmatprep.subr.bf16.mxu0 0
    %2657 = vmatpush1.bf16.msra.mxu0 0
    %2658 = vmatprep.subr.bf16.mxu0 0
    %2659 = vmatpush1.bf16.msra.mxu0 %v2642
    %2660 = vmatprep.subr.bf16.mxu0 0
    %2661 = vmatpush2.bf16.msra.mxu0 0
    %2662 = vmatprep.subr.bf16.mxu0 0
    %2663 = vmatpush2.bf16.msra.mxu0 0
    %2664 = vmatprep.subr.bf16.mxu0 0
    %2665 = vmatpush2.bf16.msra.mxu0 0
    %2666 = vmatprep.subr.bf16.mxu0 0
    %2667 = vmatpush2.bf16.msra.mxu0 0
    %2668 = vmatprep.subr.bf16.mxu0 0
    %2669 = vmatpush2.bf16.msra.mxu0 0
    %2670 = vmatprep.subr.bf16.mxu0 0
    %2671 = vmatpush2.bf16.msra.mxu0 0
    %2672 = vmatprep.subr.bf16.mxu0 0
    %2673 = vmatpush2.bf16.msra.mxu0 0
    %2674 = vmatprep.subr.bf16.mxu0 0
    %2675 = vmatpush2.bf16.msra.mxu0 0
    %2676 = vmatprep.mubr.bf16.mxu0 0
    %2677 = vmatmul.mubr.bf16.gmra.mxu0 %v2639
    %v2678 = vpop.f32.mrf.mxu0
    %v2679 = vadd.f32 0.0, %v2678
    %v2680 = vpop.f32.mrf.mxu0
    %v2681 = vpop.f32.mrf.mxu0
    %v2682 = vpop.f32.mrf.mxu0
    %2683 = vdwg.mxu0
    %2684 = vrot.lane.b32.xlu0 %v1905, 64
    %v2685 = vpop.permute.xlu0 %2684
    %v2687 = vsel %vm1124, %v2394, 0
    %v2690 = vsel %vm1128, %v2685, 0
    %2692 = vmatprep.subr.bf16.mxu0 0
    %2693 = vmatpush1.bf16.msra.mxu0 0
    %2694 = vmatprep.subr.bf16.mxu0 0
    %2695 = vmatpush1.bf16.msra.mxu0 0
    %2696 = vmatprep.subr.bf16.mxu0 0
    %2697 = vmatpush1.bf16.msra.mxu0 0
    %2698 = vmatprep.subr.bf16.mxu0 0
    %2699 = vmatpush1.bf16.msra.mxu0 0
    %2700 = vmatprep.subr.bf16.mxu0 0
    %2701 = vmatpush1.bf16.msra.mxu0 0
    %2702 = vmatprep.subr.bf16.mxu0 0
    %2703 = vmatpush1.bf16.msra.mxu0 0
    %2704 = vmatprep.subr.bf16.mxu0 0
    %2705 = vmatpush1.bf16.msra.mxu0 0
    %2706 = vmatprep.subr.bf16.mxu0 0
    %2707 = vmatpush1.bf16.msra.mxu0 %v2690
    %2708 = vmatprep.subr.bf16.mxu0 0
    %2709 = vmatpush2.bf16.msra.mxu0 0
    %2710 = vmatprep.subr.bf16.mxu0 0
    %2711 = vmatpush2.bf16.msra.mxu0 0
    %2712 = vmatprep.subr.bf16.mxu0 0
    %2713 = vmatpush2.bf16.msra.mxu0 0
    %2714 = vmatprep.subr.bf16.mxu0 0
    %2715 = vmatpush2.bf16.msra.mxu0 0
    %2716 = vmatprep.subr.bf16.mxu0 0
    %2717 = vmatpush2.bf16.msra.mxu0 0
    %2718 = vmatprep.subr.bf16.mxu0 0
    %2719 = vmatpush2.bf16.msra.mxu0 0
    %2720 = vmatprep.subr.bf16.mxu0 0
    %2721 = vmatpush2.bf16.msra.mxu0 0
    %2722 = vmatprep.subr.bf16.mxu0 0
    %2723 = vmatpush2.bf16.msra.mxu0 0
    %2724 = vmatprep.mubr.bf16.mxu0 0
    %2725 = vmatmul.mubr.bf16.gmra.mxu0 %v2687
    %v2726 = vpop.f32.mrf.mxu0
    %v2727 = vadd.f32 0.0, %v2726
    %v2728 = vpop.f32.mrf.mxu0
    %v2729 = vpop.f32.mrf.mxu0
    %v2730 = vpop.f32.mrf.mxu0
    %2731 = vdwg.mxu0
    %2732 = vrot.lane.b32.xlu0 %v1907, 64
    %v2733 = vpop.permute.xlu0 %2732
    %v2735 = vsel %vm1124, %v2395, 0
    %v2738 = vsel %vm1128, %v2733, 0
    %2740 = vmatprep.subr.bf16.mxu0 0
    %2741 = vmatpush1.bf16.msra.mxu0 0
    %2742 = vmatprep.subr.bf16.mxu0 0
    %2743 = vmatpush1.bf16.msra.mxu0 0
    %2744 = vmatprep.subr.bf16.mxu0 0
    %2745 = vmatpush1.bf16.msra.mxu0 0
    %2746 = vmatprep.subr.bf16.mxu0 0
    %2747 = vmatpush1.bf16.msra.mxu0 0
    %2748 = vmatprep.subr.bf16.mxu0 0
    %2749 = vmatpush1.bf16.msra.mxu0 0
    %2750 = vmatprep.subr.bf16.mxu0 0
    %2751 = vmatpush1.bf16.msra.mxu0 0
    %2752 = vmatprep.subr.bf16.mxu0 0
    %2753 = vmatpush1.bf16.msra.mxu0 0
    %2754 = vmatprep.subr.bf16.mxu0 0
    %2755 = vmatpush1.bf16.msra.mxu0 %v2738
    %2756 = vmatprep.subr.bf16.mxu0 0
    %2757 = vmatpush2.bf16.msra.mxu0 0
    %2758 = vmatprep.subr.bf16.mxu0 0
    %2759 = vmatpush2.bf16.msra.mxu0 0
    %2760 = vmatprep.subr.bf16.mxu0 0
    %2761 = vmatpush2.bf16.msra.mxu0 0
    %2762 = vmatprep.subr.bf16.mxu0 0
    %2763 = vmatpush2.bf16.msra.mxu0 0
    %2764 = vmatprep.subr.bf16.mxu0 0
    %2765 = vmatpush2.bf16.msra.mxu0 0
    %2766 = vmatprep.subr.bf16.mxu0 0
    %2767 = vmatpush2.bf16.msra.mxu0 0
    %2768 = vmatprep.subr.bf16.mxu0 0
    %2769 = vmatpush2.bf16.msra.mxu0 0
    %2770 = vmatprep.subr.bf16.mxu0 0
    %2771 = vmatpush2.bf16.msra.mxu0 0
    %2772 = vmatprep.mubr.bf16.mxu0 0
    %2773 = vmatmul.mubr.bf16.gmra.mxu0 %v2735
    %v2774 = vpop.f32.mrf.mxu0
    %v2775 = vadd.f32 0.0, %v2774
    %v2776 = vpop.f32.mrf.mxu0
    %v2777 = vpop.f32.mrf.mxu0
    %v2778 = vpop.f32.mrf.mxu0
    %2779 = vdwg.mxu0
    %2781 = vrot.lane.b32.xlu0 %v2487, 8
    %v2782 = vpop.permute.xlu0 %2781
    %2785 = vrot.lane.b32.xlu0 %v2535, 16
    %v2786 = vpop.permute.xlu0 %2785
    %2789 = vrot.lane.b32.xlu0 %v2583, 24
    %v2790 = vpop.permute.xlu0 %2789
    %v2792 = vsel %vm634, %v2439, %v2782
    %v2793 = vsel %vm1521, %v2792, %v2786
    %v2794 = vsel %vm1523, %v2793, %v2790
    %2796 = vrot.lane.b32.xlu0 %v2679, 8
    %v2797 = vpop.permute.xlu0 %2796
    %2800 = vrot.lane.b32.xlu0 %v2727, 16
    %v2801 = vpop.permute.xlu0 %2800
    %2804 = vrot.lane.b32.xlu0 %v2775, 24
    %v2805 = vpop.permute.xlu0 %2804
    %v2807 = vsel %vm634, %v2631, %v2797
    %v2808 = vsel %vm1521, %v2807, %v2801
    %v2809 = vsel %vm1523, %v2808, %v2805
    %v2811 = vrot.slane %v2809, 6
    %v2813 = vsel %vm547, %v2794, %v2811
    %v2814 = vpack.c.bf16 %v2813, %v2813
    %s2815 = scalar_lea.vmem %s7, 16
    %v2816 = vld [vmem:[%s2815] sm:$0xf]
    %v2817 = vld [vmem:[%s2815 + $0x4] sm:$0xf]
    %v2818 = vld [vmem:[%s2815 + $0x8] sm:$0xf]
    %v2819 = vld [vmem:[%s2815 + $0xc] sm:$0xf]
    %s2820 = scalar_lea.vmem %s8, 1
    %v2821 = vld [vmem:[%s2820] sm:$0x1]
    %v2823 = vlaneseq
    %v2824 = vshrl.u32 %v2823, 7
    %v2825 = vsub.s32 0, %v2824
    %v2826 = vrot.slane %v2821, %v2825
    %v2832 = vunpack.c.l.b16 %v2816
    %v2833 = vunpack.c.l.b16 %v2817
    %v2834 = vunpack.c.l.b16 %v2818
    %v2835 = vunpack.c.l.b16 %v2819
    %v2836 = vpack.c.b16 %v2833, %v2832
    %v2837 = vpack.c.b16 %v2835, %v2834
    %v2841 = vsel %vm573, %v2814, 0
    %2843 = vmatprep.subr.bf16.mxu0 0
    %2844 = vmatpush1.bf16.msra.mxu0 0
    %2845 = vmatprep.subr.bf16.mxu0 0
    %2846 = vmatpush1.bf16.msra.mxu0 0
    %2847 = vmatprep.subr.bf16.mxu0 0
    %2848 = vmatpush1.bf16.msra.mxu0 0
    %2849 = vmatprep.subr.bf16.mxu0 0
    %2850 = vmatpush1.bf16.msra.mxu0 0
    %2851 = vmatprep.subr.bf16.mxu0 0
    %2852 = vmatpush1.bf16.msra.mxu0 0
    %2853 = vmatprep.subr.bf16.mxu0 0
    %2854 = vmatpush1.bf16.msra.mxu0 0
    %2855 = vmatprep.subr.bf16.mxu0 0
    %2856 = vmatpush1.bf16.msra.mxu0 %v2837
    %2857 = vmatprep.subr.bf16.mxu0 0
    %2858 = vmatpush1.bf16.msra.mxu0 %v2836
    %2859 = vmatprep.subr.bf16.mxu0 0
    %2860 = vmatpush2.bf16.msra.mxu0 0
    %2861 = vmatprep.subr.bf16.mxu0 0
    %2862 = vmatpush2.bf16.msra.mxu0 0
    %2863 = vmatprep.subr.bf16.mxu0 0
    %2864 = vmatpush2.bf16.msra.mxu0 0
    %2865 = vmatprep.subr.bf16.mxu0 0
    %2866 = vmatpush2.bf16.msra.mxu0 0
    %2867 = vmatprep.subr.bf16.mxu0 0
    %2868 = vmatpush2.bf16.msra.mxu0 0
    %2869 = vmatprep.subr.bf16.mxu0 0
    %2870 = vmatpush2.bf16.msra.mxu0 0
    %2871 = vmatprep.subr.bf16.mxu0 0
    %2872 = vmatpush2.bf16.msra.mxu0 0
    %2873 = vmatprep.subr.bf16.mxu0 0
    %2874 = vmatpush2.bf16.msra.mxu0 0
    %2875 = vmatprep.mubr.bf16.mxu0 0
    %2876 = vmatmul.mubr.bf16.gmra.mxu0 %v2841
    %v2877 = vpop.f32.mrf.mxu0
    %v2878 = vadd.f32 %v2826, %v2877
    %v2879 = vpop.f32.mrf.mxu0
    %v2880 = vpop.f32.mrf.mxu0
    %v2881 = vpop.f32.mrf.mxu0
    %2882 = vdwg.mxu0
    %v2883 = vadd.f32 %v1823, %v2878
    %s2884 = scalar_lea.vmem %s9, 1
    %v2885 = vld [vmem:[%s2884] sm:$0x1]
    %s2886 = scalar_lea.vmem %s10, 1
    %v2887 = vld [vmem:[%s2886] sm:$0x1]
    %v2888 = vsel %vm1614, %v2883, 0.0
    %2889 = vadd.xlane.f32.xlu0 %v2888
    %v2890 = vpop.xlane.xlu0 %2889
    %v2891 = vmul.f32 %v2890, %v1618
    %v2892 = vsub.f32 %v2883, %v2891
    %v2893 = vmul.f32 %v2892, %v2892
    %v2894 = vsel %vm1614, %v2893, 0.0
    %2895 = vadd.xlane.f32.xlu0 %v2894
    %v2896 = vpop.xlane.xlu0 %2895
    %v2897 = vmul.f32 %v2896, %v1618
    %v2898 = vadd.f32 %v2897, 1e-05
    %v2899 = vrsqrt.pop %v2898
    %v2900 = vmul.f32 %v2892, %v2899
    %v2902 = vlaneseq
    %v2903 = vshrl.u32 %v2902, 7
    %v2904 = vsub.s32 0, %v2903
    %v2905 = vrot.slane %v2885, %v2904
    %v2907 = vmul.f32 %v2900, %v2905
    %v2909 = vlaneseq
    %v2910 = vshrl.u32 %v2909, 7
    %v2911 = vsub.s32 0, %v2910
    %v2912 = vrot.slane %v2887, %v2911
    %v2914 = vadd.f32 %v2907, %v2912
    %v2915 = vpack.c.bf16 %v2914, %v2914
    %s2916 = scalar_lea.vmem %s11, 16
    %v2917 = vld [vmem:[%s2916] sm:$0xf]
    %v2918 = vld [vmem:[%s2916 + $0x4] sm:$0xf]
    %v2919 = vld [vmem:[%s2916 + $0x8] sm:$0xf]
    %v2920 = vld [vmem:[%s2916 + $0xc] sm:$0xf]
    %s2921 = scalar_lea.vmem %s12, 1
    %v2922 = vld [vmem:[%s2921] sm:$0x1]
    %v2924 = vlaneseq
    %v2925 = vshrl.u32 %v2924, 7
    %v2926 = vsub.s32 0, %v2925
    %v2927 = vrot.slane %v2922, %v2926
    %v2933 = vunpack.c.l.b16 %v2917
    %v2934 = vunpack.c.l.b16 %v2918
    %v2935 = vunpack.c.l.b16 %v2919
    %v2936 = vunpack.c.l.b16 %v2920
    %v2937 = vpack.c.b16 %v2934, %v2933
    %v2938 = vpack.c.b16 %v2936, %v2935
    %v2942 = vsel %vm573, %v2915, 0
    %2944 = vmatprep.subr.bf16.mxu0 0
    %2945 = vmatpush1.bf16.msra.mxu0 0
    %2946 = vmatprep.subr.bf16.mxu0 0
    %2947 = vmatpush1.bf16.msra.mxu0 0
    %2948 = vmatprep.subr.bf16.mxu0 0
    %2949 = vmatpush1.bf16.msra.mxu0 0
    %2950 = vmatprep.subr.bf16.mxu0 0
    %2951 = vmatpush1.bf16.msra.mxu0 0
    %2952 = vmatprep.subr.bf16.mxu0 0
    %2953 = vmatpush1.bf16.msra.mxu0 0
    %2954 = vmatprep.subr.bf16.mxu0 0
    %2955 = vmatpush1.bf16.msra.mxu0 0
    %2956 = vmatprep.subr.bf16.mxu0 0
    %2957 = vmatpush1.bf16.msra.mxu0 %v2938
    %2958 = vmatprep.subr.bf16.mxu0 0
    %2959 = vmatpush1.bf16.msra.mxu0 %v2937
    %2960 = vmatprep.subr.bf16.mxu0 0
    %2961 = vmatpush2.bf16.msra.mxu0 0
    %2962 = vmatprep.subr.bf16.mxu0 0
    %2963 = vmatpush2.bf16.msra.mxu0 0
    %2964 = vmatprep.subr.bf16.mxu0 0
    %2965 = vmatpush2.bf16.msra.mxu0 0
    %2966 = vmatprep.subr.bf16.mxu0 0
    %2967 = vmatpush2.bf16.msra.mxu0 0
    %2968 = vmatprep.subr.bf16.mxu0 0
    %2969 = vmatpush2.bf16.msra.mxu0 0
    %2970 = vmatprep.subr.bf16.mxu0 0
    %2971 = vmatpush2.bf16.msra.mxu0 0
    %2972 = vmatprep.subr.bf16.mxu0 0
    %2973 = vmatpush2.bf16.msra.mxu0 0
    %2974 = vmatprep.subr.bf16.mxu0 0
    %2975 = vmatpush2.bf16.msra.mxu0 0
    %2976 = vmatprep.mubr.bf16.mxu0 0
    %2977 = vmatmul.mubr.bf16.gmra.mxu0 %v2942
    %v2978 = vpop.f32.mrf.mxu0
    %v2979 = vadd.f32 %v2927, %v2978
    %v2980 = vpop.f32.mrf.mxu0
    %v2981 = vpop.f32.mrf.mxu0
    %v2982 = vpop.f32.mrf.mxu0
    %2983 = vdwg.mxu0
    %v2984 = vmax.f32 %v2979, 0.0
    %v2985 = vpack.c.bf16 %v2984, %v2984
    %s2986 = scalar_lea.vmem %s13, 32
    %v2987 = vld [vmem:[%s2986] sm:$0xf]
    %v2988 = vld [vmem:[%s2986 + $0x4] sm:$0xf]
    %v2989 = vld [vmem:[%s2986 + $0x8] sm:$0xf]
    %v2990 = vld [vmem:[%s2986 + $0xc] sm:$0xf]
    %v2991 = vld [vmem:[%s2986 + $0x10] sm:$0xf]
    %v2992 = vld [vmem:[%s2986 + $0x14] sm:$0xf]
    %v2993 = vld [vmem:[%s2986 + $0x18] sm:$0xf]
    %v2994 = vld [vmem:[%s2986 + $0x1c] sm:$0xf]
    %s2995 = scalar_lea.vmem %s14, 1
    %v2996 = vld [vmem:[%s2995] sm:$0x1]
    %v2998 = vlaneseq
    %v2999 = vshrl.u32 %v2998, 7
    %v3000 = vsub.s32 0, %v2999
    %v3001 = vrot.slane %v2996, %v3000
    %v3011 = vunpack.c.l.b16 %v2987
    %v3012 = vunpack.c.l.b16 %v2988
    %v3013 = vunpack.c.l.b16 %v2989
    %v3014 = vunpack.c.l.b16 %v2990
    %v3015 = vunpack.c.l.b16 %v2991
    %v3016 = vunpack.c.l.b16 %v2992
    %v3017 = vunpack.c.l.b16 %v2993
    %v3018 = vunpack.c.l.b16 %v2994
    %v3019 = vpack.c.b16 %v3012, %v3011
    %v3020 = vpack.c.b16 %v3014, %v3013
    %v3021 = vpack.c.b16 %v3016, %v3015
    %v3022 = vpack.c.b16 %v3018, %v3017
    %v3028 = vsel %vm403, %v2985, 0
    %3030 = vmatprep.subr.bf16.mxu0 0
    %3031 = vmatpush1.bf16.msra.mxu0 0
    %3032 = vmatprep.subr.bf16.mxu0 0
    %3033 = vmatpush1.bf16.msra.mxu0 0
    %3034 = vmatprep.subr.bf16.mxu0 0
    %3035 = vmatpush1.bf16.msra.mxu0 0
    %3036 = vmatprep.subr.bf16.mxu0 0
    %3037 = vmatpush1.bf16.msra.mxu0 0
    %3038 = vmatprep.subr.bf16.mxu0 0
    %3039 = vmatpush1.bf16.msra.mxu0 %v3022
    %3040 = vmatprep.subr.bf16.mxu0 0
    %3041 = vmatpush1.bf16.msra.mxu0 %v3021
    %3042 = vmatprep.subr.bf16.mxu0 0
    %3043 = vmatpush1.bf16.msra.mxu0 %v3020
    %3044 = vmatprep.subr.bf16.mxu0 0
    %3045 = vmatpush1.bf16.msra.mxu0 %v3019
    %3046 = vmatprep.subr.bf16.mxu0 0
    %3047 = vmatpush2.bf16.msra.mxu0 0
    %3048 = vmatprep.subr.bf16.mxu0 0
    %3049 = vmatpush2.bf16.msra.mxu0 0
    %3050 = vmatprep.subr.bf16.mxu0 0
    %3051 = vmatpush2.bf16.msra.mxu0 0
    %3052 = vmatprep.subr.bf16.mxu0 0
    %3053 = vmatpush2.bf16.msra.mxu0 0
    %3054 = vmatprep.subr.bf16.mxu0 0
    %3055 = vmatpush2.bf16.msra.mxu0 0
    %3056 = vmatprep.subr.bf16.mxu0 0
    %3057 = vmatpush2.bf16.msra.mxu0 0
    %3058 = vmatprep.subr.bf16.mxu0 0
    %3059 = vmatpush2.bf16.msra.mxu0 0
    %3060 = vmatprep.subr.bf16.mxu0 0
    %3061 = vmatpush2.bf16.msra.mxu0 0
    %3062 = vmatprep.mubr.bf16.mxu0 0
    %3063 = vmatmul.mubr.bf16.gmra.mxu0 %v3028
    %v3064 = vpop.f32.mrf.mxu0
    %v3065 = vadd.f32 %v3001, %v3064
    %v3066 = vpop.f32.mrf.mxu0
    %v3067 = vpop.f32.mrf.mxu0
    %v3068 = vpop.f32.mrf.mxu0
    %3069 = vdwg.mxu0
    %v3070 = vadd.f32 %v2914, %v3065
    %s3071 = scalar_lea.vmem %s15, 1
    %v3072 = vld [vmem:[%s3071] sm:$0x1]
    %s3073 = scalar_lea.vmem %s16, 1
    %v3074 = vld [vmem:[%s3073] sm:$0x1]
    %v3075 = vsel %vm1614, %v3070, 0.0
    %3076 = vadd.xlane.f32.xlu0 %v3075
    %v3077 = vpop.xlane.xlu0 %3076
    %v3078 = vmul.f32 %v3077, %v1618
    %v3079 = vsub.f32 %v3070, %v3078
    %v3080 = vmul.f32 %v3079, %v3079
    %v3081 = vsel %vm1614, %v3080, 0.0
    %3082 = vadd.xlane.f32.xlu0 %v3081
    %v3083 = vpop.xlane.xlu0 %3082
    %v3084 = vmul.f32 %v3083, %v1618
    %v3085 = vadd.f32 %v3084, 1e-05
    %v3086 = vrsqrt.pop %v3085
    %v3087 = vmul.f32 %v3079, %v3086
    %v3089 = vlaneseq
    %v3090 = vshrl.u32 %v3089, 7
    %v3091 = vsub.s32 0, %v3090
    %v3092 = vrot.slane %v3072, %v3091
    %v3094 = vmul.f32 %v3087, %v3092
    %v3096 = vlaneseq
    %v3097 = vshrl.u32 %v3096, 7
    %v3098 = vsub.s32 0, %v3097
    %v3099 = vrot.slane %v3074, %v3098
    %v3101 = vadd.f32 %v3094, %v3099
    %v3102 = vpack.c.bf16 %v3101, %v3101
    %v3103 = vld [vmem:[%s17] sm:$0xf]
    %v3104 = vld [vmem:[%s17 + $0x4] sm:$0xf]
    %v3105 = vld [vmem:[%s17 + $0x8] sm:$0xf]
    %v3106 = vld [vmem:[%s17 + $0xc] sm:$0xf]
    %v3107 = vld [vmem:[%s18] sm:$0x1]
    %v3109 = vlaneseq
    %v3110 = vshrl.u32 %v3109, 7
    %v3111 = vsub.s32 0, %v3110
    %v3112 = vrot.slane %v3107, %v3111
    %v3118 = vunpack.c.l.b16 %v3103
    %v3119 = vunpack.c.l.b16 %v3104
    %v3120 = vunpack.c.l.b16 %v3105
    %v3121 = vunpack.c.l.b16 %v3106
    %v3122 = vpack.c.b16 %v3119, %v3118
    %v3123 = vpack.c.b16 %v3121, %v3120
    %v3127 = vsel %vm573, %v3102, 0
    %3129 = vmatprep.subr.bf16.mxu0 0
    %3130 = vmatpush1.bf16.msra.mxu0 0
    %3131 = vmatprep.subr.bf16.mxu0 0
    %3132 = vmatpush1.bf16.msra.mxu0 0
    %3133 = vmatprep.subr.bf16.mxu0 0
    %3134 = vmatpush1.bf16.msra.mxu0 0
    %3135 = vmatprep.subr.bf16.mxu0 0
    %3136 = vmatpush1.bf16.msra.mxu0 0
    %3137 = vmatprep.subr.bf16.mxu0 0
    %3138 = vmatpush1.bf16.msra.mxu0 0
    %3139 = vmatprep.subr.bf16.mxu0 0
    %3140 = vmatpush1.bf16.msra.mxu0 0
    %3141 = vmatprep.subr.bf16.mxu0 0
    %3142 = vmatpush1.bf16.msra.mxu0 %v3123
    %3143 = vmatprep.subr.bf16.mxu0 0
    %3144 = vmatpush1.bf16.msra.mxu0 %v3122
    %3145 = vmatprep.subr.bf16.mxu0 0
    %3146 = vmatpush2.bf16.msra.mxu0 0
    %3147 = vmatprep.subr.bf16.mxu0 0
    %3148 = vmatpush2.bf16.msra.mxu0 0
    %3149 = vmatprep.subr.bf16.mxu0 0
    %3150 = vmatpush2.bf16.msra.mxu0 0
    %3151 = vmatprep.subr.bf16.mxu0 0
    %3152 = vmatpush2.bf16.msra.mxu0 0
    %3153 = vmatprep.subr.bf16.mxu0 0
    %3154 = vmatpush2.bf16.msra.mxu0 0
    %3155 = vmatprep.subr.bf16.mxu0 0
    %3156 = vmatpush2.bf16.msra.mxu0 0
    %3157 = vmatprep.subr.bf16.mxu0 0
    %3158 = vmatpush2.bf16.msra.mxu0 0
    %3159 = vmatprep.subr.bf16.mxu0 0
    %3160 = vmatpush2.bf16.msra.mxu0 0
    %3161 = vmatprep.mubr.bf16.mxu0 0
    %3162 = vmatmul.mubr.bf16.gmra.mxu0 %v3127
    %v3163 = vpop.f32.mrf.mxu0
    %v3164 = vadd.f32 %v3112, %v3163
    %v3165 = vpop.f32.mrf.mxu0
    %v3166 = vpop.f32.mrf.mxu0
    %v3167 = vpop.f32.mrf.mxu0
    %3168 = vdwg.mxu0
    %v3169 = vmax.f32 %v3164, 0.0
    %v3170 = vpack.c.bf16 %v3169, %v3169
    %v3171 = vld [vmem:[%s19] sm:$0xf]
    %v3172 = vld [vmem:[%s19 + $0x4] sm:$0xf]
    %v3173 = vld [vmem:[%s19 + $0x8] sm:$0xf]
    %v3174 = vld [vmem:[%s19 + $0xc] sm:$0xf]
    %v3175 = vld [vmem:[%s20] sm:$0x1]
    %v3177 = vlaneseq
    %v3178 = vshrl.u32 %v3177, 7
    %v3179 = vsub.s32 0, %v3178
    %v3180 = vrot.slane %v3175, %v3179
    %v3186 = vunpack.c.l.b16 %v3171
    %v3187 = vunpack.c.l.b16 %v3172
    %v3188 = vunpack.c.l.b16 %v3173
    %v3189 = vunpack.c.l.b16 %v3174
    %v3190 = vpack.c.b16 %v3187, %v3186
    %v3191 = vpack.c.b16 %v3189, %v3188
    %v3195 = vsel %vm573, %v3170, 0
    %3197 = vmatprep.subr.bf16.mxu0 0
    %3198 = vmatpush1.bf16.msra.mxu0 0
    %3199 = vmatprep.subr.bf16.mxu0 0
    %3200 = vmatpush1.bf16.msra.mxu0 0
    %3201 = vmatprep.subr.bf16.mxu0 0
    %3202 = vmatpush1.bf16.msra.mxu0 0
    %3203 = vmatprep.subr.bf16.mxu0 0
    %3204 = vmatpush1.bf16.msra.mxu0 0
    %3205 = vmatprep.subr.bf16.mxu0 0
    %3206 = vmatpush1.bf16.msra.mxu0 0
    %3207 = vmatprep.subr.bf16.mxu0 0
    %3208 = vmatpush1.bf16.msra.mxu0 0
    %3209 = vmatprep.subr.bf16.mxu0 0
    %3210 = vmatpush1.bf16.msra.mxu0 %v3191
    %3211 = vmatprep.subr.bf16.mxu0 0
    %3212 = vmatpush1.bf16.msra.mxu0 %v3190
    %3213 = vmatprep.subr.bf16.mxu0 0
    %3214 = vmatpush2.bf16.msra.mxu0 0
    %3215 = vmatprep.subr.bf16.mxu0 0
    %3216 = vmatpush2.bf16.msra.mxu0 0
    %3217 = vmatprep.subr.bf16.mxu0 0
    %3218 = vmatpush2.bf16.msra.mxu0 0
    %3219 = vmatprep.subr.bf16.mxu0 0
    %3220 = vmatpush2.bf16.msra.mxu0 0
    %3221 = vmatprep.subr.bf16.mxu0 0
    %3222 = vmatpush2.bf16.msra.mxu0 0
    %3223 = vmatprep.subr.bf16.mxu0 0
    %3224 = vmatpush2.bf16.msra.mxu0 0
    %3225 = vmatprep.subr.bf16.mxu0 0
    %3226 = vmatpush2.bf16.msra.mxu0 0
    %3227 = vmatprep.subr.bf16.mxu0 0
    %3228 = vmatpush2.bf16.msra.mxu0 0
    %3229 = vmatprep.mubr.bf16.mxu0 0
    %3230 = vmatmul.mubr.bf16.gmra.mxu0 %v3195
    %v3231 = vpop.f32.mrf.mxu0
    %v3232 = vadd.f32 %v3180, %v3231
    %v3233 = vpop.f32.mrf.mxu0
    %v3234 = vpop.f32.mrf.mxu0
    %v3235 = vpop.f32.mrf.mxu0
    %3236 = vdwg.mxu0
    %3237 = vst [vmem:[#allocation2] sm:$0x3] %v3232
    // Predicated region
    $region86: #{_forward_impl.5} parent=1 // pred_check
      _
    $region87: #{_forward_impl.5} parent=1 // pred_check_branch
      %3239 = sbr.rel (0) target = $region89
    $region88: #{_forward_impl.5} parent=1 // pred_region
      %s3241 = ssub.s32 32, 32
      %3242 = vsyncadd [#allocation3], %s3241
      %s3244 = sshll.u32 [#allocation2], 4
      %s3245 = int_to_ptr.vmem [resolvable:$true] %s3244
      %3247 = dma.vmem_to_hbm [thread:$0]  %s3245, 32, %s21, [#allocation3]
    $region89: #{_forward_impl.5} parent=1 // pred_fallthru
      _
    // Predicated region
    $region90: #{_forward_impl.5} parent=1 // pred_check
      _
    $region91: #{_forward_impl.5} parent=1 // pred_check_branch
      %3249 = sbr.rel (0) target = $region93
    $region92: #{_forward_impl.5} parent=1 // pred_region
      %3250 = dma.done [#allocation3], 32
    $region93: #{_forward_impl.5} parent=1 // pred_fallthru
      _
    %3251 = vsyncpa [#allocation3], 1

</llo_original>
